<compile_context>
chip_gen: v5e
topology: v5e:2x2
jax: 0.10.0
libtpu: 0.0.40
codegen_flags: <defaults>
</compile_context>

<pallas_src>
import functools
import math

import numpy as np
import jax
import jax.numpy as jnp
from jax import lax
from jax.scipy.special import erf as _jax_erf
from jax.experimental import pallas as pl
from jax.experimental.pallas import tpu as pltpu

_INV_SQRT_2PI = float(1.0 / np.sqrt(2.0 * np.pi))
_INV_SQRT_2 = float(1.0 / np.sqrt(2.0))
LANE = 128
SUB = 8


def _round_up(v, m):
    return (v + m - 1) // m * m


def _erf(x):
    # Abramowitz & Stegun 7.1.26 rational approximation (|err| < 1.5e-7);
    # lax.erf has no Mosaic lowering.  The divide goes to the EUP via reciprocal.
    a1, a2, a3, a4, a5 = (0.254829592, -0.284496736, 1.421413741,
                          -1.453152027, 1.061405429)
    p = 0.3275911
    sgn = jnp.where(x >= 0.0, 1.0, -1.0)
    ax = jnp.abs(x)
    t = pl.reciprocal(1.0 + p * ax, approx=True)
    poly = ((((a5 * t + a4) * t + a3) * t + a2) * t + a1) * t
    return sgn * (1.0 - poly * jnp.exp(-ax * ax))


def _ex_relu(mu, sigma):
    # Expected ReLU of N(mu, sigma); sigma == 0 -> relu(mu).  rsqrt/exp use the
    # EUP slot instead of VALU-heavy divides/sqrt.
    is_zero = sigma == 0.0
    sig = jnp.where(is_zero, 1e-10, sigma)
    inv_sqrt = lax.rsqrt(sig)
    sqrt_sig = sig * inv_sqrt            # = sqrt(sig)
    w = mu * inv_sqrt
    nr = sqrt_sig * (jnp.exp(-0.5 * w * w) * _INV_SQRT_2PI
                     + 0.5 * w * (1.0 + _erf(w * _INV_SQRT_2)))
    return jnp.where(is_zero, jnp.maximum(mu, 0.0), nr)


# --------------------------- Stage A: slabs + gamma --------------------------- #
def _slab_gamma_kernel(x_ref, wa_ref, b1cat_ref, wq_ref, logp_ref,
                       txs_ref, tcs_ref, gam_ref, *, n_components, kh_pad):
    x = x_ref[...]                                   # (TM, FIN_PAD) f32, NaN = missing
    isnan = jnp.isnan(x)
    xc = jnp.where(isnan, 0.0, x)                    # NaN -> 0
    nanf = isnan.astype(jnp.float32)
    obs = 1.0 - nanf                                 # padded feature lanes: iv = 0 there

    # One merged bf16 matmul produces [tx_nobias | tc] for all K components
    # packed lane-dense:  [xc | isnan] @ [[W1cat, 0], [mean_k*W1 cat, var_k*W1^2 cat]]
    left_a = jnp.concatenate([xc, nanf], axis=1).astype(jnp.bfloat16)
    out_a = jnp.dot(left_a, wa_ref[...], preferred_element_type=jnp.float32)
    txs_ref[...] = (out_a[:, :kh_pad] + b1cat_ref[...]).astype(txs_ref.dtype)
    tcs_ref[...] = out_a[:, kh_pad:].astype(tcs_ref.dtype)

    # Responsibilities gamma = softmax_k(logp_k - 0.5 * sum_f obs*(x-mean_k)^2/var_k)
    # as a single f32 matmul:
    #   quad = x^2 @ iv^T - 2 x @ (mean*iv)^T + obs @ (mean^2*iv)^T
    left_q = jnp.concatenate([xc * xc, xc, obs], axis=1)            # (TM, 3*FIN_PAD)
    quad = jnp.dot(left_q, wq_ref[...], preferred_element_type=jnp.float32)
    lp = logp_ref[...] - 0.5 * quad                                  # (TM, K_PAD)
    col = lax.broadcasted_iota(jnp.int32, lp.shape, 1)
    valid = col < n_components
    lp = jnp.where(valid, lp, -1e30)
    m = jnp.max(lp, axis=1, keepdims=True)
    e = jnp.where(valid, jnp.exp(lp - m), 0.0)
    den = jnp.sum(e, axis=1, keepdims=True)
    gam_ref[...] = e / den                           # compact (TM, K_PAD) f32


# ------------- Stage B: adj spmm + ex_relu + mixture + pool@adj --------------- #
def _spmm_mix_pool_kernel(adj_ref, txs_ref, tcs_ref, gam_ref, pool_ref,
                          esel_ref, w2rep_ref, s_ref, qp_ref,
                          acc_x_ref, acc_c_ref):
    j = pl.program_id(1)

    @pl.when(j == 0)
    def _():
        acc_x_ref[...] = jnp.zeros_like(acc_x_ref)
        acc_c_ref[...] = jnp.zeros_like(acc_c_ref)

    adj = adj_ref[...]                               # (TM, TK) bf16, 0/1 -> exact
    adj2 = adj * adj                                 # torch.mul(adj, adj)
    acc_x_ref[...] += jnp.dot(adj, txs_ref[...], preferred_element_type=jnp.float32)
    acc_c_ref[...] += jnp.dot(adj2, tcs_ref[...], preferred_element_type=jnp.float32)

    # pooled-adjacency partial: q_i[:, cols_j] = pool[:, rows_i] @ adj[rows_i, cols_j]
    # (the adjacency block is already resident; this removes Stage C's full adj pass)
    qp_ref[...] = jnp.dot(pool_ref[...], adj, preferred_element_type=jnp.float32)

    @pl.when(j == pl.num_programs(1) - 1)
    def _():
        cx = acc_x_ref[...]
        cc = jnp.maximum(acc_c_ref[...], 0.0)        # guard fp noise; cc >= 0 math'ly
        ex = _ex_relu(cx, cc)                        # (TM, KH_PAD)
        # expand compact gamma (TM, K_PAD) to the lane-packed slab layout on the MXU
        gsl = jnp.dot(gam_ref[...], esel_ref[...], preferred_element_type=jnp.float32)
        # W2rep = W2 tiled K times: sums the components and applies gc2's weight.
        s_ref[...] = jnp.dot(ex * gsl, w2rep_ref[...],
                             preferred_element_type=jnp.float32).astype(s_ref.dtype)


# ------------------ Stage C: pooled reduction + bias + log_softmax ------------ #
def _pool_logsoftmax_kernel(qp_ref, s_ref, cnt_ref, b2_ref, out_ref, acc_ref,
                            *, num_classes, n_tiles_m):
    j = pl.program_id(0)

    @pl.when(j == 0)
    def _():
        acc_ref[...] = jnp.zeros_like(acc_ref)

    # q[:, cols_j] = pool @ adj restricted to column tile j  (sum the row-tile partials)
    q = qp_ref[0]
    for r in range(1, n_tiles_m):
        q = q + qp_ref[r]
    acc_ref[...] += jnp.dot(q, s_ref[...], preferred_element_type=jnp.float32)

    @pl.when(j == pl.num_programs(0) - 1)
    def _():
        # pooled gc2 bias: (number of nodes per graph) * b2
        pooled = acc_ref[...] + cnt_ref[...] * b2_ref[...]
        col = lax.broadcasted_iota(jnp.int32, pooled.shape, 1)
        valid = col < num_classes
        pooled = jnp.where(valid, pooled, -1e30)     # mask the lane padding
        mx = jnp.max(pooled, axis=1, keepdims=True)
        z = pooled - mx
        lse = jnp.log(jnp.sum(jnp.where(valid, jnp.exp(z), 0.0),
                              axis=1, keepdims=True))
        out_ref[...] = z - lse


# --------------------------------- wrapper ------------------------------------ #
@functools.partial(jax.jit, static_argnames=("tm", "tk"))
def gcnmf_forward(x, means, logvars, logp, w1, b1, adj, w2, b2, pool, *,
                  tm=256, tk=256):
    """tm: output-row tile (raise to 512 for large graphs); tk: contraction depth
    (256 matches the v6e/v7x MXU; use 128 on v5e)."""
    N, Fin = x.shape
    K = means.shape[0]
    H = w1.shape[1]
    C = w2.shape[1]
    G = pool.shape[0]

    assert tm % LANE == 0 and tk % LANE == 0
    # v7x megacore: keep >= 2 parallel output-row blocks when the graph allows it.
    while tm > LANE and (N + tm - 1) // tm < 2:
        tm //= 2

    KH = K * H
    FIN_PAD = _round_up(Fin, LANE)                   # lane-dense feature dim
    KH_PAD = _round_up(KH, LANE)                     # lane-dense component slab
    K_PAD = _round_up(K, LANE)
    C_PAD = _round_up(C, LANE)
    G_PAD = _round_up(G, SUB)
    blk = tm * tk // math.gcd(tm, tk)
    Np = _round_up(N, blk)
    n_row = Np // tm
    n_red = Np // tk

    def pad2(a, r, c, dtype=None):
        a = jnp.pad(a, ((0, r - a.shape[0]), (0, c - a.shape[1])))
        return a if dtype is None else a.astype(dtype)

    variances = jnp.exp(logvars)
    inv_vars = jnp.exp(-logvars)

    # ---- tiny one-off parameter repack (component-tiled, lane-dense) ----
    w1cat = jnp.tile(w1, (1, K))                                        # [W1|..|W1]
    mcat = jnp.einsum('kf,fh->fkh', means, w1).reshape(Fin, KH)         # [mean_k*W1]_k
    vcat = jnp.einsum('kf,fh->fkh', variances, w1 * w1).reshape(Fin, KH)  # [var_k*W1^2]_k
    wa_x = jnp.concatenate([pad2(w1cat, Fin, KH_PAD),
                            jnp.zeros((Fin, KH_PAD), jnp.float32)], axis=1)
    wa_n = jnp.concatenate([pad2(mcat, Fin, KH_PAD),
                            pad2(vcat, Fin, KH_PAD)], axis=1)
    wa = jnp.concatenate([pad2(wa_x, FIN_PAD, 2 * KH_PAD),
                          pad2(wa_n, FIN_PAD, 2 * KH_PAD)],
                         axis=0).astype(jnp.bfloat16)                   # (2F, 2KH)
    b1cat = pad2(jnp.tile(b1, (1, K)), 1, KH_PAD, jnp.float32)

    # gamma weights: quad = x^2 @ iv^T - 2 x @ (m*iv)^T + obs @ (m^2*iv)^T
    wq = jnp.concatenate([
        pad2(inv_vars.T, FIN_PAD, K_PAD),
        pad2(-2.0 * (means * inv_vars).T, FIN_PAD, K_PAD),
        pad2((means * means * inv_vars).T, FIN_PAD, K_PAD)],
        axis=0).astype(jnp.float32)                                     # (3F, K_PAD)
    logp_pad = pad2(logp, 1, K_PAD, jnp.float32)

    # gamma lane-expansion selector and gc2 weights (W2 tiled over components)
    esel_np = np.zeros((K_PAD, KH_PAD), np.float32)
    for k in range(K):
        esel_np[k, k * H:(k + 1) * H] = 1.0
    esel = jnp.asarray(esel_np)
    w2rep = pad2(jnp.tile(w2, (K, 1)), KH_PAD, C_PAD, jnp.float32)
    b2p = pad2(b2, 1, C_PAD, jnp.float32)

    # Graph tensors: pad the node dim; bf16 for the MXU streams (binary adjacency /
    # one-hot pooling are exact in bf16).  Padded x rows are 0.0 (not NaN); padded
    # adjacency / pool columns are exactly 0 so padded nodes never contribute.
    x_p = pad2(x, Np, FIN_PAD)
    adj_p = pad2(adj, Np, Np, jnp.bfloat16)
    pool_p = pad2(pool, G_PAD, Np, jnp.bfloat16)
    cnt = pad2(jnp.sum(pool, axis=1, keepdims=True), G_PAD, 1, jnp.float32)

    # ---- Stage A ----
    kernel_a = functools.partial(_slab_gamma_kernel, n_components=K, kh_pad=KH_PAD)
    txs, tcs, gam = pl.pallas_call(
        kernel_a,
        grid=(n_row,),
        in_specs=[
            pl.BlockSpec((tm, FIN_PAD), lambda i: (i, 0)),
            pl.BlockSpec((2 * FIN_PAD, 2 * KH_PAD), lambda i: (0, 0)),
            pl.BlockSpec((1, KH_PAD), lambda i: (0, 0)),
            pl.BlockSpec((3 * FIN_PAD, K_PAD), lambda i: (0, 0)),
            pl.BlockSpec((1, K_PAD), lambda i: (0, 0)),
        ],
        out_specs=[pl.BlockSpec((tm, KH_PAD), lambda i: (i, 0)),
                   pl.BlockSpec((tm, KH_PAD), lambda i: (i, 0)),
                   pl.BlockSpec((tm, K_PAD), lambda i: (i, 0))],
        out_shape=[jax.ShapeDtypeStruct((Np, KH_PAD), jnp.bfloat16),
                   jax.ShapeDtypeStruct((Np, KH_PAD), jnp.bfloat16),
                   jax.ShapeDtypeStruct((Np, K_PAD), jnp.float32)],
        compiler_params=pltpu.CompilerParams(dimension_semantics=("parallel",)),
    )(x_p, wa, b1cat, wq, logp_pad)

    # ---- Stage B (adjacency is read from HBM exactly once) ----
    s, q_part = pl.pallas_call(
        _spmm_mix_pool_kernel,
        grid=(n_row, n_red),
        in_specs=[
            pl.BlockSpec((tm, tk), lambda i, j: (i, j)),          # adj block
            pl.BlockSpec((tk, KH_PAD), lambda i, j: (j, 0)),      # tx slab (src rows)
            pl.BlockSpec((tk, KH_PAD), lambda i, j: (j, 0)),      # tc slab
            pl.BlockSpec((tm, K_PAD), lambda i, j: (i, 0)),       # compact gamma
            pl.BlockSpec((G_PAD, tm), lambda i, j: (0, i)),       # pool (out rows)
            pl.BlockSpec((K_PAD, KH_PAD), lambda i, j: (0, 0)),   # gamma selector
            pl.BlockSpec((KH_PAD, C_PAD), lambda i, j: (0, 0)),   # gc2 weight
        ],
        out_specs=[pl.BlockSpec((tm, C_PAD), lambda i, j: (i, 0)),
                   pl.BlockSpec((None, G_PAD, tk), lambda i, j: (i, 0, j))],
        out_shape=[jax.ShapeDtypeStruct((Np, C_PAD), jnp.float32),
                   jax.ShapeDtypeStruct((n_row, G_PAD, Np), jnp.float32)],
        scratch_shapes=[pltpu.VMEM((tm, KH_PAD), jnp.float32),
                        pltpu.VMEM((tm, KH_PAD), jnp.float32)],
        compiler_params=pltpu.CompilerParams(
            dimension_semantics=("parallel", "arbitrary")),
    )(adj_p, txs, tcs, gam, pool_p, esel, w2rep)

    # ---- Stage C (tiny: no adjacency re-read) ----
    # TODO(synk): GCNConv source not provided; assumed standard spmm(adj, x@W)+b form.
    kernel_c = functools.partial(_pool_logsoftmax_kernel,
                                 num_classes=C, n_tiles_m=n_row)
    pooled = pl.pallas_call(
        kernel_c,
        grid=(n_red,),
        in_specs=[
            pl.BlockSpec((n_row, G_PAD, tk), lambda j: (0, 0, j)),  # pool@adj partials
            pl.BlockSpec((tk, C_PAD), lambda j: (j, 0)),            # s rows
            pl.BlockSpec((G_PAD, 1), lambda j: (0, 0)),             # nodes per graph
            pl.BlockSpec((1, C_PAD), lambda j: (0, 0)),             # gc2 bias
        ],
        out_specs=pl.BlockSpec((G_PAD, C_PAD), lambda j: (0, 0)),
        out_shape=jax.ShapeDtypeStruct((G_PAD, C_PAD), jnp.float32),
        scratch_shapes=[pltpu.VMEM((G_PAD, C_PAD), jnp.float32)],
        compiler_params=pltpu.CompilerParams(dimension_semantics=("arbitrary",)),
    )(q_part, s, cnt, b2p)

    return pooled[:G, :C]


# ------------------------------ pure-JAX reference ---------------------------- #
def reference_forward(x, means, logvars, logp, w1, b1, adj, w2, b2, pool):
    hi = lax.Precision.HIGHEST
    K, Fin = means.shape
    variances = jnp.exp(logvars)
    isnan = jnp.isnan(x)
    adj2 = adj * adj
    mean_mat = jnp.where(isnan[None], means[:, None, :], x[None])      # (K, N, Fin)
    var_mat = jnp.where(isnan[None], variances[:, None, :], 0.0)
    tx = jnp.einsum('knf,fh->knh', mean_mat, w1, precision=hi) + b1
    tc = jnp.einsum('knf,fh->knh', var_mat, w1 * w1, precision=hi)
    cx = jnp.einsum('nm,kmh->knh', adj, tx, precision=hi)
    cc = jnp.einsum('nm,kmh->knh', adj2, tc, precision=hi)
    is_zero = cc == 0.0
    sig = jnp.where(is_zero, 1e-10, cc)
    sq = jnp.sqrt(sig)
    w = cx / sq
    nr = sq * (jnp.exp(-0.5 * w * w) / np.sqrt(2 * np.pi)
               + 0.5 * w * (1.0 + _jax_erf(w / np.sqrt(2.0))))
    ex = jnp.where(is_zero, jnp.maximum(cx, 0.0), nr)
    log_n = -0.5 * jnp.sum((mean_mat - means[:, None, :]) ** 2
                           / variances[:, None, :], axis=2)
    log_n = log_n - 0.5 * Fin * np.log(2 * np.pi) - 0.5 * jnp.sum(logvars)
    log_prob = logp.reshape(K, 1) + log_n
    gamma = jax.nn.softmax(log_prob, axis=0)
    h = jnp.sum(ex * gamma[:, :, None], axis=0)
    o = jnp.einsum('nm,mc->nc', adj,
                   jnp.einsum('nh,hc->nc', h, w2, precision=hi),
                   precision=hi) + b2
    pooled = jnp.einsum('gn,nc->gc', pool, o, precision=hi)
    return jax.nn.log_softmax(pooled, axis=1)


def _xavier_uniform(key, fan_in, fan_out, gain):
    bound = gain * float(np.sqrt(6.0 / (fan_in + fan_out)))
    return jax.random.uniform(key, (fan_in, fan_out), jnp.float32, -bound, bound)


if __name__ == "__main__":
    # nodes, in_features, hidden, classes, GMM components, graphs
    N, FIN, H, C, K, G = 512, 8, 32, 4, 5, 1
    TM, TK = 256, 256                               # -> 2x2 Stage-B grid

    key = jax.random.PRNGKey(0)
    (k_x, k_nan, k_adj, k_w1, k_b1, k_mu, k_lv, k_lp,
     k_w2, k_b2) = jax.random.split(key, 10)

    # node features with missing (NaN) entries
    x_dense = jax.random.normal(k_x, (N, FIN), jnp.float32)
    nan_mask = jax.random.bernoulli(k_nan, 0.3, (N, FIN))
    x = jnp.where(nan_mask, jnp.nan, x_dense)

    # sparse-ish binary adjacency (symmetric + self loops)
    a = jax.random.bernoulli(k_adj, 0.01, (N, N)).astype(jnp.float32)
    adj = jnp.minimum(a + a.T + jnp.eye(N, dtype=jnp.float32), 1.0)

    # GCNmfConv parameters (sklearn GMM fit replaced by synthetic params)
    w1 = _xavier_uniform(k_w1, FIN, H, gain=1.414)
    b1 = 0.05 * jax.random.normal(k_b1, (1, H), jnp.float32)
    means = jax.random.normal(k_mu, (K, FIN), jnp.float32)
    logvars = jnp.log(jax.random.uniform(k_lv, (K, FIN), jnp.float32, 0.5, 1.5))
    mix = jax.nn.softmax(jax.random.normal(k_lp, (K,), jnp.float32))
    logp = jnp.log(mix).reshape(1, K)

    # gc2 (GCNConv): small-magnitude weights keep the add-pooled logits moderate so
    # the bf16-MXU kernel compares meaningfully against the f32 reference.
    w2 = _xavier_uniform(k_w2, H, C, gain=1.0) * 1e-3
    b2 = 0.02 * jax.random.normal(k_b2, (1, C), jnp.float32)

    # global_add_pool: single graph (data.batch all zeros) -> all-ones pool row
    pool = jnp.ones((G, N), jnp.float32)

    out = gcnmf_forward(x, means, logvars, logp, w1, b1, adj, w2, b2, pool,
                        tm=TM, tk=TK)
    out = jax.block_until_ready(out)

    ref = reference_forward(x, means, logvars, logp, w1, b1, adj, w2, b2, pool)

    # Kernel feeds the MXU bf16 operands on the adjacency path (f32 accumulation);
    # reference is f32-highest, hence the relaxed tolerance.
    np.testing.assert_allclose(np.asarray(out), np.asarray(ref), rtol=5e-2, atol=1e-1)
    assert out.shape == (G, C) and not bool(jnp.any(jnp.isnan(out)))

    print("KERNEL_OK")
</pallas_src>

<mosaic_0001>
module attributes {stable_mosaic.version = 11 : i64} {
  func.func @_pool_logsoftmax_kernel(%arg0: i32, %arg1: memref<2x8x256xf32, #tpu.memory_space<vmem>>, %arg2: memref<256x128xf32, #tpu.memory_space<vmem>>, %arg3: memref<8x1xf32, #tpu.memory_space<vmem>>, %arg4: memref<1x128xf32, #tpu.memory_space<vmem>>, %arg5: memref<8x128xf32, #tpu.memory_space<vmem>>, %arg6: memref<8x128xf32, #tpu.memory_space<vmem>>) attributes {dimension_semantics = [#tpu.dimension_semantics<arbitrary>], iteration_bounds = array<i64: 2>, scalar_prefetch = 0 : i64, scratch_operands = 1 : i64, tpu.core_type = #tpu.core_type<tc>, window_params = [{transform_indices = @transform_0, window_bounds = array<i64: 2, 8, 256>}, {transform_indices = @transform_1, window_bounds = array<i64: 256, 128>}, {pipeline_mode = #tpu.pipeline_mode<synchronous>, transform_indices = @transform_2, window_bounds = array<i64: 8, 1>}, {pipeline_mode = #tpu.pipeline_mode<synchronous>, transform_indices = @transform_3, window_bounds = array<i64: 1, 128>}, {pipeline_mode = #tpu.pipeline_mode<synchronous>, transform_indices = @transform_4, window_bounds = array<i64: 8, 128>}]} {
    %c0_i32 = arith.constant 0 : i32
    %0 = arith.cmpi eq, %arg0, %c0_i32 : i32
    %1 = arith.extui %0 : i1 to i32
    %c0_i32_0 = arith.constant 0 : i32
    %2 = arith.cmpi ne, %1, %c0_i32_0 : i32
    scf.if %2 {
      %cst_12 = arith.constant 0.000000e+00 : f32
      %16 = vector.broadcast %cst_12 : f32 to vector<8x128xf32>
      %c0_13 = arith.constant 0 : index
      %c0_14 = arith.constant 0 : index
      %17 = vector.load %arg6[%c0_13, %c0_14] : memref<8x128xf32, #tpu.memory_space<vmem>>, vector<8x128xf32>
      tpu.vector_store %arg6[%c0_13, %c0_14], %16 {strides = array<i32>} : memref<8x128xf32, #tpu.memory_space<vmem>>, vector<8x128xf32>,
    } else {
    }
    %c0 = arith.constant 0 : index
    %c0_1 = arith.constant 0 : index
    %c0_2 = arith.constant 0 : index
    %3 = vector.load %arg1[%c0, %c0_1, %c0_2] : memref<2x8x256xf32, #tpu.memory_space<vmem>>, vector<1x8x256xf32>
    %4 = vector.shape_cast %3 : vector<1x8x256xf32> to vector<8x256xf32>
    %c1 = arith.constant 1 : index
    %c0_3 = arith.constant 0 : index
    %c0_4 = arith.constant 0 : index
    %5 = vector.load %arg1[%c1, %c0_3, %c0_4] : memref<2x8x256xf32, #tpu.memory_space<vmem>>, vector<1x8x256xf32>
    %6 = vector.shape_cast %5 : vector<1x8x256xf32> to vector<8x256xf32>
    %7 = arith.addf %4, %6 : vector<8x256xf32>
    %c0_5 = arith.constant 0 : index
    %c0_6 = arith.constant 0 : index
    %8 = vector.load %arg6[%c0_5, %c0_6] : memref<8x128xf32, #tpu.memory_space<vmem>>, vector<8x128xf32>
    %c0_7 = arith.constant 0 : index
    %c0_8 = arith.constant 0 : index
    %9 = vector.load %arg2[%c0_7, %c0_8] : memref<256x128xf32, #tpu.memory_space<vmem>>, vector<256x128xf32>
    %cst = arith.constant dense<0.000000e+00> : vector<8x128xf32>
    %10 = tpu.matmul %7, %9, %cst {dimension_numbers = #tpu.dot_dimension_numbers<[1], [0], [0], [1], [0, 0, 1, 1], [], []>} : vector<8x256xf32>, vector<256x128xf32>, vector<8x128xf32> -> vector<8x128xf32>
    %11 = arith.addf %8, %10 : vector<8x128xf32>
    %c0_9 = arith.constant 0 : index
    %c0_10 = arith.constant 0 : index
    %12 = vector.load %arg6[%c0_9, %c0_10] : memref<8x128xf32, #tpu.memory_space<vmem>>, vector<8x128xf32>
    tpu.vector_store %arg6[%c0_9, %c0_10], %11 {strides = array<i32>} : memref<8x128xf32, #tpu.memory_space<vmem>>, vector<8x128xf32>,
    %c1_i32 = arith.constant 1 : i32
    %13 = arith.cmpi eq, %arg0, %c1_i32 : i32
    %14 = arith.extui %13 : i1 to i32
    %c0_i32_11 = arith.constant 0 : i32
    %15 = arith.cmpi ne, %14, %c0_i32_11 : i32
    scf.if %15 {
      %c0_12 = arith.constant 0 : index
      %c0_13 = arith.constant 0 : index
      %16 = vector.load %arg6[%c0_12, %c0_13] : memref<8x128xf32, #tpu.memory_space<vmem>>, vector<8x128xf32>
      %c0_14 = arith.constant 0 : index
      %c0_15 = arith.constant 0 : index
      %17 = vector.load %arg3[%c0_14, %c0_15] : memref<8x1xf32, #tpu.memory_space<vmem>>, vector<8x1xf32>
      %c0_16 = arith.constant 0 : index
      %c0_17 = arith.constant 0 : index
      %18 = vector.load %arg4[%c0_16, %c0_17] : memref<1x128xf32, #tpu.memory_space<vmem>>, vector<1x128xf32>
      %19 = vector.broadcast %17 : vector<8x1xf32> to vector<8x128xf32>
      %20 = vector.broadcast %18 : vector<1x128xf32> to vector<8x128xf32>
      %21 = arith.mulf %19, %20 : vector<8x128xf32>
      %22 = arith.addf %16, %21 : vector<8x128xf32>
      %23 = tpu.iota {dimensions = array<i32: 1>} : vector<8x128xi32>
      %c4_i32 = arith.constant 4 : i32
      %24 = vector.broadcast %c4_i32 : i32 to vector<8x128xi32>
      %25 = arith.cmpi slt, %23, %24 : vector<8x128xi32>
      %cst_18 = arith.constant -1.000000e+30 : f32
      %26 = vector.broadcast %cst_18 : f32 to vector<8x128xf32>
      %27 = arith.select %25, %22, %26 : vector<8x128xi1>, vector<8x128xf32>
      %cst_19 = arith.constant dense<0xFF800000> : vector<8xf32>
      %28 = vector.multi_reduction <maximumf>, %27, %cst_19 [1] : vector<8x128xf32> to vector<8xf32>
      %29 = vector.shape_cast %28 : vector<8xf32> to vector<8x1xf32>
      %30 = vector.broadcast %29 : vector<8x1xf32> to vector<8x128xf32>
      %31 = arith.subf %27, %30 : vector<8x128xf32>
      %32 = math.exp %31 : vector<8x128xf32>
      %cst_20 = arith.constant 0.000000e+00 : f32
      %33 = vector.broadcast %cst_20 : f32 to vector<8x128xf32>
      %34 = arith.select %25, %32, %33 : vector<8x128xi1>, vector<8x128xf32>
      %cst_21 = arith.constant dense<0.000000e+00> : vector<8xf32>
      %35 = vector.multi_reduction <add>, %34, %cst_21 [1] : vector<8x128xf32> to vector<8xf32>
      %36 = vector.shape_cast %35 : vector<8xf32> to vector<8x1xf32>
      %37 = math.log %36 : vector<8x1xf32>
      %38 = vector.broadcast %37 : vector<8x1xf32> to vector<8x128xf32>
      %39 = arith.subf %31, %38 : vector<8x128xf32>
      %c0_22 = arith.constant 0 : index
      %c0_23 = arith.constant 0 : index
      %40 = vector.load %arg5[%c0_22, %c0_23] : memref<8x128xf32, #tpu.memory_space<vmem>>, vector<8x128xf32>
      tpu.vector_store %arg5[%c0_22, %c0_23], %39 {strides = array<i32>} : memref<8x128xf32, #tpu.memory_space<vmem>>, vector<8x128xf32>,
    } else {
    }
    return
  }
  func.func @transform_0(%arg0: i32) -> (i32, i32, i32) {
    %c0_i32 = arith.constant 0 : i32
    %c0_i32_0 = arith.constant 0 : i32
    %c0_i32_1 = arith.constant 0 : i32
    return %c0_i32, %c0_i32_0, %arg0 : i32, i32, i32
  }
  func.func @transform_1(%arg0: i32) -> (i32, i32) {
    %c0_i32 = arith.constant 0 : i32
    %c0_i32_0 = arith.constant 0 : i32
    return %arg0, %c0_i32 : i32, i32
  }
  func.func @transform_2(%arg0: i32) -> (i32, i32) {
    %c0_i32 = arith.constant 0 : i32
    %c0_i32_0 = arith.constant 0 : i32
    %c0_i32_1 = arith.constant 0 : i32
    return %c0_i32, %c0_i32_0 : i32, i32
  }
  func.func @transform_3(%arg0: i32) -> (i32, i32) {
    %c0_i32 = arith.constant 0 : i32
    %c0_i32_0 = arith.constant 0 : i32
    %c0_i32_1 = arith.constant 0 : i32
    return %c0_i32, %c0_i32_0 : i32, i32
  }
  func.func @transform_4(%arg0: i32) -> (i32, i32) {
    %c0_i32 = arith.constant 0 : i32
    %c0_i32_0 = arith.constant 0 : i32
    %c0_i32_1 = arith.constant 0 : i32
    return %c0_i32, %c0_i32_0 : i32, i32
  }
}

module attributes {stable_mosaic.version = 11 : i64} {
  func.func @_slab_gamma_kernel(%arg0: i32, %arg1: memref<256x128xf32, #tpu.memory_space<vmem>>, %arg2: memref<256x512xbf16, #tpu.memory_space<vmem>>, %arg3: memref<1x256xf32, #tpu.memory_space<vmem>>, %arg4: memref<384x128xf32, #tpu.memory_space<vmem>>, %arg5: memref<1x128xf32, #tpu.memory_space<vmem>>, %arg6: memref<256x256xbf16, #tpu.memory_space<vmem>>, %arg7: memref<256x256xbf16, #tpu.memory_space<vmem>>, %arg8: memref<256x128xf32, #tpu.memory_space<vmem>>) attributes {dimension_semantics = [#tpu.dimension_semantics<parallel>], iteration_bounds = array<i64: 2>, scalar_prefetch = 0 : i64, scratch_operands = 0 : i64, tpu.core_type = #tpu.core_type<tc>, window_params = [{transform_indices = @transform_0, window_bounds = array<i64: 256, 128>}, {pipeline_mode = #tpu.pipeline_mode<synchronous>, transform_indices = @transform_1, window_bounds = array<i64: 256, 512>}, {pipeline_mode = #tpu.pipeline_mode<synchronous>, transform_indices = @transform_2, window_bounds = array<i64: 1, 256>}, {pipeline_mode = #tpu.pipeline_mode<synchronous>, transform_indices = @transform_3, window_bounds = array<i64: 384, 128>}, {pipeline_mode = #tpu.pipeline_mode<synchronous>, transform_indices = @transform_4, window_bounds = array<i64: 1, 128>}, {transform_indices = @transform_5, window_bounds = array<i64: 256, 256>}, {transform_indices = @transform_6, window_bounds = array<i64: 256, 256>}, {transform_indices = @transform_7, window_bounds = array<i64: 256, 128>}]} {
    %c0 = arith.constant 0 : index
    %c0_0 = arith.constant 0 : index
    %0 = vector.load %arg1[%c0, %c0_0] : memref<256x128xf32, #tpu.memory_space<vmem>>, vector<256x128xf32>
    %1 = arith.cmpf one, %0, %0 : vector<256x128xf32>
    %cst = arith.constant 0.000000e+00 : f32
    %2 = vector.broadcast %cst : f32 to vector<256x128xf32>
    %3 = arith.select %1, %2, %0 : vector<256x128xi1>, vector<256x128xf32>
    %4 = arith.extui %1 : vector<256x128xi1> to vector<256x128xi32>
    %5 = arith.sitofp %4 : vector<256x128xi32> to vector<256x128xf32>
    %cst_1 = arith.constant 1.000000e+00 : f32
    %6 = vector.broadcast %cst_1 : f32 to vector<256x128xf32>
    %7 = arith.subf %6, %5 : vector<256x128xf32>
    %8 = tpu.concatenate %3, %5 in 1 : vector<256x128xf32>, vector<256x128xf32> -> vector<256x256xf32>
    %9 = arith.truncf %8 : vector<256x256xf32> to vector<256x256xbf16>
    %c0_2 = arith.constant 0 : index
    %c0_3 = arith.constant 0 : index
    %10 = vector.load %arg2[%c0_2, %c0_3] : memref<256x512xbf16, #tpu.memory_space<vmem>>, vector<256x512xbf16>
    %cst_4 = arith.constant dense<0.000000e+00> : vector<256x512xf32>
    %11 = tpu.matmul %9, %10, %cst_4 {dimension_numbers = #tpu.dot_dimension_numbers<[1], [0], [0], [1], [0, 0, 1, 1], [], []>} : vector<256x256xbf16>, vector<256x512xbf16>, vector<256x512xf32> -> vector<256x512xf32>
    %12 = vector.extract_strided_slice %11 {offsets = [0, 0], sizes = [256, 256], strides = [1, 1]} : vector<256x512xf32> to vector<256x256xf32>
    %c0_5 = arith.constant 0 : index
    %c0_6 = arith.constant 0 : index
    %13 = vector.load %arg3[%c0_5, %c0_6] : memref<1x256xf32, #tpu.memory_space<vmem>>, vector<1x256xf32>
    %14 = vector.broadcast %13 : vector<1x256xf32> to vector<256x256xf32>
    %15 = arith.addf %12, %14 : vector<256x256xf32>
    %16 = arith.truncf %15 : vector<256x256xf32> to vector<256x256xbf16>
    %c0_7 = arith.constant 0 : index
    %c0_8 = arith.constant 0 : index
    %17 = vector.load %arg6[%c0_7, %c0_8] : memref<256x256xbf16, #tpu.memory_space<vmem>>, vector<256x256xbf16>
    tpu.vector_store %arg6[%c0_7, %c0_8], %16 {strides = array<i32>} : memref<256x256xbf16, #tpu.memory_space<vmem>>, vector<256x256xbf16>,
    %18 = vector.extract_strided_slice %11 {offsets = [0, 256], sizes = [256, 256], strides = [1, 1]} : vector<256x512xf32> to vector<256x256xf32>
    %19 = arith.truncf %18 : vector<256x256xf32> to vector<256x256xbf16>
    %c0_9 = arith.constant 0 : index
    %c0_10 = arith.constant 0 : index
    %20 = vector.load %arg7[%c0_9, %c0_10] : memref<256x256xbf16, #tpu.memory_space<vmem>>, vector<256x256xbf16>
    tpu.vector_store %arg7[%c0_9, %c0_10], %19 {strides = array<i32>} : memref<256x256xbf16, #tpu.memory_space<vmem>>, vector<256x256xbf16>,
    %21 = arith.mulf %3, %3 : vector<256x128xf32>
    %22 = tpu.concatenate %21, %3, %7 in 1 : vector<256x128xf32>, vector<256x128xf32>, vector<256x128xf32> -> vector<256x384xf32>
    %c0_11 = arith.constant 0 : index
    %c0_12 = arith.constant 0 : index
    %23 = vector.load %arg4[%c0_11, %c0_12] : memref<384x128xf32, #tpu.memory_space<vmem>>, vector<384x128xf32>
    %cst_13 = arith.constant dense<0.000000e+00> : vector<256x128xf32>
    %24 = tpu.matmul %22, %23, %cst_13 {dimension_numbers = #tpu.dot_dimension_numbers<[1], [0], [0], [1], [0, 0, 1, 1], [], []>} : vector<256x384xf32>, vector<384x128xf32>, vector<256x128xf32> -> vector<256x128xf32>
    %c0_14 = arith.constant 0 : index
    %c0_15 = arith.constant 0 : index
    %25 = vector.load %arg5[%c0_14, %c0_15] : memref<1x128xf32, #tpu.memory_space<vmem>>, vector<1x128xf32>
    %cst_16 = arith.constant 5.000000e-01 : f32
    %26 = vector.broadcast %cst_16 : f32 to vector<256x128xf32>
    %27 = arith.mulf %26, %24 : vector<256x128xf32>
    %28 = vector.broadcast %25 : vector<1x128xf32> to vector<256x128xf32>
    %29 = arith.subf %28, %27 : vector<256x128xf32>
    %30 = tpu.iota {dimensions = array<i32: 1>} : vector<256x128xi32>
    %c5_i32 = arith.constant 5 : i32
    %31 = vector.broadcast %c5_i32 : i32 to vector<256x128xi32>
    %32 = arith.cmpi slt, %30, %31 : vector<256x128xi32>
    %cst_17 = arith.constant -1.000000e+30 : f32
    %33 = vector.broadcast %cst_17 : f32 to vector<256x128xf32>
    %34 = arith.select %32, %29, %33 : vector<256x128xi1>, vector<256x128xf32>
    %cst_18 = arith.constant dense<0xFF800000> : vector<256xf32>
    %35 = vector.multi_reduction <maximumf>, %34, %cst_18 [1] : vector<256x128xf32> to vector<256xf32>
    %36 = vector.shape_cast %35 : vector<256xf32> to vector<256x1xf32>
    %37 = vector.broadcast %36 : vector<256x1xf32> to vector<256x128xf32>
    %38 = arith.subf %34, %37 : vector<256x128xf32>
    %39 = math.exp %38 : vector<256x128xf32>
    %cst_19 = arith.constant 0.000000e+00 : f32
    %40 = vector.broadcast %cst_19 : f32 to vector<256x128xf32>
    %41 = arith.select %32, %39, %40 : vector<256x128xi1>, vector<256x128xf32>
    %cst_20 = arith.constant dense<0.000000e+00> : vector<256xf32>
    %42 = vector.multi_reduction <add>, %41, %cst_20 [1] : vector<256x128xf32> to vector<256xf32>
    %43 = vector.shape_cast %42 : vector<256xf32> to vector<256x1xf32>
    %44 = vector.broadcast %43 : vector<256x1xf32> to vector<256x128xf32>
    %45 = arith.divf %41, %44 : vector<256x128xf32>
    %c0_21 = arith.constant 0 : index
    %c0_22 = arith.constant 0 : index
    %46 = vector.load %arg8[%c0_21, %c0_22] : memref<256x128xf32, #tpu.memory_space<vmem>>, vector<256x128xf32>
    tpu.vector_store %arg8[%c0_21, %c0_22], %45 {strides = array<i32>} : memref<256x128xf32, #tpu.memory_space<vmem>>, vector<256x128xf32>,
    return
  }
  func.func @transform_0(%arg0: i32) -> (i32, i32) {
    %c0_i32 = arith.constant 0 : i32
    %c0_i32_0 = arith.constant 0 : i32
    return %arg0, %c0_i32 : i32, i32
  }
  func.func @transform_1(%arg0: i32) -> (i32, i32) {
    %c0_i32 = arith.constant 0 : i32
    %c0_i32_0 = arith.constant 0 : i32
    %c0_i32_1 = arith.constant 0 : i32
    return %c0_i32, %c0_i32_0 : i32, i32
  }
  func.func @transform_2(%arg0: i32) -> (i32, i32) {
    %c0_i32 = arith.constant 0 : i32
    %c0_i32_0 = arith.constant 0 : i32
    %c0_i32_1 = arith.constant 0 : i32
    return %c0_i32, %c0_i32_0 : i32, i32
  }
  func.func @transform_3(%arg0: i32) -> (i32, i32) {
    %c0_i32 = arith.constant 0 : i32
    %c0_i32_0 = arith.constant 0 : i32
    %c0_i32_1 = arith.constant 0 : i32
    return %c0_i32, %c0_i32_0 : i32, i32
  }
  func.func @transform_4(%arg0: i32) -> (i32, i32) {
    %c0_i32 = arith.constant 0 : i32
    %c0_i32_0 = arith.constant 0 : i32
    %c0_i32_1 = arith.constant 0 : i32
    return %c0_i32, %c0_i32_0 : i32, i32
  }
  func.func @transform_5(%arg0: i32) -> (i32, i32) {
    %c0_i32 = arith.constant 0 : i32
    %c0_i32_0 = arith.constant 0 : i32
    return %arg0, %c0_i32 : i32, i32
  }
  func.func @transform_6(%arg0: i32) -> (i32, i32) {
    %c0_i32 = arith.constant 0 : i32
    %c0_i32_0 = arith.constant 0 : i32
    return %arg0, %c0_i32 : i32, i32
  }
  func.func @transform_7(%arg0: i32) -> (i32, i32) {
    %c0_i32 = arith.constant 0 : i32
    %c0_i32_0 = arith.constant 0 : i32
    return %arg0, %c0_i32 : i32, i32
  }
}

module attributes {stable_mosaic.version = 11 : i64} {
  func.func @_spmm_mix_pool_kernel(%arg0: i32, %arg1: i32, %arg2: memref<256x256xbf16, #tpu.memory_space<vmem>>, %arg3: memref<256x256xbf16, #tpu.memory_space<vmem>>, %arg4: memref<256x256xbf16, #tpu.memory_space<vmem>>, %arg5: memref<256x128xf32, #tpu.memory_space<vmem>>, %arg6: memref<8x256xbf16, #tpu.memory_space<vmem>>, %arg7: memref<128x256xf32, #tpu.memory_space<vmem>>, %arg8: memref<256x128xf32, #tpu.memory_space<vmem>>, %arg9: memref<256x128xf32, #tpu.memory_space<vmem>>, %arg10: memref<1x8x256xf32, #tpu.memory_space<vmem>>, %arg11: memref<256x256xf32, #tpu.memory_space<vmem>>, %arg12: memref<256x256xf32, #tpu.memory_space<vmem>>) attributes {dimension_semantics = [#tpu.dimension_semantics<parallel>, #tpu.dimension_semantics<arbitrary>], iteration_bounds = array<i64: 2, 2>, scalar_prefetch = 0 : i64, scratch_operands = 2 : i64, tpu.core_type = #tpu.core_type<tc>, window_params = [{transform_indices = @transform_0, window_bounds = array<i64: 256, 256>}, {transform_indices = @transform_1, window_bounds = array<i64: 256, 256>}, {transform_indices = @transform_2, window_bounds = array<i64: 256, 256>}, {transform_indices = @transform_3, window_bounds = array<i64: 256, 128>}, {transform_indices = @transform_4, window_bounds = array<i64: 8, 256>}, {pipeline_mode = #tpu.pipeline_mode<synchronous>, transform_indices = @transform_5, window_bounds = array<i64: 128, 256>}, {pipeline_mode = #tpu.pipeline_mode<synchronous>, transform_indices = @transform_6, window_bounds = array<i64: 256, 128>}, {transform_indices = @transform_7, window_bounds = array<i64: 256, 128>}, {transform_indices = @transform_8, window_bounds = array<i64: 1, 8, 256>}]} {
    %c0_i32 = arith.constant 0 : i32
    %0 = arith.cmpi eq, %arg1, %c0_i32 : i32
    %1 = arith.extui %0 : i1 to i32
    %c0_i32_0 = arith.constant 0 : i32
    %2 = arith.cmpi ne, %1, %c0_i32_0 : i32
    scf.if %2 {
      %cst_22 = arith.constant 0.000000e+00 : f32
      %23 = vector.broadcast %cst_22 : f32 to vector<256x256xf32>
      %c0_23 = arith.constant 0 : index
      %c0_24 = arith.constant 0 : index
      %24 = vector.load %arg11[%c0_23, %c0_24] : memref<256x256xf32, #tpu.memory_space<vmem>>, vector<256x256xf32>
      tpu.vector_store %arg11[%c0_23, %c0_24], %23 {strides = array<i32>} : memref<256x256xf32, #tpu.memory_space<vmem>>, vector<256x256xf32>,
      %cst_25 = arith.constant 0.000000e+00 : f32
      %25 = vector.broadcast %cst_25 : f32 to vector<256x256xf32>
      %c0_26 = arith.constant 0 : index
      %c0_27 = arith.constant 0 : index
      %26 = vector.load %arg12[%c0_26, %c0_27] : memref<256x256xf32, #tpu.memory_space<vmem>>, vector<256x256xf32>
      tpu.vector_store %arg12[%c0_26, %c0_27], %25 {strides = array<i32>} : memref<256x256xf32, #tpu.memory_space<vmem>>, vector<256x256xf32>,
    } else {
    }
    %c0 = arith.constant 0 : index
    %c0_1 = arith.constant 0 : index
    %3 = vector.load %arg2[%c0, %c0_1] : memref<256x256xbf16, #tpu.memory_space<vmem>>, vector<256x256xbf16>
    %4 = arith.mulf %3, %3 : vector<256x256xbf16>
    %c0_2 = arith.constant 0 : index
    %c0_3 = arith.constant 0 : index
    %5 = vector.load %arg11[%c0_2, %c0_3] : memref<256x256xf32, #tpu.memory_space<vmem>>, vector<256x256xf32>
    %c0_4 = arith.constant 0 : index
    %c0_5 = arith.constant 0 : index
    %6 = vector.load %arg3[%c0_4, %c0_5] : memref<256x256xbf16, #tpu.memory_space<vmem>>, vector<256x256xbf16>
    %cst = arith.constant dense<0.000000e+00> : vector<256x256xf32>
    %7 = tpu.matmul %3, %6, %cst {dimension_numbers = #tpu.dot_dimension_numbers<[1], [0], [0], [1], [0, 0, 1, 1], [], []>} : vector<256x256xbf16>, vector<256x256xbf16>, vector<256x256xf32> -> vector<256x256xf32>
    %8 = arith.addf %5, %7 : vector<256x256xf32>
    %c0_6 = arith.constant 0 : index
    %c0_7 = arith.constant 0 : index
    %9 = vector.load %arg11[%c0_6, %c0_7] : memref<256x256xf32, #tpu.memory_space<vmem>>, vector<256x256xf32>
    tpu.vector_store %arg11[%c0_6, %c0_7], %8 {strides = array<i32>} : memref<256x256xf32, #tpu.memory_space<vmem>>, vector<256x256xf32>,
    %c0_8 = arith.constant 0 : index
    %c0_9 = arith.constant 0 : index
    %10 = vector.load %arg12[%c0_8, %c0_9] : memref<256x256xf32, #tpu.memory_space<vmem>>, vector<256x256xf32>
    %c0_10 = arith.constant 0 : index
    %c0_11 = arith.constant 0 : index
    %11 = vector.load %arg4[%c0_10, %c0_11] : memref<256x256xbf16, #tpu.memory_space<vmem>>, vector<256x256xbf16>
    %cst_12 = arith.constant dense<0.000000e+00> : vector<256x256xf32>
    %12 = tpu.matmul %4, %11, %cst_12 {dimension_numbers = #tpu.dot_dimension_numbers<[1], [0], [0], [1], [0, 0, 1, 1], [], []>} : vector<256x256xbf16>, vector<256x256xbf16>, vector<256x256xf32> -> vector<256x256xf32>
    %13 = arith.addf %10, %12 : vector<256x256xf32>
    %c0_13 = arith.constant 0 : index
    %c0_14 = arith.constant 0 : index
    %14 = vector.load %arg12[%c0_13, %c0_14] : memref<256x256xf32, #tpu.memory_space<vmem>>, vector<256x256xf32>
    tpu.vector_store %arg12[%c0_13, %c0_14], %13 {strides = array<i32>} : memref<256x256xf32, #tpu.memory_space<vmem>>, vector<256x256xf32>,
    %c0_15 = arith.constant 0 : index
    %c0_16 = arith.constant 0 : index
    %15 = vector.load %arg6[%c0_15, %c0_16] : memref<8x256xbf16, #tpu.memory_space<vmem>>, vector<8x256xbf16>
    %cst_17 = arith.constant dense<0.000000e+00> : vector<8x256xf32>
    %16 = tpu.matmul %15, %3, %cst_17 {dimension_numbers = #tpu.dot_dimension_numbers<[1], [0], [0], [1], [0, 0, 1, 1], [], []>} : vector<8x256xbf16>, vector<256x256xbf16>, vector<8x256xf32> -> vector<8x256xf32>
    %c0_18 = arith.constant 0 : index
    %c0_19 = arith.constant 0 : index
    %c0_20 = arith.constant 0 : index
    %17 = vector.load %arg10[%c0_18, %c0_19, %c0_20] : memref<1x8x256xf32, #tpu.memory_space<vmem>>, vector<1x8x256xf32>
    %18 = vector.shape_cast %17 : vector<1x8x256xf32> to vector<8x256xf32>
    %19 = vector.shape_cast %16 : vector<8x256xf32> to vector<1x8x256xf32>
    tpu.vector_store %arg10[%c0_18, %c0_19, %c0_20], %19 {strides = array<i32>} : memref<1x8x256xf32, #tpu.memory_space<vmem>>, vector<1x8x256xf32>,
    %c1_i32 = arith.constant 1 : i32
    %20 = arith.cmpi eq, %arg1, %c1_i32 : i32
    %21 = arith.extui %20 : i1 to i32
    %c0_i32_21 = arith.constant 0 : i32
    %22 = arith.cmpi ne, %21, %c0_i32_21 : i32
    scf.if %22 {
      %c0_22 = arith.constant 0 : index
      %c0_23 = arith.constant 0 : index
      %23 = vector.load %arg11[%c0_22, %c0_23] : memref<256x256xf32, #tpu.memory_space<vmem>>, vector<256x256xf32>
      %c0_24 = arith.constant 0 : index
      %c0_25 = arith.constant 0 : index
      %24 = vector.load %arg12[%c0_24, %c0_25] : memref<256x256xf32, #tpu.memory_space<vmem>>, vector<256x256xf32>
      %cst_26 = arith.constant 0.000000e+00 : f32
      %25 = vector.broadcast %cst_26 : f32 to vector<256x256xf32>
      %26 = arith.maximumf %24, %25 : vector<256x256xf32>
      %cst_27 = arith.constant 0.000000e+00 : f32
      %27 = vector.broadcast %cst_27 : f32 to vector<256x256xf32>
      %28 = arith.cmpf oeq, %26, %27 : vector<256x256xf32>
      %cst_28 = arith.constant 1.000000e-10 : f32
      %29 = vector.broadcast %cst_28 : f32 to vector<256x256xf32>
      %30 = arith.select %28, %29, %26 : vector<256x256xi1>, vector<256x256xf32>
      %31 = math.rsqrt %30 : vector<256x256xf32>
      %32 = arith.mulf %30, %31 : vector<256x256xf32>
      %33 = arith.mulf %23, %31 : vector<256x256xf32>
      %cst_29 = arith.constant -5.000000e-01 : f32
      %34 = vector.broadcast %cst_29 : f32 to vector<256x256xf32>
      %35 = arith.mulf %34, %33 : vector<256x256xf32>
      %36 = arith.mulf %35, %33 : vector<256x256xf32>
      %37 = math.exp %36 : vector<256x256xf32>
      %cst_30 = arith.constant 0.398942292 : f32
      %38 = vector.broadcast %cst_30 : f32 to vector<256x256xf32>
      %39 = arith.mulf %37, %38 : vector<256x256xf32>
      %cst_31 = arith.constant 5.000000e-01 : f32
      %40 = vector.broadcast %cst_31 : f32 to vector<256x256xf32>
      %41 = arith.mulf %40, %33 : vector<256x256xf32>
      %cst_32 = arith.constant 0.707106769 : f32
      %42 = vector.broadcast %cst_32 : f32 to vector<256x256xf32>
      %43 = arith.mulf %33, %42 : vector<256x256xf32>
      %cst_33 = arith.constant 0.000000e+00 : f32
      %44 = vector.broadcast %cst_33 : f32 to vector<256x256xf32>
      %45 = arith.cmpf oge, %43, %44 : vector<256x256xf32>
      %cst_34 = arith.constant 1.000000e+00 : f32
      %cst_35 = arith.constant -1.000000e+00 : f32
      %46 = vector.broadcast %cst_34 : f32 to vector<256x256xf32>
      %47 = vector.broadcast %cst_35 : f32 to vector<256x256xf32>
      %48 = arith.select %45, %46, %47 : vector<256x256xi1>, vector<256x256xf32>
      %49 = math.absf %43 : vector<256x256xf32>
      %cst_36 = arith.constant 0.327591091 : f32
      %50 = vector.broadcast %cst_36 : f32 to vector<256x256xf32>
      %51 = arith.mulf %50, %49 : vector<256x256xf32>
      %cst_37 = arith.constant 1.000000e+00 : f32
      %52 = vector.broadcast %cst_37 : f32 to vector<256x256xf32>
      %53 = arith.addf %52, %51 : vector<256x256xf32>
      %54 = tpu.reciprocal %53 {approx = true} : vector<256x256xf32> -> vector<256x256xf32>
      %cst_38 = arith.constant 1.06140542 : f32
      %55 = vector.broadcast %cst_38 : f32 to vector<256x256xf32>
      %56 = arith.mulf %55, %54 : vector<256x256xf32>
      %cst_39 = arith.constant -1.45315206 : f32
      %57 = vector.broadcast %cst_39 : f32 to vector<256x256xf32>
      %58 = arith.addf %56, %57 : vector<256x256xf32>
      %59 = arith.mulf %58, %54 : vector<256x256xf32>
      %cst_40 = arith.constant 1.42141378 : f32
      %60 = vector.broadcast %cst_40 : f32 to vector<256x256xf32>
      %61 = arith.addf %59, %60 : vector<256x256xf32>
      %62 = arith.mulf %61, %54 : vector<256x256xf32>
      %cst_41 = arith.constant -0.284496725 : f32
      %63 = vector.broadcast %cst_41 : f32 to vector<256x256xf32>
      %64 = arith.addf %62, %63 : vector<256x256xf32>
      %65 = arith.mulf %64, %54 : vector<256x256xf32>
      %cst_42 = arith.constant 0.254829586 : f32
      %66 = vector.broadcast %cst_42 : f32 to vector<256x256xf32>
      %67 = arith.addf %65, %66 : vector<256x256xf32>
      %68 = arith.mulf %67, %54 : vector<256x256xf32>
      %cst_43 = arith.constant 0.000000e+00 : f32
      %69 = vector.broadcast %cst_43 : f32 to vector<256x256xf32>
      %70 = arith.subf %69, %49 : vector<256x256xf32>
      %71 = arith.mulf %70, %49 : vector<256x256xf32>
      %72 = math.exp %71 : vector<256x256xf32>
      %73 = arith.mulf %68, %72 : vector<256x256xf32>
      %cst_44 = arith.constant 1.000000e+00 : f32
      %74 = vector.broadcast %cst_44 : f32 to vector<256x256xf32>
      %75 = arith.subf %74, %73 : vector<256x256xf32>
      %76 = arith.mulf %48, %75 : vector<256x256xf32>
      %cst_45 = arith.constant 1.000000e+00 : f32
      %77 = vector.broadcast %cst_45 : f32 to vector<256x256xf32>
      %78 = arith.addf %77, %76 : vector<256x256xf32>
      %79 = arith.mulf %41, %78 : vector<256x256xf32>
      %80 = arith.addf %39, %79 : vector<256x256xf32>
      %81 = arith.mulf %32, %80 : vector<256x256xf32>
      %cst_46 = arith.constant 0.000000e+00 : f32
      %82 = vector.broadcast %cst_46 : f32 to vector<256x256xf32>
      %83 = arith.maximumf %23, %82 : vector<256x256xf32>
      %84 = arith.select %28, %83, %81 : vector<256x256xi1>, vector<256x256xf32>
      %c0_47 = arith.constant 0 : index
      %c0_48 = arith.constant 0 : index
      %85 = vector.load %arg5[%c0_47, %c0_48] : memref<256x128xf32, #tpu.memory_space<vmem>>, vector<256x128xf32>
      %c0_49 = arith.constant 0 : index
      %c0_50 = arith.constant 0 : index
      %86 = vector.load %arg7[%c0_49, %c0_50] : memref<128x256xf32, #tpu.memory_space<vmem>>, vector<128x256xf32>
      %cst_51 = arith.constant dense<0.000000e+00> : vector<256x256xf32>
      %87 = tpu.matmul %85, %86, %cst_51 {dimension_numbers = #tpu.dot_dimension_numbers<[1], [0], [0], [1], [0, 0, 1, 1], [], []>} : vector<256x128xf32>, vector<128x256xf32>, vector<256x256xf32> -> vector<256x256xf32>
      %88 = arith.mulf %84, %87 : vector<256x256xf32>
      %c0_52 = arith.constant 0 : index
      %c0_53 = arith.constant 0 : index
      %89 = vector.load %arg8[%c0_52, %c0_53] : memref<256x128xf32, #tpu.memory_space<vmem>>, vector<256x128xf32>
      %cst_54 = arith.constant dense<0.000000e+00> : vector<256x128xf32>
      %90 = tpu.matmul %88, %89, %cst_54 {dimension_numbers = #tpu.dot_dimension_numbers<[1], [0], [0], [1], [0, 0, 1, 1], [], []>} : vector<256x256xf32>, vector<256x128xf32>, vector<256x128xf32> -> vector<256x128xf32>
      %c0_55 = arith.constant 0 : index
      %c0_56 = arith.constant 0 : index
      %91 = vector.load %arg9[%c0_55, %c0_56] : memref<256x128xf32, #tpu.memory_space<vmem>>, vector<256x128xf32>
      tpu.vector_store %arg9[%c0_55, %c0_56], %90 {strides = array<i32>} : memref<256x128xf32, #tpu.memory_space<vmem>>, vector<256x128xf32>,
    } else {
    }
    return
  }
  func.func @transform_0(%arg0: i32, %arg1: i32) -> (i32, i32) {
    %c0_i32 = arith.constant 0 : i32
    return %arg0, %arg1 : i32, i32
  }
  func.func @transform_1(%arg0: i32, %arg1: i32) -> (i32, i32) {
    %c0_i32 = arith.constant 0 : i32
    %c0_i32_0 = arith.constant 0 : i32
    return %arg1, %c0_i32 : i32, i32
  }
  func.func @transform_2(%arg0: i32, %arg1: i32) -> (i32, i32) {
    %c0_i32 = arith.constant 0 : i32
    %c0_i32_0 = arith.constant 0 : i32
    return %arg1, %c0_i32 : i32, i32
  }
  func.func @transform_3(%arg0: i32, %arg1: i32) -> (i32, i32) {
    %c0_i32 = arith.constant 0 : i32
    %c0_i32_0 = arith.constant 0 : i32
    return %arg0, %c0_i32 : i32, i32
  }
  func.func @transform_4(%arg0: i32, %arg1: i32) -> (i32, i32) {
    %c0_i32 = arith.constant 0 : i32
    %c0_i32_0 = arith.constant 0 : i32
    return %c0_i32, %arg0 : i32, i32
  }
  func.func @transform_5(%arg0: i32, %arg1: i32) -> (i32, i32) {
    %c0_i32 = arith.constant 0 : i32
    %c0_i32_0 = arith.constant 0 : i32
    %c0_i32_1 = arith.constant 0 : i32
    return %c0_i32, %c0_i32_0 : i32, i32
  }
  func.func @transform_6(%arg0: i32, %arg1: i32) -> (i32, i32) {
    %c0_i32 = arith.constant 0 : i32
    %c0_i32_0 = arith.constant 0 : i32
    %c0_i32_1 = arith.constant 0 : i32
    return %c0_i32, %c0_i32_0 : i32, i32
  }
  func.func @transform_7(%arg0: i32, %arg1: i32) -> (i32, i32) {
    %c0_i32 = arith.constant 0 : i32
    %c0_i32_0 = arith.constant 0 : i32
    return %arg0, %c0_i32 : i32, i32
  }
  func.func @transform_8(%arg0: i32, %arg1: i32) -> (i32, i32, i32) {
    %c0_i32 = arith.constant 0 : i32
    %c0_i32_0 = arith.constant 0 : i32
    return %arg0, %c0_i32, %arg1 : i32, i32, i32
  }
}

</mosaic_0001>

<llo_original>
// kernel: gcnmf_forward.5
$region0: #{gcnmf_forward.5}
  #allocation0 [shape = 'u32[]', space=smem, size = 0x4, offset = 0x4, fixed_abs, tag = 'smem constant byte address 0x4 - core index']
  #allocation1 [shape = 'u32[72,128]{1,0:T(1,128)}', space=vmem, size = 0x9000, scoped, tag = 'internal scratch']
  #allocation2 [shape = 'f32[8,128]{1,0:T(8,128)}', space=vmem, size = 0x1000, scoped, tag = 'scratch operand']
  %s0 = inlined_call_operand.vmem [shape: f32[2,8,512], index: 0, kind: input, shape index: {}]
  %s1 = inlined_call_operand.vmem [shape: f32[512,128], index: 1, kind: input, shape index: {}]
  %s2 = inlined_call_operand.vmem [shape: f32[8,1], index: 2, kind: input, shape index: {}]
  %s3 = inlined_call_operand.vmem [shape: f32[1,128], index: 3, kind: input, shape index: {}]
  %s4 = inlined_call_operand.vmem [shape: f32[8,128], index: 4, kind: output, shape index: {}]
  %s5 = sld [smem:[#allocation0]]
  $region80: #{gcnmf_forward.5} parent=0
    _
  %s7 = ssub.s32 1, %s5
  %s8 = scalar_select 0, %s7, %s5
  $region1: #{gcnmf_forward.5} parent=0
    #allocation3 [shape = 'u8[32768]{0}', space=vmem, size = 0x8000, scoped, tag = 'input window, operand 0']
    loop: start=0, step=1, limit=4
    $region2: #{gcnmf_forward.5} parent=1 // loop_pre_header
      _
    $region3: #{gcnmf_forward.5} parent=1 // loop_header
      %s10 = sphi 0, %s14
      %p11 = scmp.ge.s32.totalorder %s10, 4
      %s20 = sphi 0, %s22
      %s23 = sphi 0, %s20
      %s24 = sphi 0, %s23
      %s40 = sphi 0, %s24
      %s46 = sphi 0, %s48
      %s49 = sphi 0, %s46
      %s50 = sphi 0, %s49
      %s66 = sphi 0, %s50
      %s70 = sphi 0, %s70
      %s72 = sphi 0, %s70
      %s73 = sphi 0, %s72
      %s87 = sphi 0, %s73
      %s91 = sphi 0, %s91
      %s93 = sphi 0, %s91
      %s94 = sphi 0, %s93
      %s108 = sphi 0, %s94
      %s112 = sphi 0, %s112
      %s114 = sphi 0, %s112
      %s115 = sphi 0, %s114
      %s129 = sphi 0, %s115
    $region4: #{gcnmf_forward.5} parent=1 // loop_header_branch
      %13 = sbr.rel (%p11) target = $region8
    $region5: #{gcnmf_forward.5} parent=1 // loop_body
      %s15 = ssub.s32 %s10, 1
      %s16 = ssub.s32 %s10, 2
      %s17 = sadd.s32 %s10, 1
      %s18 = ssub.s32 %s10, %s17
      %p19 = scmp.eq.s32.totalorder %s18, 0
      %s21 = sadd.s32 %s20, 1
      %s22 = scalar_select %p19, %s20, %s21
      %p25 = pneg %p19
      %p26 = scmp.eq.s32.totalorder %s10, 1
      %p27 = por %p25, %p26
      %p28 = scmp.ne.s32.totalorder %s20, %s23
      %p29 = scmp.eq.s32.totalorder %s10, 0
      %p30 = por %p28, %p29
      %p31 = scmp.ne.s32.totalorder %s20, %s23
      %p32 = scmp.eq.s32.totalorder %s15, 1
      %p33 = por %p31, %p32
      %p34 = scmp.ne.s32.totalorder %s23, %s24
      %p35 = scmp.eq.s32.totalorder %s15, 0
      %p36 = por %p34, %p35
      %p37 = scmp.ne.s32.totalorder %s23, %s24
      %p38 = scmp.eq.s32.totalorder %s16, 1
      %p39 = por %p37, %p38
      %p41 = scmp.ne.s32.totalorder %s24, %s40
      %p42 = scmp.eq.s32.totalorder %s16, 0
      %p43 = por %p41, %p42
      %s44 = ssub.s32 %s10, %s17
      %p45 = scmp.eq.s32.totalorder %s44, 0
      %s47 = sadd.s32 %s46, 1
      %s48 = scalar_select %p45, %s46, %s47
      %p51 = pneg %p45
      %p52 = scmp.eq.s32.totalorder %s10, 1
      %p53 = por %p51, %p52
      %p54 = scmp.ne.s32.totalorder %s46, %s49
      %p55 = scmp.eq.s32.totalorder %s10, 0
      %p56 = por %p54, %p55
      %p57 = scmp.ne.s32.totalorder %s46, %s49
      %p58 = scmp.eq.s32.totalorder %s15, 1
      %p59 = por %p57, %p58
      %p60 = scmp.ne.s32.totalorder %s49, %s50
      %p61 = scmp.eq.s32.totalorder %s15, 0
      %p62 = por %p60, %p61
      %p63 = scmp.ne.s32.totalorder %s49, %s50
      %p64 = scmp.eq.s32.totalorder %s16, 1
      %p65 = por %p63, %p64
      %p67 = scmp.ne.s32.totalorder %s50, %s66
      %p68 = scmp.eq.s32.totalorder %s16, 0
      %p69 = por %p67, %p68
      %s71 = sadd.s32 %s70, 1
      %p74 = scmp.eq.s32.totalorder %s10, 1
      %p75 = scmp.ne.s32.totalorder %s70, %s72
      %p76 = scmp.eq.s32.totalorder %s10, 0
      %p77 = por %p75, %p76
      %p78 = scmp.ne.s32.totalorder %s70, %s72
      %p79 = scmp.eq.s32.totalorder %s15, 1
      %p80 = por %p78, %p79
      %p81 = scmp.ne.s32.totalorder %s72, %s73
      %p82 = scmp.eq.s32.totalorder %s15, 0
      %p83 = por %p81, %p82
      %p84 = scmp.ne.s32.totalorder %s72, %s73
      %p85 = scmp.eq.s32.totalorder %s16, 1
      %p86 = por %p84, %p85
      %p88 = scmp.ne.s32.totalorder %s73, %s87
      %p89 = scmp.eq.s32.totalorder %s16, 0
      %p90 = por %p88, %p89
      %s92 = sadd.s32 %s91, 1
      %p95 = scmp.eq.s32.totalorder %s10, 1
      %p96 = scmp.ne.s32.totalorder %s91, %s93
      %p97 = scmp.eq.s32.totalorder %s10, 0
      %p98 = por %p96, %p97
      %p99 = scmp.ne.s32.totalorder %s91, %s93
      %p100 = scmp.eq.s32.totalorder %s15, 1
      %p101 = por %p99, %p100
      %p102 = scmp.ne.s32.totalorder %s93, %s94
      %p103 = scmp.eq.s32.totalorder %s15, 0
      %p104 = por %p102, %p103
      %p105 = scmp.ne.s32.totalorder %s93, %s94
      %p106 = scmp.eq.s32.totalorder %s16, 1
      %p107 = por %p105, %p106
      %p109 = scmp.ne.s32.totalorder %s94, %s108
      %p110 = scmp.eq.s32.totalorder %s16, 0
      %p111 = por %p109, %p110
      %s113 = sadd.s32 %s112, 1
      %p116 = scmp.eq.s32.totalorder %s10, 1
      %p117 = scmp.ne.s32.totalorder %s112, %s114
      %p118 = scmp.eq.s32.totalorder %s10, 0
      %p119 = por %p117, %p118
      %p120 = scmp.ne.s32.totalorder %s112, %s114
      %p121 = scmp.eq.s32.totalorder %s15, 1
      %p122 = por %p120, %p121
      %p123 = scmp.ne.s32.totalorder %s114, %s115
      %p124 = scmp.eq.s32.totalorder %s15, 0
      %p125 = por %p123, %p124
      %p126 = scmp.ne.s32.totalorder %s114, %s115
      %p127 = scmp.eq.s32.totalorder %s16, 1
      %p128 = por %p126, %p127
      %p130 = scmp.ne.s32.totalorder %s115, %s129
      %p131 = scmp.eq.s32.totalorder %s16, 0
      %p132 = por %p130, %p131
      %p133 = scmp.le.s32.totalorder 1, %s10
      %p134 = scmp.lt.s32.totalorder %s10, 3
      %p135 = pnand %p133, %p134
      %p136 = pneg %p135
      // Predicated region
      $region9: #{gcnmf_forward.5} parent=5 // pred_check
        _
      $region10: #{gcnmf_forward.5} parent=5 // pred_check_branch
        %138 = sbr.rel (%p135) target = $region12
      $region11: #{gcnmf_forward.5} parent=5 // pred_region
        %s139 = ssub.s32 %s10, 1
        // Predicated region
        $region13: #{gcnmf_forward.5} parent=11 // pred_check
          %p140 = pneg %p83
        $region14: #{gcnmf_forward.5} parent=11 // pred_check_branch
          %142 = sbr.rel (%p140) target = $region16
        $region15: #{gcnmf_forward.5} parent=11 // pred_region
          _
        $region16: #{gcnmf_forward.5} parent=11 // pred_fallthru
          _
        // Predicated region
        $region17: #{gcnmf_forward.5} parent=11 // pred_check
          %p143 = pneg %p104
        $region18: #{gcnmf_forward.5} parent=11 // pred_check_branch
          %145 = sbr.rel (%p143) target = $region20
        $region19: #{gcnmf_forward.5} parent=11 // pred_region
          _
        $region20: #{gcnmf_forward.5} parent=11 // pred_fallthru
          _
      $region12: #{gcnmf_forward.5} parent=5 // pred_fallthru
        _
      %p146 = scmp.lt.s32.totalorder %s10, 2
      // Predicated region
      $region21: #{gcnmf_forward.5} parent=5 // pred_check
        %p147 = pneg %p146
      $region22: #{gcnmf_forward.5} parent=5 // pred_check_branch
        %149 = sbr.rel (%p147) target = $region24
      $region23: #{gcnmf_forward.5} parent=5 // pred_region
        // Predicated region
        $region25: #{gcnmf_forward.5} parent=23 // pred_check
          %p150 = pneg %p30
        $region26: #{gcnmf_forward.5} parent=23 // pred_check_branch
          %152 = sbr.rel (%p150) target = $region28
        $region27: #{gcnmf_forward.5} parent=23 // pred_region
          %s153 = sand.u32 %s20, 1
          %s154 = sand.u32 %s20, 1
          %s155 = smul.addr %s154, 32
          %s156 = scalar_lea.vmem [#allocation3], %s155
          %s157 = smul.u32 2, %s10
          %s158 = smul.addr %s157, 8
          %s159 = scalar_lea.vmem %s0, %s158
          // Predicated region
          $region29: #{gcnmf_forward.5} parent=27 // pred_check
            _
          $region30: #{gcnmf_forward.5} parent=27 // pred_check_branch
            %161 = sbr.rel (0) target = $region32
          $region31: #{gcnmf_forward.5} parent=27 // pred_region
            // Predicated region
            $region33: #{gcnmf_forward.5} parent=31 // pred_check
              _
            $region34: #{gcnmf_forward.5} parent=31 // pred_check_branch
              %163 = sbr.rel (0) target = $region36
            $region35: #{gcnmf_forward.5} parent=31 // pred_region
              loop: start=0, step=1, limit=1
              $region37: #{gcnmf_forward.5} parent=35 // loop_pre_header
                _
              $region38: #{gcnmf_forward.5} parent=35 // loop_header
                %s165 = sphi 0, %s169
                %p166 = scmp.ge.s32.totalorder %s165, 1
                %s170 = sphi %s159, %s159
                %s171 = sphi %s156, %s156
              $region39: #{gcnmf_forward.5} parent=35 // loop_header_branch
                %168 = sbr.rel (%p166) target = $region43
              $region40: #{gcnmf_forward.5} parent=35 // loop_body
                %v172 = vld [vmem:[%s170] sm:$0xff]
                %173 = vst [vmem:[%s171] sm:$0xff] %v172
                %v174 = vld [vmem:[%s170 + $0x8] sm:$0xff]
                %175 = vst [vmem:[%s171 + $0x8] sm:$0xff] %v174
                %v176 = vld [vmem:[%s170 + $0x20] sm:$0xff]
                %177 = vst [vmem:[%s171 + $0x10] sm:$0xff] %v176
                %v178 = vld [vmem:[%s170 + $0x28] sm:$0xff]
                %179 = vst [vmem:[%s171 + $0x18] sm:$0xff] %v178
              $region41: #{gcnmf_forward.5} parent=35 // loop_footer
                %s169 = sadd.s32 1, %s165
              $region42: #{gcnmf_forward.5} parent=35 // loop_footer_branch
                %164 = sbr.rel target = $region38
              $region43: #{gcnmf_forward.5} parent=35 // loop_exit
                _
            $region36: #{gcnmf_forward.5} parent=31 // pred_fallthru
              _
            // Predicated region
            $region44: #{gcnmf_forward.5} parent=31 // pred_check
              _
            $region45: #{gcnmf_forward.5} parent=31 // pred_check_branch
              %181 = sbr.rel target = $region47
            $region46: #{gcnmf_forward.5} parent=31 // pred_region
              _
            $region47: #{gcnmf_forward.5} parent=31 // pred_fallthru
              _
          $region32: #{gcnmf_forward.5} parent=27 // pred_fallthru
            _
          %182 = vnop
        $region28: #{gcnmf_forward.5} parent=23 // pred_fallthru
          _
        // Predicated region
        $region48: #{gcnmf_forward.5} parent=23 // pred_check
          %p183 = pneg %p56
        $region49: #{gcnmf_forward.5} parent=23 // pred_check_branch
          %185 = sbr.rel (%p183) target = $region51
        $region50: #{gcnmf_forward.5} parent=23 // pred_region
          %s186 = smul.u32 32, %s10
          %p187 = scmp.lt.s32.totalorder %s186, 63
          %s188 = scalar_select %p187, %s186, 63
          %s189 = smul.addr %s188, 8
          %s190 = scalar_lea.vmem %s1, %s189
          %s191 = smul.u32 32, %s10
        $region51: #{gcnmf_forward.5} parent=23 // pred_fallthru
          _
      $region24: #{gcnmf_forward.5} parent=5 // pred_fallthru
        _
      %p192 = scmp.le.s32.totalorder 1, %s10
      %p193 = scmp.lt.s32.totalorder %s10, 3
      %p194 = pnand %p192, %p193
      %p195 = pneg %p194
      // Predicated region
      $region52: #{gcnmf_forward.5} parent=5 // pred_check
        _
      $region53: #{gcnmf_forward.5} parent=5 // pred_check_branch
        %197 = sbr.rel (%p194) target = $region55
      $region54: #{gcnmf_forward.5} parent=5 // pred_region
        %s198 = ssub.s32 %s10, 1
        %s199 = sand.u32 %s23, 1
        %s200 = sand.u32 %s23, 1
        %s201 = smul.addr %s200, 32
        %s202 = scalar_lea.vmem [#allocation3], %s201
        // Predicated region
        $region56: #{gcnmf_forward.5} parent=54 // pred_check
          %p203 = pneg %p36
        $region57: #{gcnmf_forward.5} parent=54 // pred_check_branch
          %205 = sbr.rel (%p203) target = $region59
        $region58: #{gcnmf_forward.5} parent=54 // pred_region
          _
        $region59: #{gcnmf_forward.5} parent=54 // pred_fallthru
          _
        %s206 = sand.u32 %s23, 1
        %s207 = sand.u32 %s23, 1
        %s208 = smul.addr %s207, 32
        %s209 = scalar_lea.vmem [#allocation3], %s208
        %p210 = pneg %p36
        %p211 = pneg %p33
        %s212 = smul.u32 32, %s15
        %p213 = scmp.lt.s32.totalorder %s212, 63
        %s214 = scalar_select %p213, %s212, 63
        %s215 = smul.addr %s214, 8
        %s216 = scalar_lea.vmem %s1, %s215
        %p217 = pneg %p62
        %p218 = pneg %p59
        %p219 = pneg %p83
        %p220 = pneg %p80
        %p221 = pneg %p104
        %p222 = pneg %p101
        %p223 = pneg %p125
        %p224 = pneg %p122
        %s225 = smul.u32 2, %s15
        %s226 = smul.u32 32, %s15
        %p227 = scmp.lt.s32.totalorder %s226, 63
        %s228 = scalar_select %p227, %s226, 63
        %s229 = smul.addr %s228, 8
        %s230 = scalar_lea.vmem %s1, %s229
        %s231 = smul.u32 32, %s15
        %p232 = scmp.eq.s32.totalorder %s15, 0
        // Predicated region
        $region60: #{gcnmf_forward.5} parent=54 // pred_check
          %p233 = pneg %p232
        $region61: #{gcnmf_forward.5} parent=54 // pred_check_branch
          %235 = sbr.rel (%p233) target = $region63
        $region62: #{gcnmf_forward.5} parent=54 // pred_region
          %236 = vst [vmem:[#allocation2] sm:$0xff] 0.0
        $region63: #{gcnmf_forward.5} parent=54 // pred_fallthru
          _
        %v237 = vld [vmem:[%s202] sm:$0xff]
        %v238 = vld [vmem:[%s202 + $0x8] sm:$0xff]
        %s239 = scalar_lea.vmem %s202, 16 [#allocation3]
        %v240 = vld [vmem:[%s239] sm:$0xff]
        %v241 = vld [vmem:[%s239 + $0x8] sm:$0xff]
        %v242 = vadd.f32 %v237, %v240
        %v243 = vadd.f32 %v238, %v241
        %v244 = vld [vmem:[#allocation2] sm:$0xff]
        %v245 = vld [vmem:[%s230] sm:$0xff]
        %v246 = vld [vmem:[%s230 + $0x8] sm:$0xff]
        %v247 = vld [vmem:[%s230 + $0x10] sm:$0xff]
        %v248 = vld [vmem:[%s230 + $0x18] sm:$0xff]
        %v249 = vld [vmem:[%s230 + $0x20] sm:$0xff]
        %v250 = vld [vmem:[%s230 + $0x28] sm:$0xff]
        %v251 = vld [vmem:[%s230 + $0x30] sm:$0xff]
        %v252 = vld [vmem:[%s230 + $0x38] sm:$0xff]
        %v253 = vld [vmem:[%s230 + $0x40] sm:$0xff]
        %v254 = vld [vmem:[%s230 + $0x48] sm:$0xff]
        %v255 = vld [vmem:[%s230 + $0x50] sm:$0xff]
        %v256 = vld [vmem:[%s230 + $0x58] sm:$0xff]
        %v257 = vld [vmem:[%s230 + $0x60] sm:$0xff]
        %v258 = vld [vmem:[%s230 + $0x68] sm:$0xff]
        %v259 = vld [vmem:[%s230 + $0x70] sm:$0xff]
        %v260 = vld [vmem:[%s230 + $0x78] sm:$0xff]
        %v261 = vld [vmem:[%s230 + $0x80] sm:$0xff]
        %v262 = vld [vmem:[%s230 + $0x88] sm:$0xff]
        %v263 = vld [vmem:[%s230 + $0x90] sm:$0xff]
        %v264 = vld [vmem:[%s230 + $0x98] sm:$0xff]
        %v265 = vld [vmem:[%s230 + $0xa0] sm:$0xff]
        %v266 = vld [vmem:[%s230 + $0xa8] sm:$0xff]
        %v267 = vld [vmem:[%s230 + $0xb0] sm:$0xff]
        %v268 = vld [vmem:[%s230 + $0xb8] sm:$0xff]
        %v269 = vld [vmem:[%s230 + $0xc0] sm:$0xff]
        %v270 = vld [vmem:[%s230 + $0xc8] sm:$0xff]
        %v271 = vld [vmem:[%s230 + $0xd0] sm:$0xff]
        %v272 = vld [vmem:[%s230 + $0xd8] sm:$0xff]
        %v273 = vld [vmem:[%s230 + $0xe0] sm:$0xff]
        %v274 = vld [vmem:[%s230 + $0xe8] sm:$0xff]
        %v275 = vld [vmem:[%s230 + $0xf0] sm:$0xff]
        %v276 = vld [vmem:[%s230 + $0xf8] sm:$0xff]
        %277 = vmatpush.msra.mxu0 %v260
        %278 = vmatpush.msra.mxu0 %v259
        %279 = vmatpush.msra.mxu0 %v258
        %280 = vmatpush.msra.mxu0 %v257
        %281 = vmatpush.msra.mxu0 %v256
        %282 = vmatpush.msra.mxu0 %v255
        %283 = vmatpush.msra.mxu0 %v254
        %284 = vmatpush.msra.mxu0 %v253
        %285 = vmatpush.msra.mxu0 %v252
        %286 = vmatpush.msra.mxu0 %v251
        %287 = vmatpush.msra.mxu0 %v250
        %288 = vmatpush.msra.mxu0 %v249
        %289 = vmatpush.msra.mxu0 %v248
        %290 = vmatpush.msra.mxu0 %v247
        %291 = vmatpush.msra.mxu0 %v246
        %292 = vmatpush.msra.mxu0 %v245
        %293 = vmatmul.f32.gmra.mxu0 %v242
        %v294 = vpop.f32.mrf.mxu0
        %v295 = vadd.f32 0.0, %v294
        %296 = vdwg.mxu0
        %297 = vmatpush.msra.mxu0 %v276
        %298 = vmatpush.msra.mxu0 %v275
        %299 = vmatpush.msra.mxu0 %v274
        %300 = vmatpush.msra.mxu0 %v273
        %301 = vmatpush.msra.mxu0 %v272
        %302 = vmatpush.msra.mxu0 %v271
        %303 = vmatpush.msra.mxu0 %v270
        %304 = vmatpush.msra.mxu0 %v269
        %305 = vmatpush.msra.mxu0 %v268
        %306 = vmatpush.msra.mxu0 %v267
        %307 = vmatpush.msra.mxu0 %v266
        %308 = vmatpush.msra.mxu0 %v265
        %309 = vmatpush.msra.mxu0 %v264
        %310 = vmatpush.msra.mxu0 %v263
        %311 = vmatpush.msra.mxu0 %v262
        %312 = vmatpush.msra.mxu0 %v261
        %313 = vmatmul.f32.gmra.mxu0 %v243
        %v314 = vpop.f32.mrf.mxu0
        %v315 = vadd.f32 %v295, %v314
        %316 = vdwg.mxu0
        %v317 = vadd.f32 %v244, %v315
        %318 = vst [vmem:[#allocation2] sm:$0xff] %v317
        %p319 = scmp.eq.s32.totalorder %s15, 1
        // Predicated region
        $region64: #{gcnmf_forward.5} parent=54 // pred_check
          %p320 = pneg %p319
        $region65: #{gcnmf_forward.5} parent=54 // pred_check_branch
          %322 = sbr.rel (%p320) target = $region67
        $region66: #{gcnmf_forward.5} parent=54 // pred_region
          %v323 = vld [vmem:[#allocation2] sm:$0xff]
          %v324 = vld [vmem:[%s2] sm:$0xff]
          %v325 = vld [vmem:[%s3] sm:$0x1]
          %327 = vset.pattern.permute.xlu0 0
          %328 = vperm.xlu0 %327, %v324
          %v329 = vpop.permute.xlu0 %328
          %v332 = vperm.slane %v325, 0
          %v334 = vmul.f32 %v329, %v332
          %v335 = vadd.f32 %v323, %v334
          %v336 = vlaneseq
          %v337 = vand.u32 %v336, 127
          %vm338 = vcmp.lt.s32.totalorder %v337, 4
          %v339 = vsel %vm338, %v335, -1e+30
          %340 = vmax.xlane.f32.xlu0 %v339
          %v341 = vpop.xlane.xlu0 %340
          %v342 = vsub.f32 %v339, %v341
          %v343 = vmul.f32 %v342, 1.442695
          %v344 = vpow.pop %v343
          %v345 = vsel %vm338, %v344, 0.0
          %346 = vadd.xlane.f32.xlu0 %v345
          %v347 = vpop.xlane.xlu0 %346
          %v348 = vlog2.pop %v347
          %v349 = vmul.f32 %v348, 0.6931472
          %v350 = vsub.f32 %v342, %v349
          %351 = vst [vmem:[%s4] sm:$0xff] %v350
        $region67: #{gcnmf_forward.5} parent=54 // pred_fallthru
          _
        // Predicated region
        $region68: #{gcnmf_forward.5} parent=54 // pred_check
          %p352 = pneg %p122
        $region69: #{gcnmf_forward.5} parent=54 // pred_check_branch
          %354 = sbr.rel (%p352) target = $region71
        $region70: #{gcnmf_forward.5} parent=54 // pred_region
          _
        $region71: #{gcnmf_forward.5} parent=54 // pred_fallthru
          _
        // Predicated region
        $region72: #{gcnmf_forward.5} parent=54 // pred_check
          %p355 = pneg %p122
        $region73: #{gcnmf_forward.5} parent=54 // pred_check_branch
          %357 = sbr.rel (%p355) target = $region75
        $region74: #{gcnmf_forward.5} parent=54 // pred_region
          _
        $region75: #{gcnmf_forward.5} parent=54 // pred_fallthru
          _
      $region55: #{gcnmf_forward.5} parent=5 // pred_fallthru
        _
      %p358 = scmp.le.s32.totalorder 2, %s10
      // Predicated region
      $region76: #{gcnmf_forward.5} parent=5 // pred_check
        %p359 = pneg %p358
      $region77: #{gcnmf_forward.5} parent=5 // pred_check_branch
        %361 = sbr.rel (%p359) target = $region79
      $region78: #{gcnmf_forward.5} parent=5 // pred_region
        %s362 = ssub.s32 %s10, 2
      $region79: #{gcnmf_forward.5} parent=5 // pred_fallthru
        _
    $region6: #{gcnmf_forward.5} parent=1 // loop_footer
      %s14 = sadd.s32 1, %s10
    $region7: #{gcnmf_forward.5} parent=1 // loop_footer_branch
      %9 = sbr.rel target = $region3
    $region8: #{gcnmf_forward.5} parent=1 // loop_exit
      _

// kernel: gcnmf_forward.3
$region0: #{gcnmf_forward.3}
  #allocation0 [shape = 'u32[]', space=smem, size = 0x4, offset = 0x4, fixed_abs, tag = 'smem constant byte address 0x4 - core index']
  #allocation1 [shape = 'u32[72,128]{1,0:T(1,128)}', space=vmem, size = 0x9000, scoped, tag = 'internal scratch']
  %s0 = inlined_call_operand.vmem [shape: f32[512,128], index: 0, kind: input, shape index: {}]
  %s1 = inlined_call_operand.vmem [shape: bf16[256,512], index: 1, kind: input, shape index: {}]
  %s2 = inlined_call_operand.vmem [shape: f32[1,256], index: 2, kind: input, shape index: {}]
  %s3 = inlined_call_operand.vmem [shape: f32[384,128], index: 3, kind: input, shape index: {}]
  %s4 = inlined_call_operand.vmem [shape: f32[1,128], index: 4, kind: input, shape index: {}]
  %s5 = inlined_call_operand.vmem [shape: bf16[512,256], index: 5, kind: output, shape index: {0}]
  %s6 = inlined_call_operand.vmem [shape: bf16[512,256], index: 6, kind: output, shape index: {1}]
  %s7 = inlined_call_operand.vmem [shape: f32[512,128], index: 7, kind: output, shape index: {2}]
  %8 = xla_tuple %s5, %s6, %s7
  %s9 = sld [smem:[#allocation0]]
  $region69: #{gcnmf_forward.3} parent=0
    _
  %s11 = ssub.s32 1, %s9
  %s12 = scalar_select 0, %s11, %s9
  loop: start=0, step=1, limit=4
  $region2: #{gcnmf_forward.3} parent=0 // loop_pre_header
    _
  $region3: #{gcnmf_forward.3} parent=0 // loop_header
    %s14 = sphi 0, %s18
    %p15 = scmp.ge.s32.totalorder %s14, 4
    %s24 = sphi 0, %s26
    %s27 = sphi 0, %s24
    %s28 = sphi 0, %s27
    %s44 = sphi 0, %s28
    %s48 = sphi 0, %s48
    %s50 = sphi 0, %s48
    %s51 = sphi 0, %s50
    %s65 = sphi 0, %s51
    %s69 = sphi 0, %s69
    %s71 = sphi 0, %s69
    %s72 = sphi 0, %s71
    %s86 = sphi 0, %s72
    %s90 = sphi 0, %s90
    %s92 = sphi 0, %s90
    %s93 = sphi 0, %s92
    %s107 = sphi 0, %s93
    %s111 = sphi 0, %s111
    %s113 = sphi 0, %s111
    %s114 = sphi 0, %s113
    %s128 = sphi 0, %s114
    %s134 = sphi 0, %s136
    %s137 = sphi 0, %s134
    %s138 = sphi 0, %s137
    %s154 = sphi 0, %s138
    %s160 = sphi 0, %s162
    %s163 = sphi 0, %s160
    %s164 = sphi 0, %s163
    %s180 = sphi 0, %s164
    %s186 = sphi 0, %s188
    %s189 = sphi 0, %s186
    %s190 = sphi 0, %s189
    %s206 = sphi 0, %s190
  $region4: #{gcnmf_forward.3} parent=0 // loop_header_branch
    %17 = sbr.rel (%p15) target = $region8
  $region5: #{gcnmf_forward.3} parent=0 // loop_body
    %s19 = ssub.s32 %s14, 1
    %s20 = ssub.s32 %s14, 2
    %s21 = sadd.s32 %s14, 1
    %s22 = ssub.s32 %s14, %s21
    %p23 = scmp.eq.s32.totalorder %s22, 0
    %s25 = sadd.s32 %s24, 1
    %s26 = scalar_select %p23, %s24, %s25
    %p29 = pneg %p23
    %p30 = scmp.eq.s32.totalorder %s14, 1
    %p31 = por %p29, %p30
    %p32 = scmp.ne.s32.totalorder %s24, %s27
    %p33 = scmp.eq.s32.totalorder %s14, 0
    %p34 = por %p32, %p33
    %p35 = scmp.ne.s32.totalorder %s24, %s27
    %p36 = scmp.eq.s32.totalorder %s19, 1
    %p37 = por %p35, %p36
    %p38 = scmp.ne.s32.totalorder %s27, %s28
    %p39 = scmp.eq.s32.totalorder %s19, 0
    %p40 = por %p38, %p39
    %p41 = scmp.ne.s32.totalorder %s27, %s28
    %p42 = scmp.eq.s32.totalorder %s20, 1
    %p43 = por %p41, %p42
    %p45 = scmp.ne.s32.totalorder %s28, %s44
    %p46 = scmp.eq.s32.totalorder %s20, 0
    %p47 = por %p45, %p46
    %s49 = sadd.s32 %s48, 1
    %p52 = scmp.eq.s32.totalorder %s14, 1
    %p53 = scmp.ne.s32.totalorder %s48, %s50
    %p54 = scmp.eq.s32.totalorder %s14, 0
    %p55 = por %p53, %p54
    %p56 = scmp.ne.s32.totalorder %s48, %s50
    %p57 = scmp.eq.s32.totalorder %s19, 1
    %p58 = por %p56, %p57
    %p59 = scmp.ne.s32.totalorder %s50, %s51
    %p60 = scmp.eq.s32.totalorder %s19, 0
    %p61 = por %p59, %p60
    %p62 = scmp.ne.s32.totalorder %s50, %s51
    %p63 = scmp.eq.s32.totalorder %s20, 1
    %p64 = por %p62, %p63
    %p66 = scmp.ne.s32.totalorder %s51, %s65
    %p67 = scmp.eq.s32.totalorder %s20, 0
    %p68 = por %p66, %p67
    %s70 = sadd.s32 %s69, 1
    %p73 = scmp.eq.s32.totalorder %s14, 1
    %p74 = scmp.ne.s32.totalorder %s69, %s71
    %p75 = scmp.eq.s32.totalorder %s14, 0
    %p76 = por %p74, %p75
    %p77 = scmp.ne.s32.totalorder %s69, %s71
    %p78 = scmp.eq.s32.totalorder %s19, 1
    %p79 = por %p77, %p78
    %p80 = scmp.ne.s32.totalorder %s71, %s72
    %p81 = scmp.eq.s32.totalorder %s19, 0
    %p82 = por %p80, %p81
    %p83 = scmp.ne.s32.totalorder %s71, %s72
    %p84 = scmp.eq.s32.totalorder %s20, 1
    %p85 = por %p83, %p84
    %p87 = scmp.ne.s32.totalorder %s72, %s86
    %p88 = scmp.eq.s32.totalorder %s20, 0
    %p89 = por %p87, %p88
    %s91 = sadd.s32 %s90, 1
    %p94 = scmp.eq.s32.totalorder %s14, 1
    %p95 = scmp.ne.s32.totalorder %s90, %s92
    %p96 = scmp.eq.s32.totalorder %s14, 0
    %p97 = por %p95, %p96
    %p98 = scmp.ne.s32.totalorder %s90, %s92
    %p99 = scmp.eq.s32.totalorder %s19, 1
    %p100 = por %p98, %p99
    %p101 = scmp.ne.s32.totalorder %s92, %s93
    %p102 = scmp.eq.s32.totalorder %s19, 0
    %p103 = por %p101, %p102
    %p104 = scmp.ne.s32.totalorder %s92, %s93
    %p105 = scmp.eq.s32.totalorder %s20, 1
    %p106 = por %p104, %p105
    %p108 = scmp.ne.s32.totalorder %s93, %s107
    %p109 = scmp.eq.s32.totalorder %s20, 0
    %p110 = por %p108, %p109
    %s112 = sadd.s32 %s111, 1
    %p115 = scmp.eq.s32.totalorder %s14, 1
    %p116 = scmp.ne.s32.totalorder %s111, %s113
    %p117 = scmp.eq.s32.totalorder %s14, 0
    %p118 = por %p116, %p117
    %p119 = scmp.ne.s32.totalorder %s111, %s113
    %p120 = scmp.eq.s32.totalorder %s19, 1
    %p121 = por %p119, %p120
    %p122 = scmp.ne.s32.totalorder %s113, %s114
    %p123 = scmp.eq.s32.totalorder %s19, 0
    %p124 = por %p122, %p123
    %p125 = scmp.ne.s32.totalorder %s113, %s114
    %p126 = scmp.eq.s32.totalorder %s20, 1
    %p127 = por %p125, %p126
    %p129 = scmp.ne.s32.totalorder %s114, %s128
    %p130 = scmp.eq.s32.totalorder %s20, 0
    %p131 = por %p129, %p130
    %s132 = ssub.s32 %s14, %s21
    %p133 = scmp.eq.s32.totalorder %s132, 0
    %s135 = sadd.s32 %s134, 1
    %s136 = scalar_select %p133, %s134, %s135
    %p139 = pneg %p133
    %p140 = scmp.eq.s32.totalorder %s14, 1
    %p141 = por %p139, %p140
    %p142 = scmp.ne.s32.totalorder %s134, %s137
    %p143 = scmp.eq.s32.totalorder %s14, 0
    %p144 = por %p142, %p143
    %p145 = scmp.ne.s32.totalorder %s134, %s137
    %p146 = scmp.eq.s32.totalorder %s19, 1
    %p147 = por %p145, %p146
    %p148 = scmp.ne.s32.totalorder %s137, %s138
    %p149 = scmp.eq.s32.totalorder %s19, 0
    %p150 = por %p148, %p149
    %p151 = scmp.ne.s32.totalorder %s137, %s138
    %p152 = scmp.eq.s32.totalorder %s20, 1
    %p153 = por %p151, %p152
    %p155 = scmp.ne.s32.totalorder %s138, %s154
    %p156 = scmp.eq.s32.totalorder %s20, 0
    %p157 = por %p155, %p156
    %s158 = ssub.s32 %s14, %s21
    %p159 = scmp.eq.s32.totalorder %s158, 0
    %s161 = sadd.s32 %s160, 1
    %s162 = scalar_select %p159, %s160, %s161
    %p165 = pneg %p159
    %p166 = scmp.eq.s32.totalorder %s14, 1
    %p167 = por %p165, %p166
    %p168 = scmp.ne.s32.totalorder %s160, %s163
    %p169 = scmp.eq.s32.totalorder %s14, 0
    %p170 = por %p168, %p169
    %p171 = scmp.ne.s32.totalorder %s160, %s163
    %p172 = scmp.eq.s32.totalorder %s19, 1
    %p173 = por %p171, %p172
    %p174 = scmp.ne.s32.totalorder %s163, %s164
    %p175 = scmp.eq.s32.totalorder %s19, 0
    %p176 = por %p174, %p175
    %p177 = scmp.ne.s32.totalorder %s163, %s164
    %p178 = scmp.eq.s32.totalorder %s20, 1
    %p179 = por %p177, %p178
    %p181 = scmp.ne.s32.totalorder %s164, %s180
    %p182 = scmp.eq.s32.totalorder %s20, 0
    %p183 = por %p181, %p182
    %s184 = ssub.s32 %s14, %s21
    %p185 = scmp.eq.s32.totalorder %s184, 0
    %s187 = sadd.s32 %s186, 1
    %s188 = scalar_select %p185, %s186, %s187
    %p191 = pneg %p185
    %p192 = scmp.eq.s32.totalorder %s14, 1
    %p193 = por %p191, %p192
    %p194 = scmp.ne.s32.totalorder %s186, %s189
    %p195 = scmp.eq.s32.totalorder %s14, 0
    %p196 = por %p194, %p195
    %p197 = scmp.ne.s32.totalorder %s186, %s189
    %p198 = scmp.eq.s32.totalorder %s19, 1
    %p199 = por %p197, %p198
    %p200 = scmp.ne.s32.totalorder %s189, %s190
    %p201 = scmp.eq.s32.totalorder %s19, 0
    %p202 = por %p200, %p201
    %p203 = scmp.ne.s32.totalorder %s189, %s190
    %p204 = scmp.eq.s32.totalorder %s20, 1
    %p205 = por %p203, %p204
    %p207 = scmp.ne.s32.totalorder %s190, %s206
    %p208 = scmp.eq.s32.totalorder %s20, 0
    %p209 = por %p207, %p208
    %p210 = scmp.le.s32.totalorder 1, %s14
    %p211 = scmp.lt.s32.totalorder %s14, 3
    %p212 = pnand %p210, %p211
    %p213 = pneg %p212
    // Predicated region
    $region9: #{gcnmf_forward.3} parent=5 // pred_check
      _
    $region10: #{gcnmf_forward.3} parent=5 // pred_check_branch
      %215 = sbr.rel (%p212) target = $region12
    $region11: #{gcnmf_forward.3} parent=5 // pred_region
      %s216 = ssub.s32 %s14, 1
      // Predicated region
      $region13: #{gcnmf_forward.3} parent=11 // pred_check
        %p217 = pneg %p61
      $region14: #{gcnmf_forward.3} parent=11 // pred_check_branch
        %219 = sbr.rel (%p217) target = $region16
      $region15: #{gcnmf_forward.3} parent=11 // pred_region
        _
      $region16: #{gcnmf_forward.3} parent=11 // pred_fallthru
        _
      // Predicated region
      $region17: #{gcnmf_forward.3} parent=11 // pred_check
        %p220 = pneg %p82
      $region18: #{gcnmf_forward.3} parent=11 // pred_check_branch
        %222 = sbr.rel (%p220) target = $region20
      $region19: #{gcnmf_forward.3} parent=11 // pred_region
        _
      $region20: #{gcnmf_forward.3} parent=11 // pred_fallthru
        _
      // Predicated region
      $region21: #{gcnmf_forward.3} parent=11 // pred_check
        %p223 = pneg %p103
      $region22: #{gcnmf_forward.3} parent=11 // pred_check_branch
        %225 = sbr.rel (%p223) target = $region24
      $region23: #{gcnmf_forward.3} parent=11 // pred_region
        _
      $region24: #{gcnmf_forward.3} parent=11 // pred_fallthru
        _
      // Predicated region
      $region25: #{gcnmf_forward.3} parent=11 // pred_check
        %p226 = pneg %p124
      $region26: #{gcnmf_forward.3} parent=11 // pred_check_branch
        %228 = sbr.rel (%p226) target = $region28
      $region27: #{gcnmf_forward.3} parent=11 // pred_region
        _
      $region28: #{gcnmf_forward.3} parent=11 // pred_fallthru
        _
    $region12: #{gcnmf_forward.3} parent=5 // pred_fallthru
      _
    %p229 = scmp.lt.s32.totalorder %s14, 2
    // Predicated region
    $region29: #{gcnmf_forward.3} parent=5 // pred_check
      %p230 = pneg %p229
    $region30: #{gcnmf_forward.3} parent=5 // pred_check_branch
      %232 = sbr.rel (%p230) target = $region32
    $region31: #{gcnmf_forward.3} parent=5 // pred_region
      // Predicated region
      $region33: #{gcnmf_forward.3} parent=31 // pred_check
        %p233 = pneg %p34
      $region34: #{gcnmf_forward.3} parent=31 // pred_check_branch
        %235 = sbr.rel (%p233) target = $region36
      $region35: #{gcnmf_forward.3} parent=31 // pred_region
        %s236 = smul.u32 32, %s14
        %p237 = scmp.lt.s32.totalorder %s236, 63
        %s238 = scalar_select %p237, %s236, 63
        %s239 = smul.addr %s238, 8
        %s240 = scalar_lea.vmem %s0, %s239
        %s241 = smul.u32 32, %s14
      $region36: #{gcnmf_forward.3} parent=31 // pred_fallthru
        _
    $region32: #{gcnmf_forward.3} parent=5 // pred_fallthru
      _
    %p242 = scmp.le.s32.totalorder 1, %s14
    %p243 = scmp.lt.s32.totalorder %s14, 3
    %p244 = pnand %p242, %p243
    %p245 = pneg %p244
    // Predicated region
    $region37: #{gcnmf_forward.3} parent=5 // pred_check
      _
    $region38: #{gcnmf_forward.3} parent=5 // pred_check_branch
      %247 = sbr.rel (%p244) target = $region40
    $region39: #{gcnmf_forward.3} parent=5 // pred_region
      %s248 = ssub.s32 %s14, 1
      %s249 = smul.u32 32, %s19
      %p250 = scmp.lt.s32.totalorder %s249, 63
      %s251 = scalar_select %p250, %s249, 63
      %s252 = smul.addr %s251, 8
      %s253 = scalar_lea.vmem %s0, %s252
      %p254 = pneg %p40
      %p255 = pneg %p37
      %p256 = pneg %p61
      %p257 = pneg %p58
      %p258 = pneg %p82
      %p259 = pneg %p79
      %p260 = pneg %p103
      %p261 = pneg %p100
      %p262 = pneg %p124
      %p263 = pneg %p121
      %p264 = pneg %p150
      %p265 = pneg %p147
      %s266 = smul.u32 32, %s19
      %p267 = scmp.lt.s32.totalorder %s266, 63
      %s268 = scalar_select %p267, %s266, 63
      %s269 = smul.addr %s268, 2
      %s270 = smul.addr %s269, 4
      %s271 = scalar_lea.vmem %s5, %s270
      %p272 = pneg %p176
      %p273 = pneg %p173
      %s274 = smul.u32 32, %s19
      %p275 = scmp.lt.s32.totalorder %s274, 63
      %s276 = scalar_select %p275, %s274, 63
      %s277 = smul.addr %s276, 2
      %s278 = smul.addr %s277, 4
      %s279 = scalar_lea.vmem %s6, %s278
      %p280 = pneg %p202
      %p281 = pneg %p199
      %s282 = smul.u32 32, %s19
      %p283 = scmp.lt.s32.totalorder %s282, 63
      %s284 = scalar_select %p283, %s282, 63
      %s285 = smul.addr %s284, 8
      %s286 = scalar_lea.vmem %s7, %s285
      %s287 = smul.u32 32, %s19
      %p288 = scmp.lt.s32.totalorder %s287, 63
      %s289 = scalar_select %p288, %s287, 63
      %s290 = smul.addr %s289, 8
      %s291 = scalar_lea.vmem %s0, %s290
      %s292 = smul.u32 32, %s19
      %s293 = smul.u32 32, %s19
      %p294 = scmp.lt.s32.totalorder %s293, 63
      %s295 = scalar_select %p294, %s293, 63
      %s296 = smul.addr %s295, 2
      %s297 = smul.addr %s296, 4
      %s298 = scalar_lea.vmem %s5, %s297
      %s299 = smul.u32 32, %s19
      %s300 = smul.u32 32, %s19
      %p301 = scmp.lt.s32.totalorder %s300, 63
      %s302 = scalar_select %p301, %s300, 63
      %s303 = smul.addr %s302, 2
      %s304 = smul.addr %s303, 4
      %s305 = scalar_lea.vmem %s6, %s304
      %s306 = smul.u32 32, %s19
      %s307 = smul.u32 32, %s19
      %p308 = scmp.lt.s32.totalorder %s307, 63
      %s309 = scalar_select %p308, %s307, 63
      %s310 = smul.addr %s309, 8
      %s311 = scalar_lea.vmem %s7, %s310
      %s312 = smul.u32 32, %s19
      %v313 = vld [vmem:[%s291] sm:$0xff]
      %v314 = vld [vmem:[%s291 + $0x8] sm:$0xff]
      %v315 = vld [vmem:[%s291 + $0x10] sm:$0xff]
      %v316 = vld [vmem:[%s291 + $0x18] sm:$0xff]
      %v317 = vld [vmem:[%s291 + $0x20] sm:$0xff]
      %v318 = vld [vmem:[%s291 + $0x28] sm:$0xff]
      %v319 = vld [vmem:[%s291 + $0x30] sm:$0xff]
      %v320 = vld [vmem:[%s291 + $0x38] sm:$0xff]
      %v321 = vld [vmem:[%s291 + $0x40] sm:$0xff]
      %v322 = vld [vmem:[%s291 + $0x48] sm:$0xff]
      %v323 = vld [vmem:[%s291 + $0x50] sm:$0xff]
      %v324 = vld [vmem:[%s291 + $0x58] sm:$0xff]
      %v325 = vld [vmem:[%s291 + $0x60] sm:$0xff]
      %v326 = vld [vmem:[%s291 + $0x68] sm:$0xff]
      %v327 = vld [vmem:[%s291 + $0x70] sm:$0xff]
      %v328 = vld [vmem:[%s291 + $0x78] sm:$0xff]
      %v329 = vld [vmem:[%s291 + $0x80] sm:$0xff]
      %v330 = vld [vmem:[%s291 + $0x88] sm:$0xff]
      %v331 = vld [vmem:[%s291 + $0x90] sm:$0xff]
      %v332 = vld [vmem:[%s291 + $0x98] sm:$0xff]
      %v333 = vld [vmem:[%s291 + $0xa0] sm:$0xff]
      %v334 = vld [vmem:[%s291 + $0xa8] sm:$0xff]
      %v335 = vld [vmem:[%s291 + $0xb0] sm:$0xff]
      %v336 = vld [vmem:[%s291 + $0xb8] sm:$0xff]
      %v337 = vld [vmem:[%s291 + $0xc0] sm:$0xff]
      %v338 = vld [vmem:[%s291 + $0xc8] sm:$0xff]
      %v339 = vld [vmem:[%s291 + $0xd0] sm:$0xff]
      %v340 = vld [vmem:[%s291 + $0xd8] sm:$0xff]
      %v341 = vld [vmem:[%s291 + $0xe0] sm:$0xff]
      %v342 = vld [vmem:[%s291 + $0xe8] sm:$0xff]
      %v343 = vld [vmem:[%s291 + $0xf0] sm:$0xff]
      %v344 = vld [vmem:[%s291 + $0xf8] sm:$0xff]
      %vm345 = vcmp.ne.f32.partialorder %v313, %v313
      %vm346 = vcmp.ne.f32.partialorder %v314, %v314
      %vm347 = vcmp.ne.f32.partialorder %v315, %v315
      %vm348 = vcmp.ne.f32.partialorder %v316, %v316
      %vm349 = vcmp.ne.f32.partialorder %v317, %v317
      %vm350 = vcmp.ne.f32.partialorder %v318, %v318
      %vm351 = vcmp.ne.f32.partialorder %v319, %v319
      %vm352 = vcmp.ne.f32.partialorder %v320, %v320
      %vm353 = vcmp.ne.f32.partialorder %v321, %v321
      %vm354 = vcmp.ne.f32.partialorder %v322, %v322
      %vm355 = vcmp.ne.f32.partialorder %v323, %v323
      %vm356 = vcmp.ne.f32.partialorder %v324, %v324
      %vm357 = vcmp.ne.f32.partialorder %v325, %v325
      %vm358 = vcmp.ne.f32.partialorder %v326, %v326
      %vm359 = vcmp.ne.f32.partialorder %v327, %v327
      %vm360 = vcmp.ne.f32.partialorder %v328, %v328
      %vm361 = vcmp.ne.f32.partialorder %v329, %v329
      %vm362 = vcmp.ne.f32.partialorder %v330, %v330
      %vm363 = vcmp.ne.f32.partialorder %v331, %v331
      %vm364 = vcmp.ne.f32.partialorder %v332, %v332
      %vm365 = vcmp.ne.f32.partialorder %v333, %v333
      %vm366 = vcmp.ne.f32.partialorder %v334, %v334
      %vm367 = vcmp.ne.f32.partialorder %v335, %v335
      %vm368 = vcmp.ne.f32.partialorder %v336, %v336
      %vm369 = vcmp.ne.f32.partialorder %v337, %v337
      %vm370 = vcmp.ne.f32.partialorder %v338, %v338
      %vm371 = vcmp.ne.f32.partialorder %v339, %v339
      %vm372 = vcmp.ne.f32.partialorder %v340, %v340
      %vm373 = vcmp.ne.f32.partialorder %v341, %v341
      %vm374 = vcmp.ne.f32.partialorder %v342, %v342
      %vm375 = vcmp.ne.f32.partialorder %v343, %v343
      %vm376 = vcmp.ne.f32.partialorder %v344, %v344
      %v377 = vsel %vm345, 0.0, %v313
      %v378 = vsel %vm346, 0.0, %v314
      %v379 = vsel %vm347, 0.0, %v315
      %v380 = vsel %vm348, 0.0, %v316
      %v381 = vsel %vm349, 0.0, %v317
      %v382 = vsel %vm350, 0.0, %v318
      %v383 = vsel %vm351, 0.0, %v319
      %v384 = vsel %vm352, 0.0, %v320
      %v385 = vsel %vm353, 0.0, %v321
      %v386 = vsel %vm354, 0.0, %v322
      %v387 = vsel %vm355, 0.0, %v323
      %v388 = vsel %vm356, 0.0, %v324
      %v389 = vsel %vm357, 0.0, %v325
      %v390 = vsel %vm358, 0.0, %v326
      %v391 = vsel %vm359, 0.0, %v327
      %v392 = vsel %vm360, 0.0, %v328
      %v393 = vsel %vm361, 0.0, %v329
      %v394 = vsel %vm362, 0.0, %v330
      %v395 = vsel %vm363, 0.0, %v331
      %v396 = vsel %vm364, 0.0, %v332
      %v397 = vsel %vm365, 0.0, %v333
      %v398 = vsel %vm366, 0.0, %v334
      %v399 = vsel %vm367, 0.0, %v335
      %v400 = vsel %vm368, 0.0, %v336
      %v401 = vsel %vm369, 0.0, %v337
      %v402 = vsel %vm370, 0.0, %v338
      %v403 = vsel %vm371, 0.0, %v339
      %v404 = vsel %vm372, 0.0, %v340
      %v405 = vsel %vm373, 0.0, %v341
      %v406 = vsel %vm374, 0.0, %v342
      %v407 = vsel %vm375, 0.0, %v343
      %v408 = vsel %vm376, 0.0, %v344
      %v409 = vsel %vm345, 1, 0
      %v410 = vsel %vm346, 1, 0
      %v411 = vsel %vm347, 1, 0
      %v412 = vsel %vm348, 1, 0
      %v413 = vsel %vm349, 1, 0
      %v414 = vsel %vm350, 1, 0
      %v415 = vsel %vm351, 1, 0
      %v416 = vsel %vm352, 1, 0
      %v417 = vsel %vm353, 1, 0
      %v418 = vsel %vm354, 1, 0
      %v419 = vsel %vm355, 1, 0
      %v420 = vsel %vm356, 1, 0
      %v421 = vsel %vm357, 1, 0
      %v422 = vsel %vm358, 1, 0
      %v423 = vsel %vm359, 1, 0
      %v424 = vsel %vm360, 1, 0
      %v425 = vsel %vm361, 1, 0
      %v426 = vsel %vm362, 1, 0
      %v427 = vsel %vm363, 1, 0
      %v428 = vsel %vm364, 1, 0
      %v429 = vsel %vm365, 1, 0
      %v430 = vsel %vm366, 1, 0
      %v431 = vsel %vm367, 1, 0
      %v432 = vsel %vm368, 1, 0
      %v433 = vsel %vm369, 1, 0
      %v434 = vsel %vm370, 1, 0
      %v435 = vsel %vm371, 1, 0
      %v436 = vsel %vm372, 1, 0
      %v437 = vsel %vm373, 1, 0
      %v438 = vsel %vm374, 1, 0
      %v439 = vsel %vm375, 1, 0
      %v440 = vsel %vm376, 1, 0
      %v441 = vcvt.s32.f32 %v409
      %v442 = vcvt.s32.f32 %v410
      %v443 = vcvt.s32.f32 %v411
      %v444 = vcvt.s32.f32 %v412
      %v445 = vcvt.s32.f32 %v413
      %v446 = vcvt.s32.f32 %v414
      %v447 = vcvt.s32.f32 %v415
      %v448 = vcvt.s32.f32 %v416
      %v449 = vcvt.s32.f32 %v417
      %v450 = vcvt.s32.f32 %v418
      %v451 = vcvt.s32.f32 %v419
      %v452 = vcvt.s32.f32 %v420
      %v453 = vcvt.s32.f32 %v421
      %v454 = vcvt.s32.f32 %v422
      %v455 = vcvt.s32.f32 %v423
      %v456 = vcvt.s32.f32 %v424
      %v457 = vcvt.s32.f32 %v425
      %v458 = vcvt.s32.f32 %v426
      %v459 = vcvt.s32.f32 %v427
      %v460 = vcvt.s32.f32 %v428
      %v461 = vcvt.s32.f32 %v429
      %v462 = vcvt.s32.f32 %v430
      %v463 = vcvt.s32.f32 %v431
      %v464 = vcvt.s32.f32 %v432
      %v465 = vcvt.s32.f32 %v433
      %v466 = vcvt.s32.f32 %v434
      %v467 = vcvt.s32.f32 %v435
      %v468 = vcvt.s32.f32 %v436
      %v469 = vcvt.s32.f32 %v437
      %v470 = vcvt.s32.f32 %v438
      %v471 = vcvt.s32.f32 %v439
      %v472 = vcvt.s32.f32 %v440
      %v473 = vsub.f32 1.0, %v441
      %v474 = vsub.f32 1.0, %v442
      %v475 = vsub.f32 1.0, %v443
      %v476 = vsub.f32 1.0, %v444
      %v477 = vsub.f32 1.0, %v445
      %v478 = vsub.f32 1.0, %v446
      %v479 = vsub.f32 1.0, %v447
      %v480 = vsub.f32 1.0, %v448
      %v481 = vsub.f32 1.0, %v449
      %v482 = vsub.f32 1.0, %v450
      %v483 = vsub.f32 1.0, %v451
      %v484 = vsub.f32 1.0, %v452
      %v485 = vsub.f32 1.0, %v453
      %v486 = vsub.f32 1.0, %v454
      %v487 = vsub.f32 1.0, %v455
      %v488 = vsub.f32 1.0, %v456
      %v489 = vsub.f32 1.0, %v457
      %v490 = vsub.f32 1.0, %v458
      %v491 = vsub.f32 1.0, %v459
      %v492 = vsub.f32 1.0, %v460
      %v493 = vsub.f32 1.0, %v461
      %v494 = vsub.f32 1.0, %v462
      %v495 = vsub.f32 1.0, %v463
      %v496 = vsub.f32 1.0, %v464
      %v497 = vsub.f32 1.0, %v465
      %v498 = vsub.f32 1.0, %v466
      %v499 = vsub.f32 1.0, %v467
      %v500 = vsub.f32 1.0, %v468
      %v501 = vsub.f32 1.0, %v469
      %v502 = vsub.f32 1.0, %v470
      %v503 = vsub.f32 1.0, %v471
      %v504 = vsub.f32 1.0, %v472
      %v505 = vpack.c.bf16 %v378, %v377
      %v506 = vpack.c.bf16 %v442, %v441
      %v507 = vpack.c.bf16 %v380, %v379
      %v508 = vpack.c.bf16 %v444, %v443
      %v509 = vpack.c.bf16 %v382, %v381
      %v510 = vpack.c.bf16 %v446, %v445
      %v511 = vpack.c.bf16 %v384, %v383
      %v512 = vpack.c.bf16 %v448, %v447
      %v513 = vpack.c.bf16 %v386, %v385
      %v514 = vpack.c.bf16 %v450, %v449
      %v515 = vpack.c.bf16 %v388, %v387
      %v516 = vpack.c.bf16 %v452, %v451
      %v517 = vpack.c.bf16 %v390, %v389
      %v518 = vpack.c.bf16 %v454, %v453
      %v519 = vpack.c.bf16 %v392, %v391
      %v520 = vpack.c.bf16 %v456, %v455
      %v521 = vpack.c.bf16 %v394, %v393
      %v522 = vpack.c.bf16 %v458, %v457
      %v523 = vpack.c.bf16 %v396, %v395
      %v524 = vpack.c.bf16 %v460, %v459
      %v525 = vpack.c.bf16 %v398, %v397
      %v526 = vpack.c.bf16 %v462, %v461
      %v527 = vpack.c.bf16 %v400, %v399
      %v528 = vpack.c.bf16 %v464, %v463
      %v529 = vpack.c.bf16 %v402, %v401
      %v530 = vpack.c.bf16 %v466, %v465
      %v531 = vpack.c.bf16 %v404, %v403
      %v532 = vpack.c.bf16 %v468, %v467
      %v533 = vpack.c.bf16 %v406, %v405
      %v534 = vpack.c.bf16 %v470, %v469
      %v535 = vpack.c.bf16 %v408, %v407
      %v536 = vpack.c.bf16 %v472, %v471
      %v537 = vld [vmem:[%s1] sm:$0xff]
      %v538 = vld [vmem:[%s1 + $0x8] sm:$0xff]
      %v539 = vld [vmem:[%s1 + $0x10] sm:$0xff]
      %v540 = vld [vmem:[%s1 + $0x18] sm:$0xff]
      %v541 = vld [vmem:[%s1 + $0x20] sm:$0xff]
      %v542 = vld [vmem:[%s1 + $0x28] sm:$0xff]
      %v543 = vld [vmem:[%s1 + $0x30] sm:$0xff]
      %v544 = vld [vmem:[%s1 + $0x38] sm:$0xff]
      %v545 = vld [vmem:[%s1 + $0x40] sm:$0xff]
      %v546 = vld [vmem:[%s1 + $0x48] sm:$0xff]
      %v547 = vld [vmem:[%s1 + $0x50] sm:$0xff]
      %v548 = vld [vmem:[%s1 + $0x58] sm:$0xff]
      %v549 = vld [vmem:[%s1 + $0x60] sm:$0xff]
      %v550 = vld [vmem:[%s1 + $0x68] sm:$0xff]
      %v551 = vld [vmem:[%s1 + $0x70] sm:$0xff]
      %v552 = vld [vmem:[%s1 + $0x78] sm:$0xff]
      %v553 = vld [vmem:[%s1 + $0x80] sm:$0xff]
      %v554 = vld [vmem:[%s1 + $0x88] sm:$0xff]
      %v555 = vld [vmem:[%s1 + $0x90] sm:$0xff]
      %v556 = vld [vmem:[%s1 + $0x98] sm:$0xff]
      %v557 = vld [vmem:[%s1 + $0xa0] sm:$0xff]
      %v558 = vld [vmem:[%s1 + $0xa8] sm:$0xff]
      %v559 = vld [vmem:[%s1 + $0xb0] sm:$0xff]
      %v560 = vld [vmem:[%s1 + $0xb8] sm:$0xff]
      %v561 = vld [vmem:[%s1 + $0xc0] sm:$0xff]
      %v562 = vld [vmem:[%s1 + $0xc8] sm:$0xff]
      %v563 = vld [vmem:[%s1 + $0xd0] sm:$0xff]
      %v564 = vld [vmem:[%s1 + $0xd8] sm:$0xff]
      %v565 = vld [vmem:[%s1 + $0xe0] sm:$0xff]
      %v566 = vld [vmem:[%s1 + $0xe8] sm:$0xff]
      %v567 = vld [vmem:[%s1 + $0xf0] sm:$0xff]
      %v568 = vld [vmem:[%s1 + $0xf8] sm:$0xff]
      %v569 = vld [vmem:[%s1 + $0x100] sm:$0xff]
      %v570 = vld [vmem:[%s1 + $0x108] sm:$0xff]
      %v571 = vld [vmem:[%s1 + $0x110] sm:$0xff]
      %v572 = vld [vmem:[%s1 + $0x118] sm:$0xff]
      %v573 = vld [vmem:[%s1 + $0x120] sm:$0xff]
      %v574 = vld [vmem:[%s1 + $0x128] sm:$0xff]
      %v575 = vld [vmem:[%s1 + $0x130] sm:$0xff]
      %v576 = vld [vmem:[%s1 + $0x138] sm:$0xff]
      %v577 = vld [vmem:[%s1 + $0x140] sm:$0xff]
      %v578 = vld [vmem:[%s1 + $0x148] sm:$0xff]
      %v579 = vld [vmem:[%s1 + $0x150] sm:$0xff]
      %v580 = vld [vmem:[%s1 + $0x158] sm:$0xff]
      %v581 = vld [vmem:[%s1 + $0x160] sm:$0xff]
      %v582 = vld [vmem:[%s1 + $0x168] sm:$0xff]
      %v583 = vld [vmem:[%s1 + $0x170] sm:$0xff]
      %v584 = vld [vmem:[%s1 + $0x178] sm:$0xff]
      %v585 = vld [vmem:[%s1 + $0x180] sm:$0xff]
      %v586 = vld [vmem:[%s1 + $0x188] sm:$0xff]
      %v587 = vld [vmem:[%s1 + $0x190] sm:$0xff]
      %v588 = vld [vmem:[%s1 + $0x198] sm:$0xff]
      %v589 = vld [vmem:[%s1 + $0x1a0] sm:$0xff]
      %v590 = vld [vmem:[%s1 + $0x1a8] sm:$0xff]
      %v591 = vld [vmem:[%s1 + $0x1b0] sm:$0xff]
      %v592 = vld [vmem:[%s1 + $0x1b8] sm:$0xff]
      %v593 = vld [vmem:[%s1 + $0x1c0] sm:$0xff]
      %v594 = vld [vmem:[%s1 + $0x1c8] sm:$0xff]
      %v595 = vld [vmem:[%s1 + $0x1d0] sm:$0xff]
      %v596 = vld [vmem:[%s1 + $0x1d8] sm:$0xff]
      %v597 = vld [vmem:[%s1 + $0x1e0] sm:$0xff]
      %v598 = vld [vmem:[%s1 + $0x1e8] sm:$0xff]
      %v599 = vld [vmem:[%s1 + $0x1f0] sm:$0xff]
      %v600 = vld [vmem:[%s1 + $0x1f8] sm:$0xff]
      %v665 = vunpack.c.l.b16 %v537
      %v666 = vunpack.c.h.b16 %v537
      %v667 = vunpack.c.l.b16 %v538
      %v668 = vunpack.c.h.b16 %v538
      %v669 = vunpack.c.l.b16 %v539
      %v670 = vunpack.c.h.b16 %v539
      %v671 = vunpack.c.l.b16 %v540
      %v672 = vunpack.c.h.b16 %v540
      %v673 = vunpack.c.l.b16 %v541
      %v674 = vunpack.c.h.b16 %v541
      %v675 = vunpack.c.l.b16 %v542
      %v676 = vunpack.c.h.b16 %v542
      %v677 = vunpack.c.l.b16 %v543
      %v678 = vunpack.c.h.b16 %v543
      %v679 = vunpack.c.l.b16 %v544
      %v680 = vunpack.c.h.b16 %v544
      %v681 = vunpack.c.l.b16 %v545
      %v682 = vunpack.c.h.b16 %v545
      %v683 = vunpack.c.l.b16 %v546
      %v684 = vunpack.c.h.b16 %v546
      %v685 = vunpack.c.l.b16 %v547
      %v686 = vunpack.c.h.b16 %v547
      %v687 = vunpack.c.l.b16 %v548
      %v688 = vunpack.c.h.b16 %v548
      %v689 = vunpack.c.l.b16 %v549
      %v690 = vunpack.c.h.b16 %v549
      %v691 = vunpack.c.l.b16 %v550
      %v692 = vunpack.c.h.b16 %v550
      %v693 = vunpack.c.l.b16 %v551
      %v694 = vunpack.c.h.b16 %v551
      %v695 = vunpack.c.l.b16 %v552
      %v696 = vunpack.c.h.b16 %v552
      %v697 = vunpack.c.l.b16 %v553
      %v698 = vunpack.c.h.b16 %v553
      %v699 = vunpack.c.l.b16 %v554
      %v700 = vunpack.c.h.b16 %v554
      %v701 = vunpack.c.l.b16 %v555
      %v702 = vunpack.c.h.b16 %v555
      %v703 = vunpack.c.l.b16 %v556
      %v704 = vunpack.c.h.b16 %v556
      %v705 = vunpack.c.l.b16 %v557
      %v706 = vunpack.c.h.b16 %v557
      %v707 = vunpack.c.l.b16 %v558
      %v708 = vunpack.c.h.b16 %v558
      %v709 = vunpack.c.l.b16 %v559
      %v710 = vunpack.c.h.b16 %v559
      %v711 = vunpack.c.l.b16 %v560
      %v712 = vunpack.c.h.b16 %v560
      %v713 = vunpack.c.l.b16 %v561
      %v714 = vunpack.c.h.b16 %v561
      %v715 = vunpack.c.l.b16 %v562
      %v716 = vunpack.c.h.b16 %v562
      %v717 = vunpack.c.l.b16 %v563
      %v718 = vunpack.c.h.b16 %v563
      %v719 = vunpack.c.l.b16 %v564
      %v720 = vunpack.c.h.b16 %v564
      %v721 = vunpack.c.l.b16 %v565
      %v722 = vunpack.c.h.b16 %v565
      %v723 = vunpack.c.l.b16 %v566
      %v724 = vunpack.c.h.b16 %v566
      %v725 = vunpack.c.l.b16 %v567
      %v726 = vunpack.c.h.b16 %v567
      %v727 = vunpack.c.l.b16 %v568
      %v728 = vunpack.c.h.b16 %v568
      %v729 = vunpack.c.l.b16 %v569
      %v730 = vunpack.c.h.b16 %v569
      %v731 = vunpack.c.l.b16 %v570
      %v732 = vunpack.c.h.b16 %v570
      %v733 = vunpack.c.l.b16 %v571
      %v734 = vunpack.c.h.b16 %v571
      %v735 = vunpack.c.l.b16 %v572
      %v736 = vunpack.c.h.b16 %v572
      %v737 = vunpack.c.l.b16 %v573
      %v738 = vunpack.c.h.b16 %v573
      %v739 = vunpack.c.l.b16 %v574
      %v740 = vunpack.c.h.b16 %v574
      %v741 = vunpack.c.l.b16 %v575
      %v742 = vunpack.c.h.b16 %v575
      %v743 = vunpack.c.l.b16 %v576
      %v744 = vunpack.c.h.b16 %v576
      %v745 = vunpack.c.l.b16 %v577
      %v746 = vunpack.c.h.b16 %v577
      %v747 = vunpack.c.l.b16 %v578
      %v748 = vunpack.c.h.b16 %v578
      %v749 = vunpack.c.l.b16 %v579
      %v750 = vunpack.c.h.b16 %v579
      %v751 = vunpack.c.l.b16 %v580
      %v752 = vunpack.c.h.b16 %v580
      %v753 = vunpack.c.l.b16 %v581
      %v754 = vunpack.c.h.b16 %v581
      %v755 = vunpack.c.l.b16 %v582
      %v756 = vunpack.c.h.b16 %v582
      %v757 = vunpack.c.l.b16 %v583
      %v758 = vunpack.c.h.b16 %v583
      %v759 = vunpack.c.l.b16 %v584
      %v760 = vunpack.c.h.b16 %v584
      %v761 = vunpack.c.l.b16 %v585
      %v762 = vunpack.c.h.b16 %v585
      %v763 = vunpack.c.l.b16 %v586
      %v764 = vunpack.c.h.b16 %v586
      %v765 = vunpack.c.l.b16 %v587
      %v766 = vunpack.c.h.b16 %v587
      %v767 = vunpack.c.l.b16 %v588
      %v768 = vunpack.c.h.b16 %v588
      %v769 = vunpack.c.l.b16 %v589
      %v770 = vunpack.c.h.b16 %v589
      %v771 = vunpack.c.l.b16 %v590
      %v772 = vunpack.c.h.b16 %v590
      %v773 = vunpack.c.l.b16 %v591
      %v774 = vunpack.c.h.b16 %v591
      %v775 = vunpack.c.l.b16 %v592
      %v776 = vunpack.c.h.b16 %v592
      %v777 = vunpack.c.l.b16 %v593
      %v778 = vunpack.c.h.b16 %v593
      %v779 = vunpack.c.l.b16 %v594
      %v780 = vunpack.c.h.b16 %v594
      %v781 = vunpack.c.l.b16 %v595
      %v782 = vunpack.c.h.b16 %v595
      %v783 = vunpack.c.l.b16 %v596
      %v784 = vunpack.c.h.b16 %v596
      %v785 = vunpack.c.l.b16 %v597
      %v786 = vunpack.c.h.b16 %v597
      %v787 = vunpack.c.l.b16 %v598
      %v788 = vunpack.c.h.b16 %v598
      %v789 = vunpack.c.l.b16 %v599
      %v790 = vunpack.c.h.b16 %v599
      %v791 = vunpack.c.l.b16 %v600
      %v792 = vunpack.c.h.b16 %v600
      %v793 = vpack.c.b16 %v669, %v665
      %v794 = vpack.c.b16 %v670, %v666
      %v795 = vpack.c.b16 %v671, %v667
      %v796 = vpack.c.b16 %v672, %v668
      %v797 = vpack.c.b16 %v677, %v673
      %v798 = vpack.c.b16 %v678, %v674
      %v799 = vpack.c.b16 %v679, %v675
      %v800 = vpack.c.b16 %v680, %v676
      %v801 = vpack.c.b16 %v685, %v681
      %v802 = vpack.c.b16 %v686, %v682
      %v803 = vpack.c.b16 %v687, %v683
      %v804 = vpack.c.b16 %v688, %v684
      %v805 = vpack.c.b16 %v693, %v689
      %v806 = vpack.c.b16 %v694, %v690
      %v807 = vpack.c.b16 %v695, %v691
      %v808 = vpack.c.b16 %v696, %v692
      %v809 = vpack.c.b16 %v701, %v697
      %v810 = vpack.c.b16 %v702, %v698
      %v811 = vpack.c.b16 %v703, %v699
      %v812 = vpack.c.b16 %v704, %v700
      %v813 = vpack.c.b16 %v709, %v705
      %v814 = vpack.c.b16 %v710, %v706
      %v815 = vpack.c.b16 %v711, %v707
      %v816 = vpack.c.b16 %v712, %v708
      %v817 = vpack.c.b16 %v717, %v713
      %v818 = vpack.c.b16 %v718, %v714
      %v819 = vpack.c.b16 %v719, %v715
      %v820 = vpack.c.b16 %v720, %v716
      %v821 = vpack.c.b16 %v725, %v721
      %v822 = vpack.c.b16 %v726, %v722
      %v823 = vpack.c.b16 %v727, %v723
      %v824 = vpack.c.b16 %v728, %v724
      %v825 = vpack.c.b16 %v733, %v729
      %v826 = vpack.c.b16 %v734, %v730
      %v827 = vpack.c.b16 %v735, %v731
      %v828 = vpack.c.b16 %v736, %v732
      %v829 = vpack.c.b16 %v741, %v737
      %v830 = vpack.c.b16 %v742, %v738
      %v831 = vpack.c.b16 %v743, %v739
      %v832 = vpack.c.b16 %v744, %v740
      %v833 = vpack.c.b16 %v749, %v745
      %v834 = vpack.c.b16 %v750, %v746
      %v835 = vpack.c.b16 %v751, %v747
      %v836 = vpack.c.b16 %v752, %v748
      %v837 = vpack.c.b16 %v757, %v753
      %v838 = vpack.c.b16 %v758, %v754
      %v839 = vpack.c.b16 %v759, %v755
      %v840 = vpack.c.b16 %v760, %v756
      %v841 = vpack.c.b16 %v765, %v761
      %v842 = vpack.c.b16 %v766, %v762
      %v843 = vpack.c.b16 %v767, %v763
      %v844 = vpack.c.b16 %v768, %v764
      %v845 = vpack.c.b16 %v773, %v769
      %v846 = vpack.c.b16 %v774, %v770
      %v847 = vpack.c.b16 %v775, %v771
      %v848 = vpack.c.b16 %v776, %v772
      %v849 = vpack.c.b16 %v781, %v777
      %v850 = vpack.c.b16 %v782, %v778
      %v851 = vpack.c.b16 %v783, %v779
      %v852 = vpack.c.b16 %v784, %v780
      %v853 = vpack.c.b16 %v789, %v785
      %v854 = vpack.c.b16 %v790, %v786
      %v855 = vpack.c.b16 %v791, %v787
      %v856 = vpack.c.b16 %v792, %v788
      %921 = vmatpush.bf16.msra.mxu0 %v821
      %922 = vmatpush.bf16.msra.mxu0 %v817
      %923 = vmatpush.bf16.msra.mxu0 %v813
      %924 = vmatpush.bf16.msra.mxu0 %v809
      %925 = vmatpush.bf16.msra.mxu0 %v805
      %926 = vmatpush.bf16.msra.mxu0 %v801
      %927 = vmatpush.bf16.msra.mxu0 %v797
      %928 = vmatpush.bf16.msra.mxu0 %v793
      %929 = vmatmul.bf16.gmra.mxu0 %v505
      %v930 = vpop.f32.mrf.mxu0
      %v931 = vadd.f32 0.0, %v930
      %v932 = vpop.f32.mrf.mxu0
      %v933 = vadd.f32 0.0, %v932
      %934 = vmatmul.bf16.gmra.mxu0 %v507
      %v935 = vpop.f32.mrf.mxu0
      %v936 = vadd.f32 0.0, %v935
      %v937 = vpop.f32.mrf.mxu0
      %v938 = vadd.f32 0.0, %v937
      %939 = vmatmul.bf16.gmra.mxu0 %v509
      %v940 = vpop.f32.mrf.mxu0
      %v941 = vadd.f32 0.0, %v940
      %v942 = vpop.f32.mrf.mxu0
      %v943 = vadd.f32 0.0, %v942
      %944 = vmatmul.bf16.gmra.mxu0 %v511
      %v945 = vpop.f32.mrf.mxu0
      %v946 = vadd.f32 0.0, %v945
      %v947 = vpop.f32.mrf.mxu0
      %v948 = vadd.f32 0.0, %v947
      %949 = vmatmul.bf16.gmra.mxu0 %v513
      %v950 = vpop.f32.mrf.mxu0
      %v951 = vadd.f32 0.0, %v950
      %v952 = vpop.f32.mrf.mxu0
      %v953 = vadd.f32 0.0, %v952
      %954 = vmatmul.bf16.gmra.mxu0 %v515
      %v955 = vpop.f32.mrf.mxu0
      %v956 = vadd.f32 0.0, %v955
      %v957 = vpop.f32.mrf.mxu0
      %v958 = vadd.f32 0.0, %v957
      %959 = vmatmul.bf16.gmra.mxu0 %v517
      %v960 = vpop.f32.mrf.mxu0
      %v961 = vadd.f32 0.0, %v960
      %v962 = vpop.f32.mrf.mxu0
      %v963 = vadd.f32 0.0, %v962
      %964 = vmatmul.bf16.gmra.mxu0 %v519
      %v965 = vpop.f32.mrf.mxu0
      %v966 = vadd.f32 0.0, %v965
      %v967 = vpop.f32.mrf.mxu0
      %v968 = vadd.f32 0.0, %v967
      %969 = vmatmul.bf16.gmra.mxu0 %v521
      %v970 = vpop.f32.mrf.mxu0
      %v971 = vadd.f32 0.0, %v970
      %v972 = vpop.f32.mrf.mxu0
      %v973 = vadd.f32 0.0, %v972
      %974 = vmatmul.bf16.gmra.mxu0 %v523
      %v975 = vpop.f32.mrf.mxu0
      %v976 = vadd.f32 0.0, %v975
      %v977 = vpop.f32.mrf.mxu0
      %v978 = vadd.f32 0.0, %v977
      %979 = vmatmul.bf16.gmra.mxu0 %v525
      %v980 = vpop.f32.mrf.mxu0
      %v981 = vadd.f32 0.0, %v980
      %v982 = vpop.f32.mrf.mxu0
      %v983 = vadd.f32 0.0, %v982
      %984 = vmatmul.bf16.gmra.mxu0 %v527
      %v985 = vpop.f32.mrf.mxu0
      %v986 = vadd.f32 0.0, %v985
      %v987 = vpop.f32.mrf.mxu0
      %v988 = vadd.f32 0.0, %v987
      %989 = vmatmul.bf16.gmra.mxu0 %v529
      %v990 = vpop.f32.mrf.mxu0
      %v991 = vadd.f32 0.0, %v990
      %v992 = vpop.f32.mrf.mxu0
      %v993 = vadd.f32 0.0, %v992
      %994 = vmatmul.bf16.gmra.mxu0 %v531
      %v995 = vpop.f32.mrf.mxu0
      %v996 = vadd.f32 0.0, %v995
      %v997 = vpop.f32.mrf.mxu0
      %v998 = vadd.f32 0.0, %v997
      %999 = vmatmul.bf16.gmra.mxu0 %v533
      %v1000 = vpop.f32.mrf.mxu0
      %v1001 = vadd.f32 0.0, %v1000
      %v1002 = vpop.f32.mrf.mxu0
      %v1003 = vadd.f32 0.0, %v1002
      %1004 = vmatmul.bf16.gmra.mxu0 %v535
      %v1005 = vpop.f32.mrf.mxu0
      %v1006 = vadd.f32 0.0, %v1005
      %v1007 = vpop.f32.mrf.mxu0
      %v1008 = vadd.f32 0.0, %v1007
      %1009 = vdwg.mxu0
      %1010 = vmatpush.bf16.msra.mxu0 %v853
      %1011 = vmatpush.bf16.msra.mxu0 %v849
      %1012 = vmatpush.bf16.msra.mxu0 %v845
      %1013 = vmatpush.bf16.msra.mxu0 %v841
      %1014 = vmatpush.bf16.msra.mxu0 %v837
      %1015 = vmatpush.bf16.msra.mxu0 %v833
      %1016 = vmatpush.bf16.msra.mxu0 %v829
      %1017 = vmatpush.bf16.msra.mxu0 %v825
      %1018 = vmatmul.bf16.gmra.mxu0 %v506
      %v1019 = vpop.f32.mrf.mxu0
      %v1020 = vadd.f32 %v931, %v1019
      %v1021 = vpop.f32.mrf.mxu0
      %v1022 = vadd.f32 %v933, %v1021
      %1023 = vmatmul.bf16.gmra.mxu0 %v508
      %v1024 = vpop.f32.mrf.mxu0
      %v1025 = vadd.f32 %v936, %v1024
      %v1026 = vpop.f32.mrf.mxu0
      %v1027 = vadd.f32 %v938, %v1026
      %1028 = vmatmul.bf16.gmra.mxu0 %v510
      %v1029 = vpop.f32.mrf.mxu0
      %v1030 = vadd.f32 %v941, %v1029
      %v1031 = vpop.f32.mrf.mxu0
      %v1032 = vadd.f32 %v943, %v1031
      %1033 = vmatmul.bf16.gmra.mxu0 %v512
      %v1034 = vpop.f32.mrf.mxu0
      %v1035 = vadd.f32 %v946, %v1034
      %v1036 = vpop.f32.mrf.mxu0
      %v1037 = vadd.f32 %v948, %v1036
      %1038 = vmatmul.bf16.gmra.mxu0 %v514
      %v1039 = vpop.f32.mrf.mxu0
      %v1040 = vadd.f32 %v951, %v1039
      %v1041 = vpop.f32.mrf.mxu0
      %v1042 = vadd.f32 %v953, %v1041
      %1043 = vmatmul.bf16.gmra.mxu0 %v516
      %v1044 = vpop.f32.mrf.mxu0
      %v1045 = vadd.f32 %v956, %v1044
      %v1046 = vpop.f32.mrf.mxu0
      %v1047 = vadd.f32 %v958, %v1046
      %1048 = vmatmul.bf16.gmra.mxu0 %v518
      %v1049 = vpop.f32.mrf.mxu0
      %v1050 = vadd.f32 %v961, %v1049
      %v1051 = vpop.f32.mrf.mxu0
      %v1052 = vadd.f32 %v963, %v1051
      %1053 = vmatmul.bf16.gmra.mxu0 %v520
      %v1054 = vpop.f32.mrf.mxu0
      %v1055 = vadd.f32 %v966, %v1054
      %v1056 = vpop.f32.mrf.mxu0
      %v1057 = vadd.f32 %v968, %v1056
      %1058 = vmatmul.bf16.gmra.mxu0 %v522
      %v1059 = vpop.f32.mrf.mxu0
      %v1060 = vadd.f32 %v971, %v1059
      %v1061 = vpop.f32.mrf.mxu0
      %v1062 = vadd.f32 %v973, %v1061
      %1063 = vmatmul.bf16.gmra.mxu0 %v524
      %v1064 = vpop.f32.mrf.mxu0
      %v1065 = vadd.f32 %v976, %v1064
      %v1066 = vpop.f32.mrf.mxu0
      %v1067 = vadd.f32 %v978, %v1066
      %1068 = vmatmul.bf16.gmra.mxu0 %v526
      %v1069 = vpop.f32.mrf.mxu0
      %v1070 = vadd.f32 %v981, %v1069
      %v1071 = vpop.f32.mrf.mxu0
      %v1072 = vadd.f32 %v983, %v1071
      %1073 = vmatmul.bf16.gmra.mxu0 %v528
      %v1074 = vpop.f32.mrf.mxu0
      %v1075 = vadd.f32 %v986, %v1074
      %v1076 = vpop.f32.mrf.mxu0
      %v1077 = vadd.f32 %v988, %v1076
      %1078 = vmatmul.bf16.gmra.mxu0 %v530
      %v1079 = vpop.f32.mrf.mxu0
      %v1080 = vadd.f32 %v991, %v1079
      %v1081 = vpop.f32.mrf.mxu0
      %v1082 = vadd.f32 %v993, %v1081
      %1083 = vmatmul.bf16.gmra.mxu0 %v532
      %v1084 = vpop.f32.mrf.mxu0
      %v1085 = vadd.f32 %v996, %v1084
      %v1086 = vpop.f32.mrf.mxu0
      %v1087 = vadd.f32 %v998, %v1086
      %1088 = vmatmul.bf16.gmra.mxu0 %v534
      %v1089 = vpop.f32.mrf.mxu0
      %v1090 = vadd.f32 %v1001, %v1089
      %v1091 = vpop.f32.mrf.mxu0
      %v1092 = vadd.f32 %v1003, %v1091
      %1093 = vmatmul.bf16.gmra.mxu0 %v536
      %v1094 = vpop.f32.mrf.mxu0
      %v1095 = vadd.f32 %v1006, %v1094
      %v1096 = vpop.f32.mrf.mxu0
      %v1097 = vadd.f32 %v1008, %v1096
      %1098 = vdwg.mxu0
      %1099 = vmatpush.bf16.msra.mxu0 %v822
      %1100 = vmatpush.bf16.msra.mxu0 %v818
      %1101 = vmatpush.bf16.msra.mxu0 %v814
      %1102 = vmatpush.bf16.msra.mxu0 %v810
      %1103 = vmatpush.bf16.msra.mxu0 %v806
      %1104 = vmatpush.bf16.msra.mxu0 %v802
      %1105 = vmatpush.bf16.msra.mxu0 %v798
      %1106 = vmatpush.bf16.msra.mxu0 %v794
      %1107 = vmatmul.bf16.gmra.mxu0 %v505
      %v1108 = vpop.f32.mrf.mxu0
      %v1109 = vadd.f32 0.0, %v1108
      %v1110 = vpop.f32.mrf.mxu0
      %v1111 = vadd.f32 0.0, %v1110
      %1112 = vmatmul.bf16.gmra.mxu0 %v507
      %v1113 = vpop.f32.mrf.mxu0
      %v1114 = vadd.f32 0.0, %v1113
      %v1115 = vpop.f32.mrf.mxu0
      %v1116 = vadd.f32 0.0, %v1115
      %1117 = vmatmul.bf16.gmra.mxu0 %v509
      %v1118 = vpop.f32.mrf.mxu0
      %v1119 = vadd.f32 0.0, %v1118
      %v1120 = vpop.f32.mrf.mxu0
      %v1121 = vadd.f32 0.0, %v1120
      %1122 = vmatmul.bf16.gmra.mxu0 %v511
      %v1123 = vpop.f32.mrf.mxu0
      %v1124 = vadd.f32 0.0, %v1123
      %v1125 = vpop.f32.mrf.mxu0
      %v1126 = vadd.f32 0.0, %v1125
      %1127 = vmatmul.bf16.gmra.mxu0 %v513
      %v1128 = vpop.f32.mrf.mxu0
      %v1129 = vadd.f32 0.0, %v1128
      %v1130 = vpop.f32.mrf.mxu0
      %v1131 = vadd.f32 0.0, %v1130
      %1132 = vmatmul.bf16.gmra.mxu0 %v515
      %v1133 = vpop.f32.mrf.mxu0
      %v1134 = vadd.f32 0.0, %v1133
      %v1135 = vpop.f32.mrf.mxu0
      %v1136 = vadd.f32 0.0, %v1135
      %1137 = vmatmul.bf16.gmra.mxu0 %v517
      %v1138 = vpop.f32.mrf.mxu0
      %v1139 = vadd.f32 0.0, %v1138
      %v1140 = vpop.f32.mrf.mxu0
      %v1141 = vadd.f32 0.0, %v1140
      %1142 = vmatmul.bf16.gmra.mxu0 %v519
      %v1143 = vpop.f32.mrf.mxu0
      %v1144 = vadd.f32 0.0, %v1143
      %v1145 = vpop.f32.mrf.mxu0
      %v1146 = vadd.f32 0.0, %v1145
      %1147 = vmatmul.bf16.gmra.mxu0 %v521
      %v1148 = vpop.f32.mrf.mxu0
      %v1149 = vadd.f32 0.0, %v1148
      %v1150 = vpop.f32.mrf.mxu0
      %v1151 = vadd.f32 0.0, %v1150
      %1152 = vmatmul.bf16.gmra.mxu0 %v523
      %v1153 = vpop.f32.mrf.mxu0
      %v1154 = vadd.f32 0.0, %v1153
      %v1155 = vpop.f32.mrf.mxu0
      %v1156 = vadd.f32 0.0, %v1155
      %1157 = vmatmul.bf16.gmra.mxu0 %v525
      %v1158 = vpop.f32.mrf.mxu0
      %v1159 = vadd.f32 0.0, %v1158
      %v1160 = vpop.f32.mrf.mxu0
      %v1161 = vadd.f32 0.0, %v1160
      %1162 = vmatmul.bf16.gmra.mxu0 %v527
      %v1163 = vpop.f32.mrf.mxu0
      %v1164 = vadd.f32 0.0, %v1163
      %v1165 = vpop.f32.mrf.mxu0
      %v1166 = vadd.f32 0.0, %v1165
      %1167 = vmatmul.bf16.gmra.mxu0 %v529
      %v1168 = vpop.f32.mrf.mxu0
      %v1169 = vadd.f32 0.0, %v1168
      %v1170 = vpop.f32.mrf.mxu0
      %v1171 = vadd.f32 0.0, %v1170
      %1172 = vmatmul.bf16.gmra.mxu0 %v531
      %v1173 = vpop.f32.mrf.mxu0
      %v1174 = vadd.f32 0.0, %v1173
      %v1175 = vpop.f32.mrf.mxu0
      %v1176 = vadd.f32 0.0, %v1175
      %1177 = vmatmul.bf16.gmra.mxu0 %v533
      %v1178 = vpop.f32.mrf.mxu0
      %v1179 = vadd.f32 0.0, %v1178
      %v1180 = vpop.f32.mrf.mxu0
      %v1181 = vadd.f32 0.0, %v1180
      %1182 = vmatmul.bf16.gmra.mxu0 %v535
      %v1183 = vpop.f32.mrf.mxu0
      %v1184 = vadd.f32 0.0, %v1183
      %v1185 = vpop.f32.mrf.mxu0
      %v1186 = vadd.f32 0.0, %v1185
      %1187 = vdwg.mxu0
      %1188 = vmatpush.bf16.msra.mxu0 %v854
      %1189 = vmatpush.bf16.msra.mxu0 %v850
      %1190 = vmatpush.bf16.msra.mxu0 %v846
      %1191 = vmatpush.bf16.msra.mxu0 %v842
      %1192 = vmatpush.bf16.msra.mxu0 %v838
      %1193 = vmatpush.bf16.msra.mxu0 %v834
      %1194 = vmatpush.bf16.msra.mxu0 %v830
      %1195 = vmatpush.bf16.msra.mxu0 %v826
      %1196 = vmatmul.bf16.gmra.mxu0 %v506
      %v1197 = vpop.f32.mrf.mxu0
      %v1198 = vadd.f32 %v1109, %v1197
      %v1199 = vpop.f32.mrf.mxu0
      %v1200 = vadd.f32 %v1111, %v1199
      %1201 = vmatmul.bf16.gmra.mxu0 %v508
      %v1202 = vpop.f32.mrf.mxu0
      %v1203 = vadd.f32 %v1114, %v1202
      %v1204 = vpop.f32.mrf.mxu0
      %v1205 = vadd.f32 %v1116, %v1204
      %1206 = vmatmul.bf16.gmra.mxu0 %v510
      %v1207 = vpop.f32.mrf.mxu0
      %v1208 = vadd.f32 %v1119, %v1207
      %v1209 = vpop.f32.mrf.mxu0
      %v1210 = vadd.f32 %v1121, %v1209
      %1211 = vmatmul.bf16.gmra.mxu0 %v512
      %v1212 = vpop.f32.mrf.mxu0
      %v1213 = vadd.f32 %v1124, %v1212
      %v1214 = vpop.f32.mrf.mxu0
      %v1215 = vadd.f32 %v1126, %v1214
      %1216 = vmatmul.bf16.gmra.mxu0 %v514
      %v1217 = vpop.f32.mrf.mxu0
      %v1218 = vadd.f32 %v1129, %v1217
      %v1219 = vpop.f32.mrf.mxu0
      %v1220 = vadd.f32 %v1131, %v1219
      %1221 = vmatmul.bf16.gmra.mxu0 %v516
      %v1222 = vpop.f32.mrf.mxu0
      %v1223 = vadd.f32 %v1134, %v1222
      %v1224 = vpop.f32.mrf.mxu0
      %v1225 = vadd.f32 %v1136, %v1224
      %1226 = vmatmul.bf16.gmra.mxu0 %v518
      %v1227 = vpop.f32.mrf.mxu0
      %v1228 = vadd.f32 %v1139, %v1227
      %v1229 = vpop.f32.mrf.mxu0
      %v1230 = vadd.f32 %v1141, %v1229
      %1231 = vmatmul.bf16.gmra.mxu0 %v520
      %v1232 = vpop.f32.mrf.mxu0
      %v1233 = vadd.f32 %v1144, %v1232
      %v1234 = vpop.f32.mrf.mxu0
      %v1235 = vadd.f32 %v1146, %v1234
      %1236 = vmatmul.bf16.gmra.mxu0 %v522
      %v1237 = vpop.f32.mrf.mxu0
      %v1238 = vadd.f32 %v1149, %v1237
      %v1239 = vpop.f32.mrf.mxu0
      %v1240 = vadd.f32 %v1151, %v1239
      %1241 = vmatmul.bf16.gmra.mxu0 %v524
      %v1242 = vpop.f32.mrf.mxu0
      %v1243 = vadd.f32 %v1154, %v1242
      %v1244 = vpop.f32.mrf.mxu0
      %v1245 = vadd.f32 %v1156, %v1244
      %1246 = vmatmul.bf16.gmra.mxu0 %v526
      %v1247 = vpop.f32.mrf.mxu0
      %v1248 = vadd.f32 %v1159, %v1247
      %v1249 = vpop.f32.mrf.mxu0
      %v1250 = vadd.f32 %v1161, %v1249
      %1251 = vmatmul.bf16.gmra.mxu0 %v528
      %v1252 = vpop.f32.mrf.mxu0
      %v1253 = vadd.f32 %v1164, %v1252
      %v1254 = vpop.f32.mrf.mxu0
      %v1255 = vadd.f32 %v1166, %v1254
      %1256 = vmatmul.bf16.gmra.mxu0 %v530
      %v1257 = vpop.f32.mrf.mxu0
      %v1258 = vadd.f32 %v1169, %v1257
      %v1259 = vpop.f32.mrf.mxu0
      %v1260 = vadd.f32 %v1171, %v1259
      %1261 = vmatmul.bf16.gmra.mxu0 %v532
      %v1262 = vpop.f32.mrf.mxu0
      %v1263 = vadd.f32 %v1174, %v1262
      %v1264 = vpop.f32.mrf.mxu0
      %v1265 = vadd.f32 %v1176, %v1264
      %1266 = vmatmul.bf16.gmra.mxu0 %v534
      %v1267 = vpop.f32.mrf.mxu0
      %v1268 = vadd.f32 %v1179, %v1267
      %v1269 = vpop.f32.mrf.mxu0
      %v1270 = vadd.f32 %v1181, %v1269
      %1271 = vmatmul.bf16.gmra.mxu0 %v536
      %v1272 = vpop.f32.mrf.mxu0
      %v1273 = vadd.f32 %v1184, %v1272
      %v1274 = vpop.f32.mrf.mxu0
      %v1275 = vadd.f32 %v1186, %v1274
      %1276 = vdwg.mxu0
      %1277 = vmatpush.bf16.msra.mxu0 %v823
      %1278 = vmatpush.bf16.msra.mxu0 %v819
      %1279 = vmatpush.bf16.msra.mxu0 %v815
      %1280 = vmatpush.bf16.msra.mxu0 %v811
      %1281 = vmatpush.bf16.msra.mxu0 %v807
      %1282 = vmatpush.bf16.msra.mxu0 %v803
      %1283 = vmatpush.bf16.msra.mxu0 %v799
      %1284 = vmatpush.bf16.msra.mxu0 %v795
      %1285 = vmatmul.bf16.gmra.mxu0 %v505
      %v1286 = vpop.f32.mrf.mxu0
      %v1287 = vadd.f32 0.0, %v1286
      %v1288 = vpop.f32.mrf.mxu0
      %v1289 = vadd.f32 0.0, %v1288
      %1290 = vmatmul.bf16.gmra.mxu0 %v507
      %v1291 = vpop.f32.mrf.mxu0
      %v1292 = vadd.f32 0.0, %v1291
      %v1293 = vpop.f32.mrf.mxu0
      %v1294 = vadd.f32 0.0, %v1293
      %1295 = vmatmul.bf16.gmra.mxu0 %v509
      %v1296 = vpop.f32.mrf.mxu0
      %v1297 = vadd.f32 0.0, %v1296
      %v1298 = vpop.f32.mrf.mxu0
      %v1299 = vadd.f32 0.0, %v1298
      %1300 = vmatmul.bf16.gmra.mxu0 %v511
      %v1301 = vpop.f32.mrf.mxu0
      %v1302 = vadd.f32 0.0, %v1301
      %v1303 = vpop.f32.mrf.mxu0
      %v1304 = vadd.f32 0.0, %v1303
      %1305 = vmatmul.bf16.gmra.mxu0 %v513
      %v1306 = vpop.f32.mrf.mxu0
      %v1307 = vadd.f32 0.0, %v1306
      %v1308 = vpop.f32.mrf.mxu0
      %v1309 = vadd.f32 0.0, %v1308
      %1310 = vmatmul.bf16.gmra.mxu0 %v515
      %v1311 = vpop.f32.mrf.mxu0
      %v1312 = vadd.f32 0.0, %v1311
      %v1313 = vpop.f32.mrf.mxu0
      %v1314 = vadd.f32 0.0, %v1313
      %1315 = vmatmul.bf16.gmra.mxu0 %v517
      %v1316 = vpop.f32.mrf.mxu0
      %v1317 = vadd.f32 0.0, %v1316
      %v1318 = vpop.f32.mrf.mxu0
      %v1319 = vadd.f32 0.0, %v1318
      %1320 = vmatmul.bf16.gmra.mxu0 %v519
      %v1321 = vpop.f32.mrf.mxu0
      %v1322 = vadd.f32 0.0, %v1321
      %v1323 = vpop.f32.mrf.mxu0
      %v1324 = vadd.f32 0.0, %v1323
      %1325 = vmatmul.bf16.gmra.mxu0 %v521
      %v1326 = vpop.f32.mrf.mxu0
      %v1327 = vadd.f32 0.0, %v1326
      %v1328 = vpop.f32.mrf.mxu0
      %v1329 = vadd.f32 0.0, %v1328
      %1330 = vmatmul.bf16.gmra.mxu0 %v523
      %v1331 = vpop.f32.mrf.mxu0
      %v1332 = vadd.f32 0.0, %v1331
      %v1333 = vpop.f32.mrf.mxu0
      %v1334 = vadd.f32 0.0, %v1333
      %1335 = vmatmul.bf16.gmra.mxu0 %v525
      %v1336 = vpop.f32.mrf.mxu0
      %v1337 = vadd.f32 0.0, %v1336
      %v1338 = vpop.f32.mrf.mxu0
      %v1339 = vadd.f32 0.0, %v1338
      %1340 = vmatmul.bf16.gmra.mxu0 %v527
      %v1341 = vpop.f32.mrf.mxu0
      %v1342 = vadd.f32 0.0, %v1341
      %v1343 = vpop.f32.mrf.mxu0
      %v1344 = vadd.f32 0.0, %v1343
      %1345 = vmatmul.bf16.gmra.mxu0 %v529
      %v1346 = vpop.f32.mrf.mxu0
      %v1347 = vadd.f32 0.0, %v1346
      %v1348 = vpop.f32.mrf.mxu0
      %v1349 = vadd.f32 0.0, %v1348
      %1350 = vmatmul.bf16.gmra.mxu0 %v531
      %v1351 = vpop.f32.mrf.mxu0
      %v1352 = vadd.f32 0.0, %v1351
      %v1353 = vpop.f32.mrf.mxu0
      %v1354 = vadd.f32 0.0, %v1353
      %1355 = vmatmul.bf16.gmra.mxu0 %v533
      %v1356 = vpop.f32.mrf.mxu0
      %v1357 = vadd.f32 0.0, %v1356
      %v1358 = vpop.f32.mrf.mxu0
      %v1359 = vadd.f32 0.0, %v1358
      %1360 = vmatmul.bf16.gmra.mxu0 %v535
      %v1361 = vpop.f32.mrf.mxu0
      %v1362 = vadd.f32 0.0, %v1361
      %v1363 = vpop.f32.mrf.mxu0
      %v1364 = vadd.f32 0.0, %v1363
      %1365 = vdwg.mxu0
      %1366 = vmatpush.bf16.msra.mxu0 %v855
      %1367 = vmatpush.bf16.msra.mxu0 %v851
      %1368 = vmatpush.bf16.msra.mxu0 %v847
      %1369 = vmatpush.bf16.msra.mxu0 %v843
      %1370 = vmatpush.bf16.msra.mxu0 %v839
      %1371 = vmatpush.bf16.msra.mxu0 %v835
      %1372 = vmatpush.bf16.msra.mxu0 %v831
      %1373 = vmatpush.bf16.msra.mxu0 %v827
      %1374 = vmatmul.bf16.gmra.mxu0 %v506
      %v1375 = vpop.f32.mrf.mxu0
      %v1376 = vadd.f32 %v1287, %v1375
      %v1377 = vpop.f32.mrf.mxu0
      %v1378 = vadd.f32 %v1289, %v1377
      %1379 = vmatmul.bf16.gmra.mxu0 %v508
      %v1380 = vpop.f32.mrf.mxu0
      %v1381 = vadd.f32 %v1292, %v1380
      %v1382 = vpop.f32.mrf.mxu0
      %v1383 = vadd.f32 %v1294, %v1382
      %1384 = vmatmul.bf16.gmra.mxu0 %v510
      %v1385 = vpop.f32.mrf.mxu0
      %v1386 = vadd.f32 %v1297, %v1385
      %v1387 = vpop.f32.mrf.mxu0
      %v1388 = vadd.f32 %v1299, %v1387
      %1389 = vmatmul.bf16.gmra.mxu0 %v512
      %v1390 = vpop.f32.mrf.mxu0
      %v1391 = vadd.f32 %v1302, %v1390
      %v1392 = vpop.f32.mrf.mxu0
      %v1393 = vadd.f32 %v1304, %v1392
      %1394 = vmatmul.bf16.gmra.mxu0 %v514
      %v1395 = vpop.f32.mrf.mxu0
      %v1396 = vadd.f32 %v1307, %v1395
      %v1397 = vpop.f32.mrf.mxu0
      %v1398 = vadd.f32 %v1309, %v1397
      %1399 = vmatmul.bf16.gmra.mxu0 %v516
      %v1400 = vpop.f32.mrf.mxu0
      %v1401 = vadd.f32 %v1312, %v1400
      %v1402 = vpop.f32.mrf.mxu0
      %v1403 = vadd.f32 %v1314, %v1402
      %1404 = vmatmul.bf16.gmra.mxu0 %v518
      %v1405 = vpop.f32.mrf.mxu0
      %v1406 = vadd.f32 %v1317, %v1405
      %v1407 = vpop.f32.mrf.mxu0
      %v1408 = vadd.f32 %v1319, %v1407
      %1409 = vmatmul.bf16.gmra.mxu0 %v520
      %v1410 = vpop.f32.mrf.mxu0
      %v1411 = vadd.f32 %v1322, %v1410
      %v1412 = vpop.f32.mrf.mxu0
      %v1413 = vadd.f32 %v1324, %v1412
      %1414 = vmatmul.bf16.gmra.mxu0 %v522
      %v1415 = vpop.f32.mrf.mxu0
      %v1416 = vadd.f32 %v1327, %v1415
      %v1417 = vpop.f32.mrf.mxu0
      %v1418 = vadd.f32 %v1329, %v1417
      %1419 = vmatmul.bf16.gmra.mxu0 %v524
      %v1420 = vpop.f32.mrf.mxu0
      %v1421 = vadd.f32 %v1332, %v1420
      %v1422 = vpop.f32.mrf.mxu0
      %v1423 = vadd.f32 %v1334, %v1422
      %1424 = vmatmul.bf16.gmra.mxu0 %v526
      %v1425 = vpop.f32.mrf.mxu0
      %v1426 = vadd.f32 %v1337, %v1425
      %v1427 = vpop.f32.mrf.mxu0
      %v1428 = vadd.f32 %v1339, %v1427
      %1429 = vmatmul.bf16.gmra.mxu0 %v528
      %v1430 = vpop.f32.mrf.mxu0
      %v1431 = vadd.f32 %v1342, %v1430
      %v1432 = vpop.f32.mrf.mxu0
      %v1433 = vadd.f32 %v1344, %v1432
      %1434 = vmatmul.bf16.gmra.mxu0 %v530
      %v1435 = vpop.f32.mrf.mxu0
      %v1436 = vadd.f32 %v1347, %v1435
      %v1437 = vpop.f32.mrf.mxu0
      %v1438 = vadd.f32 %v1349, %v1437
      %1439 = vmatmul.bf16.gmra.mxu0 %v532
      %v1440 = vpop.f32.mrf.mxu0
      %v1441 = vadd.f32 %v1352, %v1440
      %v1442 = vpop.f32.mrf.mxu0
      %v1443 = vadd.f32 %v1354, %v1442
      %1444 = vmatmul.bf16.gmra.mxu0 %v534
      %v1445 = vpop.f32.mrf.mxu0
      %v1446 = vadd.f32 %v1357, %v1445
      %v1447 = vpop.f32.mrf.mxu0
      %v1448 = vadd.f32 %v1359, %v1447
      %1449 = vmatmul.bf16.gmra.mxu0 %v536
      %v1450 = vpop.f32.mrf.mxu0
      %v1451 = vadd.f32 %v1362, %v1450
      %v1452 = vpop.f32.mrf.mxu0
      %v1453 = vadd.f32 %v1364, %v1452
      %1454 = vdwg.mxu0
      %1455 = vmatpush.bf16.msra.mxu0 %v824
      %1456 = vmatpush.bf16.msra.mxu0 %v820
      %1457 = vmatpush.bf16.msra.mxu0 %v816
      %1458 = vmatpush.bf16.msra.mxu0 %v812
      %1459 = vmatpush.bf16.msra.mxu0 %v808
      %1460 = vmatpush.bf16.msra.mxu0 %v804
      %1461 = vmatpush.bf16.msra.mxu0 %v800
      %1462 = vmatpush.bf16.msra.mxu0 %v796
      %1463 = vmatmul.bf16.gmra.mxu0 %v505
      %v1464 = vpop.f32.mrf.mxu0
      %v1465 = vadd.f32 0.0, %v1464
      %v1466 = vpop.f32.mrf.mxu0
      %v1467 = vadd.f32 0.0, %v1466
      %1468 = vmatmul.bf16.gmra.mxu0 %v507
      %v1469 = vpop.f32.mrf.mxu0
      %v1470 = vadd.f32 0.0, %v1469
      %v1471 = vpop.f32.mrf.mxu0
      %v1472 = vadd.f32 0.0, %v1471
      %1473 = vmatmul.bf16.gmra.mxu0 %v509
      %v1474 = vpop.f32.mrf.mxu0
      %v1475 = vadd.f32 0.0, %v1474
      %v1476 = vpop.f32.mrf.mxu0
      %v1477 = vadd.f32 0.0, %v1476
      %1478 = vmatmul.bf16.gmra.mxu0 %v511
      %v1479 = vpop.f32.mrf.mxu0
      %v1480 = vadd.f32 0.0, %v1479
      %v1481 = vpop.f32.mrf.mxu0
      %v1482 = vadd.f32 0.0, %v1481
      %1483 = vmatmul.bf16.gmra.mxu0 %v513
      %v1484 = vpop.f32.mrf.mxu0
      %v1485 = vadd.f32 0.0, %v1484
      %v1486 = vpop.f32.mrf.mxu0
      %v1487 = vadd.f32 0.0, %v1486
      %1488 = vmatmul.bf16.gmra.mxu0 %v515
      %v1489 = vpop.f32.mrf.mxu0
      %v1490 = vadd.f32 0.0, %v1489
      %v1491 = vpop.f32.mrf.mxu0
      %v1492 = vadd.f32 0.0, %v1491
      %1493 = vmatmul.bf16.gmra.mxu0 %v517
      %v1494 = vpop.f32.mrf.mxu0
      %v1495 = vadd.f32 0.0, %v1494
      %v1496 = vpop.f32.mrf.mxu0
      %v1497 = vadd.f32 0.0, %v1496
      %1498 = vmatmul.bf16.gmra.mxu0 %v519
      %v1499 = vpop.f32.mrf.mxu0
      %v1500 = vadd.f32 0.0, %v1499
      %v1501 = vpop.f32.mrf.mxu0
      %v1502 = vadd.f32 0.0, %v1501
      %1503 = vmatmul.bf16.gmra.mxu0 %v521
      %v1504 = vpop.f32.mrf.mxu0
      %v1505 = vadd.f32 0.0, %v1504
      %v1506 = vpop.f32.mrf.mxu0
      %v1507 = vadd.f32 0.0, %v1506
      %1508 = vmatmul.bf16.gmra.mxu0 %v523
      %v1509 = vpop.f32.mrf.mxu0
      %v1510 = vadd.f32 0.0, %v1509
      %v1511 = vpop.f32.mrf.mxu0
      %v1512 = vadd.f32 0.0, %v1511
      %1513 = vmatmul.bf16.gmra.mxu0 %v525
      %v1514 = vpop.f32.mrf.mxu0
      %v1515 = vadd.f32 0.0, %v1514
      %v1516 = vpop.f32.mrf.mxu0
      %v1517 = vadd.f32 0.0, %v1516
      %1518 = vmatmul.bf16.gmra.mxu0 %v527
      %v1519 = vpop.f32.mrf.mxu0
      %v1520 = vadd.f32 0.0, %v1519
      %v1521 = vpop.f32.mrf.mxu0
      %v1522 = vadd.f32 0.0, %v1521
      %1523 = vmatmul.bf16.gmra.mxu0 %v529
      %v1524 = vpop.f32.mrf.mxu0
      %v1525 = vadd.f32 0.0, %v1524
      %v1526 = vpop.f32.mrf.mxu0
      %v1527 = vadd.f32 0.0, %v1526
      %1528 = vmatmul.bf16.gmra.mxu0 %v531
      %v1529 = vpop.f32.mrf.mxu0
      %v1530 = vadd.f32 0.0, %v1529
      %v1531 = vpop.f32.mrf.mxu0
      %v1532 = vadd.f32 0.0, %v1531
      %1533 = vmatmul.bf16.gmra.mxu0 %v533
      %v1534 = vpop.f32.mrf.mxu0
      %v1535 = vadd.f32 0.0, %v1534
      %v1536 = vpop.f32.mrf.mxu0
      %v1537 = vadd.f32 0.0, %v1536
      %1538 = vmatmul.bf16.gmra.mxu0 %v535
      %v1539 = vpop.f32.mrf.mxu0
      %v1540 = vadd.f32 0.0, %v1539
      %v1541 = vpop.f32.mrf.mxu0
      %v1542 = vadd.f32 0.0, %v1541
      %1543 = vdwg.mxu0
      %1544 = vmatpush.bf16.msra.mxu0 %v856
      %1545 = vmatpush.bf16.msra.mxu0 %v852
      %1546 = vmatpush.bf16.msra.mxu0 %v848
      %1547 = vmatpush.bf16.msra.mxu0 %v844
      %1548 = vmatpush.bf16.msra.mxu0 %v840
      %1549 = vmatpush.bf16.msra.mxu0 %v836
      %1550 = vmatpush.bf16.msra.mxu0 %v832
      %1551 = vmatpush.bf16.msra.mxu0 %v828
      %1552 = vmatmul.bf16.gmra.mxu0 %v506
      %v1553 = vpop.f32.mrf.mxu0
      %v1554 = vadd.f32 %v1465, %v1553
      %v1555 = vpop.f32.mrf.mxu0
      %v1556 = vadd.f32 %v1467, %v1555
      %1557 = vmatmul.bf16.gmra.mxu0 %v508
      %v1558 = vpop.f32.mrf.mxu0
      %v1559 = vadd.f32 %v1470, %v1558
      %v1560 = vpop.f32.mrf.mxu0
      %v1561 = vadd.f32 %v1472, %v1560
      %1562 = vmatmul.bf16.gmra.mxu0 %v510
      %v1563 = vpop.f32.mrf.mxu0
      %v1564 = vadd.f32 %v1475, %v1563
      %v1565 = vpop.f32.mrf.mxu0
      %v1566 = vadd.f32 %v1477, %v1565
      %1567 = vmatmul.bf16.gmra.mxu0 %v512
      %v1568 = vpop.f32.mrf.mxu0
      %v1569 = vadd.f32 %v1480, %v1568
      %v1570 = vpop.f32.mrf.mxu0
      %v1571 = vadd.f32 %v1482, %v1570
      %1572 = vmatmul.bf16.gmra.mxu0 %v514
      %v1573 = vpop.f32.mrf.mxu0
      %v1574 = vadd.f32 %v1485, %v1573
      %v1575 = vpop.f32.mrf.mxu0
      %v1576 = vadd.f32 %v1487, %v1575
      %1577 = vmatmul.bf16.gmra.mxu0 %v516
      %v1578 = vpop.f32.mrf.mxu0
      %v1579 = vadd.f32 %v1490, %v1578
      %v1580 = vpop.f32.mrf.mxu0
      %v1581 = vadd.f32 %v1492, %v1580
      %1582 = vmatmul.bf16.gmra.mxu0 %v518
      %v1583 = vpop.f32.mrf.mxu0
      %v1584 = vadd.f32 %v1495, %v1583
      %v1585 = vpop.f32.mrf.mxu0
      %v1586 = vadd.f32 %v1497, %v1585
      %1587 = vmatmul.bf16.gmra.mxu0 %v520
      %v1588 = vpop.f32.mrf.mxu0
      %v1589 = vadd.f32 %v1500, %v1588
      %v1590 = vpop.f32.mrf.mxu0
      %v1591 = vadd.f32 %v1502, %v1590
      %1592 = vmatmul.bf16.gmra.mxu0 %v522
      %v1593 = vpop.f32.mrf.mxu0
      %v1594 = vadd.f32 %v1505, %v1593
      %v1595 = vpop.f32.mrf.mxu0
      %v1596 = vadd.f32 %v1507, %v1595
      %1597 = vmatmul.bf16.gmra.mxu0 %v524
      %v1598 = vpop.f32.mrf.mxu0
      %v1599 = vadd.f32 %v1510, %v1598
      %v1600 = vpop.f32.mrf.mxu0
      %v1601 = vadd.f32 %v1512, %v1600
      %1602 = vmatmul.bf16.gmra.mxu0 %v526
      %v1603 = vpop.f32.mrf.mxu0
      %v1604 = vadd.f32 %v1515, %v1603
      %v1605 = vpop.f32.mrf.mxu0
      %v1606 = vadd.f32 %v1517, %v1605
      %1607 = vmatmul.bf16.gmra.mxu0 %v528
      %v1608 = vpop.f32.mrf.mxu0
      %v1609 = vadd.f32 %v1520, %v1608
      %v1610 = vpop.f32.mrf.mxu0
      %v1611 = vadd.f32 %v1522, %v1610
      %1612 = vmatmul.bf16.gmra.mxu0 %v530
      %v1613 = vpop.f32.mrf.mxu0
      %v1614 = vadd.f32 %v1525, %v1613
      %v1615 = vpop.f32.mrf.mxu0
      %v1616 = vadd.f32 %v1527, %v1615
      %1617 = vmatmul.bf16.gmra.mxu0 %v532
      %v1618 = vpop.f32.mrf.mxu0
      %v1619 = vadd.f32 %v1530, %v1618
      %v1620 = vpop.f32.mrf.mxu0
      %v1621 = vadd.f32 %v1532, %v1620
      %1622 = vmatmul.bf16.gmra.mxu0 %v534
      %v1623 = vpop.f32.mrf.mxu0
      %v1624 = vadd.f32 %v1535, %v1623
      %v1625 = vpop.f32.mrf.mxu0
      %v1626 = vadd.f32 %v1537, %v1625
      %1627 = vmatmul.bf16.gmra.mxu0 %v536
      %v1628 = vpop.f32.mrf.mxu0
      %v1629 = vadd.f32 %v1540, %v1628
      %v1630 = vpop.f32.mrf.mxu0
      %v1631 = vadd.f32 %v1542, %v1630
      %1632 = vdwg.mxu0
      %v1633 = vld [vmem:[%s2] sm:$0x3]
      %v1635 = vperm.slane %v1633, 0
      %v1636 = vperm.slane %v1633, 1
      %v1639 = vadd.f32 %v1020, %v1635
      %v1640 = vadd.f32 %v1198, %v1636
      %v1641 = vadd.f32 %v1022, %v1635
      %v1642 = vadd.f32 %v1200, %v1636
      %v1643 = vadd.f32 %v1025, %v1635
      %v1644 = vadd.f32 %v1203, %v1636
      %v1645 = vadd.f32 %v1027, %v1635
      %v1646 = vadd.f32 %v1205, %v1636
      %v1647 = vadd.f32 %v1030, %v1635
      %v1648 = vadd.f32 %v1208, %v1636
      %v1649 = vadd.f32 %v1032, %v1635
      %v1650 = vadd.f32 %v1210, %v1636
      %v1651 = vadd.f32 %v1035, %v1635
      %v1652 = vadd.f32 %v1213, %v1636
      %v1653 = vadd.f32 %v1037, %v1635
      %v1654 = vadd.f32 %v1215, %v1636
      %v1655 = vadd.f32 %v1040, %v1635
      %v1656 = vadd.f32 %v1218, %v1636
      %v1657 = vadd.f32 %v1042, %v1635
      %v1658 = vadd.f32 %v1220, %v1636
      %v1659 = vadd.f32 %v1045, %v1635
      %v1660 = vadd.f32 %v1223, %v1636
      %v1661 = vadd.f32 %v1047, %v1635
      %v1662 = vadd.f32 %v1225, %v1636
      %v1663 = vadd.f32 %v1050, %v1635
      %v1664 = vadd.f32 %v1228, %v1636
      %v1665 = vadd.f32 %v1052, %v1635
      %v1666 = vadd.f32 %v1230, %v1636
      %v1667 = vadd.f32 %v1055, %v1635
      %v1668 = vadd.f32 %v1233, %v1636
      %v1669 = vadd.f32 %v1057, %v1635
      %v1670 = vadd.f32 %v1235, %v1636
      %v1671 = vadd.f32 %v1060, %v1635
      %v1672 = vadd.f32 %v1238, %v1636
      %v1673 = vadd.f32 %v1062, %v1635
      %v1674 = vadd.f32 %v1240, %v1636
      %v1675 = vadd.f32 %v1065, %v1635
      %v1676 = vadd.f32 %v1243, %v1636
      %v1677 = vadd.f32 %v1067, %v1635
      %v1678 = vadd.f32 %v1245, %v1636
      %v1679 = vadd.f32 %v1070, %v1635
      %v1680 = vadd.f32 %v1248, %v1636
      %v1681 = vadd.f32 %v1072, %v1635
      %v1682 = vadd.f32 %v1250, %v1636
      %v1683 = vadd.f32 %v1075, %v1635
      %v1684 = vadd.f32 %v1253, %v1636
      %v1685 = vadd.f32 %v1077, %v1635
      %v1686 = vadd.f32 %v1255, %v1636
      %v1687 = vadd.f32 %v1080, %v1635
      %v1688 = vadd.f32 %v1258, %v1636
      %v1689 = vadd.f32 %v1082, %v1635
      %v1690 = vadd.f32 %v1260, %v1636
      %v1691 = vadd.f32 %v1085, %v1635
      %v1692 = vadd.f32 %v1263, %v1636
      %v1693 = vadd.f32 %v1087, %v1635
      %v1694 = vadd.f32 %v1265, %v1636
      %v1695 = vadd.f32 %v1090, %v1635
      %v1696 = vadd.f32 %v1268, %v1636
      %v1697 = vadd.f32 %v1092, %v1635
      %v1698 = vadd.f32 %v1270, %v1636
      %v1699 = vadd.f32 %v1095, %v1635
      %v1700 = vadd.f32 %v1273, %v1636
      %v1701 = vadd.f32 %v1097, %v1635
      %v1702 = vadd.f32 %v1275, %v1636
      %v1703 = vpack.c.bf16 %v1640, %v1639
      %v1704 = vpack.c.bf16 %v1642, %v1641
      %v1705 = vpack.c.bf16 %v1644, %v1643
      %v1706 = vpack.c.bf16 %v1646, %v1645
      %v1707 = vpack.c.bf16 %v1648, %v1647
      %v1708 = vpack.c.bf16 %v1650, %v1649
      %v1709 = vpack.c.bf16 %v1652, %v1651
      %v1710 = vpack.c.bf16 %v1654, %v1653
      %v1711 = vpack.c.bf16 %v1656, %v1655
      %v1712 = vpack.c.bf16 %v1658, %v1657
      %v1713 = vpack.c.bf16 %v1660, %v1659
      %v1714 = vpack.c.bf16 %v1662, %v1661
      %v1715 = vpack.c.bf16 %v1664, %v1663
      %v1716 = vpack.c.bf16 %v1666, %v1665
      %v1717 = vpack.c.bf16 %v1668, %v1667
      %v1718 = vpack.c.bf16 %v1670, %v1669
      %v1719 = vpack.c.bf16 %v1672, %v1671
      %v1720 = vpack.c.bf16 %v1674, %v1673
      %v1721 = vpack.c.bf16 %v1676, %v1675
      %v1722 = vpack.c.bf16 %v1678, %v1677
      %v1723 = vpack.c.bf16 %v1680, %v1679
      %v1724 = vpack.c.bf16 %v1682, %v1681
      %v1725 = vpack.c.bf16 %v1684, %v1683
      %v1726 = vpack.c.bf16 %v1686, %v1685
      %v1727 = vpack.c.bf16 %v1688, %v1687
      %v1728 = vpack.c.bf16 %v1690, %v1689
      %v1729 = vpack.c.bf16 %v1692, %v1691
      %v1730 = vpack.c.bf16 %v1694, %v1693
      %v1731 = vpack.c.bf16 %v1696, %v1695
      %v1732 = vpack.c.bf16 %v1698, %v1697
      %v1733 = vpack.c.bf16 %v1700, %v1699
      %v1734 = vpack.c.bf16 %v1702, %v1701
      %1735 = vst [vmem:[%s298] sm:$0xff] %v1703
      %1736 = vst [vmem:[%s298 + $0x8] sm:$0xff] %v1704
      %1737 = vst [vmem:[%s298 + $0x10] sm:$0xff] %v1705
      %1738 = vst [vmem:[%s298 + $0x18] sm:$0xff] %v1706
      %1739 = vst [vmem:[%s298 + $0x20] sm:$0xff] %v1707
      %1740 = vst [vmem:[%s298 + $0x28] sm:$0xff] %v1708
      %1741 = vst [vmem:[%s298 + $0x30] sm:$0xff] %v1709
      %1742 = vst [vmem:[%s298 + $0x38] sm:$0xff] %v1710
      %1743 = vst [vmem:[%s298 + $0x40] sm:$0xff] %v1711
      %1744 = vst [vmem:[%s298 + $0x48] sm:$0xff] %v1712
      %1745 = vst [vmem:[%s298 + $0x50] sm:$0xff] %v1713
      %1746 = vst [vmem:[%s298 + $0x58] sm:$0xff] %v1714
      %1747 = vst [vmem:[%s298 + $0x60] sm:$0xff] %v1715
      %1748 = vst [vmem:[%s298 + $0x68] sm:$0xff] %v1716
      %1749 = vst [vmem:[%s298 + $0x70] sm:$0xff] %v1717
      %1750 = vst [vmem:[%s298 + $0x78] sm:$0xff] %v1718
      %1751 = vst [vmem:[%s298 + $0x80] sm:$0xff] %v1719
      %1752 = vst [vmem:[%s298 + $0x88] sm:$0xff] %v1720
      %1753 = vst [vmem:[%s298 + $0x90] sm:$0xff] %v1721
      %1754 = vst [vmem:[%s298 + $0x98] sm:$0xff] %v1722
      %1755 = vst [vmem:[%s298 + $0xa0] sm:$0xff] %v1723
      %1756 = vst [vmem:[%s298 + $0xa8] sm:$0xff] %v1724
      %1757 = vst [vmem:[%s298 + $0xb0] sm:$0xff] %v1725
      %1758 = vst [vmem:[%s298 + $0xb8] sm:$0xff] %v1726
      %1759 = vst [vmem:[%s298 + $0xc0] sm:$0xff] %v1727
      %1760 = vst [vmem:[%s298 + $0xc8] sm:$0xff] %v1728
      %1761 = vst [vmem:[%s298 + $0xd0] sm:$0xff] %v1729
      %1762 = vst [vmem:[%s298 + $0xd8] sm:$0xff] %v1730
      %1763 = vst [vmem:[%s298 + $0xe0] sm:$0xff] %v1731
      %1764 = vst [vmem:[%s298 + $0xe8] sm:$0xff] %v1732
      %1765 = vst [vmem:[%s298 + $0xf0] sm:$0xff] %v1733
      %1766 = vst [vmem:[%s298 + $0xf8] sm:$0xff] %v1734
      %v1767 = vpack.c.bf16 %v1554, %v1376
      %v1768 = vpack.c.bf16 %v1556, %v1378
      %v1769 = vpack.c.bf16 %v1559, %v1381
      %v1770 = vpack.c.bf16 %v1561, %v1383
      %v1771 = vpack.c.bf16 %v1564, %v1386
      %v1772 = vpack.c.bf16 %v1566, %v1388
      %v1773 = vpack.c.bf16 %v1569, %v1391
      %v1774 = vpack.c.bf16 %v1571, %v1393
      %v1775 = vpack.c.bf16 %v1574, %v1396
      %v1776 = vpack.c.bf16 %v1576, %v1398
      %v1777 = vpack.c.bf16 %v1579, %v1401
      %v1778 = vpack.c.bf16 %v1581, %v1403
      %v1779 = vpack.c.bf16 %v1584, %v1406
      %v1780 = vpack.c.bf16 %v1586, %v1408
      %v1781 = vpack.c.bf16 %v1589, %v1411
      %v1782 = vpack.c.bf16 %v1591, %v1413
      %v1783 = vpack.c.bf16 %v1594, %v1416
      %v1784 = vpack.c.bf16 %v1596, %v1418
      %v1785 = vpack.c.bf16 %v1599, %v1421
      %v1786 = vpack.c.bf16 %v1601, %v1423
      %v1787 = vpack.c.bf16 %v1604, %v1426
      %v1788 = vpack.c.bf16 %v1606, %v1428
      %v1789 = vpack.c.bf16 %v1609, %v1431
      %v1790 = vpack.c.bf16 %v1611, %v1433
      %v1791 = vpack.c.bf16 %v1614, %v1436
      %v1792 = vpack.c.bf16 %v1616, %v1438
      %v1793 = vpack.c.bf16 %v1619, %v1441
      %v1794 = vpack.c.bf16 %v1621, %v1443
      %v1795 = vpack.c.bf16 %v1624, %v1446
      %v1796 = vpack.c.bf16 %v1626, %v1448
      %v1797 = vpack.c.bf16 %v1629, %v1451
      %v1798 = vpack.c.bf16 %v1631, %v1453
      %1799 = vst [vmem:[%s305] sm:$0xff] %v1767
      %1800 = vst [vmem:[%s305 + $0x8] sm:$0xff] %v1768
      %1801 = vst [vmem:[%s305 + $0x10] sm:$0xff] %v1769
      %1802 = vst [vmem:[%s305 + $0x18] sm:$0xff] %v1770
      %1803 = vst [vmem:[%s305 + $0x20] sm:$0xff] %v1771
      %1804 = vst [vmem:[%s305 + $0x28] sm:$0xff] %v1772
      %1805 = vst [vmem:[%s305 + $0x30] sm:$0xff] %v1773
      %1806 = vst [vmem:[%s305 + $0x38] sm:$0xff] %v1774
      %1807 = vst [vmem:[%s305 + $0x40] sm:$0xff] %v1775
      %1808 = vst [vmem:[%s305 + $0x48] sm:$0xff] %v1776
      %1809 = vst [vmem:[%s305 + $0x50] sm:$0xff] %v1777
      %1810 = vst [vmem:[%s305 + $0x58] sm:$0xff] %v1778
      %1811 = vst [vmem:[%s305 + $0x60] sm:$0xff] %v1779
      %1812 = vst [vmem:[%s305 + $0x68] sm:$0xff] %v1780
      %1813 = vst [vmem:[%s305 + $0x70] sm:$0xff] %v1781
      %1814 = vst [vmem:[%s305 + $0x78] sm:$0xff] %v1782
      %1815 = vst [vmem:[%s305 + $0x80] sm:$0xff] %v1783
      %1816 = vst [vmem:[%s305 + $0x88] sm:$0xff] %v1784
      %1817 = vst [vmem:[%s305 + $0x90] sm:$0xff] %v1785
      %1818 = vst [vmem:[%s305 + $0x98] sm:$0xff] %v1786
      %1819 = vst [vmem:[%s305 + $0xa0] sm:$0xff] %v1787
      %1820 = vst [vmem:[%s305 + $0xa8] sm:$0xff] %v1788
      %1821 = vst [vmem:[%s305 + $0xb0] sm:$0xff] %v1789
      %1822 = vst [vmem:[%s305 + $0xb8] sm:$0xff] %v1790
      %1823 = vst [vmem:[%s305 + $0xc0] sm:$0xff] %v1791
      %1824 = vst [vmem:[%s305 + $0xc8] sm:$0xff] %v1792
      %1825 = vst [vmem:[%s305 + $0xd0] sm:$0xff] %v1793
      %1826 = vst [vmem:[%s305 + $0xd8] sm:$0xff] %v1794
      %1827 = vst [vmem:[%s305 + $0xe0] sm:$0xff] %v1795
      %1828 = vst [vmem:[%s305 + $0xe8] sm:$0xff] %v1796
      %1829 = vst [vmem:[%s305 + $0xf0] sm:$0xff] %v1797
      %1830 = vst [vmem:[%s305 + $0xf8] sm:$0xff] %v1798
      %v1831 = vmul.f32 %v377, %v377
      %v1832 = vmul.f32 %v378, %v378
      %v1833 = vmul.f32 %v379, %v379
      %v1834 = vmul.f32 %v380, %v380
      %v1835 = vmul.f32 %v381, %v381
      %v1836 = vmul.f32 %v382, %v382
      %v1837 = vmul.f32 %v383, %v383
      %v1838 = vmul.f32 %v384, %v384
      %v1839 = vmul.f32 %v385, %v385
      %v1840 = vmul.f32 %v386, %v386
      %v1841 = vmul.f32 %v387, %v387
      %v1842 = vmul.f32 %v388, %v388
      %v1843 = vmul.f32 %v389, %v389
      %v1844 = vmul.f32 %v390, %v390
      %v1845 = vmul.f32 %v391, %v391
      %v1846 = vmul.f32 %v392, %v392
      %v1847 = vmul.f32 %v393, %v393
      %v1848 = vmul.f32 %v394, %v394
      %v1849 = vmul.f32 %v395, %v395
      %v1850 = vmul.f32 %v396, %v396
      %v1851 = vmul.f32 %v397, %v397
      %v1852 = vmul.f32 %v398, %v398
      %v1853 = vmul.f32 %v399, %v399
      %v1854 = vmul.f32 %v400, %v400
      %v1855 = vmul.f32 %v401, %v401
      %v1856 = vmul.f32 %v402, %v402
      %v1857 = vmul.f32 %v403, %v403
      %v1858 = vmul.f32 %v404, %v404
      %v1859 = vmul.f32 %v405, %v405
      %v1860 = vmul.f32 %v406, %v406
      %v1861 = vmul.f32 %v407, %v407
      %v1862 = vmul.f32 %v408, %v408
      %v1863 = vld [vmem:[%s3] sm:$0xff]
      %v1864 = vld [vmem:[%s3 + $0x8] sm:$0xff]
      %v1865 = vld [vmem:[%s3 + $0x10] sm:$0xff]
      %v1866 = vld [vmem:[%s3 + $0x18] sm:$0xff]
      %v1867 = vld [vmem:[%s3 + $0x20] sm:$0xff]
      %v1868 = vld [vmem:[%s3 + $0x28] sm:$0xff]
      %v1869 = vld [vmem:[%s3 + $0x30] sm:$0xff]
      %v1870 = vld [vmem:[%s3 + $0x38] sm:$0xff]
      %v1871 = vld [vmem:[%s3 + $0x40] sm:$0xff]
      %v1872 = vld [vmem:[%s3 + $0x48] sm:$0xff]
      %v1873 = vld [vmem:[%s3 + $0x50] sm:$0xff]
      %v1874 = vld [vmem:[%s3 + $0x58] sm:$0xff]
      %v1875 = vld [vmem:[%s3 + $0x60] sm:$0xff]
      %v1876 = vld [vmem:[%s3 + $0x68] sm:$0xff]
      %v1877 = vld [vmem:[%s3 + $0x70] sm:$0xff]
      %v1878 = vld [vmem:[%s3 + $0x78] sm:$0xff]
      %v1879 = vld [vmem:[%s3 + $0x80] sm:$0xff]
      %v1880 = vld [vmem:[%s3 + $0x88] sm:$0xff]
      %v1881 = vld [vmem:[%s3 + $0x90] sm:$0xff]
      %v1882 = vld [vmem:[%s3 + $0x98] sm:$0xff]
      %v1883 = vld [vmem:[%s3 + $0xa0] sm:$0xff]
      %v1884 = vld [vmem:[%s3 + $0xa8] sm:$0xff]
      %v1885 = vld [vmem:[%s3 + $0xb0] sm:$0xff]
      %v1886 = vld [vmem:[%s3 + $0xb8] sm:$0xff]
      %v1887 = vld [vmem:[%s3 + $0xc0] sm:$0xff]
      %v1888 = vld [vmem:[%s3 + $0xc8] sm:$0xff]
      %v1889 = vld [vmem:[%s3 + $0xd0] sm:$0xff]
      %v1890 = vld [vmem:[%s3 + $0xd8] sm:$0xff]
      %v1891 = vld [vmem:[%s3 + $0xe0] sm:$0xff]
      %v1892 = vld [vmem:[%s3 + $0xe8] sm:$0xff]
      %v1893 = vld [vmem:[%s3 + $0xf0] sm:$0xff]
      %v1894 = vld [vmem:[%s3 + $0xf8] sm:$0xff]
      %v1895 = vld [vmem:[%s3 + $0x100] sm:$0xff]
      %v1896 = vld [vmem:[%s3 + $0x108] sm:$0xff]
      %v1897 = vld [vmem:[%s3 + $0x110] sm:$0xff]
      %v1898 = vld [vmem:[%s3 + $0x118] sm:$0xff]
      %v1899 = vld [vmem:[%s3 + $0x120] sm:$0xff]
      %v1900 = vld [vmem:[%s3 + $0x128] sm:$0xff]
      %v1901 = vld [vmem:[%s3 + $0x130] sm:$0xff]
      %v1902 = vld [vmem:[%s3 + $0x138] sm:$0xff]
      %v1903 = vld [vmem:[%s3 + $0x140] sm:$0xff]
      %v1904 = vld [vmem:[%s3 + $0x148] sm:$0xff]
      %v1905 = vld [vmem:[%s3 + $0x150] sm:$0xff]
      %v1906 = vld [vmem:[%s3 + $0x158] sm:$0xff]
      %v1907 = vld [vmem:[%s3 + $0x160] sm:$0xff]
      %v1908 = vld [vmem:[%s3 + $0x168] sm:$0xff]
      %v1909 = vld [vmem:[%s3 + $0x170] sm:$0xff]
      %v1910 = vld [vmem:[%s3 + $0x178] sm:$0xff]
      %1911 = vmatpush.msra.mxu0 %v1878
      %1912 = vmatpush.msra.mxu0 %v1877
      %1913 = vmatpush.msra.mxu0 %v1876
      %1914 = vmatpush.msra.mxu0 %v1875
      %1915 = vmatpush.msra.mxu0 %v1874
      %1916 = vmatpush.msra.mxu0 %v1873
      %1917 = vmatpush.msra.mxu0 %v1872
      %1918 = vmatpush.msra.mxu0 %v1871
      %1919 = vmatpush.msra.mxu0 %v1870
      %1920 = vmatpush.msra.mxu0 %v1869
      %1921 = vmatpush.msra.mxu0 %v1868
      %1922 = vmatpush.msra.mxu0 %v1867
      %1923 = vmatpush.msra.mxu0 %v1866
      %1924 = vmatpush.msra.mxu0 %v1865
      %1925 = vmatpush.msra.mxu0 %v1864
      %1926 = vmatpush.msra.mxu0 %v1863
      %1927 = vmatmul.f32.gmra.mxu0 %v1831
      %v1928 = vpop.f32.mrf.mxu0
      %v1929 = vadd.f32 0.0, %v1928
      %1930 = vmatmul.f32.gmra.mxu0 %v1832
      %v1931 = vpop.f32.mrf.mxu0
      %v1932 = vadd.f32 0.0, %v1931
      %1933 = vmatmul.f32.gmra.mxu0 %v1833
      %v1934 = vpop.f32.mrf.mxu0
      %v1935 = vadd.f32 0.0, %v1934
      %1936 = vmatmul.f32.gmra.mxu0 %v1834
      %v1937 = vpop.f32.mrf.mxu0
      %v1938 = vadd.f32 0.0, %v1937
      %1939 = vmatmul.f32.gmra.mxu0 %v1835
      %v1940 = vpop.f32.mrf.mxu0
      %v1941 = vadd.f32 0.0, %v1940
      %1942 = vmatmul.f32.gmra.mxu0 %v1836
      %v1943 = vpop.f32.mrf.mxu0
      %v1944 = vadd.f32 0.0, %v1943
      %1945 = vmatmul.f32.gmra.mxu0 %v1837
      %v1946 = vpop.f32.mrf.mxu0
      %v1947 = vadd.f32 0.0, %v1946
      %1948 = vmatmul.f32.gmra.mxu0 %v1838
      %v1949 = vpop.f32.mrf.mxu0
      %v1950 = vadd.f32 0.0, %v1949
      %1951 = vmatmul.f32.gmra.mxu0 %v1839
      %v1952 = vpop.f32.mrf.mxu0
      %v1953 = vadd.f32 0.0, %v1952
      %1954 = vmatmul.f32.gmra.mxu0 %v1840
      %v1955 = vpop.f32.mrf.mxu0
      %v1956 = vadd.f32 0.0, %v1955
      %1957 = vmatmul.f32.gmra.mxu0 %v1841
      %v1958 = vpop.f32.mrf.mxu0
      %v1959 = vadd.f32 0.0, %v1958
      %1960 = vmatmul.f32.gmra.mxu0 %v1842
      %v1961 = vpop.f32.mrf.mxu0
      %v1962 = vadd.f32 0.0, %v1961
      %1963 = vmatmul.f32.gmra.mxu0 %v1843
      %v1964 = vpop.f32.mrf.mxu0
      %v1965 = vadd.f32 0.0, %v1964
      %1966 = vmatmul.f32.gmra.mxu0 %v1844
      %v1967 = vpop.f32.mrf.mxu0
      %v1968 = vadd.f32 0.0, %v1967
      %1969 = vmatmul.f32.gmra.mxu0 %v1845
      %v1970 = vpop.f32.mrf.mxu0
      %v1971 = vadd.f32 0.0, %v1970
      %1972 = vmatmul.f32.gmra.mxu0 %v1846
      %v1973 = vpop.f32.mrf.mxu0
      %v1974 = vadd.f32 0.0, %v1973
      %1975 = vmatmul.f32.gmra.mxu0 %v1847
      %v1976 = vpop.f32.mrf.mxu0
      %v1977 = vadd.f32 0.0, %v1976
      %1978 = vmatmul.f32.gmra.mxu0 %v1848
      %v1979 = vpop.f32.mrf.mxu0
      %v1980 = vadd.f32 0.0, %v1979
      %1981 = vmatmul.f32.gmra.mxu0 %v1849
      %v1982 = vpop.f32.mrf.mxu0
      %v1983 = vadd.f32 0.0, %v1982
      %1984 = vmatmul.f32.gmra.mxu0 %v1850
      %v1985 = vpop.f32.mrf.mxu0
      %v1986 = vadd.f32 0.0, %v1985
      %1987 = vmatmul.f32.gmra.mxu0 %v1851
      %v1988 = vpop.f32.mrf.mxu0
      %v1989 = vadd.f32 0.0, %v1988
      %1990 = vmatmul.f32.gmra.mxu0 %v1852
      %v1991 = vpop.f32.mrf.mxu0
      %v1992 = vadd.f32 0.0, %v1991
      %1993 = vmatmul.f32.gmra.mxu0 %v1853
      %v1994 = vpop.f32.mrf.mxu0
      %v1995 = vadd.f32 0.0, %v1994
      %1996 = vmatmul.f32.gmra.mxu0 %v1854
      %v1997 = vpop.f32.mrf.mxu0
      %v1998 = vadd.f32 0.0, %v1997
      %1999 = vmatmul.f32.gmra.mxu0 %v1855
      %v2000 = vpop.f32.mrf.mxu0
      %v2001 = vadd.f32 0.0, %v2000
      %2002 = vmatmul.f32.gmra.mxu0 %v1856
      %v2003 = vpop.f32.mrf.mxu0
      %v2004 = vadd.f32 0.0, %v2003
      %2005 = vmatmul.f32.gmra.mxu0 %v1857
      %v2006 = vpop.f32.mrf.mxu0
      %v2007 = vadd.f32 0.0, %v2006
      %2008 = vmatmul.f32.gmra.mxu0 %v1858
      %v2009 = vpop.f32.mrf.mxu0
      %v2010 = vadd.f32 0.0, %v2009
      %2011 = vmatmul.f32.gmra.mxu0 %v1859
      %v2012 = vpop.f32.mrf.mxu0
      %v2013 = vadd.f32 0.0, %v2012
      %2014 = vmatmul.f32.gmra.mxu0 %v1860
      %v2015 = vpop.f32.mrf.mxu0
      %v2016 = vadd.f32 0.0, %v2015
      %2017 = vmatmul.f32.gmra.mxu0 %v1861
      %v2018 = vpop.f32.mrf.mxu0
      %v2019 = vadd.f32 0.0, %v2018
      %2020 = vmatmul.f32.gmra.mxu0 %v1862
      %v2021 = vpop.f32.mrf.mxu0
      %v2022 = vadd.f32 0.0, %v2021
      %2023 = vdwg.mxu0
      %2024 = vmatpush.msra.mxu0 %v1894
      %2025 = vmatpush.msra.mxu0 %v1893
      %2026 = vmatpush.msra.mxu0 %v1892
      %2027 = vmatpush.msra.mxu0 %v1891
      %2028 = vmatpush.msra.mxu0 %v1890
      %2029 = vmatpush.msra.mxu0 %v1889
      %2030 = vmatpush.msra.mxu0 %v1888
      %2031 = vmatpush.msra.mxu0 %v1887
      %2032 = vmatpush.msra.mxu0 %v1886
      %2033 = vmatpush.msra.mxu0 %v1885
      %2034 = vmatpush.msra.mxu0 %v1884
      %2035 = vmatpush.msra.mxu0 %v1883
      %2036 = vmatpush.msra.mxu0 %v1882
      %2037 = vmatpush.msra.mxu0 %v1881
      %2038 = vmatpush.msra.mxu0 %v1880
      %2039 = vmatpush.msra.mxu0 %v1879
      %2040 = vmatmul.f32.gmra.mxu0 %v377
      %v2041 = vpop.f32.mrf.mxu0
      %v2042 = vadd.f32 %v1929, %v2041
      %2043 = vmatmul.f32.gmra.mxu0 %v378
      %v2044 = vpop.f32.mrf.mxu0
      %v2045 = vadd.f32 %v1932, %v2044
      %2046 = vmatmul.f32.gmra.mxu0 %v379
      %v2047 = vpop.f32.mrf.mxu0
      %v2048 = vadd.f32 %v1935, %v2047
      %2049 = vmatmul.f32.gmra.mxu0 %v380
      %v2050 = vpop.f32.mrf.mxu0
      %v2051 = vadd.f32 %v1938, %v2050
      %2052 = vmatmul.f32.gmra.mxu0 %v381
      %v2053 = vpop.f32.mrf.mxu0
      %v2054 = vadd.f32 %v1941, %v2053
      %2055 = vmatmul.f32.gmra.mxu0 %v382
      %v2056 = vpop.f32.mrf.mxu0
      %v2057 = vadd.f32 %v1944, %v2056
      %2058 = vmatmul.f32.gmra.mxu0 %v383
      %v2059 = vpop.f32.mrf.mxu0
      %v2060 = vadd.f32 %v1947, %v2059
      %2061 = vmatmul.f32.gmra.mxu0 %v384
      %v2062 = vpop.f32.mrf.mxu0
      %v2063 = vadd.f32 %v1950, %v2062
      %2064 = vmatmul.f32.gmra.mxu0 %v385
      %v2065 = vpop.f32.mrf.mxu0
      %v2066 = vadd.f32 %v1953, %v2065
      %2067 = vmatmul.f32.gmra.mxu0 %v386
      %v2068 = vpop.f32.mrf.mxu0
      %v2069 = vadd.f32 %v1956, %v2068
      %2070 = vmatmul.f32.gmra.mxu0 %v387
      %v2071 = vpop.f32.mrf.mxu0
      %v2072 = vadd.f32 %v1959, %v2071
      %2073 = vmatmul.f32.gmra.mxu0 %v388
      %v2074 = vpop.f32.mrf.mxu0
      %v2075 = vadd.f32 %v1962, %v2074
      %2076 = vmatmul.f32.gmra.mxu0 %v389
      %v2077 = vpop.f32.mrf.mxu0
      %v2078 = vadd.f32 %v1965, %v2077
      %2079 = vmatmul.f32.gmra.mxu0 %v390
      %v2080 = vpop.f32.mrf.mxu0
      %v2081 = vadd.f32 %v1968, %v2080
      %2082 = vmatmul.f32.gmra.mxu0 %v391
      %v2083 = vpop.f32.mrf.mxu0
      %v2084 = vadd.f32 %v1971, %v2083
      %2085 = vmatmul.f32.gmra.mxu0 %v392
      %v2086 = vpop.f32.mrf.mxu0
      %v2087 = vadd.f32 %v1974, %v2086
      %2088 = vmatmul.f32.gmra.mxu0 %v393
      %v2089 = vpop.f32.mrf.mxu0
      %v2090 = vadd.f32 %v1977, %v2089
      %2091 = vmatmul.f32.gmra.mxu0 %v394
      %v2092 = vpop.f32.mrf.mxu0
      %v2093 = vadd.f32 %v1980, %v2092
      %2094 = vmatmul.f32.gmra.mxu0 %v395
      %v2095 = vpop.f32.mrf.mxu0
      %v2096 = vadd.f32 %v1983, %v2095
      %2097 = vmatmul.f32.gmra.mxu0 %v396
      %v2098 = vpop.f32.mrf.mxu0
      %v2099 = vadd.f32 %v1986, %v2098
      %2100 = vmatmul.f32.gmra.mxu0 %v397
      %v2101 = vpop.f32.mrf.mxu0
      %v2102 = vadd.f32 %v1989, %v2101
      %2103 = vmatmul.f32.gmra.mxu0 %v398
      %v2104 = vpop.f32.mrf.mxu0
      %v2105 = vadd.f32 %v1992, %v2104
      %2106 = vmatmul.f32.gmra.mxu0 %v399
      %v2107 = vpop.f32.mrf.mxu0
      %v2108 = vadd.f32 %v1995, %v2107
      %2109 = vmatmul.f32.gmra.mxu0 %v400
      %v2110 = vpop.f32.mrf.mxu0
      %v2111 = vadd.f32 %v1998, %v2110
      %2112 = vmatmul.f32.gmra.mxu0 %v401
      %v2113 = vpop.f32.mrf.mxu0
      %v2114 = vadd.f32 %v2001, %v2113
      %2115 = vmatmul.f32.gmra.mxu0 %v402
      %v2116 = vpop.f32.mrf.mxu0
      %v2117 = vadd.f32 %v2004, %v2116
      %2118 = vmatmul.f32.gmra.mxu0 %v403
      %v2119 = vpop.f32.mrf.mxu0
      %v2120 = vadd.f32 %v2007, %v2119
      %2121 = vmatmul.f32.gmra.mxu0 %v404
      %v2122 = vpop.f32.mrf.mxu0
      %v2123 = vadd.f32 %v2010, %v2122
      %2124 = vmatmul.f32.gmra.mxu0 %v405
      %v2125 = vpop.f32.mrf.mxu0
      %v2126 = vadd.f32 %v2013, %v2125
      %2127 = vmatmul.f32.gmra.mxu0 %v406
      %v2128 = vpop.f32.mrf.mxu0
      %v2129 = vadd.f32 %v2016, %v2128
      %2130 = vmatmul.f32.gmra.mxu0 %v407
      %v2131 = vpop.f32.mrf.mxu0
      %v2132 = vadd.f32 %v2019, %v2131
      %2133 = vmatmul.f32.gmra.mxu0 %v408
      %v2134 = vpop.f32.mrf.mxu0
      %v2135 = vadd.f32 %v2022, %v2134
      %2136 = vdwg.mxu0
      %2137 = vmatpush.msra.mxu0 %v1910
      %2138 = vmatpush.msra.mxu0 %v1909
      %2139 = vmatpush.msra.mxu0 %v1908
      %2140 = vmatpush.msra.mxu0 %v1907
      %2141 = vmatpush.msra.mxu0 %v1906
      %2142 = vmatpush.msra.mxu0 %v1905
      %2143 = vmatpush.msra.mxu0 %v1904
      %2144 = vmatpush.msra.mxu0 %v1903
      %2145 = vmatpush.msra.mxu0 %v1902
      %2146 = vmatpush.msra.mxu0 %v1901
      %2147 = vmatpush.msra.mxu0 %v1900
      %2148 = vmatpush.msra.mxu0 %v1899
      %2149 = vmatpush.msra.mxu0 %v1898
      %2150 = vmatpush.msra.mxu0 %v1897
      %2151 = vmatpush.msra.mxu0 %v1896
      %2152 = vmatpush.msra.mxu0 %v1895
      %2153 = vmatmul.f32.gmra.mxu0 %v473
      %v2154 = vpop.f32.mrf.mxu0
      %v2155 = vadd.f32 %v2042, %v2154
      %2156 = vmatmul.f32.gmra.mxu0 %v474
      %v2157 = vpop.f32.mrf.mxu0
      %v2158 = vadd.f32 %v2045, %v2157
      %2159 = vmatmul.f32.gmra.mxu0 %v475
      %v2160 = vpop.f32.mrf.mxu0
      %v2161 = vadd.f32 %v2048, %v2160
      %2162 = vmatmul.f32.gmra.mxu0 %v476
      %v2163 = vpop.f32.mrf.mxu0
      %v2164 = vadd.f32 %v2051, %v2163
      %2165 = vmatmul.f32.gmra.mxu0 %v477
      %v2166 = vpop.f32.mrf.mxu0
      %v2167 = vadd.f32 %v2054, %v2166
      %2168 = vmatmul.f32.gmra.mxu0 %v478
      %v2169 = vpop.f32.mrf.mxu0
      %v2170 = vadd.f32 %v2057, %v2169
      %2171 = vmatmul.f32.gmra.mxu0 %v479
      %v2172 = vpop.f32.mrf.mxu0
      %v2173 = vadd.f32 %v2060, %v2172
      %2174 = vmatmul.f32.gmra.mxu0 %v480
      %v2175 = vpop.f32.mrf.mxu0
      %v2176 = vadd.f32 %v2063, %v2175
      %2177 = vmatmul.f32.gmra.mxu0 %v481
      %v2178 = vpop.f32.mrf.mxu0
      %v2179 = vadd.f32 %v2066, %v2178
      %2180 = vmatmul.f32.gmra.mxu0 %v482
      %v2181 = vpop.f32.mrf.mxu0
      %v2182 = vadd.f32 %v2069, %v2181
      %2183 = vmatmul.f32.gmra.mxu0 %v483
      %v2184 = vpop.f32.mrf.mxu0
      %v2185 = vadd.f32 %v2072, %v2184
      %2186 = vmatmul.f32.gmra.mxu0 %v484
      %v2187 = vpop.f32.mrf.mxu0
      %v2188 = vadd.f32 %v2075, %v2187
      %2189 = vmatmul.f32.gmra.mxu0 %v485
      %v2190 = vpop.f32.mrf.mxu0
      %v2191 = vadd.f32 %v2078, %v2190
      %2192 = vmatmul.f32.gmra.mxu0 %v486
      %v2193 = vpop.f32.mrf.mxu0
      %v2194 = vadd.f32 %v2081, %v2193
      %2195 = vmatmul.f32.gmra.mxu0 %v487
      %v2196 = vpop.f32.mrf.mxu0
      %v2197 = vadd.f32 %v2084, %v2196
      %2198 = vmatmul.f32.gmra.mxu0 %v488
      %v2199 = vpop.f32.mrf.mxu0
      %v2200 = vadd.f32 %v2087, %v2199
      %2201 = vmatmul.f32.gmra.mxu0 %v489
      %v2202 = vpop.f32.mrf.mxu0
      %v2203 = vadd.f32 %v2090, %v2202
      %2204 = vmatmul.f32.gmra.mxu0 %v490
      %v2205 = vpop.f32.mrf.mxu0
      %v2206 = vadd.f32 %v2093, %v2205
      %2207 = vmatmul.f32.gmra.mxu0 %v491
      %v2208 = vpop.f32.mrf.mxu0
      %v2209 = vadd.f32 %v2096, %v2208
      %2210 = vmatmul.f32.gmra.mxu0 %v492
      %v2211 = vpop.f32.mrf.mxu0
      %v2212 = vadd.f32 %v2099, %v2211
      %2213 = vmatmul.f32.gmra.mxu0 %v493
      %v2214 = vpop.f32.mrf.mxu0
      %v2215 = vadd.f32 %v2102, %v2214
      %2216 = vmatmul.f32.gmra.mxu0 %v494
      %v2217 = vpop.f32.mrf.mxu0
      %v2218 = vadd.f32 %v2105, %v2217
      %2219 = vmatmul.f32.gmra.mxu0 %v495
      %v2220 = vpop.f32.mrf.mxu0
      %v2221 = vadd.f32 %v2108, %v2220
      %2222 = vmatmul.f32.gmra.mxu0 %v496
      %v2223 = vpop.f32.mrf.mxu0
      %v2224 = vadd.f32 %v2111, %v2223
      %2225 = vmatmul.f32.gmra.mxu0 %v497
      %v2226 = vpop.f32.mrf.mxu0
      %v2227 = vadd.f32 %v2114, %v2226
      %2228 = vmatmul.f32.gmra.mxu0 %v498
      %v2229 = vpop.f32.mrf.mxu0
      %v2230 = vadd.f32 %v2117, %v2229
      %2231 = vmatmul.f32.gmra.mxu0 %v499
      %v2232 = vpop.f32.mrf.mxu0
      %v2233 = vadd.f32 %v2120, %v2232
      %2234 = vmatmul.f32.gmra.mxu0 %v500
      %v2235 = vpop.f32.mrf.mxu0
      %v2236 = vadd.f32 %v2123, %v2235
      %2237 = vmatmul.f32.gmra.mxu0 %v501
      %v2238 = vpop.f32.mrf.mxu0
      %v2239 = vadd.f32 %v2126, %v2238
      %2240 = vmatmul.f32.gmra.mxu0 %v502
      %v2241 = vpop.f32.mrf.mxu0
      %v2242 = vadd.f32 %v2129, %v2241
      %2243 = vmatmul.f32.gmra.mxu0 %v503
      %v2244 = vpop.f32.mrf.mxu0
      %v2245 = vadd.f32 %v2132, %v2244
      %2246 = vmatmul.f32.gmra.mxu0 %v504
      %v2247 = vpop.f32.mrf.mxu0
      %v2248 = vadd.f32 %v2135, %v2247
      %2249 = vdwg.mxu0
      %v2250 = vld [vmem:[%s4] sm:$0x1]
      %v2251 = vmul.f32 %v2155, 0.5
      %v2252 = vmul.f32 %v2158, 0.5
      %v2253 = vmul.f32 %v2161, 0.5
      %v2254 = vmul.f32 %v2164, 0.5
      %v2255 = vmul.f32 %v2167, 0.5
      %v2256 = vmul.f32 %v2170, 0.5
      %v2257 = vmul.f32 %v2173, 0.5
      %v2258 = vmul.f32 %v2176, 0.5
      %v2259 = vmul.f32 %v2179, 0.5
      %v2260 = vmul.f32 %v2182, 0.5
      %v2261 = vmul.f32 %v2185, 0.5
      %v2262 = vmul.f32 %v2188, 0.5
      %v2263 = vmul.f32 %v2191, 0.5
      %v2264 = vmul.f32 %v2194, 0.5
      %v2265 = vmul.f32 %v2197, 0.5
      %v2266 = vmul.f32 %v2200, 0.5
      %v2267 = vmul.f32 %v2203, 0.5
      %v2268 = vmul.f32 %v2206, 0.5
      %v2269 = vmul.f32 %v2209, 0.5
      %v2270 = vmul.f32 %v2212, 0.5
      %v2271 = vmul.f32 %v2215, 0.5
      %v2272 = vmul.f32 %v2218, 0.5
      %v2273 = vmul.f32 %v2221, 0.5
      %v2274 = vmul.f32 %v2224, 0.5
      %v2275 = vmul.f32 %v2227, 0.5
      %v2276 = vmul.f32 %v2230, 0.5
      %v2277 = vmul.f32 %v2233, 0.5
      %v2278 = vmul.f32 %v2236, 0.5
      %v2279 = vmul.f32 %v2239, 0.5
      %v2280 = vmul.f32 %v2242, 0.5
      %v2281 = vmul.f32 %v2245, 0.5
      %v2282 = vmul.f32 %v2248, 0.5
      %v2284 = vperm.slane %v2250, 0
      %v2286 = vsub.f32 %v2284, %v2251
      %v2287 = vsub.f32 %v2284, %v2252
      %v2288 = vsub.f32 %v2284, %v2253
      %v2289 = vsub.f32 %v2284, %v2254
      %v2290 = vsub.f32 %v2284, %v2255
      %v2291 = vsub.f32 %v2284, %v2256
      %v2292 = vsub.f32 %v2284, %v2257
      %v2293 = vsub.f32 %v2284, %v2258
      %v2294 = vsub.f32 %v2284, %v2259
      %v2295 = vsub.f32 %v2284, %v2260
      %v2296 = vsub.f32 %v2284, %v2261
      %v2297 = vsub.f32 %v2284, %v2262
      %v2298 = vsub.f32 %v2284, %v2263
      %v2299 = vsub.f32 %v2284, %v2264
      %v2300 = vsub.f32 %v2284, %v2265
      %v2301 = vsub.f32 %v2284, %v2266
      %v2302 = vsub.f32 %v2284, %v2267
      %v2303 = vsub.f32 %v2284, %v2268
      %v2304 = vsub.f32 %v2284, %v2269
      %v2305 = vsub.f32 %v2284, %v2270
      %v2306 = vsub.f32 %v2284, %v2271
      %v2307 = vsub.f32 %v2284, %v2272
      %v2308 = vsub.f32 %v2284, %v2273
      %v2309 = vsub.f32 %v2284, %v2274
      %v2310 = vsub.f32 %v2284, %v2275
      %v2311 = vsub.f32 %v2284, %v2276
      %v2312 = vsub.f32 %v2284, %v2277
      %v2313 = vsub.f32 %v2284, %v2278
      %v2314 = vsub.f32 %v2284, %v2279
      %v2315 = vsub.f32 %v2284, %v2280
      %v2316 = vsub.f32 %v2284, %v2281
      %v2317 = vsub.f32 %v2284, %v2282
      %v2318 = vlaneseq
      %v2319 = vand.u32 %v2318, 127
      %vm2320 = vcmp.lt.s32.totalorder %v2319, 5
      %v2321 = vsel %vm2320, %v2286, -1e+30
      %v2322 = vsel %vm2320, %v2287, -1e+30
      %v2323 = vsel %vm2320, %v2288, -1e+30
      %v2324 = vsel %vm2320, %v2289, -1e+30
      %v2325 = vsel %vm2320, %v2290, -1e+30
      %v2326 = vsel %vm2320, %v2291, -1e+30
      %v2327 = vsel %vm2320, %v2292, -1e+30
      %v2328 = vsel %vm2320, %v2293, -1e+30
      %v2329 = vsel %vm2320, %v2294, -1e+30
      %v2330 = vsel %vm2320, %v2295, -1e+30
      %v2331 = vsel %vm2320, %v2296, -1e+30
      %v2332 = vsel %vm2320, %v2297, -1e+30
      %v2333 = vsel %vm2320, %v2298, -1e+30
      %v2334 = vsel %vm2320, %v2299, -1e+30
      %v2335 = vsel %vm2320, %v2300, -1e+30
      %v2336 = vsel %vm2320, %v2301, -1e+30
      %v2337 = vsel %vm2320, %v2302, -1e+30
      %v2338 = vsel %vm2320, %v2303, -1e+30
      %v2339 = vsel %vm2320, %v2304, -1e+30
      %v2340 = vsel %vm2320, %v2305, -1e+30
      %v2341 = vsel %vm2320, %v2306, -1e+30
      %v2342 = vsel %vm2320, %v2307, -1e+30
      %v2343 = vsel %vm2320, %v2308, -1e+30
      %v2344 = vsel %vm2320, %v2309, -1e+30
      %v2345 = vsel %vm2320, %v2310, -1e+30
      %v2346 = vsel %vm2320, %v2311, -1e+30
      %v2347 = vsel %vm2320, %v2312, -1e+30
      %v2348 = vsel %vm2320, %v2313, -1e+30
      %v2349 = vsel %vm2320, %v2314, -1e+30
      %v2350 = vsel %vm2320, %v2315, -1e+30
      %v2351 = vsel %vm2320, %v2316, -1e+30
      %v2352 = vsel %vm2320, %v2317, -1e+30
      %2353 = vmax.xlane.f32.xlu0 %v2321
      %v2354 = vpop.xlane.xlu0 %2353
      %2355 = vmax.xlane.f32.xlu0 %v2322
      %v2356 = vpop.xlane.xlu0 %2355
      %2357 = vmax.xlane.f32.xlu0 %v2323
      %v2358 = vpop.xlane.xlu0 %2357
      %2359 = vmax.xlane.f32.xlu0 %v2324
      %v2360 = vpop.xlane.xlu0 %2359
      %2361 = vmax.xlane.f32.xlu0 %v2325
      %v2362 = vpop.xlane.xlu0 %2361
      %2363 = vmax.xlane.f32.xlu0 %v2326
      %v2364 = vpop.xlane.xlu0 %2363
      %2365 = vmax.xlane.f32.xlu0 %v2327
      %v2366 = vpop.xlane.xlu0 %2365
      %2367 = vmax.xlane.f32.xlu0 %v2328
      %v2368 = vpop.xlane.xlu0 %2367
      %2369 = vmax.xlane.f32.xlu0 %v2329
      %v2370 = vpop.xlane.xlu0 %2369
      %2371 = vmax.xlane.f32.xlu0 %v2330
      %v2372 = vpop.xlane.xlu0 %2371
      %2373 = vmax.xlane.f32.xlu0 %v2331
      %v2374 = vpop.xlane.xlu0 %2373
      %2375 = vmax.xlane.f32.xlu0 %v2332
      %v2376 = vpop.xlane.xlu0 %2375
      %2377 = vmax.xlane.f32.xlu0 %v2333
      %v2378 = vpop.xlane.xlu0 %2377
      %2379 = vmax.xlane.f32.xlu0 %v2334
      %v2380 = vpop.xlane.xlu0 %2379
      %2381 = vmax.xlane.f32.xlu0 %v2335
      %v2382 = vpop.xlane.xlu0 %2381
      %2383 = vmax.xlane.f32.xlu0 %v2336
      %v2384 = vpop.xlane.xlu0 %2383
      %2385 = vmax.xlane.f32.xlu0 %v2337
      %v2386 = vpop.xlane.xlu0 %2385
      %2387 = vmax.xlane.f32.xlu0 %v2338
      %v2388 = vpop.xlane.xlu0 %2387
      %2389 = vmax.xlane.f32.xlu0 %v2339
      %v2390 = vpop.xlane.xlu0 %2389
      %2391 = vmax.xlane.f32.xlu0 %v2340
      %v2392 = vpop.xlane.xlu0 %2391
      %2393 = vmax.xlane.f32.xlu0 %v2341
      %v2394 = vpop.xlane.xlu0 %2393
      %2395 = vmax.xlane.f32.xlu0 %v2342
      %v2396 = vpop.xlane.xlu0 %2395
      %2397 = vmax.xlane.f32.xlu0 %v2343
      %v2398 = vpop.xlane.xlu0 %2397
      %2399 = vmax.xlane.f32.xlu0 %v2344
      %v2400 = vpop.xlane.xlu0 %2399
      %2401 = vmax.xlane.f32.xlu0 %v2345
      %v2402 = vpop.xlane.xlu0 %2401
      %2403 = vmax.xlane.f32.xlu0 %v2346
      %v2404 = vpop.xlane.xlu0 %2403
      %2405 = vmax.xlane.f32.xlu0 %v2347
      %v2406 = vpop.xlane.xlu0 %2405
      %2407 = vmax.xlane.f32.xlu0 %v2348
      %v2408 = vpop.xlane.xlu0 %2407
      %2409 = vmax.xlane.f32.xlu0 %v2349
      %v2410 = vpop.xlane.xlu0 %2409
      %2411 = vmax.xlane.f32.xlu0 %v2350
      %v2412 = vpop.xlane.xlu0 %2411
      %2413 = vmax.xlane.f32.xlu0 %v2351
      %v2414 = vpop.xlane.xlu0 %2413
      %2415 = vmax.xlane.f32.xlu0 %v2352
      %v2416 = vpop.xlane.xlu0 %2415
      %v2417 = vsub.f32 %v2321, %v2354
      %v2418 = vsub.f32 %v2322, %v2356
      %v2419 = vsub.f32 %v2323, %v2358
      %v2420 = vsub.f32 %v2324, %v2360
      %v2421 = vsub.f32 %v2325, %v2362
      %v2422 = vsub.f32 %v2326, %v2364
      %v2423 = vsub.f32 %v2327, %v2366
      %v2424 = vsub.f32 %v2328, %v2368
      %v2425 = vsub.f32 %v2329, %v2370
      %v2426 = vsub.f32 %v2330, %v2372
      %v2427 = vsub.f32 %v2331, %v2374
      %v2428 = vsub.f32 %v2332, %v2376
      %v2429 = vsub.f32 %v2333, %v2378
      %v2430 = vsub.f32 %v2334, %v2380
      %v2431 = vsub.f32 %v2335, %v2382
      %v2432 = vsub.f32 %v2336, %v2384
      %v2433 = vsub.f32 %v2337, %v2386
      %v2434 = vsub.f32 %v2338, %v2388
      %v2435 = vsub.f32 %v2339, %v2390
      %v2436 = vsub.f32 %v2340, %v2392
      %v2437 = vsub.f32 %v2341, %v2394
      %v2438 = vsub.f32 %v2342, %v2396
      %v2439 = vsub.f32 %v2343, %v2398
      %v2440 = vsub.f32 %v2344, %v2400
      %v2441 = vsub.f32 %v2345, %v2402
      %v2442 = vsub.f32 %v2346, %v2404
      %v2443 = vsub.f32 %v2347, %v2406
      %v2444 = vsub.f32 %v2348, %v2408
      %v2445 = vsub.f32 %v2349, %v2410
      %v2446 = vsub.f32 %v2350, %v2412
      %v2447 = vsub.f32 %v2351, %v2414
      %v2448 = vsub.f32 %v2352, %v2416
      %v2449 = vmul.f32 %v2417, 1.442695
      %v2450 = vpow.pop %v2449
      %v2451 = vmul.f32 %v2418, 1.442695
      %v2452 = vpow.pop %v2451
      %v2453 = vmul.f32 %v2419, 1.442695
      %v2454 = vpow.pop %v2453
      %v2455 = vmul.f32 %v2420, 1.442695
      %v2456 = vpow.pop %v2455
      %v2457 = vmul.f32 %v2421, 1.442695
      %v2458 = vpow.pop %v2457
      %v2459 = vmul.f32 %v2422, 1.442695
      %v2460 = vpow.pop %v2459
      %v2461 = vmul.f32 %v2423, 1.442695
      %v2462 = vpow.pop %v2461
      %v2463 = vmul.f32 %v2424, 1.442695
      %v2464 = vpow.pop %v2463
      %v2465 = vmul.f32 %v2425, 1.442695
      %v2466 = vpow.pop %v2465
      %v2467 = vmul.f32 %v2426, 1.442695
      %v2468 = vpow.pop %v2467
      %v2469 = vmul.f32 %v2427, 1.442695
      %v2470 = vpow.pop %v2469
      %v2471 = vmul.f32 %v2428, 1.442695
      %v2472 = vpow.pop %v2471
      %v2473 = vmul.f32 %v2429, 1.442695
      %v2474 = vpow.pop %v2473
      %v2475 = vmul.f32 %v2430, 1.442695
      %v2476 = vpow.pop %v2475
      %v2477 = vmul.f32 %v2431, 1.442695
      %v2478 = vpow.pop %v2477
      %v2479 = vmul.f32 %v2432, 1.442695
      %v2480 = vpow.pop %v2479
      %v2481 = vmul.f32 %v2433, 1.442695
      %v2482 = vpow.pop %v2481
      %v2483 = vmul.f32 %v2434, 1.442695
      %v2484 = vpow.pop %v2483
      %v2485 = vmul.f32 %v2435, 1.442695
      %v2486 = vpow.pop %v2485
      %v2487 = vmul.f32 %v2436, 1.442695
      %v2488 = vpow.pop %v2487
      %v2489 = vmul.f32 %v2437, 1.442695
      %v2490 = vpow.pop %v2489
      %v2491 = vmul.f32 %v2438, 1.442695
      %v2492 = vpow.pop %v2491
      %v2493 = vmul.f32 %v2439, 1.442695
      %v2494 = vpow.pop %v2493
      %v2495 = vmul.f32 %v2440, 1.442695
      %v2496 = vpow.pop %v2495
      %v2497 = vmul.f32 %v2441, 1.442695
      %v2498 = vpow.pop %v2497
      %v2499 = vmul.f32 %v2442, 1.442695
      %v2500 = vpow.pop %v2499
      %v2501 = vmul.f32 %v2443, 1.442695
      %v2502 = vpow.pop %v2501
      %v2503 = vmul.f32 %v2444, 1.442695
      %v2504 = vpow.pop %v2503
      %v2505 = vmul.f32 %v2445, 1.442695
      %v2506 = vpow.pop %v2505
      %v2507 = vmul.f32 %v2446, 1.442695
      %v2508 = vpow.pop %v2507
      %v2509 = vmul.f32 %v2447, 1.442695
      %v2510 = vpow.pop %v2509
      %v2511 = vmul.f32 %v2448, 1.442695
      %v2512 = vpow.pop %v2511
      %v2513 = vsel %vm2320, %v2450, 0.0
      %v2514 = vsel %vm2320, %v2452, 0.0
      %v2515 = vsel %vm2320, %v2454, 0.0
      %v2516 = vsel %vm2320, %v2456, 0.0
      %v2517 = vsel %vm2320, %v2458, 0.0
      %v2518 = vsel %vm2320, %v2460, 0.0
      %v2519 = vsel %vm2320, %v2462, 0.0
      %v2520 = vsel %vm2320, %v2464, 0.0
      %v2521 = vsel %vm2320, %v2466, 0.0
      %v2522 = vsel %vm2320, %v2468, 0.0
      %v2523 = vsel %vm2320, %v2470, 0.0
      %v2524 = vsel %vm2320, %v2472, 0.0
      %v2525 = vsel %vm2320, %v2474, 0.0
      %v2526 = vsel %vm2320, %v2476, 0.0
      %v2527 = vsel %vm2320, %v2478, 0.0
      %v2528 = vsel %vm2320, %v2480, 0.0
      %v2529 = vsel %vm2320, %v2482, 0.0
      %v2530 = vsel %vm2320, %v2484, 0.0
      %v2531 = vsel %vm2320, %v2486, 0.0
      %v2532 = vsel %vm2320, %v2488, 0.0
      %v2533 = vsel %vm2320, %v2490, 0.0
      %v2534 = vsel %vm2320, %v2492, 0.0
      %v2535 = vsel %vm2320, %v2494, 0.0
      %v2536 = vsel %vm2320, %v2496, 0.0
      %v2537 = vsel %vm2320, %v2498, 0.0
      %v2538 = vsel %vm2320, %v2500, 0.0
      %v2539 = vsel %vm2320, %v2502, 0.0
      %v2540 = vsel %vm2320, %v2504, 0.0
      %v2541 = vsel %vm2320, %v2506, 0.0
      %v2542 = vsel %vm2320, %v2508, 0.0
      %v2543 = vsel %vm2320, %v2510, 0.0
      %v2544 = vsel %vm2320, %v2512, 0.0
      %2545 = vadd.xlane.f32.xlu0 %v2513
      %v2546 = vpop.xlane.xlu0 %2545
      %2547 = vadd.xlane.f32.xlu0 %v2514
      %v2548 = vpop.xlane.xlu0 %2547
      %2549 = vadd.xlane.f32.xlu0 %v2515
      %v2550 = vpop.xlane.xlu0 %2549
      %2551 = vadd.xlane.f32.xlu0 %v2516
      %v2552 = vpop.xlane.xlu0 %2551
      %2553 = vadd.xlane.f32.xlu0 %v2517
      %v2554 = vpop.xlane.xlu0 %2553
      %2555 = vadd.xlane.f32.xlu0 %v2518
      %v2556 = vpop.xlane.xlu0 %2555
      %2557 = vadd.xlane.f32.xlu0 %v2519
      %v2558 = vpop.xlane.xlu0 %2557
      %2559 = vadd.xlane.f32.xlu0 %v2520
      %v2560 = vpop.xlane.xlu0 %2559
      %2561 = vadd.xlane.f32.xlu0 %v2521
      %v2562 = vpop.xlane.xlu0 %2561
      %2563 = vadd.xlane.f32.xlu0 %v2522
      %v2564 = vpop.xlane.xlu0 %2563
      %2565 = vadd.xlane.f32.xlu0 %v2523
      %v2566 = vpop.xlane.xlu0 %2565
      %2567 = vadd.xlane.f32.xlu0 %v2524
      %v2568 = vpop.xlane.xlu0 %2567
      %2569 = vadd.xlane.f32.xlu0 %v2525
      %v2570 = vpop.xlane.xlu0 %2569
      %2571 = vadd.xlane.f32.xlu0 %v2526
      %v2572 = vpop.xlane.xlu0 %2571
      %2573 = vadd.xlane.f32.xlu0 %v2527
      %v2574 = vpop.xlane.xlu0 %2573
      %2575 = vadd.xlane.f32.xlu0 %v2528
      %v2576 = vpop.xlane.xlu0 %2575
      %2577 = vadd.xlane.f32.xlu0 %v2529
      %v2578 = vpop.xlane.xlu0 %2577
      %2579 = vadd.xlane.f32.xlu0 %v2530
      %v2580 = vpop.xlane.xlu0 %2579
      %2581 = vadd.xlane.f32.xlu0 %v2531
      %v2582 = vpop.xlane.xlu0 %2581
      %2583 = vadd.xlane.f32.xlu0 %v2532
      %v2584 = vpop.xlane.xlu0 %2583
      %2585 = vadd.xlane.f32.xlu0 %v2533
      %v2586 = vpop.xlane.xlu0 %2585
      %2587 = vadd.xlane.f32.xlu0 %v2534
      %v2588 = vpop.xlane.xlu0 %2587
      %2589 = vadd.xlane.f32.xlu0 %v2535
      %v2590 = vpop.xlane.xlu0 %2589
      %2591 = vadd.xlane.f32.xlu0 %v2536
      %v2592 = vpop.xlane.xlu0 %2591
      %2593 = vadd.xlane.f32.xlu0 %v2537
      %v2594 = vpop.xlane.xlu0 %2593
      %2595 = vadd.xlane.f32.xlu0 %v2538
      %v2596 = vpop.xlane.xlu0 %2595
      %2597 = vadd.xlane.f32.xlu0 %v2539
      %v2598 = vpop.xlane.xlu0 %2597
      %2599 = vadd.xlane.f32.xlu0 %v2540
      %v2600 = vpop.xlane.xlu0 %2599
      %2601 = vadd.xlane.f32.xlu0 %v2541
      %v2602 = vpop.xlane.xlu0 %2601
      %2603 = vadd.xlane.f32.xlu0 %v2542
      %v2604 = vpop.xlane.xlu0 %2603
      %2605 = vadd.xlane.f32.xlu0 %v2543
      %v2606 = vpop.xlane.xlu0 %2605
      %2607 = vadd.xlane.f32.xlu0 %v2544
      %v2608 = vpop.xlane.xlu0 %2607
      %v2609 = vrcp.pop %v2546
      %v2610 = vmul.f32 %v2546, %v2609
      %v2611 = vsub.f32 1.0, %v2610
      %v2612 = vmul.f32 %v2609, %v2611
      %v2613 = vadd.f32 %v2609, %v2612
      %vm2614 = vweird.f32 %v2546
      %vm2615 = vweird.f32 %v2609
      %vm2616 = vmor %vm2614, %vm2615
      %v2617 = vsel %vm2616, %v2609, %v2613
      %v2618 = vand.u32 2147483647, %v2546
      %vm2619 = vcmp.eq.f32.partialorder %v2618, 8.507059e+37
      %v2620 = vand.u32 %v2546, 2147483648
      %v2621 = vor.u32 1.1754944e-38, %v2620
      %v2622 = vsel %vm2619, %v2621, %v2617
      %v2623 = vmul.f32 %v2513, %v2622
      %v2624 = vrcp.pop %v2548
      %v2625 = vmul.f32 %v2548, %v2624
      %v2626 = vsub.f32 1.0, %v2625
      %v2627 = vmul.f32 %v2624, %v2626
      %v2628 = vadd.f32 %v2624, %v2627
      %vm2629 = vweird.f32 %v2548
      %vm2630 = vweird.f32 %v2624
      %vm2631 = vmor %vm2629, %vm2630
      %v2632 = vsel %vm2631, %v2624, %v2628
      %v2633 = vand.u32 2147483647, %v2548
      %vm2634 = vcmp.eq.f32.partialorder %v2633, 8.507059e+37
      %v2635 = vand.u32 %v2548, 2147483648
      %v2636 = vor.u32 1.1754944e-38, %v2635
      %v2637 = vsel %vm2634, %v2636, %v2632
      %v2638 = vmul.f32 %v2514, %v2637
      %v2639 = vrcp.pop %v2550
      %v2640 = vmul.f32 %v2550, %v2639
      %v2641 = vsub.f32 1.0, %v2640
      %v2642 = vmul.f32 %v2639, %v2641
      %v2643 = vadd.f32 %v2639, %v2642
      %vm2644 = vweird.f32 %v2550
      %vm2645 = vweird.f32 %v2639
      %vm2646 = vmor %vm2644, %vm2645
      %v2647 = vsel %vm2646, %v2639, %v2643
      %v2648 = vand.u32 2147483647, %v2550
      %vm2649 = vcmp.eq.f32.partialorder %v2648, 8.507059e+37
      %v2650 = vand.u32 %v2550, 2147483648
      %v2651 = vor.u32 1.1754944e-38, %v2650
      %v2652 = vsel %vm2649, %v2651, %v2647
      %v2653 = vmul.f32 %v2515, %v2652
      %v2654 = vrcp.pop %v2552
      %v2655 = vmul.f32 %v2552, %v2654
      %v2656 = vsub.f32 1.0, %v2655
      %v2657 = vmul.f32 %v2654, %v2656
      %v2658 = vadd.f32 %v2654, %v2657
      %vm2659 = vweird.f32 %v2552
      %vm2660 = vweird.f32 %v2654
      %vm2661 = vmor %vm2659, %vm2660
      %v2662 = vsel %vm2661, %v2654, %v2658
      %v2663 = vand.u32 2147483647, %v2552
      %vm2664 = vcmp.eq.f32.partialorder %v2663, 8.507059e+37
      %v2665 = vand.u32 %v2552, 2147483648
      %v2666 = vor.u32 1.1754944e-38, %v2665
      %v2667 = vsel %vm2664, %v2666, %v2662
      %v2668 = vmul.f32 %v2516, %v2667
      %v2669 = vrcp.pop %v2554
      %v2670 = vmul.f32 %v2554, %v2669
      %v2671 = vsub.f32 1.0, %v2670
      %v2672 = vmul.f32 %v2669, %v2671
      %v2673 = vadd.f32 %v2669, %v2672
      %vm2674 = vweird.f32 %v2554
      %vm2675 = vweird.f32 %v2669
      %vm2676 = vmor %vm2674, %vm2675
      %v2677 = vsel %vm2676, %v2669, %v2673
      %v2678 = vand.u32 2147483647, %v2554
      %vm2679 = vcmp.eq.f32.partialorder %v2678, 8.507059e+37
      %v2680 = vand.u32 %v2554, 2147483648
      %v2681 = vor.u32 1.1754944e-38, %v2680
      %v2682 = vsel %vm2679, %v2681, %v2677
      %v2683 = vmul.f32 %v2517, %v2682
      %v2684 = vrcp.pop %v2556
      %v2685 = vmul.f32 %v2556, %v2684
      %v2686 = vsub.f32 1.0, %v2685
      %v2687 = vmul.f32 %v2684, %v2686
      %v2688 = vadd.f32 %v2684, %v2687
      %vm2689 = vweird.f32 %v2556
      %vm2690 = vweird.f32 %v2684
      %vm2691 = vmor %vm2689, %vm2690
      %v2692 = vsel %vm2691, %v2684, %v2688
      %v2693 = vand.u32 2147483647, %v2556
      %vm2694 = vcmp.eq.f32.partialorder %v2693, 8.507059e+37
      %v2695 = vand.u32 %v2556, 2147483648
      %v2696 = vor.u32 1.1754944e-38, %v2695
      %v2697 = vsel %vm2694, %v2696, %v2692
      %v2698 = vmul.f32 %v2518, %v2697
      %v2699 = vrcp.pop %v2558
      %v2700 = vmul.f32 %v2558, %v2699
      %v2701 = vsub.f32 1.0, %v2700
      %v2702 = vmul.f32 %v2699, %v2701
      %v2703 = vadd.f32 %v2699, %v2702
      %vm2704 = vweird.f32 %v2558
      %vm2705 = vweird.f32 %v2699
      %vm2706 = vmor %vm2704, %vm2705
      %v2707 = vsel %vm2706, %v2699, %v2703
      %v2708 = vand.u32 2147483647, %v2558
      %vm2709 = vcmp.eq.f32.partialorder %v2708, 8.507059e+37
      %v2710 = vand.u32 %v2558, 2147483648
      %v2711 = vor.u32 1.1754944e-38, %v2710
      %v2712 = vsel %vm2709, %v2711, %v2707
      %v2713 = vmul.f32 %v2519, %v2712
      %v2714 = vrcp.pop %v2560
      %v2715 = vmul.f32 %v2560, %v2714
      %v2716 = vsub.f32 1.0, %v2715
      %v2717 = vmul.f32 %v2714, %v2716
      %v2718 = vadd.f32 %v2714, %v2717
      %vm2719 = vweird.f32 %v2560
      %vm2720 = vweird.f32 %v2714
      %vm2721 = vmor %vm2719, %vm2720
      %v2722 = vsel %vm2721, %v2714, %v2718
      %v2723 = vand.u32 2147483647, %v2560
      %vm2724 = vcmp.eq.f32.partialorder %v2723, 8.507059e+37
      %v2725 = vand.u32 %v2560, 2147483648
      %v2726 = vor.u32 1.1754944e-38, %v2725
      %v2727 = vsel %vm2724, %v2726, %v2722
      %v2728 = vmul.f32 %v2520, %v2727
      %v2729 = vrcp.pop %v2562
      %v2730 = vmul.f32 %v2562, %v2729
      %v2731 = vsub.f32 1.0, %v2730
      %v2732 = vmul.f32 %v2729, %v2731
      %v2733 = vadd.f32 %v2729, %v2732
      %vm2734 = vweird.f32 %v2562
      %vm2735 = vweird.f32 %v2729
      %vm2736 = vmor %vm2734, %vm2735
      %v2737 = vsel %vm2736, %v2729, %v2733
      %v2738 = vand.u32 2147483647, %v2562
      %vm2739 = vcmp.eq.f32.partialorder %v2738, 8.507059e+37
      %v2740 = vand.u32 %v2562, 2147483648
      %v2741 = vor.u32 1.1754944e-38, %v2740
      %v2742 = vsel %vm2739, %v2741, %v2737
      %v2743 = vmul.f32 %v2521, %v2742
      %v2744 = vrcp.pop %v2564
      %v2745 = vmul.f32 %v2564, %v2744
      %v2746 = vsub.f32 1.0, %v2745
      %v2747 = vmul.f32 %v2744, %v2746
      %v2748 = vadd.f32 %v2744, %v2747
      %vm2749 = vweird.f32 %v2564
      %vm2750 = vweird.f32 %v2744
      %vm2751 = vmor %vm2749, %vm2750
      %v2752 = vsel %vm2751, %v2744, %v2748
      %v2753 = vand.u32 2147483647, %v2564
      %vm2754 = vcmp.eq.f32.partialorder %v2753, 8.507059e+37
      %v2755 = vand.u32 %v2564, 2147483648
      %v2756 = vor.u32 1.1754944e-38, %v2755
      %v2757 = vsel %vm2754, %v2756, %v2752
      %v2758 = vmul.f32 %v2522, %v2757
      %v2759 = vrcp.pop %v2566
      %v2760 = vmul.f32 %v2566, %v2759
      %v2761 = vsub.f32 1.0, %v2760
      %v2762 = vmul.f32 %v2759, %v2761
      %v2763 = vadd.f32 %v2759, %v2762
      %vm2764 = vweird.f32 %v2566
      %vm2765 = vweird.f32 %v2759
      %vm2766 = vmor %vm2764, %vm2765
      %v2767 = vsel %vm2766, %v2759, %v2763
      %v2768 = vand.u32 2147483647, %v2566
      %vm2769 = vcmp.eq.f32.partialorder %v2768, 8.507059e+37
      %v2770 = vand.u32 %v2566, 2147483648
      %v2771 = vor.u32 1.1754944e-38, %v2770
      %v2772 = vsel %vm2769, %v2771, %v2767
      %v2773 = vmul.f32 %v2523, %v2772
      %v2774 = vrcp.pop %v2568
      %v2775 = vmul.f32 %v2568, %v2774
      %v2776 = vsub.f32 1.0, %v2775
      %v2777 = vmul.f32 %v2774, %v2776
      %v2778 = vadd.f32 %v2774, %v2777
      %vm2779 = vweird.f32 %v2568
      %vm2780 = vweird.f32 %v2774
      %vm2781 = vmor %vm2779, %vm2780
      %v2782 = vsel %vm2781, %v2774, %v2778
      %v2783 = vand.u32 2147483647, %v2568
      %vm2784 = vcmp.eq.f32.partialorder %v2783, 8.507059e+37
      %v2785 = vand.u32 %v2568, 2147483648
      %v2786 = vor.u32 1.1754944e-38, %v2785
      %v2787 = vsel %vm2784, %v2786, %v2782
      %v2788 = vmul.f32 %v2524, %v2787
      %v2789 = vrcp.pop %v2570
      %v2790 = vmul.f32 %v2570, %v2789
      %v2791 = vsub.f32 1.0, %v2790
      %v2792 = vmul.f32 %v2789, %v2791
      %v2793 = vadd.f32 %v2789, %v2792
      %vm2794 = vweird.f32 %v2570
      %vm2795 = vweird.f32 %v2789
      %vm2796 = vmor %vm2794, %vm2795
      %v2797 = vsel %vm2796, %v2789, %v2793
      %v2798 = vand.u32 2147483647, %v2570
      %vm2799 = vcmp.eq.f32.partialorder %v2798, 8.507059e+37
      %v2800 = vand.u32 %v2570, 2147483648
      %v2801 = vor.u32 1.1754944e-38, %v2800
      %v2802 = vsel %vm2799, %v2801, %v2797
      %v2803 = vmul.f32 %v2525, %v2802
      %v2804 = vrcp.pop %v2572
      %v2805 = vmul.f32 %v2572, %v2804
      %v2806 = vsub.f32 1.0, %v2805
      %v2807 = vmul.f32 %v2804, %v2806
      %v2808 = vadd.f32 %v2804, %v2807
      %vm2809 = vweird.f32 %v2572
      %vm2810 = vweird.f32 %v2804
      %vm2811 = vmor %vm2809, %vm2810
      %v2812 = vsel %vm2811, %v2804, %v2808
      %v2813 = vand.u32 2147483647, %v2572
      %vm2814 = vcmp.eq.f32.partialorder %v2813, 8.507059e+37
      %v2815 = vand.u32 %v2572, 2147483648
      %v2816 = vor.u32 1.1754944e-38, %v2815
      %v2817 = vsel %vm2814, %v2816, %v2812
      %v2818 = vmul.f32 %v2526, %v2817
      %v2819 = vrcp.pop %v2574
      %v2820 = vmul.f32 %v2574, %v2819
      %v2821 = vsub.f32 1.0, %v2820
      %v2822 = vmul.f32 %v2819, %v2821
      %v2823 = vadd.f32 %v2819, %v2822
      %vm2824 = vweird.f32 %v2574
      %vm2825 = vweird.f32 %v2819
      %vm2826 = vmor %vm2824, %vm2825
      %v2827 = vsel %vm2826, %v2819, %v2823
      %v2828 = vand.u32 2147483647, %v2574
      %vm2829 = vcmp.eq.f32.partialorder %v2828, 8.507059e+37
      %v2830 = vand.u32 %v2574, 2147483648
      %v2831 = vor.u32 1.1754944e-38, %v2830
      %v2832 = vsel %vm2829, %v2831, %v2827
      %v2833 = vmul.f32 %v2527, %v2832
      %v2834 = vrcp.pop %v2576
      %v2835 = vmul.f32 %v2576, %v2834
      %v2836 = vsub.f32 1.0, %v2835
      %v2837 = vmul.f32 %v2834, %v2836
      %v2838 = vadd.f32 %v2834, %v2837
      %vm2839 = vweird.f32 %v2576
      %vm2840 = vweird.f32 %v2834
      %vm2841 = vmor %vm2839, %vm2840
      %v2842 = vsel %vm2841, %v2834, %v2838
      %v2843 = vand.u32 2147483647, %v2576
      %vm2844 = vcmp.eq.f32.partialorder %v2843, 8.507059e+37
      %v2845 = vand.u32 %v2576, 2147483648
      %v2846 = vor.u32 1.1754944e-38, %v2845
      %v2847 = vsel %vm2844, %v2846, %v2842
      %v2848 = vmul.f32 %v2528, %v2847
      %v2849 = vrcp.pop %v2578
      %v2850 = vmul.f32 %v2578, %v2849
      %v2851 = vsub.f32 1.0, %v2850
      %v2852 = vmul.f32 %v2849, %v2851
      %v2853 = vadd.f32 %v2849, %v2852
      %vm2854 = vweird.f32 %v2578
      %vm2855 = vweird.f32 %v2849
      %vm2856 = vmor %vm2854, %vm2855
      %v2857 = vsel %vm2856, %v2849, %v2853
      %v2858 = vand.u32 2147483647, %v2578
      %vm2859 = vcmp.eq.f32.partialorder %v2858, 8.507059e+37
      %v2860 = vand.u32 %v2578, 2147483648
      %v2861 = vor.u32 1.1754944e-38, %v2860
      %v2862 = vsel %vm2859, %v2861, %v2857
      %v2863 = vmul.f32 %v2529, %v2862
      %v2864 = vrcp.pop %v2580
      %v2865 = vmul.f32 %v2580, %v2864
      %v2866 = vsub.f32 1.0, %v2865
      %v2867 = vmul.f32 %v2864, %v2866
      %v2868 = vadd.f32 %v2864, %v2867
      %vm2869 = vweird.f32 %v2580
      %vm2870 = vweird.f32 %v2864
      %vm2871 = vmor %vm2869, %vm2870
      %v2872 = vsel %vm2871, %v2864, %v2868
      %v2873 = vand.u32 2147483647, %v2580
      %vm2874 = vcmp.eq.f32.partialorder %v2873, 8.507059e+37
      %v2875 = vand.u32 %v2580, 2147483648
      %v2876 = vor.u32 1.1754944e-38, %v2875
      %v2877 = vsel %vm2874, %v2876, %v2872
      %v2878 = vmul.f32 %v2530, %v2877
      %v2879 = vrcp.pop %v2582
      %v2880 = vmul.f32 %v2582, %v2879
      %v2881 = vsub.f32 1.0, %v2880
      %v2882 = vmul.f32 %v2879, %v2881
      %v2883 = vadd.f32 %v2879, %v2882
      %vm2884 = vweird.f32 %v2582
      %vm2885 = vweird.f32 %v2879
      %vm2886 = vmor %vm2884, %vm2885
      %v2887 = vsel %vm2886, %v2879, %v2883
      %v2888 = vand.u32 2147483647, %v2582
      %vm2889 = vcmp.eq.f32.partialorder %v2888, 8.507059e+37
      %v2890 = vand.u32 %v2582, 2147483648
      %v2891 = vor.u32 1.1754944e-38, %v2890
      %v2892 = vsel %vm2889, %v2891, %v2887
      %v2893 = vmul.f32 %v2531, %v2892
      %v2894 = vrcp.pop %v2584
      %v2895 = vmul.f32 %v2584, %v2894
      %v2896 = vsub.f32 1.0, %v2895
      %v2897 = vmul.f32 %v2894, %v2896
      %v2898 = vadd.f32 %v2894, %v2897
      %vm2899 = vweird.f32 %v2584
      %vm2900 = vweird.f32 %v2894
      %vm2901 = vmor %vm2899, %vm2900
      %v2902 = vsel %vm2901, %v2894, %v2898
      %v2903 = vand.u32 2147483647, %v2584
      %vm2904 = vcmp.eq.f32.partialorder %v2903, 8.507059e+37
      %v2905 = vand.u32 %v2584, 2147483648
      %v2906 = vor.u32 1.1754944e-38, %v2905
      %v2907 = vsel %vm2904, %v2906, %v2902
      %v2908 = vmul.f32 %v2532, %v2907
      %v2909 = vrcp.pop %v2586
      %v2910 = vmul.f32 %v2586, %v2909
      %v2911 = vsub.f32 1.0, %v2910
      %v2912 = vmul.f32 %v2909, %v2911
      %v2913 = vadd.f32 %v2909, %v2912
      %vm2914 = vweird.f32 %v2586
      %vm2915 = vweird.f32 %v2909
      %vm2916 = vmor %vm2914, %vm2915
      %v2917 = vsel %vm2916, %v2909, %v2913
      %v2918 = vand.u32 2147483647, %v2586
      %vm2919 = vcmp.eq.f32.partialorder %v2918, 8.507059e+37
      %v2920 = vand.u32 %v2586, 2147483648
      %v2921 = vor.u32 1.1754944e-38, %v2920
      %v2922 = vsel %vm2919, %v2921, %v2917
      %v2923 = vmul.f32 %v2533, %v2922
      %v2924 = vrcp.pop %v2588
      %v2925 = vmul.f32 %v2588, %v2924
      %v2926 = vsub.f32 1.0, %v2925
      %v2927 = vmul.f32 %v2924, %v2926
      %v2928 = vadd.f32 %v2924, %v2927
      %vm2929 = vweird.f32 %v2588
      %vm2930 = vweird.f32 %v2924
      %vm2931 = vmor %vm2929, %vm2930
      %v2932 = vsel %vm2931, %v2924, %v2928
      %v2933 = vand.u32 2147483647, %v2588
      %vm2934 = vcmp.eq.f32.partialorder %v2933, 8.507059e+37
      %v2935 = vand.u32 %v2588, 2147483648
      %v2936 = vor.u32 1.1754944e-38, %v2935
      %v2937 = vsel %vm2934, %v2936, %v2932
      %v2938 = vmul.f32 %v2534, %v2937
      %v2939 = vrcp.pop %v2590
      %v2940 = vmul.f32 %v2590, %v2939
      %v2941 = vsub.f32 1.0, %v2940
      %v2942 = vmul.f32 %v2939, %v2941
      %v2943 = vadd.f32 %v2939, %v2942
      %vm2944 = vweird.f32 %v2590
      %vm2945 = vweird.f32 %v2939
      %vm2946 = vmor %vm2944, %vm2945
      %v2947 = vsel %vm2946, %v2939, %v2943
      %v2948 = vand.u32 2147483647, %v2590
      %vm2949 = vcmp.eq.f32.partialorder %v2948, 8.507059e+37
      %v2950 = vand.u32 %v2590, 2147483648
      %v2951 = vor.u32 1.1754944e-38, %v2950
      %v2952 = vsel %vm2949, %v2951, %v2947
      %v2953 = vmul.f32 %v2535, %v2952
      %v2954 = vrcp.pop %v2592
      %v2955 = vmul.f32 %v2592, %v2954
      %v2956 = vsub.f32 1.0, %v2955
      %v2957 = vmul.f32 %v2954, %v2956
      %v2958 = vadd.f32 %v2954, %v2957
      %vm2959 = vweird.f32 %v2592
      %vm2960 = vweird.f32 %v2954
      %vm2961 = vmor %vm2959, %vm2960
      %v2962 = vsel %vm2961, %v2954, %v2958
      %v2963 = vand.u32 2147483647, %v2592
      %vm2964 = vcmp.eq.f32.partialorder %v2963, 8.507059e+37
      %v2965 = vand.u32 %v2592, 2147483648
      %v2966 = vor.u32 1.1754944e-38, %v2965
      %v2967 = vsel %vm2964, %v2966, %v2962
      %v2968 = vmul.f32 %v2536, %v2967
      %v2969 = vrcp.pop %v2594
      %v2970 = vmul.f32 %v2594, %v2969
      %v2971 = vsub.f32 1.0, %v2970
      %v2972 = vmul.f32 %v2969, %v2971
      %v2973 = vadd.f32 %v2969, %v2972
      %vm2974 = vweird.f32 %v2594
      %vm2975 = vweird.f32 %v2969
      %vm2976 = vmor %vm2974, %vm2975
      %v2977 = vsel %vm2976, %v2969, %v2973
      %v2978 = vand.u32 2147483647, %v2594
      %vm2979 = vcmp.eq.f32.partialorder %v2978, 8.507059e+37
      %v2980 = vand.u32 %v2594, 2147483648
      %v2981 = vor.u32 1.1754944e-38, %v2980
      %v2982 = vsel %vm2979, %v2981, %v2977
      %v2983 = vmul.f32 %v2537, %v2982
      %v2984 = vrcp.pop %v2596
      %v2985 = vmul.f32 %v2596, %v2984
      %v2986 = vsub.f32 1.0, %v2985
      %v2987 = vmul.f32 %v2984, %v2986
      %v2988 = vadd.f32 %v2984, %v2987
      %vm2989 = vweird.f32 %v2596
      %vm2990 = vweird.f32 %v2984
      %vm2991 = vmor %vm2989, %vm2990
      %v2992 = vsel %vm2991, %v2984, %v2988
      %v2993 = vand.u32 2147483647, %v2596
      %vm2994 = vcmp.eq.f32.partialorder %v2993, 8.507059e+37
      %v2995 = vand.u32 %v2596, 2147483648
      %v2996 = vor.u32 1.1754944e-38, %v2995
      %v2997 = vsel %vm2994, %v2996, %v2992
      %v2998 = vmul.f32 %v2538, %v2997
      %v2999 = vrcp.pop %v2598
      %v3000 = vmul.f32 %v2598, %v2999
      %v3001 = vsub.f32 1.0, %v3000
      %v3002 = vmul.f32 %v2999, %v3001
      %v3003 = vadd.f32 %v2999, %v3002
      %vm3004 = vweird.f32 %v2598
      %vm3005 = vweird.f32 %v2999
      %vm3006 = vmor %vm3004, %vm3005
      %v3007 = vsel %vm3006, %v2999, %v3003
      %v3008 = vand.u32 2147483647, %v2598
      %vm3009 = vcmp.eq.f32.partialorder %v3008, 8.507059e+37
      %v3010 = vand.u32 %v2598, 2147483648
      %v3011 = vor.u32 1.1754944e-38, %v3010
      %v3012 = vsel %vm3009, %v3011, %v3007
      %v3013 = vmul.f32 %v2539, %v3012
      %v3014 = vrcp.pop %v2600
      %v3015 = vmul.f32 %v2600, %v3014
      %v3016 = vsub.f32 1.0, %v3015
      %v3017 = vmul.f32 %v3014, %v3016
      %v3018 = vadd.f32 %v3014, %v3017
      %vm3019 = vweird.f32 %v2600
      %vm3020 = vweird.f32 %v3014
      %vm3021 = vmor %vm3019, %vm3020
      %v3022 = vsel %vm3021, %v3014, %v3018
      %v3023 = vand.u32 2147483647, %v2600
      %vm3024 = vcmp.eq.f32.partialorder %v3023, 8.507059e+37
      %v3025 = vand.u32 %v2600, 2147483648
      %v3026 = vor.u32 1.1754944e-38, %v3025
      %v3027 = vsel %vm3024, %v3026, %v3022
      %v3028 = vmul.f32 %v2540, %v3027
      %v3029 = vrcp.pop %v2602
      %v3030 = vmul.f32 %v2602, %v3029
      %v3031 = vsub.f32 1.0, %v3030
      %v3032 = vmul.f32 %v3029, %v3031
      %v3033 = vadd.f32 %v3029, %v3032
      %vm3034 = vweird.f32 %v2602
      %vm3035 = vweird.f32 %v3029
      %vm3036 = vmor %vm3034, %vm3035
      %v3037 = vsel %vm3036, %v3029, %v3033
      %v3038 = vand.u32 2147483647, %v2602
      %vm3039 = vcmp.eq.f32.partialorder %v3038, 8.507059e+37
      %v3040 = vand.u32 %v2602, 2147483648
      %v3041 = vor.u32 1.1754944e-38, %v3040
      %v3042 = vsel %vm3039, %v3041, %v3037
      %v3043 = vmul.f32 %v2541, %v3042
      %v3044 = vrcp.pop %v2604
      %v3045 = vmul.f32 %v2604, %v3044
      %v3046 = vsub.f32 1.0, %v3045
      %v3047 = vmul.f32 %v3044, %v3046
      %v3048 = vadd.f32 %v3044, %v3047
      %vm3049 = vweird.f32 %v2604
      %vm3050 = vweird.f32 %v3044
      %vm3051 = vmor %vm3049, %vm3050
      %v3052 = vsel %vm3051, %v3044, %v3048
      %v3053 = vand.u32 2147483647, %v2604
      %vm3054 = vcmp.eq.f32.partialorder %v3053, 8.507059e+37
      %v3055 = vand.u32 %v2604, 2147483648
      %v3056 = vor.u32 1.1754944e-38, %v3055
      %v3057 = vsel %vm3054, %v3056, %v3052
      %v3058 = vmul.f32 %v2542, %v3057
      %v3059 = vrcp.pop %v2606
      %v3060 = vmul.f32 %v2606, %v3059
      %v3061 = vsub.f32 1.0, %v3060
      %v3062 = vmul.f32 %v3059, %v3061
      %v3063 = vadd.f32 %v3059, %v3062
      %vm3064 = vweird.f32 %v2606
      %vm3065 = vweird.f32 %v3059
      %vm3066 = vmor %vm3064, %vm3065
      %v3067 = vsel %vm3066, %v3059, %v3063
      %v3068 = vand.u32 2147483647, %v2606
      %vm3069 = vcmp.eq.f32.partialorder %v3068, 8.507059e+37
      %v3070 = vand.u32 %v2606, 2147483648
      %v3071 = vor.u32 1.1754944e-38, %v3070
      %v3072 = vsel %vm3069, %v3071, %v3067
      %v3073 = vmul.f32 %v2543, %v3072
      %v3074 = vrcp.pop %v2608
      %v3075 = vmul.f32 %v2608, %v3074
      %v3076 = vsub.f32 1.0, %v3075
      %v3077 = vmul.f32 %v3074, %v3076
      %v3078 = vadd.f32 %v3074, %v3077
      %vm3079 = vweird.f32 %v2608
      %vm3080 = vweird.f32 %v3074
      %vm3081 = vmor %vm3079, %vm3080
      %v3082 = vsel %vm3081, %v3074, %v3078
      %v3083 = vand.u32 2147483647, %v2608
      %vm3084 = vcmp.eq.f32.partialorder %v3083, 8.507059e+37
      %v3085 = vand.u32 %v2608, 2147483648
      %v3086 = vor.u32 1.1754944e-38, %v3085
      %v3087 = vsel %vm3084, %v3086, %v3082
      %v3088 = vmul.f32 %v2544, %v3087
      %3089 = vst [vmem:[%s311] sm:$0xff] %v2623
      %3090 = vst [vmem:[%s311 + $0x8] sm:$0xff] %v2638
      %3091 = vst [vmem:[%s311 + $0x10] sm:$0xff] %v2653
      %3092 = vst [vmem:[%s311 + $0x18] sm:$0xff] %v2668
      %3093 = vst [vmem:[%s311 + $0x20] sm:$0xff] %v2683
      %3094 = vst [vmem:[%s311 + $0x28] sm:$0xff] %v2698
      %3095 = vst [vmem:[%s311 + $0x30] sm:$0xff] %v2713
      %3096 = vst [vmem:[%s311 + $0x38] sm:$0xff] %v2728
      %3097 = vst [vmem:[%s311 + $0x40] sm:$0xff] %v2743
      %3098 = vst [vmem:[%s311 + $0x48] sm:$0xff] %v2758
      %3099 = vst [vmem:[%s311 + $0x50] sm:$0xff] %v2773
      %3100 = vst [vmem:[%s311 + $0x58] sm:$0xff] %v2788
      %3101 = vst [vmem:[%s311 + $0x60] sm:$0xff] %v2803
      %3102 = vst [vmem:[%s311 + $0x68] sm:$0xff] %v2818
      %3103 = vst [vmem:[%s311 + $0x70] sm:$0xff] %v2833
      %3104 = vst [vmem:[%s311 + $0x78] sm:$0xff] %v2848
      %3105 = vst [vmem:[%s311 + $0x80] sm:$0xff] %v2863
      %3106 = vst [vmem:[%s311 + $0x88] sm:$0xff] %v2878
      %3107 = vst [vmem:[%s311 + $0x90] sm:$0xff] %v2893
      %3108 = vst [vmem:[%s311 + $0x98] sm:$0xff] %v2908
      %3109 = vst [vmem:[%s311 + $0xa0] sm:$0xff] %v2923
      %3110 = vst [vmem:[%s311 + $0xa8] sm:$0xff] %v2938
      %3111 = vst [vmem:[%s311 + $0xb0] sm:$0xff] %v2953
      %3112 = vst [vmem:[%s311 + $0xb8] sm:$0xff] %v2968
      %3113 = vst [vmem:[%s311 + $0xc0] sm:$0xff] %v2983
      %3114 = vst [vmem:[%s311 + $0xc8] sm:$0xff] %v2998
      %3115 = vst [vmem:[%s311 + $0xd0] sm:$0xff] %v3013
      %3116 = vst [vmem:[%s311 + $0xd8] sm:$0xff] %v3028
      %3117 = vst [vmem:[%s311 + $0xe0] sm:$0xff] %v3043
      %3118 = vst [vmem:[%s311 + $0xe8] sm:$0xff] %v3058
      %3119 = vst [vmem:[%s311 + $0xf0] sm:$0xff] %v3073
      %3120 = vst [vmem:[%s311 + $0xf8] sm:$0xff] %v3088
      %s3121 = smul.u32 32, %s19
      %p3122 = scmp.lt.s32.totalorder %s3121, 63
      %s3123 = scalar_select %p3122, %s3121, 63
      %s3124 = smul.addr %s3123, 2
      %s3125 = smul.addr %s3124, 4
      %s3126 = scalar_lea.vmem %s5, %s3125
      %s3127 = smul.u32 32, %s19
      %p3128 = scmp.lt.s32.totalorder %s3127, 63
      %s3129 = scalar_select %p3128, %s3127, 63
      %s3130 = smul.addr %s3129, 2
      %s3131 = smul.addr %s3130, 4
      %s3132 = scalar_lea.vmem %s6, %s3131
      %s3133 = smul.u32 32, %s19
      %p3134 = scmp.lt.s32.totalorder %s3133, 63
      %s3135 = scalar_select %p3134, %s3133, 63
      %s3136 = smul.addr %s3135, 8
      %s3137 = scalar_lea.vmem %s7, %s3136
      // Predicated region
      $region41: #{gcnmf_forward.3} parent=39 // pred_check
        %p3138 = pneg %p147
      $region42: #{gcnmf_forward.3} parent=39 // pred_check_branch
        %3140 = sbr.rel (%p3138) target = $region44
      $region43: #{gcnmf_forward.3} parent=39 // pred_region
        %s3141 = smul.u32 32, %s19
      $region44: #{gcnmf_forward.3} parent=39 // pred_fallthru
        _
      // Predicated region
      $region45: #{gcnmf_forward.3} parent=39 // pred_check
        %p3142 = pneg %p173
      $region46: #{gcnmf_forward.3} parent=39 // pred_check_branch
        %3144 = sbr.rel (%p3142) target = $region48
      $region47: #{gcnmf_forward.3} parent=39 // pred_region
        %s3145 = smul.u32 32, %s19
      $region48: #{gcnmf_forward.3} parent=39 // pred_fallthru
        _
      // Predicated region
      $region49: #{gcnmf_forward.3} parent=39 // pred_check
        %p3146 = pneg %p199
      $region50: #{gcnmf_forward.3} parent=39 // pred_check_branch
        %3148 = sbr.rel (%p3146) target = $region52
      $region51: #{gcnmf_forward.3} parent=39 // pred_region
        %s3149 = smul.u32 32, %s19
      $region52: #{gcnmf_forward.3} parent=39 // pred_fallthru
        _
    $region40: #{gcnmf_forward.3} parent=5 // pred_fallthru
      _
    %p3150 = scmp.le.s32.totalorder 2, %s14
    // Predicated region
    $region53: #{gcnmf_forward.3} parent=5 // pred_check
      %p3151 = pneg %p3150
    $region54: #{gcnmf_forward.3} parent=5 // pred_check_branch
      %3153 = sbr.rel (%p3151) target = $region56
    $region55: #{gcnmf_forward.3} parent=5 // pred_region
      %s3154 = ssub.s32 %s14, 2
      // Predicated region
      $region57: #{gcnmf_forward.3} parent=55 // pred_check
        %p3155 = pneg %p153
      $region58: #{gcnmf_forward.3} parent=55 // pred_check_branch
        %3157 = sbr.rel (%p3155) target = $region60
      $region59: #{gcnmf_forward.3} parent=55 // pred_region
        %s3158 = smul.u32 32, %s20
        %p3159 = scmp.lt.s32.totalorder %s3158, 63
        %s3160 = scalar_select %p3159, %s3158, 63
        %s3161 = smul.addr %s3160, 2
        %s3162 = smul.addr %s3161, 4
        %s3163 = scalar_lea.vmem %s5, %s3162
      $region60: #{gcnmf_forward.3} parent=55 // pred_fallthru
        _
      // Predicated region
      $region61: #{gcnmf_forward.3} parent=55 // pred_check
        %p3164 = pneg %p179
      $region62: #{gcnmf_forward.3} parent=55 // pred_check_branch
        %3166 = sbr.rel (%p3164) target = $region64
      $region63: #{gcnmf_forward.3} parent=55 // pred_region
        %s3167 = smul.u32 32, %s20
        %p3168 = scmp.lt.s32.totalorder %s3167, 63
        %s3169 = scalar_select %p3168, %s3167, 63
        %s3170 = smul.addr %s3169, 2
        %s3171 = smul.addr %s3170, 4
        %s3172 = scalar_lea.vmem %s6, %s3171
      $region64: #{gcnmf_forward.3} parent=55 // pred_fallthru
        _
      // Predicated region
      $region65: #{gcnmf_forward.3} parent=55 // pred_check
        %p3173 = pneg %p205
      $region66: #{gcnmf_forward.3} parent=55 // pred_check_branch
        %3175 = sbr.rel (%p3173) target = $region68
      $region67: #{gcnmf_forward.3} parent=55 // pred_region
        %s3176 = smul.u32 32, %s20
        %p3177 = scmp.lt.s32.totalorder %s3176, 63
        %s3178 = scalar_select %p3177, %s3176, 63
        %s3179 = smul.addr %s3178, 8
        %s3180 = scalar_lea.vmem %s7, %s3179
      $region68: #{gcnmf_forward.3} parent=55 // pred_fallthru
        _
    $region56: #{gcnmf_forward.3} parent=5 // pred_fallthru
      _
  $region6: #{gcnmf_forward.3} parent=0 // loop_footer
    %s18 = sadd.s32 1, %s14
  $region7: #{gcnmf_forward.3} parent=0 // loop_footer_branch
    %13 = sbr.rel target = $region3
  $region8: #{gcnmf_forward.3} parent=0 // loop_exit
    _

// kernel: gcnmf_forward.4
$region0: #{gcnmf_forward.4}
  #allocation0 [shape = 'u32[]', space=smem, size = 0x4, offset = 0x4, fixed_abs, tag = 'smem constant byte address 0x4 - core index']
  #allocation1 [shape = 'u32[72,128]{1,0:T(1,128)}', space=vmem, size = 0x9000, scoped, tag = 'internal scratch']
  #allocation2 [shape = 'f32[256,256]{1,0:T(8,128)}', space=vmem, size = 0x40000, scoped, tag = 'scratch operand']
  #allocation3 [shape = 'f32[256,256]{1,0:T(8,128)}', space=vmem, size = 0x40000, scoped, tag = 'scratch operand']
  %s0 = inlined_call_operand.vmem [shape: bf16[512,512], index: 0, kind: input, shape index: {}]
  %s1 = inlined_call_operand.vmem [shape: bf16[512,256], index: 1, kind: input, shape index: {}]
  %s2 = inlined_call_operand.vmem [shape: bf16[512,256], index: 2, kind: input, shape index: {}]
  %s3 = inlined_call_operand.vmem [shape: f32[512,128], index: 3, kind: input, shape index: {}]
  %s4 = inlined_call_operand.vmem [shape: bf16[8,512], index: 4, kind: input, shape index: {}]
  %s5 = inlined_call_operand.vmem [shape: f32[128,256], index: 5, kind: input, shape index: {}]
  %s6 = inlined_call_operand.vmem [shape: f32[256,128], index: 6, kind: input, shape index: {}]
  %s7 = inlined_call_operand.vmem [shape: f32[512,128], index: 7, kind: output, shape index: {0}]
  %s8 = inlined_call_operand.vmem [shape: f32[2,8,512], index: 8, kind: output, shape index: {1}]
  %9 = xla_tuple %s7, %s8
  %s10 = sld [smem:[#allocation0]]
  $region115: #{gcnmf_forward.4} parent=0
    _
  %s12 = ssub.s32 1, %s10
  %s13 = scalar_select 0, %s12, %s10
  $region1: #{gcnmf_forward.4} parent=0
    #allocation4 [shape = 'u8[262144]{0}', space=vmem, size = 0x40000, scoped, tag = 'input window, operand 0']
    loop: start=0, step=1, limit=6
    $region2: #{gcnmf_forward.4} parent=1 // loop_pre_header
      _
    $region3: #{gcnmf_forward.4} parent=1 // loop_header
      %s15 = sphi 0, %s19
      %p16 = scmp.ge.s32.totalorder %s15, 6
      %s22 = sphi 0, %s34
      %s23 = sphi 0, %s30
      %s24 = sphi 0, %s22
      %s25 = sphi 0, %s23
      %s26 = sphi 0, %s24
      %s27 = sphi 0, %s25
      %s39 = sphi 0, %s41
      %s42 = sphi 0, %s39
      %s43 = sphi 0, %s42
      %s59 = sphi 0, %s43
      %s65 = sphi 0, %s67
      %s68 = sphi 0, %s65
      %s69 = sphi 0, %s68
      %s85 = sphi 0, %s69
      %s91 = sphi 0, %s93
      %s94 = sphi 0, %s91
      %s95 = sphi 0, %s94
      %s111 = sphi 0, %s95
      %s117 = sphi 0, %s119
      %s120 = sphi 0, %s117
      %s121 = sphi 0, %s120
      %s137 = sphi 0, %s121
      %s143 = sphi 0, %s145
      %s146 = sphi 0, %s143
      %s147 = sphi 0, %s146
      %s163 = sphi 0, %s147
      %s167 = sphi 0, %s167
      %s169 = sphi 0, %s167
      %s170 = sphi 0, %s169
      %s184 = sphi 0, %s170
      %s188 = sphi 0, %s188
      %s190 = sphi 0, %s188
      %s191 = sphi 0, %s190
      %s205 = sphi 0, %s191
      %s211 = sphi 0, %s213
      %s214 = sphi 0, %s211
      %s215 = sphi 0, %s214
      %s231 = sphi 0, %s215
      %s239 = sphi 0, %s241
      %s242 = sphi 0, %s239
      %s243 = sphi 0, %s242
      %s259 = sphi 0, %s243
    $region4: #{gcnmf_forward.4} parent=1 // loop_header_branch
      %18 = sbr.rel (%p16) target = $region8
    $region5: #{gcnmf_forward.4} parent=1 // loop_body
      %s20 = ssub.s32 %s15, 1
      %s21 = ssub.s32 %s15, 2
      %s28 = sadd.s32 1, %s23
      %p29 = scmp.ge.s32.totalorder %s28, 2
      %s30 = scalar_select %p29, 0, %s28
      %s31 = sadd.s32 1, %s22
      %s32 = scalar_select %p29, %s31, %s22
      %p33 = scmp.ge.s32.totalorder %s32, 2
      %s34 = scalar_select %p33, 0, %s32
      %s35 = ssub.s32 %s22, %s34
      %s36 = ssub.s32 %s23, %s30
      %s37 = sor.u32 %s35, %s36
      %p38 = scmp.eq.s32.totalorder %s37, 0
      %s40 = sadd.s32 %s39, 1
      %s41 = scalar_select %p38, %s39, %s40
      %p44 = pneg %p38
      %p45 = scmp.eq.s32.totalorder %s15, 3
      %p46 = por %p44, %p45
      %p47 = scmp.ne.s32.totalorder %s39, %s42
      %p48 = scmp.eq.s32.totalorder %s15, 0
      %p49 = por %p47, %p48
      %p50 = scmp.ne.s32.totalorder %s39, %s42
      %p51 = scmp.eq.s32.totalorder %s20, 3
      %p52 = por %p50, %p51
      %p53 = scmp.ne.s32.totalorder %s42, %s43
      %p54 = scmp.eq.s32.totalorder %s20, 0
      %p55 = por %p53, %p54
      %p56 = scmp.ne.s32.totalorder %s42, %s43
      %p57 = scmp.eq.s32.totalorder %s21, 3
      %p58 = por %p56, %p57
      %p60 = scmp.ne.s32.totalorder %s43, %s59
      %p61 = scmp.eq.s32.totalorder %s21, 0
      %p62 = por %p60, %p61
      %s63 = ssub.s32 %s23, %s30
      %p64 = scmp.eq.s32.totalorder %s63, 0
      %s66 = sadd.s32 %s65, 1
      %s67 = scalar_select %p64, %s65, %s66
      %p70 = pneg %p64
      %p71 = scmp.eq.s32.totalorder %s15, 3
      %p72 = por %p70, %p71
      %p73 = scmp.ne.s32.totalorder %s65, %s68
      %p74 = scmp.eq.s32.totalorder %s15, 0
      %p75 = por %p73, %p74
      %p76 = scmp.ne.s32.totalorder %s65, %s68
      %p77 = scmp.eq.s32.totalorder %s20, 3
      %p78 = por %p76, %p77
      %p79 = scmp.ne.s32.totalorder %s68, %s69
      %p80 = scmp.eq.s32.totalorder %s20, 0
      %p81 = por %p79, %p80
      %p82 = scmp.ne.s32.totalorder %s68, %s69
      %p83 = scmp.eq.s32.totalorder %s21, 3
      %p84 = por %p82, %p83
      %p86 = scmp.ne.s32.totalorder %s69, %s85
      %p87 = scmp.eq.s32.totalorder %s21, 0
      %p88 = por %p86, %p87
      %s89 = ssub.s32 %s23, %s30
      %p90 = scmp.eq.s32.totalorder %s89, 0
      %s92 = sadd.s32 %s91, 1
      %s93 = scalar_select %p90, %s91, %s92
      %p96 = pneg %p90
      %p97 = scmp.eq.s32.totalorder %s15, 3
      %p98 = por %p96, %p97
      %p99 = scmp.ne.s32.totalorder %s91, %s94
      %p100 = scmp.eq.s32.totalorder %s15, 0
      %p101 = por %p99, %p100
      %p102 = scmp.ne.s32.totalorder %s91, %s94
      %p103 = scmp.eq.s32.totalorder %s20, 3
      %p104 = por %p102, %p103
      %p105 = scmp.ne.s32.totalorder %s94, %s95
      %p106 = scmp.eq.s32.totalorder %s20, 0
      %p107 = por %p105, %p106
      %p108 = scmp.ne.s32.totalorder %s94, %s95
      %p109 = scmp.eq.s32.totalorder %s21, 3
      %p110 = por %p108, %p109
      %p112 = scmp.ne.s32.totalorder %s95, %s111
      %p113 = scmp.eq.s32.totalorder %s21, 0
      %p114 = por %p112, %p113
      %s115 = ssub.s32 %s22, %s34
      %p116 = scmp.eq.s32.totalorder %s115, 0
      %s118 = sadd.s32 %s117, 1
      %s119 = scalar_select %p116, %s117, %s118
      %p122 = pneg %p116
      %p123 = scmp.eq.s32.totalorder %s15, 3
      %p124 = por %p122, %p123
      %p125 = scmp.ne.s32.totalorder %s117, %s120
      %p126 = scmp.eq.s32.totalorder %s15, 0
      %p127 = por %p125, %p126
      %p128 = scmp.ne.s32.totalorder %s117, %s120
      %p129 = scmp.eq.s32.totalorder %s20, 3
      %p130 = por %p128, %p129
      %p131 = scmp.ne.s32.totalorder %s120, %s121
      %p132 = scmp.eq.s32.totalorder %s20, 0
      %p133 = por %p131, %p132
      %p134 = scmp.ne.s32.totalorder %s120, %s121
      %p135 = scmp.eq.s32.totalorder %s21, 3
      %p136 = por %p134, %p135
      %p138 = scmp.ne.s32.totalorder %s121, %s137
      %p139 = scmp.eq.s32.totalorder %s21, 0
      %p140 = por %p138, %p139
      %s141 = ssub.s32 %s22, %s34
      %p142 = scmp.eq.s32.totalorder %s141, 0
      %s144 = sadd.s32 %s143, 1
      %s145 = scalar_select %p142, %s143, %s144
      %p148 = pneg %p142
      %p149 = scmp.eq.s32.totalorder %s15, 3
      %p150 = por %p148, %p149
      %p151 = scmp.ne.s32.totalorder %s143, %s146
      %p152 = scmp.eq.s32.totalorder %s15, 0
      %p153 = por %p151, %p152
      %p154 = scmp.ne.s32.totalorder %s143, %s146
      %p155 = scmp.eq.s32.totalorder %s20, 3
      %p156 = por %p154, %p155
      %p157 = scmp.ne.s32.totalorder %s146, %s147
      %p158 = scmp.eq.s32.totalorder %s20, 0
      %p159 = por %p157, %p158
      %p160 = scmp.ne.s32.totalorder %s146, %s147
      %p161 = scmp.eq.s32.totalorder %s21, 3
      %p162 = por %p160, %p161
      %p164 = scmp.ne.s32.totalorder %s147, %s163
      %p165 = scmp.eq.s32.totalorder %s21, 0
      %p166 = por %p164, %p165
      %s168 = sadd.s32 %s167, 1
      %p171 = scmp.eq.s32.totalorder %s15, 3
      %p172 = scmp.ne.s32.totalorder %s167, %s169
      %p173 = scmp.eq.s32.totalorder %s15, 0
      %p174 = por %p172, %p173
      %p175 = scmp.ne.s32.totalorder %s167, %s169
      %p176 = scmp.eq.s32.totalorder %s20, 3
      %p177 = por %p175, %p176
      %p178 = scmp.ne.s32.totalorder %s169, %s170
      %p179 = scmp.eq.s32.totalorder %s20, 0
      %p180 = por %p178, %p179
      %p181 = scmp.ne.s32.totalorder %s169, %s170
      %p182 = scmp.eq.s32.totalorder %s21, 3
      %p183 = por %p181, %p182
      %p185 = scmp.ne.s32.totalorder %s170, %s184
      %p186 = scmp.eq.s32.totalorder %s21, 0
      %p187 = por %p185, %p186
      %s189 = sadd.s32 %s188, 1
      %p192 = scmp.eq.s32.totalorder %s15, 3
      %p193 = scmp.ne.s32.totalorder %s188, %s190
      %p194 = scmp.eq.s32.totalorder %s15, 0
      %p195 = por %p193, %p194
      %p196 = scmp.ne.s32.totalorder %s188, %s190
      %p197 = scmp.eq.s32.totalorder %s20, 3
      %p198 = por %p196, %p197
      %p199 = scmp.ne.s32.totalorder %s190, %s191
      %p200 = scmp.eq.s32.totalorder %s20, 0
      %p201 = por %p199, %p200
      %p202 = scmp.ne.s32.totalorder %s190, %s191
      %p203 = scmp.eq.s32.totalorder %s21, 3
      %p204 = por %p202, %p203
      %p206 = scmp.ne.s32.totalorder %s191, %s205
      %p207 = scmp.eq.s32.totalorder %s21, 0
      %p208 = por %p206, %p207
      %s209 = ssub.s32 %s22, %s34
      %p210 = scmp.eq.s32.totalorder %s209, 0
      %s212 = sadd.s32 %s211, 1
      %s213 = scalar_select %p210, %s211, %s212
      %p216 = pneg %p210
      %p217 = scmp.eq.s32.totalorder %s15, 3
      %p218 = por %p216, %p217
      %p219 = scmp.ne.s32.totalorder %s211, %s214
      %p220 = scmp.eq.s32.totalorder %s15, 0
      %p221 = por %p219, %p220
      %p222 = scmp.ne.s32.totalorder %s211, %s214
      %p223 = scmp.eq.s32.totalorder %s20, 3
      %p224 = por %p222, %p223
      %p225 = scmp.ne.s32.totalorder %s214, %s215
      %p226 = scmp.eq.s32.totalorder %s20, 0
      %p227 = por %p225, %p226
      %p228 = scmp.ne.s32.totalorder %s214, %s215
      %p229 = scmp.eq.s32.totalorder %s21, 3
      %p230 = por %p228, %p229
      %p232 = scmp.ne.s32.totalorder %s215, %s231
      %p233 = scmp.eq.s32.totalorder %s21, 0
      %p234 = por %p232, %p233
      %s235 = ssub.s32 %s22, %s34
      %s236 = ssub.s32 %s23, %s30
      %s237 = sor.u32 %s235, %s236
      %p238 = scmp.eq.s32.totalorder %s237, 0
      %s240 = sadd.s32 %s239, 1
      %s241 = scalar_select %p238, %s239, %s240
      %p244 = pneg %p238
      %p245 = scmp.eq.s32.totalorder %s15, 3
      %p246 = por %p244, %p245
      %p247 = scmp.ne.s32.totalorder %s239, %s242
      %p248 = scmp.eq.s32.totalorder %s15, 0
      %p249 = por %p247, %p248
      %p250 = scmp.ne.s32.totalorder %s239, %s242
      %p251 = scmp.eq.s32.totalorder %s20, 3
      %p252 = por %p250, %p251
      %p253 = scmp.ne.s32.totalorder %s242, %s243
      %p254 = scmp.eq.s32.totalorder %s20, 0
      %p255 = por %p253, %p254
      %p256 = scmp.ne.s32.totalorder %s242, %s243
      %p257 = scmp.eq.s32.totalorder %s21, 3
      %p258 = por %p256, %p257
      %p260 = scmp.ne.s32.totalorder %s243, %s259
      %p261 = scmp.eq.s32.totalorder %s21, 0
      %p262 = por %p260, %p261
      %p263 = scmp.le.s32.totalorder 1, %s15
      %p264 = scmp.lt.s32.totalorder %s15, 5
      %p265 = pnand %p263, %p264
      %p266 = pneg %p265
      // Predicated region
      $region9: #{gcnmf_forward.4} parent=5 // pred_check
        _
      $region10: #{gcnmf_forward.4} parent=5 // pred_check_branch
        %268 = sbr.rel (%p265) target = $region12
      $region11: #{gcnmf_forward.4} parent=5 // pred_region
        %s269 = ssub.s32 %s15, 1
        // Predicated region
        $region13: #{gcnmf_forward.4} parent=11 // pred_check
          %p270 = pneg %p180
        $region14: #{gcnmf_forward.4} parent=11 // pred_check_branch
          %272 = sbr.rel (%p270) target = $region16
        $region15: #{gcnmf_forward.4} parent=11 // pred_region
          _
        $region16: #{gcnmf_forward.4} parent=11 // pred_fallthru
          _
        // Predicated region
        $region17: #{gcnmf_forward.4} parent=11 // pred_check
          %p273 = pneg %p201
        $region18: #{gcnmf_forward.4} parent=11 // pred_check_branch
          %275 = sbr.rel (%p273) target = $region20
        $region19: #{gcnmf_forward.4} parent=11 // pred_region
          _
        $region20: #{gcnmf_forward.4} parent=11 // pred_fallthru
          _
      $region12: #{gcnmf_forward.4} parent=5 // pred_fallthru
        _
      %p276 = scmp.lt.s32.totalorder %s15, 4
      // Predicated region
      $region21: #{gcnmf_forward.4} parent=5 // pred_check
        %p277 = pneg %p276
      $region22: #{gcnmf_forward.4} parent=5 // pred_check_branch
        %279 = sbr.rel (%p277) target = $region24
      $region23: #{gcnmf_forward.4} parent=5 // pred_region
        // Predicated region
        $region25: #{gcnmf_forward.4} parent=23 // pred_check
          %p280 = pneg %p49
        $region26: #{gcnmf_forward.4} parent=23 // pred_check_branch
          %282 = sbr.rel (%p280) target = $region28
        $region27: #{gcnmf_forward.4} parent=23 // pred_region
          %s283 = sand.u32 %s39, 1
          %s284 = sand.u32 %s39, 1
          %s285 = smul.addr %s284, 256
          %s286 = scalar_lea.vmem [#allocation4], %s285
          %s287 = smul.u32 32, %s22
          %s288 = smul.u32 2, %s23
          %s289 = smul.addr %s287, 4
          %s290 = sadd.s32 %s288, %s289
          %s291 = smul.addr %s290, 4
          %s292 = scalar_lea.vmem %s0, %s291
          // Predicated region
          $region29: #{gcnmf_forward.4} parent=27 // pred_check
            _
          $region30: #{gcnmf_forward.4} parent=27 // pred_check_branch
            %294 = sbr.rel (0) target = $region32
          $region31: #{gcnmf_forward.4} parent=27 // pred_region
            // Predicated region
            $region33: #{gcnmf_forward.4} parent=31 // pred_check
              _
            $region34: #{gcnmf_forward.4} parent=31 // pred_check_branch
              %296 = sbr.rel (0) target = $region36
            $region35: #{gcnmf_forward.4} parent=31 // pred_region
              // Predicated region
              $region48: #{gcnmf_forward.4} parent=35 // pred_check
                _
              $region49: #{gcnmf_forward.4} parent=35 // pred_check_branch
                %374 = sbr.rel (0) target = $region51
              $region50: #{gcnmf_forward.4} parent=35 // pred_region
                loop: start=0, step=1, limit=1
                $region52: #{gcnmf_forward.4} parent=50 // loop_pre_header
                  _
                $region53: #{gcnmf_forward.4} parent=50 // loop_header
                  %s376 = sphi 0, %s380
                  %p377 = scmp.ge.s32.totalorder %s376, 1
                  %s381 = sphi %s292, %s292
                  %s382 = sphi %s286, %s286
                $region54: #{gcnmf_forward.4} parent=50 // loop_header_branch
                  %379 = sbr.rel (%p377) target = $region58
                $region55: #{gcnmf_forward.4} parent=50 // loop_body
                  %v383 = vld [vmem:[%s381] sm:$0xff]
                  %384 = vst [vmem:[%s382] sm:$0xff] %v383
                  %v385 = vld [vmem:[%s381 + $0x10] sm:$0xff]
                  %386 = vst [vmem:[%s382 + $0x8] sm:$0xff] %v385
                  %v387 = vld [vmem:[%s381 + $0x20] sm:$0xff]
                  %388 = vst [vmem:[%s382 + $0x10] sm:$0xff] %v387
                  %v389 = vld [vmem:[%s381 + $0x30] sm:$0xff]
                  %390 = vst [vmem:[%s382 + $0x18] sm:$0xff] %v389
                  %v391 = vld [vmem:[%s381 + $0x40] sm:$0xff]
                  %392 = vst [vmem:[%s382 + $0x20] sm:$0xff] %v391
                  %v393 = vld [vmem:[%s381 + $0x50] sm:$0xff]
                  %394 = vst [vmem:[%s382 + $0x28] sm:$0xff] %v393
                  %v395 = vld [vmem:[%s381 + $0x60] sm:$0xff]
                  %396 = vst [vmem:[%s382 + $0x30] sm:$0xff] %v395
                  %v397 = vld [vmem:[%s381 + $0x70] sm:$0xff]
                  %398 = vst [vmem:[%s382 + $0x38] sm:$0xff] %v397
                  %v399 = vld [vmem:[%s381 + $0x80] sm:$0xff]
                  %400 = vst [vmem:[%s382 + $0x40] sm:$0xff] %v399
                  %v401 = vld [vmem:[%s381 + $0x90] sm:$0xff]
                  %402 = vst [vmem:[%s382 + $0x48] sm:$0xff] %v401
                  %v403 = vld [vmem:[%s381 + $0xa0] sm:$0xff]
                  %404 = vst [vmem:[%s382 + $0x50] sm:$0xff] %v403
                  %v405 = vld [vmem:[%s381 + $0xb0] sm:$0xff]
                  %406 = vst [vmem:[%s382 + $0x58] sm:$0xff] %v405
                  %v407 = vld [vmem:[%s381 + $0xc0] sm:$0xff]
                  %408 = vst [vmem:[%s382 + $0x60] sm:$0xff] %v407
                  %v409 = vld [vmem:[%s381 + $0xd0] sm:$0xff]
                  %410 = vst [vmem:[%s382 + $0x68] sm:$0xff] %v409
                  %v411 = vld [vmem:[%s381 + $0xe0] sm:$0xff]
                  %412 = vst [vmem:[%s382 + $0x70] sm:$0xff] %v411
                  %v413 = vld [vmem:[%s381 + $0xf0] sm:$0xff]
                  %414 = vst [vmem:[%s382 + $0x78] sm:$0xff] %v413
                  %v415 = vld [vmem:[%s381 + $0x100] sm:$0xff]
                  %416 = vst [vmem:[%s382 + $0x80] sm:$0xff] %v415
                  %v417 = vld [vmem:[%s381 + $0x110] sm:$0xff]
                  %418 = vst [vmem:[%s382 + $0x88] sm:$0xff] %v417
                  %v419 = vld [vmem:[%s381 + $0x120] sm:$0xff]
                  %420 = vst [vmem:[%s382 + $0x90] sm:$0xff] %v419
                  %v421 = vld [vmem:[%s381 + $0x130] sm:$0xff]
                  %422 = vst [vmem:[%s382 + $0x98] sm:$0xff] %v421
                  %v423 = vld [vmem:[%s381 + $0x140] sm:$0xff]
                  %424 = vst [vmem:[%s382 + $0xa0] sm:$0xff] %v423
                  %v425 = vld [vmem:[%s381 + $0x150] sm:$0xff]
                  %426 = vst [vmem:[%s382 + $0xa8] sm:$0xff] %v425
                  %v427 = vld [vmem:[%s381 + $0x160] sm:$0xff]
                  %428 = vst [vmem:[%s382 + $0xb0] sm:$0xff] %v427
                  %v429 = vld [vmem:[%s381 + $0x170] sm:$0xff]
                  %430 = vst [vmem:[%s382 + $0xb8] sm:$0xff] %v429
                  %v431 = vld [vmem:[%s381 + $0x180] sm:$0xff]
                  %432 = vst [vmem:[%s382 + $0xc0] sm:$0xff] %v431
                  %v433 = vld [vmem:[%s381 + $0x190] sm:$0xff]
                  %434 = vst [vmem:[%s382 + $0xc8] sm:$0xff] %v433
                  %v435 = vld [vmem:[%s381 + $0x1a0] sm:$0xff]
                  %436 = vst [vmem:[%s382 + $0xd0] sm:$0xff] %v435
                  %v437 = vld [vmem:[%s381 + $0x1b0] sm:$0xff]
                  %438 = vst [vmem:[%s382 + $0xd8] sm:$0xff] %v437
                  %v439 = vld [vmem:[%s381 + $0x1c0] sm:$0xff]
                  %440 = vst [vmem:[%s382 + $0xe0] sm:$0xff] %v439
                  %v441 = vld [vmem:[%s381 + $0x1d0] sm:$0xff]
                  %442 = vst [vmem:[%s382 + $0xe8] sm:$0xff] %v441
                  %v443 = vld [vmem:[%s381 + $0x1e0] sm:$0xff]
                  %444 = vst [vmem:[%s382 + $0xf0] sm:$0xff] %v443
                  %v445 = vld [vmem:[%s381 + $0x1f0] sm:$0xff]
                  %446 = vst [vmem:[%s382 + $0xf8] sm:$0xff] %v445
                $region56: #{gcnmf_forward.4} parent=50 // loop_footer
                  %s380 = sadd.s32 1, %s376
                $region57: #{gcnmf_forward.4} parent=50 // loop_footer_branch
                  %375 = sbr.rel target = $region53
                $region58: #{gcnmf_forward.4} parent=50 // loop_exit
                  _
              $region51: #{gcnmf_forward.4} parent=35 // pred_fallthru
                _
              // Predicated region
              $region59: #{gcnmf_forward.4} parent=35 // pred_check
                _
              $region60: #{gcnmf_forward.4} parent=35 // pred_check_branch
                %448 = sbr.rel target = $region62
              $region61: #{gcnmf_forward.4} parent=35 // pred_region
                _
              $region62: #{gcnmf_forward.4} parent=35 // pred_fallthru
                _
            $region36: #{gcnmf_forward.4} parent=31 // pred_fallthru
              _
            // Predicated region
            $region37: #{gcnmf_forward.4} parent=31 // pred_check
              _
            $region38: #{gcnmf_forward.4} parent=31 // pred_check_branch
              %298 = sbr.rel target = $region40
            $region39: #{gcnmf_forward.4} parent=31 // pred_region
              %s300 = ssub.s32 256, 1
              loop: start=0, step=1, limit=1
              $region41: #{gcnmf_forward.4} parent=39 // loop_pre_header
                _
              $region42: #{gcnmf_forward.4} parent=39 // loop_header
                %s302 = sphi 0, %s306
                %p303 = scmp.ge.s32.totalorder %s302, 1
                %s307 = sphi %s292, %s292
                %s308 = sphi %s286, %s286
              $region43: #{gcnmf_forward.4} parent=39 // loop_header_branch
                %305 = sbr.rel (%p303) target = $region47
              $region44: #{gcnmf_forward.4} parent=39 // loop_body
                %v309 = vld [vmem:[%s307] sm:%s300]
                %310 = vst [vmem:[%s308] sm:%s300] %v309
                %v311 = vld [vmem:[%s307 + $0x10] sm:%s300]
                %312 = vst [vmem:[%s308 + $0x8] sm:%s300] %v311
                %v313 = vld [vmem:[%s307 + $0x20] sm:%s300]
                %314 = vst [vmem:[%s308 + $0x10] sm:%s300] %v313
                %v315 = vld [vmem:[%s307 + $0x30] sm:%s300]
                %316 = vst [vmem:[%s308 + $0x18] sm:%s300] %v315
                %v317 = vld [vmem:[%s307 + $0x40] sm:%s300]
                %318 = vst [vmem:[%s308 + $0x20] sm:%s300] %v317
                %v319 = vld [vmem:[%s307 + $0x50] sm:%s300]
                %320 = vst [vmem:[%s308 + $0x28] sm:%s300] %v319
                %v321 = vld [vmem:[%s307 + $0x60] sm:%s300]
                %322 = vst [vmem:[%s308 + $0x30] sm:%s300] %v321
                %v323 = vld [vmem:[%s307 + $0x70] sm:%s300]
                %324 = vst [vmem:[%s308 + $0x38] sm:%s300] %v323
                %v325 = vld [vmem:[%s307 + $0x80] sm:%s300]
                %326 = vst [vmem:[%s308 + $0x40] sm:%s300] %v325
                %v327 = vld [vmem:[%s307 + $0x90] sm:%s300]
                %328 = vst [vmem:[%s308 + $0x48] sm:%s300] %v327
                %v329 = vld [vmem:[%s307 + $0xa0] sm:%s300]
                %330 = vst [vmem:[%s308 + $0x50] sm:%s300] %v329
                %v331 = vld [vmem:[%s307 + $0xb0] sm:%s300]
                %332 = vst [vmem:[%s308 + $0x58] sm:%s300] %v331
                %v333 = vld [vmem:[%s307 + $0xc0] sm:%s300]
                %334 = vst [vmem:[%s308 + $0x60] sm:%s300] %v333
                %v335 = vld [vmem:[%s307 + $0xd0] sm:%s300]
                %336 = vst [vmem:[%s308 + $0x68] sm:%s300] %v335
                %v337 = vld [vmem:[%s307 + $0xe0] sm:%s300]
                %338 = vst [vmem:[%s308 + $0x70] sm:%s300] %v337
                %v339 = vld [vmem:[%s307 + $0xf0] sm:%s300]
                %340 = vst [vmem:[%s308 + $0x78] sm:%s300] %v339
                %v341 = vld [vmem:[%s307 + $0x100] sm:%s300]
                %342 = vst [vmem:[%s308 + $0x80] sm:%s300] %v341
                %v343 = vld [vmem:[%s307 + $0x110] sm:%s300]
                %344 = vst [vmem:[%s308 + $0x88] sm:%s300] %v343
                %v345 = vld [vmem:[%s307 + $0x120] sm:%s300]
                %346 = vst [vmem:[%s308 + $0x90] sm:%s300] %v345
                %v347 = vld [vmem:[%s307 + $0x130] sm:%s300]
                %348 = vst [vmem:[%s308 + $0x98] sm:%s300] %v347
                %v349 = vld [vmem:[%s307 + $0x140] sm:%s300]
                %350 = vst [vmem:[%s308 + $0xa0] sm:%s300] %v349
                %v351 = vld [vmem:[%s307 + $0x150] sm:%s300]
                %352 = vst [vmem:[%s308 + $0xa8] sm:%s300] %v351
                %v353 = vld [vmem:[%s307 + $0x160] sm:%s300]
                %354 = vst [vmem:[%s308 + $0xb0] sm:%s300] %v353
                %v355 = vld [vmem:[%s307 + $0x170] sm:%s300]
                %356 = vst [vmem:[%s308 + $0xb8] sm:%s300] %v355
                %v357 = vld [vmem:[%s307 + $0x180] sm:%s300]
                %358 = vst [vmem:[%s308 + $0xc0] sm:%s300] %v357
                %v359 = vld [vmem:[%s307 + $0x190] sm:%s300]
                %360 = vst [vmem:[%s308 + $0xc8] sm:%s300] %v359
                %v361 = vld [vmem:[%s307 + $0x1a0] sm:%s300]
                %362 = vst [vmem:[%s308 + $0xd0] sm:%s300] %v361
                %v363 = vld [vmem:[%s307 + $0x1b0] sm:%s300]
                %364 = vst [vmem:[%s308 + $0xd8] sm:%s300] %v363
                %v365 = vld [vmem:[%s307 + $0x1c0] sm:%s300]
                %366 = vst [vmem:[%s308 + $0xe0] sm:%s300] %v365
                %v367 = vld [vmem:[%s307 + $0x1d0] sm:%s300]
                %368 = vst [vmem:[%s308 + $0xe8] sm:%s300] %v367
                %v369 = vld [vmem:[%s307 + $0x1e0] sm:%s300]
                %370 = vst [vmem:[%s308 + $0xf0] sm:%s300] %v369
                %v371 = vld [vmem:[%s307 + $0x1f0] sm:%s300]
                %372 = vst [vmem:[%s308 + $0xf8] sm:%s300] %v371
              $region45: #{gcnmf_forward.4} parent=39 // loop_footer
                %s306 = sadd.s32 1, %s302
              $region46: #{gcnmf_forward.4} parent=39 // loop_footer_branch
                %301 = sbr.rel target = $region42
              $region47: #{gcnmf_forward.4} parent=39 // loop_exit
                _
            $region40: #{gcnmf_forward.4} parent=31 // pred_fallthru
              _
          $region32: #{gcnmf_forward.4} parent=27 // pred_fallthru
            _
          %449 = vnop
        $region28: #{gcnmf_forward.4} parent=23 // pred_fallthru
          _
        // Predicated region
        $region63: #{gcnmf_forward.4} parent=23 // pred_check
          %p450 = pneg %p75
        $region64: #{gcnmf_forward.4} parent=23 // pred_check_branch
          %452 = sbr.rel (%p450) target = $region66
        $region65: #{gcnmf_forward.4} parent=23 // pred_region
          %s453 = smul.u32 32, %s23
          %p454 = scmp.lt.s32.totalorder %s453, 63
          %s455 = scalar_select %p454, %s453, 63
          %s456 = smul.addr %s455, 2
          %s457 = smul.addr %s456, 4
          %s458 = scalar_lea.vmem %s1, %s457
          %s459 = smul.u32 32, %s23
        $region66: #{gcnmf_forward.4} parent=23 // pred_fallthru
          _
        // Predicated region
        $region67: #{gcnmf_forward.4} parent=23 // pred_check
          %p460 = pneg %p101
        $region68: #{gcnmf_forward.4} parent=23 // pred_check_branch
          %462 = sbr.rel (%p460) target = $region70
        $region69: #{gcnmf_forward.4} parent=23 // pred_region
          %s463 = smul.u32 32, %s23
          %p464 = scmp.lt.s32.totalorder %s463, 63
          %s465 = scalar_select %p464, %s463, 63
          %s466 = smul.addr %s465, 2
          %s467 = smul.addr %s466, 4
          %s468 = scalar_lea.vmem %s2, %s467
          %s469 = smul.u32 32, %s23
        $region70: #{gcnmf_forward.4} parent=23 // pred_fallthru
          _
        // Predicated region
        $region71: #{gcnmf_forward.4} parent=23 // pred_check
          %p470 = pneg %p127
        $region72: #{gcnmf_forward.4} parent=23 // pred_check_branch
          %472 = sbr.rel (%p470) target = $region74
        $region73: #{gcnmf_forward.4} parent=23 // pred_region
          %s473 = smul.u32 32, %s22
          %p474 = scmp.lt.s32.totalorder %s473, 63
          %s475 = scalar_select %p474, %s473, 63
          %s476 = smul.addr %s475, 8
          %s477 = scalar_lea.vmem %s3, %s476
          %s478 = smul.u32 32, %s22
        $region74: #{gcnmf_forward.4} parent=23 // pred_fallthru
          _
        // Predicated region
        $region75: #{gcnmf_forward.4} parent=23 // pred_check
          %p479 = pneg %p153
        $region76: #{gcnmf_forward.4} parent=23 // pred_check_branch
          %481 = sbr.rel (%p479) target = $region78
        $region77: #{gcnmf_forward.4} parent=23 // pred_region
          %s482 = smul.u32 2, %s22
          %p483 = scmp.lt.s32.totalorder %s482, 3
          %s484 = scalar_select %p483, %s482, 3
          %s485 = smul.addr %s484, 4
          %s486 = scalar_lea.vmem %s4, %s485
          %s487 = smul.u32 2, %s22
        $region78: #{gcnmf_forward.4} parent=23 // pred_fallthru
          _
      $region24: #{gcnmf_forward.4} parent=5 // pred_fallthru
        _
      %p488 = scmp.le.s32.totalorder 1, %s15
      %p489 = scmp.lt.s32.totalorder %s15, 5
      %p490 = pnand %p488, %p489
      %p491 = pneg %p490
      // Predicated region
      $region79: #{gcnmf_forward.4} parent=5 // pred_check
        _
      $region80: #{gcnmf_forward.4} parent=5 // pred_check_branch
        %493 = sbr.rel (%p490) target = $region82
      $region81: #{gcnmf_forward.4} parent=5 // pred_region
        %s494 = ssub.s32 %s15, 1
        %s495 = sand.u32 %s42, 1
        %s496 = sand.u32 %s42, 1
        %s497 = smul.addr %s496, 256
        %s498 = scalar_lea.vmem [#allocation4], %s497
        // Predicated region
        $region83: #{gcnmf_forward.4} parent=81 // pred_check
          %p499 = pneg %p55
        $region84: #{gcnmf_forward.4} parent=81 // pred_check_branch
          %501 = sbr.rel (%p499) target = $region86
        $region85: #{gcnmf_forward.4} parent=81 // pred_region
          _
        $region86: #{gcnmf_forward.4} parent=81 // pred_fallthru
          _
        %s502 = sand.u32 %s42, 1
        %s503 = sand.u32 %s42, 1
        %s504 = smul.addr %s503, 256
        %s505 = scalar_lea.vmem [#allocation4], %s504
        %p506 = pneg %p55
        %p507 = pneg %p52
        %s508 = smul.u32 32, %s25
        %p509 = scmp.lt.s32.totalorder %s508, 63
        %s510 = scalar_select %p509, %s508, 63
        %s511 = smul.addr %s510, 2
        %s512 = smul.addr %s511, 4
        %s513 = scalar_lea.vmem %s1, %s512
        %p514 = pneg %p81
        %p515 = pneg %p78
        %s516 = smul.u32 32, %s25
        %p517 = scmp.lt.s32.totalorder %s516, 63
        %s518 = scalar_select %p517, %s516, 63
        %s519 = smul.addr %s518, 2
        %s520 = smul.addr %s519, 4
        %s521 = scalar_lea.vmem %s2, %s520
        %p522 = pneg %p107
        %p523 = pneg %p104
        %s524 = smul.u32 32, %s24
        %p525 = scmp.lt.s32.totalorder %s524, 63
        %s526 = scalar_select %p525, %s524, 63
        %s527 = smul.addr %s526, 8
        %s528 = scalar_lea.vmem %s3, %s527
        %p529 = pneg %p133
        %p530 = pneg %p130
        %s531 = smul.u32 2, %s24
        %p532 = scmp.lt.s32.totalorder %s531, 3
        %s533 = scalar_select %p532, %s531, 3
        %s534 = smul.addr %s533, 4
        %s535 = scalar_lea.vmem %s4, %s534
        %p536 = pneg %p159
        %p537 = pneg %p156
        %p538 = pneg %p180
        %p539 = pneg %p177
        %p540 = pneg %p201
        %p541 = pneg %p198
        %p542 = pneg %p227
        %p543 = pneg %p224
        %s544 = smul.u32 32, %s24
        %p545 = scmp.lt.s32.totalorder %s544, 63
        %s546 = scalar_select %p545, %s544, 63
        %s547 = smul.addr %s546, 8
        %s548 = scalar_lea.vmem %s7, %s547
        %p549 = pneg %p255
        %p550 = pneg %p252
        %s551 = smul.u32 2, %s25
        %p552 = scmp.lt.s32.totalorder %s24, 1
        %s553 = scalar_select %p552, %s24, 1
        %p554 = scmp.lt.s32.totalorder %s551, 3
        %s555 = scalar_select %p554, %s551, 3
        %s556 = smul.addr %s553, 4
        %s557 = sadd.s32 %s555, %s556
        %s558 = smul.addr %s557, 8
        %s559 = scalar_lea.vmem %s8, %s558
        %s560 = smul.u32 32, %s24
        %s561 = smul.u32 2, %s25
        %s562 = smul.u32 32, %s25
        %p563 = scmp.lt.s32.totalorder %s562, 63
        %s564 = scalar_select %p563, %s562, 63
        %s565 = smul.addr %s564, 2
        %s566 = smul.addr %s565, 4
        %s567 = scalar_lea.vmem %s1, %s566
        %s568 = smul.u32 32, %s25
        %s569 = smul.u32 32, %s25
        %p570 = scmp.lt.s32.totalorder %s569, 63
        %s571 = scalar_select %p570, %s569, 63
        %s572 = smul.addr %s571, 2
        %s573 = smul.addr %s572, 4
        %s574 = scalar_lea.vmem %s2, %s573
        %s575 = smul.u32 32, %s25
        %s576 = smul.u32 32, %s24
        %p577 = scmp.lt.s32.totalorder %s576, 63
        %s578 = scalar_select %p577, %s576, 63
        %s579 = smul.addr %s578, 8
        %s580 = scalar_lea.vmem %s3, %s579
        %s581 = smul.u32 32, %s24
        %s582 = smul.u32 2, %s24
        %p583 = scmp.lt.s32.totalorder %s582, 3
        %s584 = scalar_select %p583, %s582, 3
        %s585 = smul.addr %s584, 4
        %s586 = scalar_lea.vmem %s4, %s585
        %s587 = smul.u32 2, %s24
        %s588 = smul.u32 32, %s24
        %p589 = scmp.lt.s32.totalorder %s588, 63
        %s590 = scalar_select %p589, %s588, 63
        %s591 = smul.addr %s590, 8
        %s592 = scalar_lea.vmem %s7, %s591
        %s593 = smul.u32 32, %s24
        %s594 = smul.u32 2, %s25
        %p595 = scmp.lt.s32.totalorder %s24, 1
        %s596 = scalar_select %p595, %s24, 1
        %p597 = scmp.lt.s32.totalorder %s594, 3
        %s598 = scalar_select %p597, %s594, 3
        %s599 = smul.addr %s596, 4
        %s600 = sadd.s32 %s598, %s599
        %s601 = smul.addr %s600, 8
        %s602 = scalar_lea.vmem %s8, %s601
        %s603 = smul.u32 2, %s25
        %p604 = scmp.eq.s32.totalorder %s25, 0
        // Predicated region
        $region87: #{gcnmf_forward.4} parent=81 // pred_check
          %p605 = pneg %p604
        $region88: #{gcnmf_forward.4} parent=81 // pred_check_branch
          %607 = sbr.rel (%p605) target = $region90
        $region89: #{gcnmf_forward.4} parent=81 // pred_region
          %608 = vst [vmem:[#allocation2] sm:$0xff] 0.0
          %609 = vst [vmem:[#allocation2 + $0x8] sm:$0xff] 0.0
          %610 = vst [vmem:[#allocation2 + $0x10] sm:$0xff] 0.0
          %611 = vst [vmem:[#allocation2 + $0x18] sm:$0xff] 0.0
          %612 = vst [vmem:[#allocation2 + $0x20] sm:$0xff] 0.0
          %613 = vst [vmem:[#allocation2 + $0x28] sm:$0xff] 0.0
          %614 = vst [vmem:[#allocation2 + $0x30] sm:$0xff] 0.0
          %615 = vst [vmem:[#allocation2 + $0x38] sm:$0xff] 0.0
          %616 = vst [vmem:[#allocation2 + $0x40] sm:$0xff] 0.0
          %617 = vst [vmem:[#allocation2 + $0x48] sm:$0xff] 0.0
          %618 = vst [vmem:[#allocation2 + $0x50] sm:$0xff] 0.0
          %619 = vst [vmem:[#allocation2 + $0x58] sm:$0xff] 0.0
          %620 = vst [vmem:[#allocation2 + $0x60] sm:$0xff] 0.0
          %621 = vst [vmem:[#allocation2 + $0x68] sm:$0xff] 0.0
          %622 = vst [vmem:[#allocation2 + $0x70] sm:$0xff] 0.0
          %623 = vst [vmem:[#allocation2 + $0x78] sm:$0xff] 0.0
          %624 = vst [vmem:[#allocation2 + $0x80] sm:$0xff] 0.0
          %625 = vst [vmem:[#allocation2 + $0x88] sm:$0xff] 0.0
          %626 = vst [vmem:[#allocation2 + $0x90] sm:$0xff] 0.0
          %627 = vst [vmem:[#allocation2 + $0x98] sm:$0xff] 0.0
          %628 = vst [vmem:[#allocation2 + $0xa0] sm:$0xff] 0.0
          %629 = vst [vmem:[#allocation2 + $0xa8] sm:$0xff] 0.0
          %630 = vst [vmem:[#allocation2 + $0xb0] sm:$0xff] 0.0
          %631 = vst [vmem:[#allocation2 + $0xb8] sm:$0xff] 0.0
          %632 = vst [vmem:[#allocation2 + $0xc0] sm:$0xff] 0.0
          %633 = vst [vmem:[#allocation2 + $0xc8] sm:$0xff] 0.0
          %634 = vst [vmem:[#allocation2 + $0xd0] sm:$0xff] 0.0
          %635 = vst [vmem:[#allocation2 + $0xd8] sm:$0xff] 0.0
          %636 = vst [vmem:[#allocation2 + $0xe0] sm:$0xff] 0.0
          %637 = vst [vmem:[#allocation2 + $0xe8] sm:$0xff] 0.0
          %638 = vst [vmem:[#allocation2 + $0xf0] sm:$0xff] 0.0
          %639 = vst [vmem:[#allocation2 + $0xf8] sm:$0xff] 0.0
          %640 = vst [vmem:[#allocation2 + $0x100] sm:$0xff] 0.0
          %641 = vst [vmem:[#allocation2 + $0x108] sm:$0xff] 0.0
          %642 = vst [vmem:[#allocation2 + $0x110] sm:$0xff] 0.0
          %643 = vst [vmem:[#allocation2 + $0x118] sm:$0xff] 0.0
          %644 = vst [vmem:[#allocation2 + $0x120] sm:$0xff] 0.0
          %645 = vst [vmem:[#allocation2 + $0x128] sm:$0xff] 0.0
          %646 = vst [vmem:[#allocation2 + $0x130] sm:$0xff] 0.0
          %647 = vst [vmem:[#allocation2 + $0x138] sm:$0xff] 0.0
          %648 = vst [vmem:[#allocation2 + $0x140] sm:$0xff] 0.0
          %649 = vst [vmem:[#allocation2 + $0x148] sm:$0xff] 0.0
          %650 = vst [vmem:[#allocation2 + $0x150] sm:$0xff] 0.0
          %651 = vst [vmem:[#allocation2 + $0x158] sm:$0xff] 0.0
          %652 = vst [vmem:[#allocation2 + $0x160] sm:$0xff] 0.0
          %653 = vst [vmem:[#allocation2 + $0x168] sm:$0xff] 0.0
          %654 = vst [vmem:[#allocation2 + $0x170] sm:$0xff] 0.0
          %655 = vst [vmem:[#allocation2 + $0x178] sm:$0xff] 0.0
          %656 = vst [vmem:[#allocation2 + $0x180] sm:$0xff] 0.0
          %657 = vst [vmem:[#allocation2 + $0x188] sm:$0xff] 0.0
          %658 = vst [vmem:[#allocation2 + $0x190] sm:$0xff] 0.0
          %659 = vst [vmem:[#allocation2 + $0x198] sm:$0xff] 0.0
          %660 = vst [vmem:[#allocation2 + $0x1a0] sm:$0xff] 0.0
          %661 = vst [vmem:[#allocation2 + $0x1a8] sm:$0xff] 0.0
          %662 = vst [vmem:[#allocation2 + $0x1b0] sm:$0xff] 0.0
          %663 = vst [vmem:[#allocation2 + $0x1b8] sm:$0xff] 0.0
          %664 = vst [vmem:[#allocation2 + $0x1c0] sm:$0xff] 0.0
          %665 = vst [vmem:[#allocation2 + $0x1c8] sm:$0xff] 0.0
          %666 = vst [vmem:[#allocation2 + $0x1d0] sm:$0xff] 0.0
          %667 = vst [vmem:[#allocation2 + $0x1d8] sm:$0xff] 0.0
          %668 = vst [vmem:[#allocation2 + $0x1e0] sm:$0xff] 0.0
          %669 = vst [vmem:[#allocation2 + $0x1e8] sm:$0xff] 0.0
          %670 = vst [vmem:[#allocation2 + $0x1f0] sm:$0xff] 0.0
          %671 = vst [vmem:[#allocation2 + $0x1f8] sm:$0xff] 0.0
          %672 = vst [vmem:[#allocation3] sm:$0xff] 0.0
          %673 = vst [vmem:[#allocation3 + $0x8] sm:$0xff] 0.0
          %674 = vst [vmem:[#allocation3 + $0x10] sm:$0xff] 0.0
          %675 = vst [vmem:[#allocation3 + $0x18] sm:$0xff] 0.0
          %676 = vst [vmem:[#allocation3 + $0x20] sm:$0xff] 0.0
          %677 = vst [vmem:[#allocation3 + $0x28] sm:$0xff] 0.0
          %678 = vst [vmem:[#allocation3 + $0x30] sm:$0xff] 0.0
          %679 = vst [vmem:[#allocation3 + $0x38] sm:$0xff] 0.0
          %680 = vst [vmem:[#allocation3 + $0x40] sm:$0xff] 0.0
          %681 = vst [vmem:[#allocation3 + $0x48] sm:$0xff] 0.0
          %682 = vst [vmem:[#allocation3 + $0x50] sm:$0xff] 0.0
          %683 = vst [vmem:[#allocation3 + $0x58] sm:$0xff] 0.0
          %684 = vst [vmem:[#allocation3 + $0x60] sm:$0xff] 0.0
          %685 = vst [vmem:[#allocation3 + $0x68] sm:$0xff] 0.0
          %686 = vst [vmem:[#allocation3 + $0x70] sm:$0xff] 0.0
          %687 = vst [vmem:[#allocation3 + $0x78] sm:$0xff] 0.0
          %688 = vst [vmem:[#allocation3 + $0x80] sm:$0xff] 0.0
          %689 = vst [vmem:[#allocation3 + $0x88] sm:$0xff] 0.0
          %690 = vst [vmem:[#allocation3 + $0x90] sm:$0xff] 0.0
          %691 = vst [vmem:[#allocation3 + $0x98] sm:$0xff] 0.0
          %692 = vst [vmem:[#allocation3 + $0xa0] sm:$0xff] 0.0
          %693 = vst [vmem:[#allocation3 + $0xa8] sm:$0xff] 0.0
          %694 = vst [vmem:[#allocation3 + $0xb0] sm:$0xff] 0.0
          %695 = vst [vmem:[#allocation3 + $0xb8] sm:$0xff] 0.0
          %696 = vst [vmem:[#allocation3 + $0xc0] sm:$0xff] 0.0
          %697 = vst [vmem:[#allocation3 + $0xc8] sm:$0xff] 0.0
          %698 = vst [vmem:[#allocation3 + $0xd0] sm:$0xff] 0.0
          %699 = vst [vmem:[#allocation3 + $0xd8] sm:$0xff] 0.0
          %700 = vst [vmem:[#allocation3 + $0xe0] sm:$0xff] 0.0
          %701 = vst [vmem:[#allocation3 + $0xe8] sm:$0xff] 0.0
          %702 = vst [vmem:[#allocation3 + $0xf0] sm:$0xff] 0.0
          %703 = vst [vmem:[#allocation3 + $0xf8] sm:$0xff] 0.0
          %704 = vst [vmem:[#allocation3 + $0x100] sm:$0xff] 0.0
          %705 = vst [vmem:[#allocation3 + $0x108] sm:$0xff] 0.0
          %706 = vst [vmem:[#allocation3 + $0x110] sm:$0xff] 0.0
          %707 = vst [vmem:[#allocation3 + $0x118] sm:$0xff] 0.0
          %708 = vst [vmem:[#allocation3 + $0x120] sm:$0xff] 0.0
          %709 = vst [vmem:[#allocation3 + $0x128] sm:$0xff] 0.0
          %710 = vst [vmem:[#allocation3 + $0x130] sm:$0xff] 0.0
          %711 = vst [vmem:[#allocation3 + $0x138] sm:$0xff] 0.0
          %712 = vst [vmem:[#allocation3 + $0x140] sm:$0xff] 0.0
          %713 = vst [vmem:[#allocation3 + $0x148] sm:$0xff] 0.0
          %714 = vst [vmem:[#allocation3 + $0x150] sm:$0xff] 0.0
          %715 = vst [vmem:[#allocation3 + $0x158] sm:$0xff] 0.0
          %716 = vst [vmem:[#allocation3 + $0x160] sm:$0xff] 0.0
          %717 = vst [vmem:[#allocation3 + $0x168] sm:$0xff] 0.0
          %718 = vst [vmem:[#allocation3 + $0x170] sm:$0xff] 0.0
          %719 = vst [vmem:[#allocation3 + $0x178] sm:$0xff] 0.0
          %720 = vst [vmem:[#allocation3 + $0x180] sm:$0xff] 0.0
          %721 = vst [vmem:[#allocation3 + $0x188] sm:$0xff] 0.0
          %722 = vst [vmem:[#allocation3 + $0x190] sm:$0xff] 0.0
          %723 = vst [vmem:[#allocation3 + $0x198] sm:$0xff] 0.0
          %724 = vst [vmem:[#allocation3 + $0x1a0] sm:$0xff] 0.0
          %725 = vst [vmem:[#allocation3 + $0x1a8] sm:$0xff] 0.0
          %726 = vst [vmem:[#allocation3 + $0x1b0] sm:$0xff] 0.0
          %727 = vst [vmem:[#allocation3 + $0x1b8] sm:$0xff] 0.0
          %728 = vst [vmem:[#allocation3 + $0x1c0] sm:$0xff] 0.0
          %729 = vst [vmem:[#allocation3 + $0x1c8] sm:$0xff] 0.0
          %730 = vst [vmem:[#allocation3 + $0x1d0] sm:$0xff] 0.0
          %731 = vst [vmem:[#allocation3 + $0x1d8] sm:$0xff] 0.0
          %732 = vst [vmem:[#allocation3 + $0x1e0] sm:$0xff] 0.0
          %733 = vst [vmem:[#allocation3 + $0x1e8] sm:$0xff] 0.0
          %734 = vst [vmem:[#allocation3 + $0x1f0] sm:$0xff] 0.0
          %735 = vst [vmem:[#allocation3 + $0x1f8] sm:$0xff] 0.0
        $region90: #{gcnmf_forward.4} parent=81 // pred_fallthru
          _
        %v736 = vld [vmem:[%s498] sm:$0xff]
        %v737 = vld [vmem:[%s498 + $0x8] sm:$0xff]
        %v738 = vld [vmem:[%s498 + $0x10] sm:$0xff]
        %v739 = vld [vmem:[%s498 + $0x18] sm:$0xff]
        %v740 = vld [vmem:[%s498 + $0x20] sm:$0xff]
        %v741 = vld [vmem:[%s498 + $0x28] sm:$0xff]
        %v742 = vld [vmem:[%s498 + $0x30] sm:$0xff]
        %v743 = vld [vmem:[%s498 + $0x38] sm:$0xff]
        %v744 = vld [vmem:[%s498 + $0x40] sm:$0xff]
        %v745 = vld [vmem:[%s498 + $0x48] sm:$0xff]
        %v746 = vld [vmem:[%s498 + $0x50] sm:$0xff]
        %v747 = vld [vmem:[%s498 + $0x58] sm:$0xff]
        %v748 = vld [vmem:[%s498 + $0x60] sm:$0xff]
        %v749 = vld [vmem:[%s498 + $0x68] sm:$0xff]
        %v750 = vld [vmem:[%s498 + $0x70] sm:$0xff]
        %v751 = vld [vmem:[%s498 + $0x78] sm:$0xff]
        %v752 = vld [vmem:[%s498 + $0x80] sm:$0xff]
        %v753 = vld [vmem:[%s498 + $0x88] sm:$0xff]
        %v754 = vld [vmem:[%s498 + $0x90] sm:$0xff]
        %v755 = vld [vmem:[%s498 + $0x98] sm:$0xff]
        %v756 = vld [vmem:[%s498 + $0xa0] sm:$0xff]
        %v757 = vld [vmem:[%s498 + $0xa8] sm:$0xff]
        %v758 = vld [vmem:[%s498 + $0xb0] sm:$0xff]
        %v759 = vld [vmem:[%s498 + $0xb8] sm:$0xff]
        %v760 = vld [vmem:[%s498 + $0xc0] sm:$0xff]
        %v761 = vld [vmem:[%s498 + $0xc8] sm:$0xff]
        %v762 = vld [vmem:[%s498 + $0xd0] sm:$0xff]
        %v763 = vld [vmem:[%s498 + $0xd8] sm:$0xff]
        %v764 = vld [vmem:[%s498 + $0xe0] sm:$0xff]
        %v765 = vld [vmem:[%s498 + $0xe8] sm:$0xff]
        %v766 = vld [vmem:[%s498 + $0xf0] sm:$0xff]
        %v767 = vld [vmem:[%s498 + $0xf8] sm:$0xff]
        %v768 = vunpack.c.l.bf16 %v736
        %v769 = vunpack.c.h.bf16 %v736
        %v770 = vunpack.c.l.bf16 %v737
        %v771 = vunpack.c.h.bf16 %v737
        %v772 = vunpack.c.l.bf16 %v738
        %v773 = vunpack.c.h.bf16 %v738
        %v774 = vunpack.c.l.bf16 %v739
        %v775 = vunpack.c.h.bf16 %v739
        %v776 = vunpack.c.l.bf16 %v740
        %v777 = vunpack.c.h.bf16 %v740
        %v778 = vunpack.c.l.bf16 %v741
        %v779 = vunpack.c.h.bf16 %v741
        %v780 = vunpack.c.l.bf16 %v742
        %v781 = vunpack.c.h.bf16 %v742
        %v782 = vunpack.c.l.bf16 %v743
        %v783 = vunpack.c.h.bf16 %v743
        %v784 = vunpack.c.l.bf16 %v744
        %v785 = vunpack.c.h.bf16 %v744
        %v786 = vunpack.c.l.bf16 %v745
        %v787 = vunpack.c.h.bf16 %v745
        %v788 = vunpack.c.l.bf16 %v746
        %v789 = vunpack.c.h.bf16 %v746
        %v790 = vunpack.c.l.bf16 %v747
        %v791 = vunpack.c.h.bf16 %v747
        %v792 = vunpack.c.l.bf16 %v748
        %v793 = vunpack.c.h.bf16 %v748
        %v794 = vunpack.c.l.bf16 %v749
        %v795 = vunpack.c.h.bf16 %v749
        %v796 = vunpack.c.l.bf16 %v750
        %v797 = vunpack.c.h.bf16 %v750
        %v798 = vunpack.c.l.bf16 %v751
        %v799 = vunpack.c.h.bf16 %v751
        %v800 = vunpack.c.l.bf16 %v752
        %v801 = vunpack.c.h.bf16 %v752
        %v802 = vunpack.c.l.bf16 %v753
        %v803 = vunpack.c.h.bf16 %v753
        %v804 = vunpack.c.l.bf16 %v754
        %v805 = vunpack.c.h.bf16 %v754
        %v806 = vunpack.c.l.bf16 %v755
        %v807 = vunpack.c.h.bf16 %v755
        %v808 = vunpack.c.l.bf16 %v756
        %v809 = vunpack.c.h.bf16 %v756
        %v810 = vunpack.c.l.bf16 %v757
        %v811 = vunpack.c.h.bf16 %v757
        %v812 = vunpack.c.l.bf16 %v758
        %v813 = vunpack.c.h.bf16 %v758
        %v814 = vunpack.c.l.bf16 %v759
        %v815 = vunpack.c.h.bf16 %v759
        %v816 = vunpack.c.l.bf16 %v760
        %v817 = vunpack.c.h.bf16 %v760
        %v818 = vunpack.c.l.bf16 %v761
        %v819 = vunpack.c.h.bf16 %v761
        %v820 = vunpack.c.l.bf16 %v762
        %v821 = vunpack.c.h.bf16 %v762
        %v822 = vunpack.c.l.bf16 %v763
        %v823 = vunpack.c.h.bf16 %v763
        %v824 = vunpack.c.l.bf16 %v764
        %v825 = vunpack.c.h.bf16 %v764
        %v826 = vunpack.c.l.bf16 %v765
        %v827 = vunpack.c.h.bf16 %v765
        %v828 = vunpack.c.l.bf16 %v766
        %v829 = vunpack.c.h.bf16 %v766
        %v830 = vunpack.c.l.bf16 %v767
        %v831 = vunpack.c.h.bf16 %v767
        %v832 = vmul.f32 %v768, %v768
        %v833 = vmul.f32 %v769, %v769
        %v834 = vmul.f32 %v770, %v770
        %v835 = vmul.f32 %v771, %v771
        %v836 = vmul.f32 %v772, %v772
        %v837 = vmul.f32 %v773, %v773
        %v838 = vmul.f32 %v774, %v774
        %v839 = vmul.f32 %v775, %v775
        %v840 = vmul.f32 %v776, %v776
        %v841 = vmul.f32 %v777, %v777
        %v842 = vmul.f32 %v778, %v778
        %v843 = vmul.f32 %v779, %v779
        %v844 = vmul.f32 %v780, %v780
        %v845 = vmul.f32 %v781, %v781
        %v846 = vmul.f32 %v782, %v782
        %v847 = vmul.f32 %v783, %v783
        %v848 = vmul.f32 %v784, %v784
        %v849 = vmul.f32 %v785, %v785
        %v850 = vmul.f32 %v786, %v786
        %v851 = vmul.f32 %v787, %v787
        %v852 = vmul.f32 %v788, %v788
        %v853 = vmul.f32 %v789, %v789
        %v854 = vmul.f32 %v790, %v790
        %v855 = vmul.f32 %v791, %v791
        %v856 = vmul.f32 %v792, %v792
        %v857 = vmul.f32 %v793, %v793
        %v858 = vmul.f32 %v794, %v794
        %v859 = vmul.f32 %v795, %v795
        %v860 = vmul.f32 %v796, %v796
        %v861 = vmul.f32 %v797, %v797
        %v862 = vmul.f32 %v798, %v798
        %v863 = vmul.f32 %v799, %v799
        %v864 = vmul.f32 %v800, %v800
        %v865 = vmul.f32 %v801, %v801
        %v866 = vmul.f32 %v802, %v802
        %v867 = vmul.f32 %v803, %v803
        %v868 = vmul.f32 %v804, %v804
        %v869 = vmul.f32 %v805, %v805
        %v870 = vmul.f32 %v806, %v806
        %v871 = vmul.f32 %v807, %v807
        %v872 = vmul.f32 %v808, %v808
        %v873 = vmul.f32 %v809, %v809
        %v874 = vmul.f32 %v810, %v810
        %v875 = vmul.f32 %v811, %v811
        %v876 = vmul.f32 %v812, %v812
        %v877 = vmul.f32 %v813, %v813
        %v878 = vmul.f32 %v814, %v814
        %v879 = vmul.f32 %v815, %v815
        %v880 = vmul.f32 %v816, %v816
        %v881 = vmul.f32 %v817, %v817
        %v882 = vmul.f32 %v818, %v818
        %v883 = vmul.f32 %v819, %v819
        %v884 = vmul.f32 %v820, %v820
        %v885 = vmul.f32 %v821, %v821
        %v886 = vmul.f32 %v822, %v822
        %v887 = vmul.f32 %v823, %v823
        %v888 = vmul.f32 %v824, %v824
        %v889 = vmul.f32 %v825, %v825
        %v890 = vmul.f32 %v826, %v826
        %v891 = vmul.f32 %v827, %v827
        %v892 = vmul.f32 %v828, %v828
        %v893 = vmul.f32 %v829, %v829
        %v894 = vmul.f32 %v830, %v830
        %v895 = vmul.f32 %v831, %v831
        %v896 = vpack.c.bf16 %v834, %v832
        %v897 = vpack.c.bf16 %v835, %v833
        %v898 = vpack.c.bf16 %v838, %v836
        %v899 = vpack.c.bf16 %v839, %v837
        %v900 = vpack.c.bf16 %v842, %v840
        %v901 = vpack.c.bf16 %v843, %v841
        %v902 = vpack.c.bf16 %v846, %v844
        %v903 = vpack.c.bf16 %v847, %v845
        %v904 = vpack.c.bf16 %v850, %v848
        %v905 = vpack.c.bf16 %v851, %v849
        %v906 = vpack.c.bf16 %v854, %v852
        %v907 = vpack.c.bf16 %v855, %v853
        %v908 = vpack.c.bf16 %v858, %v856
        %v909 = vpack.c.bf16 %v859, %v857
        %v910 = vpack.c.bf16 %v862, %v860
        %v911 = vpack.c.bf16 %v863, %v861
        %v912 = vpack.c.bf16 %v866, %v864
        %v913 = vpack.c.bf16 %v867, %v865
        %v914 = vpack.c.bf16 %v870, %v868
        %v915 = vpack.c.bf16 %v871, %v869
        %v916 = vpack.c.bf16 %v874, %v872
        %v917 = vpack.c.bf16 %v875, %v873
        %v918 = vpack.c.bf16 %v878, %v876
        %v919 = vpack.c.bf16 %v879, %v877
        %v920 = vpack.c.bf16 %v882, %v880
        %v921 = vpack.c.bf16 %v883, %v881
        %v922 = vpack.c.bf16 %v886, %v884
        %v923 = vpack.c.bf16 %v887, %v885
        %v924 = vpack.c.bf16 %v890, %v888
        %v925 = vpack.c.bf16 %v891, %v889
        %v926 = vpack.c.bf16 %v894, %v892
        %v927 = vpack.c.bf16 %v895, %v893
        %v928 = vld [vmem:[#allocation2] sm:$0xff]
        %v929 = vld [vmem:[#allocation2 + $0x8] sm:$0xff]
        %v930 = vld [vmem:[#allocation2 + $0x10] sm:$0xff]
        %v931 = vld [vmem:[#allocation2 + $0x18] sm:$0xff]
        %v932 = vld [vmem:[#allocation2 + $0x20] sm:$0xff]
        %v933 = vld [vmem:[#allocation2 + $0x28] sm:$0xff]
        %v934 = vld [vmem:[#allocation2 + $0x30] sm:$0xff]
        %v935 = vld [vmem:[#allocation2 + $0x38] sm:$0xff]
        %v936 = vld [vmem:[#allocation2 + $0x40] sm:$0xff]
        %v937 = vld [vmem:[#allocation2 + $0x48] sm:$0xff]
        %v938 = vld [vmem:[#allocation2 + $0x50] sm:$0xff]
        %v939 = vld [vmem:[#allocation2 + $0x58] sm:$0xff]
        %v940 = vld [vmem:[#allocation2 + $0x60] sm:$0xff]
        %v941 = vld [vmem:[#allocation2 + $0x68] sm:$0xff]
        %v942 = vld [vmem:[#allocation2 + $0x70] sm:$0xff]
        %v943 = vld [vmem:[#allocation2 + $0x78] sm:$0xff]
        %v944 = vld [vmem:[#allocation2 + $0x80] sm:$0xff]
        %v945 = vld [vmem:[#allocation2 + $0x88] sm:$0xff]
        %v946 = vld [vmem:[#allocation2 + $0x90] sm:$0xff]
        %v947 = vld [vmem:[#allocation2 + $0x98] sm:$0xff]
        %v948 = vld [vmem:[#allocation2 + $0xa0] sm:$0xff]
        %v949 = vld [vmem:[#allocation2 + $0xa8] sm:$0xff]
        %v950 = vld [vmem:[#allocation2 + $0xb0] sm:$0xff]
        %v951 = vld [vmem:[#allocation2 + $0xb8] sm:$0xff]
        %v952 = vld [vmem:[#allocation2 + $0xc0] sm:$0xff]
        %v953 = vld [vmem:[#allocation2 + $0xc8] sm:$0xff]
        %v954 = vld [vmem:[#allocation2 + $0xd0] sm:$0xff]
        %v955 = vld [vmem:[#allocation2 + $0xd8] sm:$0xff]
        %v956 = vld [vmem:[#allocation2 + $0xe0] sm:$0xff]
        %v957 = vld [vmem:[#allocation2 + $0xe8] sm:$0xff]
        %v958 = vld [vmem:[#allocation2 + $0xf0] sm:$0xff]
        %v959 = vld [vmem:[#allocation2 + $0xf8] sm:$0xff]
        %v960 = vld [vmem:[#allocation2 + $0x100] sm:$0xff]
        %v961 = vld [vmem:[#allocation2 + $0x108] sm:$0xff]
        %v962 = vld [vmem:[#allocation2 + $0x110] sm:$0xff]
        %v963 = vld [vmem:[#allocation2 + $0x118] sm:$0xff]
        %v964 = vld [vmem:[#allocation2 + $0x120] sm:$0xff]
        %v965 = vld [vmem:[#allocation2 + $0x128] sm:$0xff]
        %v966 = vld [vmem:[#allocation2 + $0x130] sm:$0xff]
        %v967 = vld [vmem:[#allocation2 + $0x138] sm:$0xff]
        %v968 = vld [vmem:[#allocation2 + $0x140] sm:$0xff]
        %v969 = vld [vmem:[#allocation2 + $0x148] sm:$0xff]
        %v970 = vld [vmem:[#allocation2 + $0x150] sm:$0xff]
        %v971 = vld [vmem:[#allocation2 + $0x158] sm:$0xff]
        %v972 = vld [vmem:[#allocation2 + $0x160] sm:$0xff]
        %v973 = vld [vmem:[#allocation2 + $0x168] sm:$0xff]
        %v974 = vld [vmem:[#allocation2 + $0x170] sm:$0xff]
        %v975 = vld [vmem:[#allocation2 + $0x178] sm:$0xff]
        %v976 = vld [vmem:[#allocation2 + $0x180] sm:$0xff]
        %v977 = vld [vmem:[#allocation2 + $0x188] sm:$0xff]
        %v978 = vld [vmem:[#allocation2 + $0x190] sm:$0xff]
        %v979 = vld [vmem:[#allocation2 + $0x198] sm:$0xff]
        %v980 = vld [vmem:[#allocation2 + $0x1a0] sm:$0xff]
        %v981 = vld [vmem:[#allocation2 + $0x1a8] sm:$0xff]
        %v982 = vld [vmem:[#allocation2 + $0x1b0] sm:$0xff]
        %v983 = vld [vmem:[#allocation2 + $0x1b8] sm:$0xff]
        %v984 = vld [vmem:[#allocation2 + $0x1c0] sm:$0xff]
        %v985 = vld [vmem:[#allocation2 + $0x1c8] sm:$0xff]
        %v986 = vld [vmem:[#allocation2 + $0x1d0] sm:$0xff]
        %v987 = vld [vmem:[#allocation2 + $0x1d8] sm:$0xff]
        %v988 = vld [vmem:[#allocation2 + $0x1e0] sm:$0xff]
        %v989 = vld [vmem:[#allocation2 + $0x1e8] sm:$0xff]
        %v990 = vld [vmem:[#allocation2 + $0x1f0] sm:$0xff]
        %v991 = vld [vmem:[#allocation2 + $0x1f8] sm:$0xff]
        %v992 = vld [vmem:[%s567] sm:$0xff]
        %v993 = vld [vmem:[%s567 + $0x8] sm:$0xff]
        %v994 = vld [vmem:[%s567 + $0x10] sm:$0xff]
        %v995 = vld [vmem:[%s567 + $0x18] sm:$0xff]
        %v996 = vld [vmem:[%s567 + $0x20] sm:$0xff]
        %v997 = vld [vmem:[%s567 + $0x28] sm:$0xff]
        %v998 = vld [vmem:[%s567 + $0x30] sm:$0xff]
        %v999 = vld [vmem:[%s567 + $0x38] sm:$0xff]
        %v1000 = vld [vmem:[%s567 + $0x40] sm:$0xff]
        %v1001 = vld [vmem:[%s567 + $0x48] sm:$0xff]
        %v1002 = vld [vmem:[%s567 + $0x50] sm:$0xff]
        %v1003 = vld [vmem:[%s567 + $0x58] sm:$0xff]
        %v1004 = vld [vmem:[%s567 + $0x60] sm:$0xff]
        %v1005 = vld [vmem:[%s567 + $0x68] sm:$0xff]
        %v1006 = vld [vmem:[%s567 + $0x70] sm:$0xff]
        %v1007 = vld [vmem:[%s567 + $0x78] sm:$0xff]
        %v1008 = vld [vmem:[%s567 + $0x80] sm:$0xff]
        %v1009 = vld [vmem:[%s567 + $0x88] sm:$0xff]
        %v1010 = vld [vmem:[%s567 + $0x90] sm:$0xff]
        %v1011 = vld [vmem:[%s567 + $0x98] sm:$0xff]
        %v1012 = vld [vmem:[%s567 + $0xa0] sm:$0xff]
        %v1013 = vld [vmem:[%s567 + $0xa8] sm:$0xff]
        %v1014 = vld [vmem:[%s567 + $0xb0] sm:$0xff]
        %v1015 = vld [vmem:[%s567 + $0xb8] sm:$0xff]
        %v1016 = vld [vmem:[%s567 + $0xc0] sm:$0xff]
        %v1017 = vld [vmem:[%s567 + $0xc8] sm:$0xff]
        %v1018 = vld [vmem:[%s567 + $0xd0] sm:$0xff]
        %v1019 = vld [vmem:[%s567 + $0xd8] sm:$0xff]
        %v1020 = vld [vmem:[%s567 + $0xe0] sm:$0xff]
        %v1021 = vld [vmem:[%s567 + $0xe8] sm:$0xff]
        %v1022 = vld [vmem:[%s567 + $0xf0] sm:$0xff]
        %v1023 = vld [vmem:[%s567 + $0xf8] sm:$0xff]
        %v1056 = vunpack.c.l.b16 %v736
        %v1057 = vunpack.c.h.b16 %v736
        %v1058 = vunpack.c.l.b16 %v737
        %v1059 = vunpack.c.h.b16 %v737
        %v1060 = vunpack.c.l.b16 %v738
        %v1061 = vunpack.c.h.b16 %v738
        %v1062 = vunpack.c.l.b16 %v739
        %v1063 = vunpack.c.h.b16 %v739
        %v1064 = vunpack.c.l.b16 %v740
        %v1065 = vunpack.c.h.b16 %v740
        %v1066 = vunpack.c.l.b16 %v741
        %v1067 = vunpack.c.h.b16 %v741
        %v1068 = vunpack.c.l.b16 %v742
        %v1069 = vunpack.c.h.b16 %v742
        %v1070 = vunpack.c.l.b16 %v743
        %v1071 = vunpack.c.h.b16 %v743
        %v1072 = vunpack.c.l.b16 %v744
        %v1073 = vunpack.c.h.b16 %v744
        %v1074 = vunpack.c.l.b16 %v745
        %v1075 = vunpack.c.h.b16 %v745
        %v1076 = vunpack.c.l.b16 %v746
        %v1077 = vunpack.c.h.b16 %v746
        %v1078 = vunpack.c.l.b16 %v747
        %v1079 = vunpack.c.h.b16 %v747
        %v1080 = vunpack.c.l.b16 %v748
        %v1081 = vunpack.c.h.b16 %v748
        %v1082 = vunpack.c.l.b16 %v749
        %v1083 = vunpack.c.h.b16 %v749
        %v1084 = vunpack.c.l.b16 %v750
        %v1085 = vunpack.c.h.b16 %v750
        %v1086 = vunpack.c.l.b16 %v751
        %v1087 = vunpack.c.h.b16 %v751
        %v1088 = vunpack.c.l.b16 %v752
        %v1089 = vunpack.c.h.b16 %v752
        %v1090 = vunpack.c.l.b16 %v753
        %v1091 = vunpack.c.h.b16 %v753
        %v1092 = vunpack.c.l.b16 %v754
        %v1093 = vunpack.c.h.b16 %v754
        %v1094 = vunpack.c.l.b16 %v755
        %v1095 = vunpack.c.h.b16 %v755
        %v1096 = vunpack.c.l.b16 %v756
        %v1097 = vunpack.c.h.b16 %v756
        %v1098 = vunpack.c.l.b16 %v757
        %v1099 = vunpack.c.h.b16 %v757
        %v1100 = vunpack.c.l.b16 %v758
        %v1101 = vunpack.c.h.b16 %v758
        %v1102 = vunpack.c.l.b16 %v759
        %v1103 = vunpack.c.h.b16 %v759
        %v1104 = vunpack.c.l.b16 %v760
        %v1105 = vunpack.c.h.b16 %v760
        %v1106 = vunpack.c.l.b16 %v761
        %v1107 = vunpack.c.h.b16 %v761
        %v1108 = vunpack.c.l.b16 %v762
        %v1109 = vunpack.c.h.b16 %v762
        %v1110 = vunpack.c.l.b16 %v763
        %v1111 = vunpack.c.h.b16 %v763
        %v1112 = vunpack.c.l.b16 %v764
        %v1113 = vunpack.c.h.b16 %v764
        %v1114 = vunpack.c.l.b16 %v765
        %v1115 = vunpack.c.h.b16 %v765
        %v1116 = vunpack.c.l.b16 %v766
        %v1117 = vunpack.c.h.b16 %v766
        %v1118 = vunpack.c.l.b16 %v767
        %v1119 = vunpack.c.h.b16 %v767
        %v1120 = vpack.c.b16 %v1058, %v1056
        %v1121 = vpack.c.b16 %v1059, %v1057
        %v1122 = vpack.c.b16 %v1062, %v1060
        %v1123 = vpack.c.b16 %v1063, %v1061
        %v1124 = vpack.c.b16 %v1066, %v1064
        %v1125 = vpack.c.b16 %v1067, %v1065
        %v1126 = vpack.c.b16 %v1070, %v1068
        %v1127 = vpack.c.b16 %v1071, %v1069
        %v1128 = vpack.c.b16 %v1074, %v1072
        %v1129 = vpack.c.b16 %v1075, %v1073
        %v1130 = vpack.c.b16 %v1078, %v1076
        %v1131 = vpack.c.b16 %v1079, %v1077
        %v1132 = vpack.c.b16 %v1082, %v1080
        %v1133 = vpack.c.b16 %v1083, %v1081
        %v1134 = vpack.c.b16 %v1086, %v1084
        %v1135 = vpack.c.b16 %v1087, %v1085
        %v1136 = vpack.c.b16 %v1090, %v1088
        %v1137 = vpack.c.b16 %v1091, %v1089
        %v1138 = vpack.c.b16 %v1094, %v1092
        %v1139 = vpack.c.b16 %v1095, %v1093
        %v1140 = vpack.c.b16 %v1098, %v1096
        %v1141 = vpack.c.b16 %v1099, %v1097
        %v1142 = vpack.c.b16 %v1102, %v1100
        %v1143 = vpack.c.b16 %v1103, %v1101
        %v1144 = vpack.c.b16 %v1106, %v1104
        %v1145 = vpack.c.b16 %v1107, %v1105
        %v1146 = vpack.c.b16 %v1110, %v1108
        %v1147 = vpack.c.b16 %v1111, %v1109
        %v1148 = vpack.c.b16 %v1114, %v1112
        %v1149 = vpack.c.b16 %v1115, %v1113
        %v1150 = vpack.c.b16 %v1118, %v1116
        %v1151 = vpack.c.b16 %v1119, %v1117
        %v1216 = vunpack.c.l.b16 %v992
        %v1217 = vunpack.c.h.b16 %v992
        %v1218 = vunpack.c.l.b16 %v993
        %v1219 = vunpack.c.h.b16 %v993
        %v1220 = vunpack.c.l.b16 %v994
        %v1221 = vunpack.c.h.b16 %v994
        %v1222 = vunpack.c.l.b16 %v995
        %v1223 = vunpack.c.h.b16 %v995
        %v1224 = vunpack.c.l.b16 %v996
        %v1225 = vunpack.c.h.b16 %v996
        %v1226 = vunpack.c.l.b16 %v997
        %v1227 = vunpack.c.h.b16 %v997
        %v1228 = vunpack.c.l.b16 %v998
        %v1229 = vunpack.c.h.b16 %v998
        %v1230 = vunpack.c.l.b16 %v999
        %v1231 = vunpack.c.h.b16 %v999
        %v1232 = vunpack.c.l.b16 %v1000
        %v1233 = vunpack.c.h.b16 %v1000
        %v1234 = vunpack.c.l.b16 %v1001
        %v1235 = vunpack.c.h.b16 %v1001
        %v1236 = vunpack.c.l.b16 %v1002
        %v1237 = vunpack.c.h.b16 %v1002
        %v1238 = vunpack.c.l.b16 %v1003
        %v1239 = vunpack.c.h.b16 %v1003
        %v1240 = vunpack.c.l.b16 %v1004
        %v1241 = vunpack.c.h.b16 %v1004
        %v1242 = vunpack.c.l.b16 %v1005
        %v1243 = vunpack.c.h.b16 %v1005
        %v1244 = vunpack.c.l.b16 %v1006
        %v1245 = vunpack.c.h.b16 %v1006
        %v1246 = vunpack.c.l.b16 %v1007
        %v1247 = vunpack.c.h.b16 %v1007
        %v1248 = vunpack.c.l.b16 %v1008
        %v1249 = vunpack.c.h.b16 %v1008
        %v1250 = vunpack.c.l.b16 %v1009
        %v1251 = vunpack.c.h.b16 %v1009
        %v1252 = vunpack.c.l.b16 %v1010
        %v1253 = vunpack.c.h.b16 %v1010
        %v1254 = vunpack.c.l.b16 %v1011
        %v1255 = vunpack.c.h.b16 %v1011
        %v1256 = vunpack.c.l.b16 %v1012
        %v1257 = vunpack.c.h.b16 %v1012
        %v1258 = vunpack.c.l.b16 %v1013
        %v1259 = vunpack.c.h.b16 %v1013
        %v1260 = vunpack.c.l.b16 %v1014
        %v1261 = vunpack.c.h.b16 %v1014
        %v1262 = vunpack.c.l.b16 %v1015
        %v1263 = vunpack.c.h.b16 %v1015
        %v1264 = vunpack.c.l.b16 %v1016
        %v1265 = vunpack.c.h.b16 %v1016
        %v1266 = vunpack.c.l.b16 %v1017
        %v1267 = vunpack.c.h.b16 %v1017
        %v1268 = vunpack.c.l.b16 %v1018
        %v1269 = vunpack.c.h.b16 %v1018
        %v1270 = vunpack.c.l.b16 %v1019
        %v1271 = vunpack.c.h.b16 %v1019
        %v1272 = vunpack.c.l.b16 %v1020
        %v1273 = vunpack.c.h.b16 %v1020
        %v1274 = vunpack.c.l.b16 %v1021
        %v1275 = vunpack.c.h.b16 %v1021
        %v1276 = vunpack.c.l.b16 %v1022
        %v1277 = vunpack.c.h.b16 %v1022
        %v1278 = vunpack.c.l.b16 %v1023
        %v1279 = vunpack.c.h.b16 %v1023
        %v1280 = vpack.c.b16 %v1218, %v1216
        %v1281 = vpack.c.b16 %v1219, %v1217
        %v1282 = vpack.c.b16 %v1222, %v1220
        %v1283 = vpack.c.b16 %v1223, %v1221
        %v1284 = vpack.c.b16 %v1226, %v1224
        %v1285 = vpack.c.b16 %v1227, %v1225
        %v1286 = vpack.c.b16 %v1230, %v1228
        %v1287 = vpack.c.b16 %v1231, %v1229
        %v1288 = vpack.c.b16 %v1234, %v1232
        %v1289 = vpack.c.b16 %v1235, %v1233
        %v1290 = vpack.c.b16 %v1238, %v1236
        %v1291 = vpack.c.b16 %v1239, %v1237
        %v1292 = vpack.c.b16 %v1242, %v1240
        %v1293 = vpack.c.b16 %v1243, %v1241
        %v1294 = vpack.c.b16 %v1246, %v1244
        %v1295 = vpack.c.b16 %v1247, %v1245
        %v1296 = vpack.c.b16 %v1250, %v1248
        %v1297 = vpack.c.b16 %v1251, %v1249
        %v1298 = vpack.c.b16 %v1254, %v1252
        %v1299 = vpack.c.b16 %v1255, %v1253
        %v1300 = vpack.c.b16 %v1258, %v1256
        %v1301 = vpack.c.b16 %v1259, %v1257
        %v1302 = vpack.c.b16 %v1262, %v1260
        %v1303 = vpack.c.b16 %v1263, %v1261
        %v1304 = vpack.c.b16 %v1266, %v1264
        %v1305 = vpack.c.b16 %v1267, %v1265
        %v1306 = vpack.c.b16 %v1270, %v1268
        %v1307 = vpack.c.b16 %v1271, %v1269
        %v1308 = vpack.c.b16 %v1274, %v1272
        %v1309 = vpack.c.b16 %v1275, %v1273
        %v1310 = vpack.c.b16 %v1278, %v1276
        %v1311 = vpack.c.b16 %v1279, %v1277
        %1344 = vmatpush.bf16.msra.mxu0 %v1294
        %1345 = vmatpush.bf16.msra.mxu0 %v1292
        %1346 = vmatpush.bf16.msra.mxu0 %v1290
        %1347 = vmatpush.bf16.msra.mxu0 %v1288
        %1348 = vmatpush.bf16.msra.mxu0 %v1286
        %1349 = vmatpush.bf16.msra.mxu0 %v1284
        %1350 = vmatpush.bf16.msra.mxu0 %v1282
        %1351 = vmatpush.bf16.msra.mxu0 %v1280
        %1352 = vmatmul.bf16.gmra.mxu0 %v1120
        %v1353 = vpop.f32.mrf.mxu0
        %v1354 = vadd.f32 0.0, %v1353
        %v1355 = vpop.f32.mrf.mxu0
        %v1356 = vadd.f32 0.0, %v1355
        %1357 = vmatmul.bf16.gmra.mxu0 %v1122
        %v1358 = vpop.f32.mrf.mxu0
        %v1359 = vadd.f32 0.0, %v1358
        %v1360 = vpop.f32.mrf.mxu0
        %v1361 = vadd.f32 0.0, %v1360
        %1362 = vmatmul.bf16.gmra.mxu0 %v1124
        %v1363 = vpop.f32.mrf.mxu0
        %v1364 = vadd.f32 0.0, %v1363
        %v1365 = vpop.f32.mrf.mxu0
        %v1366 = vadd.f32 0.0, %v1365
        %1367 = vmatmul.bf16.gmra.mxu0 %v1126
        %v1368 = vpop.f32.mrf.mxu0
        %v1369 = vadd.f32 0.0, %v1368
        %v1370 = vpop.f32.mrf.mxu0
        %v1371 = vadd.f32 0.0, %v1370
        %1372 = vmatmul.bf16.gmra.mxu0 %v1128
        %v1373 = vpop.f32.mrf.mxu0
        %v1374 = vadd.f32 0.0, %v1373
        %v1375 = vpop.f32.mrf.mxu0
        %v1376 = vadd.f32 0.0, %v1375
        %1377 = vmatmul.bf16.gmra.mxu0 %v1130
        %v1378 = vpop.f32.mrf.mxu0
        %v1379 = vadd.f32 0.0, %v1378
        %v1380 = vpop.f32.mrf.mxu0
        %v1381 = vadd.f32 0.0, %v1380
        %1382 = vmatmul.bf16.gmra.mxu0 %v1132
        %v1383 = vpop.f32.mrf.mxu0
        %v1384 = vadd.f32 0.0, %v1383
        %v1385 = vpop.f32.mrf.mxu0
        %v1386 = vadd.f32 0.0, %v1385
        %1387 = vmatmul.bf16.gmra.mxu0 %v1134
        %v1388 = vpop.f32.mrf.mxu0
        %v1389 = vadd.f32 0.0, %v1388
        %v1390 = vpop.f32.mrf.mxu0
        %v1391 = vadd.f32 0.0, %v1390
        %1392 = vmatmul.bf16.gmra.mxu0 %v1136
        %v1393 = vpop.f32.mrf.mxu0
        %v1394 = vadd.f32 0.0, %v1393
        %v1395 = vpop.f32.mrf.mxu0
        %v1396 = vadd.f32 0.0, %v1395
        %1397 = vmatmul.bf16.gmra.mxu0 %v1138
        %v1398 = vpop.f32.mrf.mxu0
        %v1399 = vadd.f32 0.0, %v1398
        %v1400 = vpop.f32.mrf.mxu0
        %v1401 = vadd.f32 0.0, %v1400
        %1402 = vmatmul.bf16.gmra.mxu0 %v1140
        %v1403 = vpop.f32.mrf.mxu0
        %v1404 = vadd.f32 0.0, %v1403
        %v1405 = vpop.f32.mrf.mxu0
        %v1406 = vadd.f32 0.0, %v1405
        %1407 = vmatmul.bf16.gmra.mxu0 %v1142
        %v1408 = vpop.f32.mrf.mxu0
        %v1409 = vadd.f32 0.0, %v1408
        %v1410 = vpop.f32.mrf.mxu0
        %v1411 = vadd.f32 0.0, %v1410
        %1412 = vmatmul.bf16.gmra.mxu0 %v1144
        %v1413 = vpop.f32.mrf.mxu0
        %v1414 = vadd.f32 0.0, %v1413
        %v1415 = vpop.f32.mrf.mxu0
        %v1416 = vadd.f32 0.0, %v1415
        %1417 = vmatmul.bf16.gmra.mxu0 %v1146
        %v1418 = vpop.f32.mrf.mxu0
        %v1419 = vadd.f32 0.0, %v1418
        %v1420 = vpop.f32.mrf.mxu0
        %v1421 = vadd.f32 0.0, %v1420
        %1422 = vmatmul.bf16.gmra.mxu0 %v1148
        %v1423 = vpop.f32.mrf.mxu0
        %v1424 = vadd.f32 0.0, %v1423
        %v1425 = vpop.f32.mrf.mxu0
        %v1426 = vadd.f32 0.0, %v1425
        %1427 = vmatmul.bf16.gmra.mxu0 %v1150
        %v1428 = vpop.f32.mrf.mxu0
        %v1429 = vadd.f32 0.0, %v1428
        %v1430 = vpop.f32.mrf.mxu0
        %v1431 = vadd.f32 0.0, %v1430
        %1432 = vdwg.mxu0
        %1433 = vmatpush.bf16.msra.mxu0 %v1310
        %1434 = vmatpush.bf16.msra.mxu0 %v1308
        %1435 = vmatpush.bf16.msra.mxu0 %v1306
        %1436 = vmatpush.bf16.msra.mxu0 %v1304
        %1437 = vmatpush.bf16.msra.mxu0 %v1302
        %1438 = vmatpush.bf16.msra.mxu0 %v1300
        %1439 = vmatpush.bf16.msra.mxu0 %v1298
        %1440 = vmatpush.bf16.msra.mxu0 %v1296
        %1441 = vmatmul.bf16.gmra.mxu0 %v1121
        %v1442 = vpop.f32.mrf.mxu0
        %v1443 = vadd.f32 %v1354, %v1442
        %v1444 = vpop.f32.mrf.mxu0
        %v1445 = vadd.f32 %v1356, %v1444
        %1446 = vmatmul.bf16.gmra.mxu0 %v1123
        %v1447 = vpop.f32.mrf.mxu0
        %v1448 = vadd.f32 %v1359, %v1447
        %v1449 = vpop.f32.mrf.mxu0
        %v1450 = vadd.f32 %v1361, %v1449
        %1451 = vmatmul.bf16.gmra.mxu0 %v1125
        %v1452 = vpop.f32.mrf.mxu0
        %v1453 = vadd.f32 %v1364, %v1452
        %v1454 = vpop.f32.mrf.mxu0
        %v1455 = vadd.f32 %v1366, %v1454
        %1456 = vmatmul.bf16.gmra.mxu0 %v1127
        %v1457 = vpop.f32.mrf.mxu0
        %v1458 = vadd.f32 %v1369, %v1457
        %v1459 = vpop.f32.mrf.mxu0
        %v1460 = vadd.f32 %v1371, %v1459
        %1461 = vmatmul.bf16.gmra.mxu0 %v1129
        %v1462 = vpop.f32.mrf.mxu0
        %v1463 = vadd.f32 %v1374, %v1462
        %v1464 = vpop.f32.mrf.mxu0
        %v1465 = vadd.f32 %v1376, %v1464
        %1466 = vmatmul.bf16.gmra.mxu0 %v1131
        %v1467 = vpop.f32.mrf.mxu0
        %v1468 = vadd.f32 %v1379, %v1467
        %v1469 = vpop.f32.mrf.mxu0
        %v1470 = vadd.f32 %v1381, %v1469
        %1471 = vmatmul.bf16.gmra.mxu0 %v1133
        %v1472 = vpop.f32.mrf.mxu0
        %v1473 = vadd.f32 %v1384, %v1472
        %v1474 = vpop.f32.mrf.mxu0
        %v1475 = vadd.f32 %v1386, %v1474
        %1476 = vmatmul.bf16.gmra.mxu0 %v1135
        %v1477 = vpop.f32.mrf.mxu0
        %v1478 = vadd.f32 %v1389, %v1477
        %v1479 = vpop.f32.mrf.mxu0
        %v1480 = vadd.f32 %v1391, %v1479
        %1481 = vmatmul.bf16.gmra.mxu0 %v1137
        %v1482 = vpop.f32.mrf.mxu0
        %v1483 = vadd.f32 %v1394, %v1482
        %v1484 = vpop.f32.mrf.mxu0
        %v1485 = vadd.f32 %v1396, %v1484
        %1486 = vmatmul.bf16.gmra.mxu0 %v1139
        %v1487 = vpop.f32.mrf.mxu0
        %v1488 = vadd.f32 %v1399, %v1487
        %v1489 = vpop.f32.mrf.mxu0
        %v1490 = vadd.f32 %v1401, %v1489
        %1491 = vmatmul.bf16.gmra.mxu0 %v1141
        %v1492 = vpop.f32.mrf.mxu0
        %v1493 = vadd.f32 %v1404, %v1492
        %v1494 = vpop.f32.mrf.mxu0
        %v1495 = vadd.f32 %v1406, %v1494
        %1496 = vmatmul.bf16.gmra.mxu0 %v1143
        %v1497 = vpop.f32.mrf.mxu0
        %v1498 = vadd.f32 %v1409, %v1497
        %v1499 = vpop.f32.mrf.mxu0
        %v1500 = vadd.f32 %v1411, %v1499
        %1501 = vmatmul.bf16.gmra.mxu0 %v1145
        %v1502 = vpop.f32.mrf.mxu0
        %v1503 = vadd.f32 %v1414, %v1502
        %v1504 = vpop.f32.mrf.mxu0
        %v1505 = vadd.f32 %v1416, %v1504
        %1506 = vmatmul.bf16.gmra.mxu0 %v1147
        %v1507 = vpop.f32.mrf.mxu0
        %v1508 = vadd.f32 %v1419, %v1507
        %v1509 = vpop.f32.mrf.mxu0
        %v1510 = vadd.f32 %v1421, %v1509
        %1511 = vmatmul.bf16.gmra.mxu0 %v1149
        %v1512 = vpop.f32.mrf.mxu0
        %v1513 = vadd.f32 %v1424, %v1512
        %v1514 = vpop.f32.mrf.mxu0
        %v1515 = vadd.f32 %v1426, %v1514
        %1516 = vmatmul.bf16.gmra.mxu0 %v1151
        %v1517 = vpop.f32.mrf.mxu0
        %v1518 = vadd.f32 %v1429, %v1517
        %v1519 = vpop.f32.mrf.mxu0
        %v1520 = vadd.f32 %v1431, %v1519
        %1521 = vdwg.mxu0
        %1522 = vmatpush.bf16.msra.mxu0 %v1295
        %1523 = vmatpush.bf16.msra.mxu0 %v1293
        %1524 = vmatpush.bf16.msra.mxu0 %v1291
        %1525 = vmatpush.bf16.msra.mxu0 %v1289
        %1526 = vmatpush.bf16.msra.mxu0 %v1287
        %1527 = vmatpush.bf16.msra.mxu0 %v1285
        %1528 = vmatpush.bf16.msra.mxu0 %v1283
        %1529 = vmatpush.bf16.msra.mxu0 %v1281
        %1530 = vmatmul.bf16.gmra.mxu0 %v1120
        %v1531 = vpop.f32.mrf.mxu0
        %v1532 = vadd.f32 0.0, %v1531
        %v1533 = vpop.f32.mrf.mxu0
        %v1534 = vadd.f32 0.0, %v1533
        %1535 = vmatmul.bf16.gmra.mxu0 %v1122
        %v1536 = vpop.f32.mrf.mxu0
        %v1537 = vadd.f32 0.0, %v1536
        %v1538 = vpop.f32.mrf.mxu0
        %v1539 = vadd.f32 0.0, %v1538
        %1540 = vmatmul.bf16.gmra.mxu0 %v1124
        %v1541 = vpop.f32.mrf.mxu0
        %v1542 = vadd.f32 0.0, %v1541
        %v1543 = vpop.f32.mrf.mxu0
        %v1544 = vadd.f32 0.0, %v1543
        %1545 = vmatmul.bf16.gmra.mxu0 %v1126
        %v1546 = vpop.f32.mrf.mxu0
        %v1547 = vadd.f32 0.0, %v1546
        %v1548 = vpop.f32.mrf.mxu0
        %v1549 = vadd.f32 0.0, %v1548
        %1550 = vmatmul.bf16.gmra.mxu0 %v1128
        %v1551 = vpop.f32.mrf.mxu0
        %v1552 = vadd.f32 0.0, %v1551
        %v1553 = vpop.f32.mrf.mxu0
        %v1554 = vadd.f32 0.0, %v1553
        %1555 = vmatmul.bf16.gmra.mxu0 %v1130
        %v1556 = vpop.f32.mrf.mxu0
        %v1557 = vadd.f32 0.0, %v1556
        %v1558 = vpop.f32.mrf.mxu0
        %v1559 = vadd.f32 0.0, %v1558
        %1560 = vmatmul.bf16.gmra.mxu0 %v1132
        %v1561 = vpop.f32.mrf.mxu0
        %v1562 = vadd.f32 0.0, %v1561
        %v1563 = vpop.f32.mrf.mxu0
        %v1564 = vadd.f32 0.0, %v1563
        %1565 = vmatmul.bf16.gmra.mxu0 %v1134
        %v1566 = vpop.f32.mrf.mxu0
        %v1567 = vadd.f32 0.0, %v1566
        %v1568 = vpop.f32.mrf.mxu0
        %v1569 = vadd.f32 0.0, %v1568
        %1570 = vmatmul.bf16.gmra.mxu0 %v1136
        %v1571 = vpop.f32.mrf.mxu0
        %v1572 = vadd.f32 0.0, %v1571
        %v1573 = vpop.f32.mrf.mxu0
        %v1574 = vadd.f32 0.0, %v1573
        %1575 = vmatmul.bf16.gmra.mxu0 %v1138
        %v1576 = vpop.f32.mrf.mxu0
        %v1577 = vadd.f32 0.0, %v1576
        %v1578 = vpop.f32.mrf.mxu0
        %v1579 = vadd.f32 0.0, %v1578
        %1580 = vmatmul.bf16.gmra.mxu0 %v1140
        %v1581 = vpop.f32.mrf.mxu0
        %v1582 = vadd.f32 0.0, %v1581
        %v1583 = vpop.f32.mrf.mxu0
        %v1584 = vadd.f32 0.0, %v1583
        %1585 = vmatmul.bf16.gmra.mxu0 %v1142
        %v1586 = vpop.f32.mrf.mxu0
        %v1587 = vadd.f32 0.0, %v1586
        %v1588 = vpop.f32.mrf.mxu0
        %v1589 = vadd.f32 0.0, %v1588
        %1590 = vmatmul.bf16.gmra.mxu0 %v1144
        %v1591 = vpop.f32.mrf.mxu0
        %v1592 = vadd.f32 0.0, %v1591
        %v1593 = vpop.f32.mrf.mxu0
        %v1594 = vadd.f32 0.0, %v1593
        %1595 = vmatmul.bf16.gmra.mxu0 %v1146
        %v1596 = vpop.f32.mrf.mxu0
        %v1597 = vadd.f32 0.0, %v1596
        %v1598 = vpop.f32.mrf.mxu0
        %v1599 = vadd.f32 0.0, %v1598
        %1600 = vmatmul.bf16.gmra.mxu0 %v1148
        %v1601 = vpop.f32.mrf.mxu0
        %v1602 = vadd.f32 0.0, %v1601
        %v1603 = vpop.f32.mrf.mxu0
        %v1604 = vadd.f32 0.0, %v1603
        %1605 = vmatmul.bf16.gmra.mxu0 %v1150
        %v1606 = vpop.f32.mrf.mxu0
        %v1607 = vadd.f32 0.0, %v1606
        %v1608 = vpop.f32.mrf.mxu0
        %v1609 = vadd.f32 0.0, %v1608
        %1610 = vdwg.mxu0
        %1611 = vmatpush.bf16.msra.mxu0 %v1311
        %1612 = vmatpush.bf16.msra.mxu0 %v1309
        %1613 = vmatpush.bf16.msra.mxu0 %v1307
        %1614 = vmatpush.bf16.msra.mxu0 %v1305
        %1615 = vmatpush.bf16.msra.mxu0 %v1303
        %1616 = vmatpush.bf16.msra.mxu0 %v1301
        %1617 = vmatpush.bf16.msra.mxu0 %v1299
        %1618 = vmatpush.bf16.msra.mxu0 %v1297
        %1619 = vmatmul.bf16.gmra.mxu0 %v1121
        %v1620 = vpop.f32.mrf.mxu0
        %v1621 = vadd.f32 %v1532, %v1620
        %v1622 = vpop.f32.mrf.mxu0
        %v1623 = vadd.f32 %v1534, %v1622
        %1624 = vmatmul.bf16.gmra.mxu0 %v1123
        %v1625 = vpop.f32.mrf.mxu0
        %v1626 = vadd.f32 %v1537, %v1625
        %v1627 = vpop.f32.mrf.mxu0
        %v1628 = vadd.f32 %v1539, %v1627
        %1629 = vmatmul.bf16.gmra.mxu0 %v1125
        %v1630 = vpop.f32.mrf.mxu0
        %v1631 = vadd.f32 %v1542, %v1630
        %v1632 = vpop.f32.mrf.mxu0
        %v1633 = vadd.f32 %v1544, %v1632
        %1634 = vmatmul.bf16.gmra.mxu0 %v1127
        %v1635 = vpop.f32.mrf.mxu0
        %v1636 = vadd.f32 %v1547, %v1635
        %v1637 = vpop.f32.mrf.mxu0
        %v1638 = vadd.f32 %v1549, %v1637
        %1639 = vmatmul.bf16.gmra.mxu0 %v1129
        %v1640 = vpop.f32.mrf.mxu0
        %v1641 = vadd.f32 %v1552, %v1640
        %v1642 = vpop.f32.mrf.mxu0
        %v1643 = vadd.f32 %v1554, %v1642
        %1644 = vmatmul.bf16.gmra.mxu0 %v1131
        %v1645 = vpop.f32.mrf.mxu0
        %v1646 = vadd.f32 %v1557, %v1645
        %v1647 = vpop.f32.mrf.mxu0
        %v1648 = vadd.f32 %v1559, %v1647
        %1649 = vmatmul.bf16.gmra.mxu0 %v1133
        %v1650 = vpop.f32.mrf.mxu0
        %v1651 = vadd.f32 %v1562, %v1650
        %v1652 = vpop.f32.mrf.mxu0
        %v1653 = vadd.f32 %v1564, %v1652
        %1654 = vmatmul.bf16.gmra.mxu0 %v1135
        %v1655 = vpop.f32.mrf.mxu0
        %v1656 = vadd.f32 %v1567, %v1655
        %v1657 = vpop.f32.mrf.mxu0
        %v1658 = vadd.f32 %v1569, %v1657
        %1659 = vmatmul.bf16.gmra.mxu0 %v1137
        %v1660 = vpop.f32.mrf.mxu0
        %v1661 = vadd.f32 %v1572, %v1660
        %v1662 = vpop.f32.mrf.mxu0
        %v1663 = vadd.f32 %v1574, %v1662
        %1664 = vmatmul.bf16.gmra.mxu0 %v1139
        %v1665 = vpop.f32.mrf.mxu0
        %v1666 = vadd.f32 %v1577, %v1665
        %v1667 = vpop.f32.mrf.mxu0
        %v1668 = vadd.f32 %v1579, %v1667
        %1669 = vmatmul.bf16.gmra.mxu0 %v1141
        %v1670 = vpop.f32.mrf.mxu0
        %v1671 = vadd.f32 %v1582, %v1670
        %v1672 = vpop.f32.mrf.mxu0
        %v1673 = vadd.f32 %v1584, %v1672
        %1674 = vmatmul.bf16.gmra.mxu0 %v1143
        %v1675 = vpop.f32.mrf.mxu0
        %v1676 = vadd.f32 %v1587, %v1675
        %v1677 = vpop.f32.mrf.mxu0
        %v1678 = vadd.f32 %v1589, %v1677
        %1679 = vmatmul.bf16.gmra.mxu0 %v1145
        %v1680 = vpop.f32.mrf.mxu0
        %v1681 = vadd.f32 %v1592, %v1680
        %v1682 = vpop.f32.mrf.mxu0
        %v1683 = vadd.f32 %v1594, %v1682
        %1684 = vmatmul.bf16.gmra.mxu0 %v1147
        %v1685 = vpop.f32.mrf.mxu0
        %v1686 = vadd.f32 %v1597, %v1685
        %v1687 = vpop.f32.mrf.mxu0
        %v1688 = vadd.f32 %v1599, %v1687
        %1689 = vmatmul.bf16.gmra.mxu0 %v1149
        %v1690 = vpop.f32.mrf.mxu0
        %v1691 = vadd.f32 %v1602, %v1690
        %v1692 = vpop.f32.mrf.mxu0
        %v1693 = vadd.f32 %v1604, %v1692
        %1694 = vmatmul.bf16.gmra.mxu0 %v1151
        %v1695 = vpop.f32.mrf.mxu0
        %v1696 = vadd.f32 %v1607, %v1695
        %v1697 = vpop.f32.mrf.mxu0
        %v1698 = vadd.f32 %v1609, %v1697
        %1699 = vdwg.mxu0
        %v1700 = vadd.f32 %v928, %v1443
        %v1701 = vadd.f32 %v929, %v1621
        %v1702 = vadd.f32 %v930, %v1445
        %v1703 = vadd.f32 %v931, %v1623
        %v1704 = vadd.f32 %v932, %v1448
        %v1705 = vadd.f32 %v933, %v1626
        %v1706 = vadd.f32 %v934, %v1450
        %v1707 = vadd.f32 %v935, %v1628
        %v1708 = vadd.f32 %v936, %v1453
        %v1709 = vadd.f32 %v937, %v1631
        %v1710 = vadd.f32 %v938, %v1455
        %v1711 = vadd.f32 %v939, %v1633
        %v1712 = vadd.f32 %v940, %v1458
        %v1713 = vadd.f32 %v941, %v1636
        %v1714 = vadd.f32 %v942, %v1460
        %v1715 = vadd.f32 %v943, %v1638
        %v1716 = vadd.f32 %v944, %v1463
        %v1717 = vadd.f32 %v945, %v1641
        %v1718 = vadd.f32 %v946, %v1465
        %v1719 = vadd.f32 %v947, %v1643
        %v1720 = vadd.f32 %v948, %v1468
        %v1721 = vadd.f32 %v949, %v1646
        %v1722 = vadd.f32 %v950, %v1470
        %v1723 = vadd.f32 %v951, %v1648
        %v1724 = vadd.f32 %v952, %v1473
        %v1725 = vadd.f32 %v953, %v1651
        %v1726 = vadd.f32 %v954, %v1475
        %v1727 = vadd.f32 %v955, %v1653
        %v1728 = vadd.f32 %v956, %v1478
        %v1729 = vadd.f32 %v957, %v1656
        %v1730 = vadd.f32 %v958, %v1480
        %v1731 = vadd.f32 %v959, %v1658
        %v1732 = vadd.f32 %v960, %v1483
        %v1733 = vadd.f32 %v961, %v1661
        %v1734 = vadd.f32 %v962, %v1485
        %v1735 = vadd.f32 %v963, %v1663
        %v1736 = vadd.f32 %v964, %v1488
        %v1737 = vadd.f32 %v965, %v1666
        %v1738 = vadd.f32 %v966, %v1490
        %v1739 = vadd.f32 %v967, %v1668
        %v1740 = vadd.f32 %v968, %v1493
        %v1741 = vadd.f32 %v969, %v1671
        %v1742 = vadd.f32 %v970, %v1495
        %v1743 = vadd.f32 %v971, %v1673
        %v1744 = vadd.f32 %v972, %v1498
        %v1745 = vadd.f32 %v973, %v1676
        %v1746 = vadd.f32 %v974, %v1500
        %v1747 = vadd.f32 %v975, %v1678
        %v1748 = vadd.f32 %v976, %v1503
        %v1749 = vadd.f32 %v977, %v1681
        %v1750 = vadd.f32 %v978, %v1505
        %v1751 = vadd.f32 %v979, %v1683
        %v1752 = vadd.f32 %v980, %v1508
        %v1753 = vadd.f32 %v981, %v1686
        %v1754 = vadd.f32 %v982, %v1510
        %v1755 = vadd.f32 %v983, %v1688
        %v1756 = vadd.f32 %v984, %v1513
        %v1757 = vadd.f32 %v985, %v1691
        %v1758 = vadd.f32 %v986, %v1515
        %v1759 = vadd.f32 %v987, %v1693
        %v1760 = vadd.f32 %v988, %v1518
        %v1761 = vadd.f32 %v989, %v1696
        %v1762 = vadd.f32 %v990, %v1520
        %v1763 = vadd.f32 %v991, %v1698
        %1764 = vst [vmem:[#allocation2] sm:$0xff] %v1700
        %1765 = vst [vmem:[#allocation2 + $0x8] sm:$0xff] %v1701
        %1766 = vst [vmem:[#allocation2 + $0x10] sm:$0xff] %v1702
        %1767 = vst [vmem:[#allocation2 + $0x18] sm:$0xff] %v1703
        %1768 = vst [vmem:[#allocation2 + $0x20] sm:$0xff] %v1704
        %1769 = vst [vmem:[#allocation2 + $0x28] sm:$0xff] %v1705
        %1770 = vst [vmem:[#allocation2 + $0x30] sm:$0xff] %v1706
        %1771 = vst [vmem:[#allocation2 + $0x38] sm:$0xff] %v1707
        %1772 = vst [vmem:[#allocation2 + $0x40] sm:$0xff] %v1708
        %1773 = vst [vmem:[#allocation2 + $0x48] sm:$0xff] %v1709
        %1774 = vst [vmem:[#allocation2 + $0x50] sm:$0xff] %v1710
        %1775 = vst [vmem:[#allocation2 + $0x58] sm:$0xff] %v1711
        %1776 = vst [vmem:[#allocation2 + $0x60] sm:$0xff] %v1712
        %1777 = vst [vmem:[#allocation2 + $0x68] sm:$0xff] %v1713
        %1778 = vst [vmem:[#allocation2 + $0x70] sm:$0xff] %v1714
        %1779 = vst [vmem:[#allocation2 + $0x78] sm:$0xff] %v1715
        %1780 = vst [vmem:[#allocation2 + $0x80] sm:$0xff] %v1716
        %1781 = vst [vmem:[#allocation2 + $0x88] sm:$0xff] %v1717
        %1782 = vst [vmem:[#allocation2 + $0x90] sm:$0xff] %v1718
        %1783 = vst [vmem:[#allocation2 + $0x98] sm:$0xff] %v1719
        %1784 = vst [vmem:[#allocation2 + $0xa0] sm:$0xff] %v1720
        %1785 = vst [vmem:[#allocation2 + $0xa8] sm:$0xff] %v1721
        %1786 = vst [vmem:[#allocation2 + $0xb0] sm:$0xff] %v1722
        %1787 = vst [vmem:[#allocation2 + $0xb8] sm:$0xff] %v1723
        %1788 = vst [vmem:[#allocation2 + $0xc0] sm:$0xff] %v1724
        %1789 = vst [vmem:[#allocation2 + $0xc8] sm:$0xff] %v1725
        %1790 = vst [vmem:[#allocation2 + $0xd0] sm:$0xff] %v1726
        %1791 = vst [vmem:[#allocation2 + $0xd8] sm:$0xff] %v1727
        %1792 = vst [vmem:[#allocation2 + $0xe0] sm:$0xff] %v1728
        %1793 = vst [vmem:[#allocation2 + $0xe8] sm:$0xff] %v1729
        %1794 = vst [vmem:[#allocation2 + $0xf0] sm:$0xff] %v1730
        %1795 = vst [vmem:[#allocation2 + $0xf8] sm:$0xff] %v1731
        %1796 = vst [vmem:[#allocation2 + $0x100] sm:$0xff] %v1732
        %1797 = vst [vmem:[#allocation2 + $0x108] sm:$0xff] %v1733
        %1798 = vst [vmem:[#allocation2 + $0x110] sm:$0xff] %v1734
        %1799 = vst [vmem:[#allocation2 + $0x118] sm:$0xff] %v1735
        %1800 = vst [vmem:[#allocation2 + $0x120] sm:$0xff] %v1736
        %1801 = vst [vmem:[#allocation2 + $0x128] sm:$0xff] %v1737
        %1802 = vst [vmem:[#allocation2 + $0x130] sm:$0xff] %v1738
        %1803 = vst [vmem:[#allocation2 + $0x138] sm:$0xff] %v1739
        %1804 = vst [vmem:[#allocation2 + $0x140] sm:$0xff] %v1740
        %1805 = vst [vmem:[#allocation2 + $0x148] sm:$0xff] %v1741
        %1806 = vst [vmem:[#allocation2 + $0x150] sm:$0xff] %v1742
        %1807 = vst [vmem:[#allocation2 + $0x158] sm:$0xff] %v1743
        %1808 = vst [vmem:[#allocation2 + $0x160] sm:$0xff] %v1744
        %1809 = vst [vmem:[#allocation2 + $0x168] sm:$0xff] %v1745
        %1810 = vst [vmem:[#allocation2 + $0x170] sm:$0xff] %v1746
        %1811 = vst [vmem:[#allocation2 + $0x178] sm:$0xff] %v1747
        %1812 = vst [vmem:[#allocation2 + $0x180] sm:$0xff] %v1748
        %1813 = vst [vmem:[#allocation2 + $0x188] sm:$0xff] %v1749
        %1814 = vst [vmem:[#allocation2 + $0x190] sm:$0xff] %v1750
        %1815 = vst [vmem:[#allocation2 + $0x198] sm:$0xff] %v1751
        %1816 = vst [vmem:[#allocation2 + $0x1a0] sm:$0xff] %v1752
        %1817 = vst [vmem:[#allocation2 + $0x1a8] sm:$0xff] %v1753
        %1818 = vst [vmem:[#allocation2 + $0x1b0] sm:$0xff] %v1754
        %1819 = vst [vmem:[#allocation2 + $0x1b8] sm:$0xff] %v1755
        %1820 = vst [vmem:[#allocation2 + $0x1c0] sm:$0xff] %v1756
        %1821 = vst [vmem:[#allocation2 + $0x1c8] sm:$0xff] %v1757
        %1822 = vst [vmem:[#allocation2 + $0x1d0] sm:$0xff] %v1758
        %1823 = vst [vmem:[#allocation2 + $0x1d8] sm:$0xff] %v1759
        %1824 = vst [vmem:[#allocation2 + $0x1e0] sm:$0xff] %v1760
        %1825 = vst [vmem:[#allocation2 + $0x1e8] sm:$0xff] %v1761
        %1826 = vst [vmem:[#allocation2 + $0x1f0] sm:$0xff] %v1762
        %1827 = vst [vmem:[#allocation2 + $0x1f8] sm:$0xff] %v1763
        %v1828 = vld [vmem:[#allocation3] sm:$0xff]
        %v1829 = vld [vmem:[#allocation3 + $0x8] sm:$0xff]
        %v1830 = vld [vmem:[#allocation3 + $0x10] sm:$0xff]
        %v1831 = vld [vmem:[#allocation3 + $0x18] sm:$0xff]
        %v1832 = vld [vmem:[#allocation3 + $0x20] sm:$0xff]
        %v1833 = vld [vmem:[#allocation3 + $0x28] sm:$0xff]
        %v1834 = vld [vmem:[#allocation3 + $0x30] sm:$0xff]
        %v1835 = vld [vmem:[#allocation3 + $0x38] sm:$0xff]
        %v1836 = vld [vmem:[#allocation3 + $0x40] sm:$0xff]
        %v1837 = vld [vmem:[#allocation3 + $0x48] sm:$0xff]
        %v1838 = vld [vmem:[#allocation3 + $0x50] sm:$0xff]
        %v1839 = vld [vmem:[#allocation3 + $0x58] sm:$0xff]
        %v1840 = vld [vmem:[#allocation3 + $0x60] sm:$0xff]
        %v1841 = vld [vmem:[#allocation3 + $0x68] sm:$0xff]
        %v1842 = vld [vmem:[#allocation3 + $0x70] sm:$0xff]
        %v1843 = vld [vmem:[#allocation3 + $0x78] sm:$0xff]
        %v1844 = vld [vmem:[#allocation3 + $0x80] sm:$0xff]
        %v1845 = vld [vmem:[#allocation3 + $0x88] sm:$0xff]
        %v1846 = vld [vmem:[#allocation3 + $0x90] sm:$0xff]
        %v1847 = vld [vmem:[#allocation3 + $0x98] sm:$0xff]
        %v1848 = vld [vmem:[#allocation3 + $0xa0] sm:$0xff]
        %v1849 = vld [vmem:[#allocation3 + $0xa8] sm:$0xff]
        %v1850 = vld [vmem:[#allocation3 + $0xb0] sm:$0xff]
        %v1851 = vld [vmem:[#allocation3 + $0xb8] sm:$0xff]
        %v1852 = vld [vmem:[#allocation3 + $0xc0] sm:$0xff]
        %v1853 = vld [vmem:[#allocation3 + $0xc8] sm:$0xff]
        %v1854 = vld [vmem:[#allocation3 + $0xd0] sm:$0xff]
        %v1855 = vld [vmem:[#allocation3 + $0xd8] sm:$0xff]
        %v1856 = vld [vmem:[#allocation3 + $0xe0] sm:$0xff]
        %v1857 = vld [vmem:[#allocation3 + $0xe8] sm:$0xff]
        %v1858 = vld [vmem:[#allocation3 + $0xf0] sm:$0xff]
        %v1859 = vld [vmem:[#allocation3 + $0xf8] sm:$0xff]
        %v1860 = vld [vmem:[#allocation3 + $0x100] sm:$0xff]
        %v1861 = vld [vmem:[#allocation3 + $0x108] sm:$0xff]
        %v1862 = vld [vmem:[#allocation3 + $0x110] sm:$0xff]
        %v1863 = vld [vmem:[#allocation3 + $0x118] sm:$0xff]
        %v1864 = vld [vmem:[#allocation3 + $0x120] sm:$0xff]
        %v1865 = vld [vmem:[#allocation3 + $0x128] sm:$0xff]
        %v1866 = vld [vmem:[#allocation3 + $0x130] sm:$0xff]
        %v1867 = vld [vmem:[#allocation3 + $0x138] sm:$0xff]
        %v1868 = vld [vmem:[#allocation3 + $0x140] sm:$0xff]
        %v1869 = vld [vmem:[#allocation3 + $0x148] sm:$0xff]
        %v1870 = vld [vmem:[#allocation3 + $0x150] sm:$0xff]
        %v1871 = vld [vmem:[#allocation3 + $0x158] sm:$0xff]
        %v1872 = vld [vmem:[#allocation3 + $0x160] sm:$0xff]
        %v1873 = vld [vmem:[#allocation3 + $0x168] sm:$0xff]
        %v1874 = vld [vmem:[#allocation3 + $0x170] sm:$0xff]
        %v1875 = vld [vmem:[#allocation3 + $0x178] sm:$0xff]
        %v1876 = vld [vmem:[#allocation3 + $0x180] sm:$0xff]
        %v1877 = vld [vmem:[#allocation3 + $0x188] sm:$0xff]
        %v1878 = vld [vmem:[#allocation3 + $0x190] sm:$0xff]
        %v1879 = vld [vmem:[#allocation3 + $0x198] sm:$0xff]
        %v1880 = vld [vmem:[#allocation3 + $0x1a0] sm:$0xff]
        %v1881 = vld [vmem:[#allocation3 + $0x1a8] sm:$0xff]
        %v1882 = vld [vmem:[#allocation3 + $0x1b0] sm:$0xff]
        %v1883 = vld [vmem:[#allocation3 + $0x1b8] sm:$0xff]
        %v1884 = vld [vmem:[#allocation3 + $0x1c0] sm:$0xff]
        %v1885 = vld [vmem:[#allocation3 + $0x1c8] sm:$0xff]
        %v1886 = vld [vmem:[#allocation3 + $0x1d0] sm:$0xff]
        %v1887 = vld [vmem:[#allocation3 + $0x1d8] sm:$0xff]
        %v1888 = vld [vmem:[#allocation3 + $0x1e0] sm:$0xff]
        %v1889 = vld [vmem:[#allocation3 + $0x1e8] sm:$0xff]
        %v1890 = vld [vmem:[#allocation3 + $0x1f0] sm:$0xff]
        %v1891 = vld [vmem:[#allocation3 + $0x1f8] sm:$0xff]
        %v1892 = vld [vmem:[%s574] sm:$0xff]
        %v1893 = vld [vmem:[%s574 + $0x8] sm:$0xff]
        %v1894 = vld [vmem:[%s574 + $0x10] sm:$0xff]
        %v1895 = vld [vmem:[%s574 + $0x18] sm:$0xff]
        %v1896 = vld [vmem:[%s574 + $0x20] sm:$0xff]
        %v1897 = vld [vmem:[%s574 + $0x28] sm:$0xff]
        %v1898 = vld [vmem:[%s574 + $0x30] sm:$0xff]
        %v1899 = vld [vmem:[%s574 + $0x38] sm:$0xff]
        %v1900 = vld [vmem:[%s574 + $0x40] sm:$0xff]
        %v1901 = vld [vmem:[%s574 + $0x48] sm:$0xff]
        %v1902 = vld [vmem:[%s574 + $0x50] sm:$0xff]
        %v1903 = vld [vmem:[%s574 + $0x58] sm:$0xff]
        %v1904 = vld [vmem:[%s574 + $0x60] sm:$0xff]
        %v1905 = vld [vmem:[%s574 + $0x68] sm:$0xff]
        %v1906 = vld [vmem:[%s574 + $0x70] sm:$0xff]
        %v1907 = vld [vmem:[%s574 + $0x78] sm:$0xff]
        %v1908 = vld [vmem:[%s574 + $0x80] sm:$0xff]
        %v1909 = vld [vmem:[%s574 + $0x88] sm:$0xff]
        %v1910 = vld [vmem:[%s574 + $0x90] sm:$0xff]
        %v1911 = vld [vmem:[%s574 + $0x98] sm:$0xff]
        %v1912 = vld [vmem:[%s574 + $0xa0] sm:$0xff]
        %v1913 = vld [vmem:[%s574 + $0xa8] sm:$0xff]
        %v1914 = vld [vmem:[%s574 + $0xb0] sm:$0xff]
        %v1915 = vld [vmem:[%s574 + $0xb8] sm:$0xff]
        %v1916 = vld [vmem:[%s574 + $0xc0] sm:$0xff]
        %v1917 = vld [vmem:[%s574 + $0xc8] sm:$0xff]
        %v1918 = vld [vmem:[%s574 + $0xd0] sm:$0xff]
        %v1919 = vld [vmem:[%s574 + $0xd8] sm:$0xff]
        %v1920 = vld [vmem:[%s574 + $0xe0] sm:$0xff]
        %v1921 = vld [vmem:[%s574 + $0xe8] sm:$0xff]
        %v1922 = vld [vmem:[%s574 + $0xf0] sm:$0xff]
        %v1923 = vld [vmem:[%s574 + $0xf8] sm:$0xff]
        %v1956 = vunpack.c.l.b16 %v1892
        %v1957 = vunpack.c.h.b16 %v1892
        %v1958 = vunpack.c.l.b16 %v1893
        %v1959 = vunpack.c.h.b16 %v1893
        %v1960 = vunpack.c.l.b16 %v1894
        %v1961 = vunpack.c.h.b16 %v1894
        %v1962 = vunpack.c.l.b16 %v1895
        %v1963 = vunpack.c.h.b16 %v1895
        %v1964 = vunpack.c.l.b16 %v1896
        %v1965 = vunpack.c.h.b16 %v1896
        %v1966 = vunpack.c.l.b16 %v1897
        %v1967 = vunpack.c.h.b16 %v1897
        %v1968 = vunpack.c.l.b16 %v1898
        %v1969 = vunpack.c.h.b16 %v1898
        %v1970 = vunpack.c.l.b16 %v1899
        %v1971 = vunpack.c.h.b16 %v1899
        %v1972 = vunpack.c.l.b16 %v1900
        %v1973 = vunpack.c.h.b16 %v1900
        %v1974 = vunpack.c.l.b16 %v1901
        %v1975 = vunpack.c.h.b16 %v1901
        %v1976 = vunpack.c.l.b16 %v1902
        %v1977 = vunpack.c.h.b16 %v1902
        %v1978 = vunpack.c.l.b16 %v1903
        %v1979 = vunpack.c.h.b16 %v1903
        %v1980 = vunpack.c.l.b16 %v1904
        %v1981 = vunpack.c.h.b16 %v1904
        %v1982 = vunpack.c.l.b16 %v1905
        %v1983 = vunpack.c.h.b16 %v1905
        %v1984 = vunpack.c.l.b16 %v1906
        %v1985 = vunpack.c.h.b16 %v1906
        %v1986 = vunpack.c.l.b16 %v1907
        %v1987 = vunpack.c.h.b16 %v1907
        %v1988 = vunpack.c.l.b16 %v1908
        %v1989 = vunpack.c.h.b16 %v1908
        %v1990 = vunpack.c.l.b16 %v1909
        %v1991 = vunpack.c.h.b16 %v1909
        %v1992 = vunpack.c.l.b16 %v1910
        %v1993 = vunpack.c.h.b16 %v1910
        %v1994 = vunpack.c.l.b16 %v1911
        %v1995 = vunpack.c.h.b16 %v1911
        %v1996 = vunpack.c.l.b16 %v1912
        %v1997 = vunpack.c.h.b16 %v1912
        %v1998 = vunpack.c.l.b16 %v1913
        %v1999 = vunpack.c.h.b16 %v1913
        %v2000 = vunpack.c.l.b16 %v1914
        %v2001 = vunpack.c.h.b16 %v1914
        %v2002 = vunpack.c.l.b16 %v1915
        %v2003 = vunpack.c.h.b16 %v1915
        %v2004 = vunpack.c.l.b16 %v1916
        %v2005 = vunpack.c.h.b16 %v1916
        %v2006 = vunpack.c.l.b16 %v1917
        %v2007 = vunpack.c.h.b16 %v1917
        %v2008 = vunpack.c.l.b16 %v1918
        %v2009 = vunpack.c.h.b16 %v1918
        %v2010 = vunpack.c.l.b16 %v1919
        %v2011 = vunpack.c.h.b16 %v1919
        %v2012 = vunpack.c.l.b16 %v1920
        %v2013 = vunpack.c.h.b16 %v1920
        %v2014 = vunpack.c.l.b16 %v1921
        %v2015 = vunpack.c.h.b16 %v1921
        %v2016 = vunpack.c.l.b16 %v1922
        %v2017 = vunpack.c.h.b16 %v1922
        %v2018 = vunpack.c.l.b16 %v1923
        %v2019 = vunpack.c.h.b16 %v1923
        %v2020 = vpack.c.b16 %v1958, %v1956
        %v2021 = vpack.c.b16 %v1959, %v1957
        %v2022 = vpack.c.b16 %v1962, %v1960
        %v2023 = vpack.c.b16 %v1963, %v1961
        %v2024 = vpack.c.b16 %v1966, %v1964
        %v2025 = vpack.c.b16 %v1967, %v1965
        %v2026 = vpack.c.b16 %v1970, %v1968
        %v2027 = vpack.c.b16 %v1971, %v1969
        %v2028 = vpack.c.b16 %v1974, %v1972
        %v2029 = vpack.c.b16 %v1975, %v1973
        %v2030 = vpack.c.b16 %v1978, %v1976
        %v2031 = vpack.c.b16 %v1979, %v1977
        %v2032 = vpack.c.b16 %v1982, %v1980
        %v2033 = vpack.c.b16 %v1983, %v1981
        %v2034 = vpack.c.b16 %v1986, %v1984
        %v2035 = vpack.c.b16 %v1987, %v1985
        %v2036 = vpack.c.b16 %v1990, %v1988
        %v2037 = vpack.c.b16 %v1991, %v1989
        %v2038 = vpack.c.b16 %v1994, %v1992
        %v2039 = vpack.c.b16 %v1995, %v1993
        %v2040 = vpack.c.b16 %v1998, %v1996
        %v2041 = vpack.c.b16 %v1999, %v1997
        %v2042 = vpack.c.b16 %v2002, %v2000
        %v2043 = vpack.c.b16 %v2003, %v2001
        %v2044 = vpack.c.b16 %v2006, %v2004
        %v2045 = vpack.c.b16 %v2007, %v2005
        %v2046 = vpack.c.b16 %v2010, %v2008
        %v2047 = vpack.c.b16 %v2011, %v2009
        %v2048 = vpack.c.b16 %v2014, %v2012
        %v2049 = vpack.c.b16 %v2015, %v2013
        %v2050 = vpack.c.b16 %v2018, %v2016
        %v2051 = vpack.c.b16 %v2019, %v2017
        %2084 = vmatpush.bf16.msra.mxu0 %v2034
        %2085 = vmatpush.bf16.msra.mxu0 %v2032
        %2086 = vmatpush.bf16.msra.mxu0 %v2030
        %2087 = vmatpush.bf16.msra.mxu0 %v2028
        %2088 = vmatpush.bf16.msra.mxu0 %v2026
        %2089 = vmatpush.bf16.msra.mxu0 %v2024
        %2090 = vmatpush.bf16.msra.mxu0 %v2022
        %2091 = vmatpush.bf16.msra.mxu0 %v2020
        %2092 = vmatmul.bf16.gmra.mxu0 %v896
        %v2093 = vpop.f32.mrf.mxu0
        %v2094 = vadd.f32 0.0, %v2093
        %v2095 = vpop.f32.mrf.mxu0
        %v2096 = vadd.f32 0.0, %v2095
        %2097 = vmatmul.bf16.gmra.mxu0 %v898
        %v2098 = vpop.f32.mrf.mxu0
        %v2099 = vadd.f32 0.0, %v2098
        %v2100 = vpop.f32.mrf.mxu0
        %v2101 = vadd.f32 0.0, %v2100
        %2102 = vmatmul.bf16.gmra.mxu0 %v900
        %v2103 = vpop.f32.mrf.mxu0
        %v2104 = vadd.f32 0.0, %v2103
        %v2105 = vpop.f32.mrf.mxu0
        %v2106 = vadd.f32 0.0, %v2105
        %2107 = vmatmul.bf16.gmra.mxu0 %v902
        %v2108 = vpop.f32.mrf.mxu0
        %v2109 = vadd.f32 0.0, %v2108
        %v2110 = vpop.f32.mrf.mxu0
        %v2111 = vadd.f32 0.0, %v2110
        %2112 = vmatmul.bf16.gmra.mxu0 %v904
        %v2113 = vpop.f32.mrf.mxu0
        %v2114 = vadd.f32 0.0, %v2113
        %v2115 = vpop.f32.mrf.mxu0
        %v2116 = vadd.f32 0.0, %v2115
        %2117 = vmatmul.bf16.gmra.mxu0 %v906
        %v2118 = vpop.f32.mrf.mxu0
        %v2119 = vadd.f32 0.0, %v2118
        %v2120 = vpop.f32.mrf.mxu0
        %v2121 = vadd.f32 0.0, %v2120
        %2122 = vmatmul.bf16.gmra.mxu0 %v908
        %v2123 = vpop.f32.mrf.mxu0
        %v2124 = vadd.f32 0.0, %v2123
        %v2125 = vpop.f32.mrf.mxu0
        %v2126 = vadd.f32 0.0, %v2125
        %2127 = vmatmul.bf16.gmra.mxu0 %v910
        %v2128 = vpop.f32.mrf.mxu0
        %v2129 = vadd.f32 0.0, %v2128
        %v2130 = vpop.f32.mrf.mxu0
        %v2131 = vadd.f32 0.0, %v2130
        %2132 = vmatmul.bf16.gmra.mxu0 %v912
        %v2133 = vpop.f32.mrf.mxu0
        %v2134 = vadd.f32 0.0, %v2133
        %v2135 = vpop.f32.mrf.mxu0
        %v2136 = vadd.f32 0.0, %v2135
        %2137 = vmatmul.bf16.gmra.mxu0 %v914
        %v2138 = vpop.f32.mrf.mxu0
        %v2139 = vadd.f32 0.0, %v2138
        %v2140 = vpop.f32.mrf.mxu0
        %v2141 = vadd.f32 0.0, %v2140
        %2142 = vmatmul.bf16.gmra.mxu0 %v916
        %v2143 = vpop.f32.mrf.mxu0
        %v2144 = vadd.f32 0.0, %v2143
        %v2145 = vpop.f32.mrf.mxu0
        %v2146 = vadd.f32 0.0, %v2145
        %2147 = vmatmul.bf16.gmra.mxu0 %v918
        %v2148 = vpop.f32.mrf.mxu0
        %v2149 = vadd.f32 0.0, %v2148
        %v2150 = vpop.f32.mrf.mxu0
        %v2151 = vadd.f32 0.0, %v2150
        %2152 = vmatmul.bf16.gmra.mxu0 %v920
        %v2153 = vpop.f32.mrf.mxu0
        %v2154 = vadd.f32 0.0, %v2153
        %v2155 = vpop.f32.mrf.mxu0
        %v2156 = vadd.f32 0.0, %v2155
        %2157 = vmatmul.bf16.gmra.mxu0 %v922
        %v2158 = vpop.f32.mrf.mxu0
        %v2159 = vadd.f32 0.0, %v2158
        %v2160 = vpop.f32.mrf.mxu0
        %v2161 = vadd.f32 0.0, %v2160
        %2162 = vmatmul.bf16.gmra.mxu0 %v924
        %v2163 = vpop.f32.mrf.mxu0
        %v2164 = vadd.f32 0.0, %v2163
        %v2165 = vpop.f32.mrf.mxu0
        %v2166 = vadd.f32 0.0, %v2165
        %2167 = vmatmul.bf16.gmra.mxu0 %v926
        %v2168 = vpop.f32.mrf.mxu0
        %v2169 = vadd.f32 0.0, %v2168
        %v2170 = vpop.f32.mrf.mxu0
        %v2171 = vadd.f32 0.0, %v2170
        %2172 = vdwg.mxu0
        %2173 = vmatpush.bf16.msra.mxu0 %v2050
        %2174 = vmatpush.bf16.msra.mxu0 %v2048
        %2175 = vmatpush.bf16.msra.mxu0 %v2046
        %2176 = vmatpush.bf16.msra.mxu0 %v2044
        %2177 = vmatpush.bf16.msra.mxu0 %v2042
        %2178 = vmatpush.bf16.msra.mxu0 %v2040
        %2179 = vmatpush.bf16.msra.mxu0 %v2038
        %2180 = vmatpush.bf16.msra.mxu0 %v2036
        %2181 = vmatmul.bf16.gmra.mxu0 %v897
        %v2182 = vpop.f32.mrf.mxu0
        %v2183 = vadd.f32 %v2094, %v2182
        %v2184 = vpop.f32.mrf.mxu0
        %v2185 = vadd.f32 %v2096, %v2184
        %2186 = vmatmul.bf16.gmra.mxu0 %v899
        %v2187 = vpop.f32.mrf.mxu0
        %v2188 = vadd.f32 %v2099, %v2187
        %v2189 = vpop.f32.mrf.mxu0
        %v2190 = vadd.f32 %v2101, %v2189
        %2191 = vmatmul.bf16.gmra.mxu0 %v901
        %v2192 = vpop.f32.mrf.mxu0
        %v2193 = vadd.f32 %v2104, %v2192
        %v2194 = vpop.f32.mrf.mxu0
        %v2195 = vadd.f32 %v2106, %v2194
        %2196 = vmatmul.bf16.gmra.mxu0 %v903
        %v2197 = vpop.f32.mrf.mxu0
        %v2198 = vadd.f32 %v2109, %v2197
        %v2199 = vpop.f32.mrf.mxu0
        %v2200 = vadd.f32 %v2111, %v2199
        %2201 = vmatmul.bf16.gmra.mxu0 %v905
        %v2202 = vpop.f32.mrf.mxu0
        %v2203 = vadd.f32 %v2114, %v2202
        %v2204 = vpop.f32.mrf.mxu0
        %v2205 = vadd.f32 %v2116, %v2204
        %2206 = vmatmul.bf16.gmra.mxu0 %v907
        %v2207 = vpop.f32.mrf.mxu0
        %v2208 = vadd.f32 %v2119, %v2207
        %v2209 = vpop.f32.mrf.mxu0
        %v2210 = vadd.f32 %v2121, %v2209
        %2211 = vmatmul.bf16.gmra.mxu0 %v909
        %v2212 = vpop.f32.mrf.mxu0
        %v2213 = vadd.f32 %v2124, %v2212
        %v2214 = vpop.f32.mrf.mxu0
        %v2215 = vadd.f32 %v2126, %v2214
        %2216 = vmatmul.bf16.gmra.mxu0 %v911
        %v2217 = vpop.f32.mrf.mxu0
        %v2218 = vadd.f32 %v2129, %v2217
        %v2219 = vpop.f32.mrf.mxu0
        %v2220 = vadd.f32 %v2131, %v2219
        %2221 = vmatmul.bf16.gmra.mxu0 %v913
        %v2222 = vpop.f32.mrf.mxu0
        %v2223 = vadd.f32 %v2134, %v2222
        %v2224 = vpop.f32.mrf.mxu0
        %v2225 = vadd.f32 %v2136, %v2224
        %2226 = vmatmul.bf16.gmra.mxu0 %v915
        %v2227 = vpop.f32.mrf.mxu0
        %v2228 = vadd.f32 %v2139, %v2227
        %v2229 = vpop.f32.mrf.mxu0
        %v2230 = vadd.f32 %v2141, %v2229
        %2231 = vmatmul.bf16.gmra.mxu0 %v917
        %v2232 = vpop.f32.mrf.mxu0
        %v2233 = vadd.f32 %v2144, %v2232
        %v2234 = vpop.f32.mrf.mxu0
        %v2235 = vadd.f32 %v2146, %v2234
        %2236 = vmatmul.bf16.gmra.mxu0 %v919
        %v2237 = vpop.f32.mrf.mxu0
        %v2238 = vadd.f32 %v2149, %v2237
        %v2239 = vpop.f32.mrf.mxu0
        %v2240 = vadd.f32 %v2151, %v2239
        %2241 = vmatmul.bf16.gmra.mxu0 %v921
        %v2242 = vpop.f32.mrf.mxu0
        %v2243 = vadd.f32 %v2154, %v2242
        %v2244 = vpop.f32.mrf.mxu0
        %v2245 = vadd.f32 %v2156, %v2244
        %2246 = vmatmul.bf16.gmra.mxu0 %v923
        %v2247 = vpop.f32.mrf.mxu0
        %v2248 = vadd.f32 %v2159, %v2247
        %v2249 = vpop.f32.mrf.mxu0
        %v2250 = vadd.f32 %v2161, %v2249
        %2251 = vmatmul.bf16.gmra.mxu0 %v925
        %v2252 = vpop.f32.mrf.mxu0
        %v2253 = vadd.f32 %v2164, %v2252
        %v2254 = vpop.f32.mrf.mxu0
        %v2255 = vadd.f32 %v2166, %v2254
        %2256 = vmatmul.bf16.gmra.mxu0 %v927
        %v2257 = vpop.f32.mrf.mxu0
        %v2258 = vadd.f32 %v2169, %v2257
        %v2259 = vpop.f32.mrf.mxu0
        %v2260 = vadd.f32 %v2171, %v2259
        %2261 = vdwg.mxu0
        %2262 = vmatpush.bf16.msra.mxu0 %v2035
        %2263 = vmatpush.bf16.msra.mxu0 %v2033
        %2264 = vmatpush.bf16.msra.mxu0 %v2031
        %2265 = vmatpush.bf16.msra.mxu0 %v2029
        %2266 = vmatpush.bf16.msra.mxu0 %v2027
        %2267 = vmatpush.bf16.msra.mxu0 %v2025
        %2268 = vmatpush.bf16.msra.mxu0 %v2023
        %2269 = vmatpush.bf16.msra.mxu0 %v2021
        %2270 = vmatmul.bf16.gmra.mxu0 %v896
        %v2271 = vpop.f32.mrf.mxu0
        %v2272 = vadd.f32 0.0, %v2271
        %v2273 = vpop.f32.mrf.mxu0
        %v2274 = vadd.f32 0.0, %v2273
        %2275 = vmatmul.bf16.gmra.mxu0 %v898
        %v2276 = vpop.f32.mrf.mxu0
        %v2277 = vadd.f32 0.0, %v2276
        %v2278 = vpop.f32.mrf.mxu0
        %v2279 = vadd.f32 0.0, %v2278
        %2280 = vmatmul.bf16.gmra.mxu0 %v900
        %v2281 = vpop.f32.mrf.mxu0
        %v2282 = vadd.f32 0.0, %v2281
        %v2283 = vpop.f32.mrf.mxu0
        %v2284 = vadd.f32 0.0, %v2283
        %2285 = vmatmul.bf16.gmra.mxu0 %v902
        %v2286 = vpop.f32.mrf.mxu0
        %v2287 = vadd.f32 0.0, %v2286
        %v2288 = vpop.f32.mrf.mxu0
        %v2289 = vadd.f32 0.0, %v2288
        %2290 = vmatmul.bf16.gmra.mxu0 %v904
        %v2291 = vpop.f32.mrf.mxu0
        %v2292 = vadd.f32 0.0, %v2291
        %v2293 = vpop.f32.mrf.mxu0
        %v2294 = vadd.f32 0.0, %v2293
        %2295 = vmatmul.bf16.gmra.mxu0 %v906
        %v2296 = vpop.f32.mrf.mxu0
        %v2297 = vadd.f32 0.0, %v2296
        %v2298 = vpop.f32.mrf.mxu0
        %v2299 = vadd.f32 0.0, %v2298
        %2300 = vmatmul.bf16.gmra.mxu0 %v908
        %v2301 = vpop.f32.mrf.mxu0
        %v2302 = vadd.f32 0.0, %v2301
        %v2303 = vpop.f32.mrf.mxu0
        %v2304 = vadd.f32 0.0, %v2303
        %2305 = vmatmul.bf16.gmra.mxu0 %v910
        %v2306 = vpop.f32.mrf.mxu0
        %v2307 = vadd.f32 0.0, %v2306
        %v2308 = vpop.f32.mrf.mxu0
        %v2309 = vadd.f32 0.0, %v2308
        %2310 = vmatmul.bf16.gmra.mxu0 %v912
        %v2311 = vpop.f32.mrf.mxu0
        %v2312 = vadd.f32 0.0, %v2311
        %v2313 = vpop.f32.mrf.mxu0
        %v2314 = vadd.f32 0.0, %v2313
        %2315 = vmatmul.bf16.gmra.mxu0 %v914
        %v2316 = vpop.f32.mrf.mxu0
        %v2317 = vadd.f32 0.0, %v2316
        %v2318 = vpop.f32.mrf.mxu0
        %v2319 = vadd.f32 0.0, %v2318
        %2320 = vmatmul.bf16.gmra.mxu0 %v916
        %v2321 = vpop.f32.mrf.mxu0
        %v2322 = vadd.f32 0.0, %v2321
        %v2323 = vpop.f32.mrf.mxu0
        %v2324 = vadd.f32 0.0, %v2323
        %2325 = vmatmul.bf16.gmra.mxu0 %v918
        %v2326 = vpop.f32.mrf.mxu0
        %v2327 = vadd.f32 0.0, %v2326
        %v2328 = vpop.f32.mrf.mxu0
        %v2329 = vadd.f32 0.0, %v2328
        %2330 = vmatmul.bf16.gmra.mxu0 %v920
        %v2331 = vpop.f32.mrf.mxu0
        %v2332 = vadd.f32 0.0, %v2331
        %v2333 = vpop.f32.mrf.mxu0
        %v2334 = vadd.f32 0.0, %v2333
        %2335 = vmatmul.bf16.gmra.mxu0 %v922
        %v2336 = vpop.f32.mrf.mxu0
        %v2337 = vadd.f32 0.0, %v2336
        %v2338 = vpop.f32.mrf.mxu0
        %v2339 = vadd.f32 0.0, %v2338
        %2340 = vmatmul.bf16.gmra.mxu0 %v924
        %v2341 = vpop.f32.mrf.mxu0
        %v2342 = vadd.f32 0.0, %v2341
        %v2343 = vpop.f32.mrf.mxu0
        %v2344 = vadd.f32 0.0, %v2343
        %2345 = vmatmul.bf16.gmra.mxu0 %v926
        %v2346 = vpop.f32.mrf.mxu0
        %v2347 = vadd.f32 0.0, %v2346
        %v2348 = vpop.f32.mrf.mxu0
        %v2349 = vadd.f32 0.0, %v2348
        %2350 = vdwg.mxu0
        %2351 = vmatpush.bf16.msra.mxu0 %v2051
        %2352 = vmatpush.bf16.msra.mxu0 %v2049
        %2353 = vmatpush.bf16.msra.mxu0 %v2047
        %2354 = vmatpush.bf16.msra.mxu0 %v2045
        %2355 = vmatpush.bf16.msra.mxu0 %v2043
        %2356 = vmatpush.bf16.msra.mxu0 %v2041
        %2357 = vmatpush.bf16.msra.mxu0 %v2039
        %2358 = vmatpush.bf16.msra.mxu0 %v2037
        %2359 = vmatmul.bf16.gmra.mxu0 %v897
        %v2360 = vpop.f32.mrf.mxu0
        %v2361 = vadd.f32 %v2272, %v2360
        %v2362 = vpop.f32.mrf.mxu0
        %v2363 = vadd.f32 %v2274, %v2362
        %2364 = vmatmul.bf16.gmra.mxu0 %v899
        %v2365 = vpop.f32.mrf.mxu0
        %v2366 = vadd.f32 %v2277, %v2365
        %v2367 = vpop.f32.mrf.mxu0
        %v2368 = vadd.f32 %v2279, %v2367
        %2369 = vmatmul.bf16.gmra.mxu0 %v901
        %v2370 = vpop.f32.mrf.mxu0
        %v2371 = vadd.f32 %v2282, %v2370
        %v2372 = vpop.f32.mrf.mxu0
        %v2373 = vadd.f32 %v2284, %v2372
        %2374 = vmatmul.bf16.gmra.mxu0 %v903
        %v2375 = vpop.f32.mrf.mxu0
        %v2376 = vadd.f32 %v2287, %v2375
        %v2377 = vpop.f32.mrf.mxu0
        %v2378 = vadd.f32 %v2289, %v2377
        %2379 = vmatmul.bf16.gmra.mxu0 %v905
        %v2380 = vpop.f32.mrf.mxu0
        %v2381 = vadd.f32 %v2292, %v2380
        %v2382 = vpop.f32.mrf.mxu0
        %v2383 = vadd.f32 %v2294, %v2382
        %2384 = vmatmul.bf16.gmra.mxu0 %v907
        %v2385 = vpop.f32.mrf.mxu0
        %v2386 = vadd.f32 %v2297, %v2385
        %v2387 = vpop.f32.mrf.mxu0
        %v2388 = vadd.f32 %v2299, %v2387
        %2389 = vmatmul.bf16.gmra.mxu0 %v909
        %v2390 = vpop.f32.mrf.mxu0
        %v2391 = vadd.f32 %v2302, %v2390
        %v2392 = vpop.f32.mrf.mxu0
        %v2393 = vadd.f32 %v2304, %v2392
        %2394 = vmatmul.bf16.gmra.mxu0 %v911
        %v2395 = vpop.f32.mrf.mxu0
        %v2396 = vadd.f32 %v2307, %v2395
        %v2397 = vpop.f32.mrf.mxu0
        %v2398 = vadd.f32 %v2309, %v2397
        %2399 = vmatmul.bf16.gmra.mxu0 %v913
        %v2400 = vpop.f32.mrf.mxu0
        %v2401 = vadd.f32 %v2312, %v2400
        %v2402 = vpop.f32.mrf.mxu0
        %v2403 = vadd.f32 %v2314, %v2402
        %2404 = vmatmul.bf16.gmra.mxu0 %v915
        %v2405 = vpop.f32.mrf.mxu0
        %v2406 = vadd.f32 %v2317, %v2405
        %v2407 = vpop.f32.mrf.mxu0
        %v2408 = vadd.f32 %v2319, %v2407
        %2409 = vmatmul.bf16.gmra.mxu0 %v917
        %v2410 = vpop.f32.mrf.mxu0
        %v2411 = vadd.f32 %v2322, %v2410
        %v2412 = vpop.f32.mrf.mxu0
        %v2413 = vadd.f32 %v2324, %v2412
        %2414 = vmatmul.bf16.gmra.mxu0 %v919
        %v2415 = vpop.f32.mrf.mxu0
        %v2416 = vadd.f32 %v2327, %v2415
        %v2417 = vpop.f32.mrf.mxu0
        %v2418 = vadd.f32 %v2329, %v2417
        %2419 = vmatmul.bf16.gmra.mxu0 %v921
        %v2420 = vpop.f32.mrf.mxu0
        %v2421 = vadd.f32 %v2332, %v2420
        %v2422 = vpop.f32.mrf.mxu0
        %v2423 = vadd.f32 %v2334, %v2422
        %2424 = vmatmul.bf16.gmra.mxu0 %v923
        %v2425 = vpop.f32.mrf.mxu0
        %v2426 = vadd.f32 %v2337, %v2425
        %v2427 = vpop.f32.mrf.mxu0
        %v2428 = vadd.f32 %v2339, %v2427
        %2429 = vmatmul.bf16.gmra.mxu0 %v925
        %v2430 = vpop.f32.mrf.mxu0
        %v2431 = vadd.f32 %v2342, %v2430
        %v2432 = vpop.f32.mrf.mxu0
        %v2433 = vadd.f32 %v2344, %v2432
        %2434 = vmatmul.bf16.gmra.mxu0 %v927
        %v2435 = vpop.f32.mrf.mxu0
        %v2436 = vadd.f32 %v2347, %v2435
        %v2437 = vpop.f32.mrf.mxu0
        %v2438 = vadd.f32 %v2349, %v2437
        %2439 = vdwg.mxu0
        %v2440 = vadd.f32 %v1828, %v2183
        %v2441 = vadd.f32 %v1829, %v2361
        %v2442 = vadd.f32 %v1830, %v2185
        %v2443 = vadd.f32 %v1831, %v2363
        %v2444 = vadd.f32 %v1832, %v2188
        %v2445 = vadd.f32 %v1833, %v2366
        %v2446 = vadd.f32 %v1834, %v2190
        %v2447 = vadd.f32 %v1835, %v2368
        %v2448 = vadd.f32 %v1836, %v2193
        %v2449 = vadd.f32 %v1837, %v2371
        %v2450 = vadd.f32 %v1838, %v2195
        %v2451 = vadd.f32 %v1839, %v2373
        %v2452 = vadd.f32 %v1840, %v2198
        %v2453 = vadd.f32 %v1841, %v2376
        %v2454 = vadd.f32 %v1842, %v2200
        %v2455 = vadd.f32 %v1843, %v2378
        %v2456 = vadd.f32 %v1844, %v2203
        %v2457 = vadd.f32 %v1845, %v2381
        %v2458 = vadd.f32 %v1846, %v2205
        %v2459 = vadd.f32 %v1847, %v2383
        %v2460 = vadd.f32 %v1848, %v2208
        %v2461 = vadd.f32 %v1849, %v2386
        %v2462 = vadd.f32 %v1850, %v2210
        %v2463 = vadd.f32 %v1851, %v2388
        %v2464 = vadd.f32 %v1852, %v2213
        %v2465 = vadd.f32 %v1853, %v2391
        %v2466 = vadd.f32 %v1854, %v2215
        %v2467 = vadd.f32 %v1855, %v2393
        %v2468 = vadd.f32 %v1856, %v2218
        %v2469 = vadd.f32 %v1857, %v2396
        %v2470 = vadd.f32 %v1858, %v2220
        %v2471 = vadd.f32 %v1859, %v2398
        %v2472 = vadd.f32 %v1860, %v2223
        %v2473 = vadd.f32 %v1861, %v2401
        %v2474 = vadd.f32 %v1862, %v2225
        %v2475 = vadd.f32 %v1863, %v2403
        %v2476 = vadd.f32 %v1864, %v2228
        %v2477 = vadd.f32 %v1865, %v2406
        %v2478 = vadd.f32 %v1866, %v2230
        %v2479 = vadd.f32 %v1867, %v2408
        %v2480 = vadd.f32 %v1868, %v2233
        %v2481 = vadd.f32 %v1869, %v2411
        %v2482 = vadd.f32 %v1870, %v2235
        %v2483 = vadd.f32 %v1871, %v2413
        %v2484 = vadd.f32 %v1872, %v2238
        %v2485 = vadd.f32 %v1873, %v2416
        %v2486 = vadd.f32 %v1874, %v2240
        %v2487 = vadd.f32 %v1875, %v2418
        %v2488 = vadd.f32 %v1876, %v2243
        %v2489 = vadd.f32 %v1877, %v2421
        %v2490 = vadd.f32 %v1878, %v2245
        %v2491 = vadd.f32 %v1879, %v2423
        %v2492 = vadd.f32 %v1880, %v2248
        %v2493 = vadd.f32 %v1881, %v2426
        %v2494 = vadd.f32 %v1882, %v2250
        %v2495 = vadd.f32 %v1883, %v2428
        %v2496 = vadd.f32 %v1884, %v2253
        %v2497 = vadd.f32 %v1885, %v2431
        %v2498 = vadd.f32 %v1886, %v2255
        %v2499 = vadd.f32 %v1887, %v2433
        %v2500 = vadd.f32 %v1888, %v2258
        %v2501 = vadd.f32 %v1889, %v2436
        %v2502 = vadd.f32 %v1890, %v2260
        %v2503 = vadd.f32 %v1891, %v2438
        %2504 = vst [vmem:[#allocation3] sm:$0xff] %v2440
        %2505 = vst [vmem:[#allocation3 + $0x8] sm:$0xff] %v2441
        %2506 = vst [vmem:[#allocation3 + $0x10] sm:$0xff] %v2442
        %2507 = vst [vmem:[#allocation3 + $0x18] sm:$0xff] %v2443
        %2508 = vst [vmem:[#allocation3 + $0x20] sm:$0xff] %v2444
        %2509 = vst [vmem:[#allocation3 + $0x28] sm:$0xff] %v2445
        %2510 = vst [vmem:[#allocation3 + $0x30] sm:$0xff] %v2446
        %2511 = vst [vmem:[#allocation3 + $0x38] sm:$0xff] %v2447
        %2512 = vst [vmem:[#allocation3 + $0x40] sm:$0xff] %v2448
        %2513 = vst [vmem:[#allocation3 + $0x48] sm:$0xff] %v2449
        %2514 = vst [vmem:[#allocation3 + $0x50] sm:$0xff] %v2450
        %2515 = vst [vmem:[#allocation3 + $0x58] sm:$0xff] %v2451
        %2516 = vst [vmem:[#allocation3 + $0x60] sm:$0xff] %v2452
        %2517 = vst [vmem:[#allocation3 + $0x68] sm:$0xff] %v2453
        %2518 = vst [vmem:[#allocation3 + $0x70] sm:$0xff] %v2454
        %2519 = vst [vmem:[#allocation3 + $0x78] sm:$0xff] %v2455
        %2520 = vst [vmem:[#allocation3 + $0x80] sm:$0xff] %v2456
        %2521 = vst [vmem:[#allocation3 + $0x88] sm:$0xff] %v2457
        %2522 = vst [vmem:[#allocation3 + $0x90] sm:$0xff] %v2458
        %2523 = vst [vmem:[#allocation3 + $0x98] sm:$0xff] %v2459
        %2524 = vst [vmem:[#allocation3 + $0xa0] sm:$0xff] %v2460
        %2525 = vst [vmem:[#allocation3 + $0xa8] sm:$0xff] %v2461
        %2526 = vst [vmem:[#allocation3 + $0xb0] sm:$0xff] %v2462
        %2527 = vst [vmem:[#allocation3 + $0xb8] sm:$0xff] %v2463
        %2528 = vst [vmem:[#allocation3 + $0xc0] sm:$0xff] %v2464
        %2529 = vst [vmem:[#allocation3 + $0xc8] sm:$0xff] %v2465
        %2530 = vst [vmem:[#allocation3 + $0xd0] sm:$0xff] %v2466
        %2531 = vst [vmem:[#allocation3 + $0xd8] sm:$0xff] %v2467
        %2532 = vst [vmem:[#allocation3 + $0xe0] sm:$0xff] %v2468
        %2533 = vst [vmem:[#allocation3 + $0xe8] sm:$0xff] %v2469
        %2534 = vst [vmem:[#allocation3 + $0xf0] sm:$0xff] %v2470
        %2535 = vst [vmem:[#allocation3 + $0xf8] sm:$0xff] %v2471
        %2536 = vst [vmem:[#allocation3 + $0x100] sm:$0xff] %v2472
        %2537 = vst [vmem:[#allocation3 + $0x108] sm:$0xff] %v2473
        %2538 = vst [vmem:[#allocation3 + $0x110] sm:$0xff] %v2474
        %2539 = vst [vmem:[#allocation3 + $0x118] sm:$0xff] %v2475
        %2540 = vst [vmem:[#allocation3 + $0x120] sm:$0xff] %v2476
        %2541 = vst [vmem:[#allocation3 + $0x128] sm:$0xff] %v2477
        %2542 = vst [vmem:[#allocation3 + $0x130] sm:$0xff] %v2478
        %2543 = vst [vmem:[#allocation3 + $0x138] sm:$0xff] %v2479
        %2544 = vst [vmem:[#allocation3 + $0x140] sm:$0xff] %v2480
        %2545 = vst [vmem:[#allocation3 + $0x148] sm:$0xff] %v2481
        %2546 = vst [vmem:[#allocation3 + $0x150] sm:$0xff] %v2482
        %2547 = vst [vmem:[#allocation3 + $0x158] sm:$0xff] %v2483
        %2548 = vst [vmem:[#allocation3 + $0x160] sm:$0xff] %v2484
        %2549 = vst [vmem:[#allocation3 + $0x168] sm:$0xff] %v2485
        %2550 = vst [vmem:[#allocation3 + $0x170] sm:$0xff] %v2486
        %2551 = vst [vmem:[#allocation3 + $0x178] sm:$0xff] %v2487
        %2552 = vst [vmem:[#allocation3 + $0x180] sm:$0xff] %v2488
        %2553 = vst [vmem:[#allocation3 + $0x188] sm:$0xff] %v2489
        %2554 = vst [vmem:[#allocation3 + $0x190] sm:$0xff] %v2490
        %2555 = vst [vmem:[#allocation3 + $0x198] sm:$0xff] %v2491
        %2556 = vst [vmem:[#allocation3 + $0x1a0] sm:$0xff] %v2492
        %2557 = vst [vmem:[#allocation3 + $0x1a8] sm:$0xff] %v2493
        %2558 = vst [vmem:[#allocation3 + $0x1b0] sm:$0xff] %v2494
        %2559 = vst [vmem:[#allocation3 + $0x1b8] sm:$0xff] %v2495
        %2560 = vst [vmem:[#allocation3 + $0x1c0] sm:$0xff] %v2496
        %2561 = vst [vmem:[#allocation3 + $0x1c8] sm:$0xff] %v2497
        %2562 = vst [vmem:[#allocation3 + $0x1d0] sm:$0xff] %v2498
        %2563 = vst [vmem:[#allocation3 + $0x1d8] sm:$0xff] %v2499
        %2564 = vst [vmem:[#allocation3 + $0x1e0] sm:$0xff] %v2500
        %2565 = vst [vmem:[#allocation3 + $0x1e8] sm:$0xff] %v2501
        %2566 = vst [vmem:[#allocation3 + $0x1f0] sm:$0xff] %v2502
        %2567 = vst [vmem:[#allocation3 + $0x1f8] sm:$0xff] %v2503
        %v2568 = vld [vmem:[%s586] sm:$0xff]
        %v2570 = vunpack.c.l.b16 %v2568
        %v2571 = vunpack.c.h.b16 %v2568
        %v2572 = vpack.c.b16 %v2570, %v2570
        %v2573 = vpack.c.b16 %v2571, %v2571
        %2576 = vmatpush.bf16.msra.mxu0 %v1134
        %2577 = vmatpush.bf16.msra.mxu0 %v1132
        %2578 = vmatpush.bf16.msra.mxu0 %v1130
        %2579 = vmatpush.bf16.msra.mxu0 %v1128
        %2580 = vmatpush.bf16.msra.mxu0 %v1126
        %2581 = vmatpush.bf16.msra.mxu0 %v1124
        %2582 = vmatpush.bf16.msra.mxu0 %v1122
        %2583 = vmatpush.bf16.msra.mxu0 %v1120
        %2584 = vmatmul.bf16.gmra.mxu0 %v2572
        %v2585 = vpop.f32.mrf.mxu0
        %v2586 = vadd.f32 0.0, %v2585
        %v2587 = vpop.f32.mrf.mxu0
        %2588 = vdwg.mxu0
        %2589 = vmatpush.bf16.msra.mxu0 %v1150
        %2590 = vmatpush.bf16.msra.mxu0 %v1148
        %2591 = vmatpush.bf16.msra.mxu0 %v1146
        %2592 = vmatpush.bf16.msra.mxu0 %v1144
        %2593 = vmatpush.bf16.msra.mxu0 %v1142
        %2594 = vmatpush.bf16.msra.mxu0 %v1140
        %2595 = vmatpush.bf16.msra.mxu0 %v1138
        %2596 = vmatpush.bf16.msra.mxu0 %v1136
        %2597 = vmatmul.bf16.gmra.mxu0 %v2573
        %v2598 = vpop.f32.mrf.mxu0
        %v2599 = vadd.f32 %v2586, %v2598
        %v2600 = vpop.f32.mrf.mxu0
        %2601 = vdwg.mxu0
        %2602 = vmatpush.bf16.msra.mxu0 %v1135
        %2603 = vmatpush.bf16.msra.mxu0 %v1133
        %2604 = vmatpush.bf16.msra.mxu0 %v1131
        %2605 = vmatpush.bf16.msra.mxu0 %v1129
        %2606 = vmatpush.bf16.msra.mxu0 %v1127
        %2607 = vmatpush.bf16.msra.mxu0 %v1125
        %2608 = vmatpush.bf16.msra.mxu0 %v1123
        %2609 = vmatpush.bf16.msra.mxu0 %v1121
        %2610 = vmatmul.bf16.gmra.mxu0 %v2572
        %v2611 = vpop.f32.mrf.mxu0
        %v2612 = vadd.f32 0.0, %v2611
        %v2613 = vpop.f32.mrf.mxu0
        %2614 = vdwg.mxu0
        %2615 = vmatpush.bf16.msra.mxu0 %v1151
        %2616 = vmatpush.bf16.msra.mxu0 %v1149
        %2617 = vmatpush.bf16.msra.mxu0 %v1147
        %2618 = vmatpush.bf16.msra.mxu0 %v1145
        %2619 = vmatpush.bf16.msra.mxu0 %v1143
        %2620 = vmatpush.bf16.msra.mxu0 %v1141
        %2621 = vmatpush.bf16.msra.mxu0 %v1139
        %2622 = vmatpush.bf16.msra.mxu0 %v1137
        %2623 = vmatmul.bf16.gmra.mxu0 %v2573
        %v2624 = vpop.f32.mrf.mxu0
        %v2625 = vadd.f32 %v2612, %v2624
        %v2626 = vpop.f32.mrf.mxu0
        %2627 = vdwg.mxu0
        %2628 = vst [vmem:[%s602] sm:$0xff] %v2599
        %2629 = vst [vmem:[%s602 + $0x8] sm:$0xff] %v2625
        %p2630 = scmp.eq.s32.totalorder %s25, 1
        // Predicated region
        $region91: #{gcnmf_forward.4} parent=81 // pred_check
          %p2631 = pneg %p2630
        $region92: #{gcnmf_forward.4} parent=81 // pred_check_branch
          %2633 = sbr.rel (%p2631) target = $region94
        $region93: #{gcnmf_forward.4} parent=81 // pred_region
          %v2634 = vld [vmem:[#allocation2] sm:$0xff]
          %v2635 = vld [vmem:[#allocation2 + $0x8] sm:$0xff]
          %v2636 = vld [vmem:[#allocation2 + $0x10] sm:$0xff]
          %v2637 = vld [vmem:[#allocation2 + $0x18] sm:$0xff]
          %v2638 = vld [vmem:[#allocation2 + $0x20] sm:$0xff]
          %v2639 = vld [vmem:[#allocation2 + $0x28] sm:$0xff]
          %v2640 = vld [vmem:[#allocation2 + $0x30] sm:$0xff]
          %v2641 = vld [vmem:[#allocation2 + $0x38] sm:$0xff]
          %v2642 = vld [vmem:[#allocation2 + $0x40] sm:$0xff]
          %v2643 = vld [vmem:[#allocation2 + $0x48] sm:$0xff]
          %v2644 = vld [vmem:[#allocation2 + $0x50] sm:$0xff]
          %v2645 = vld [vmem:[#allocation2 + $0x58] sm:$0xff]
          %v2646 = vld [vmem:[#allocation2 + $0x60] sm:$0xff]
          %v2647 = vld [vmem:[#allocation2 + $0x68] sm:$0xff]
          %v2648 = vld [vmem:[#allocation2 + $0x70] sm:$0xff]
          %v2649 = vld [vmem:[#allocation2 + $0x78] sm:$0xff]
          %v2650 = vld [vmem:[#allocation2 + $0x80] sm:$0xff]
          %v2651 = vld [vmem:[#allocation2 + $0x88] sm:$0xff]
          %v2652 = vld [vmem:[#allocation2 + $0x90] sm:$0xff]
          %v2653 = vld [vmem:[#allocation2 + $0x98] sm:$0xff]
          %v2654 = vld [vmem:[#allocation2 + $0xa0] sm:$0xff]
          %v2655 = vld [vmem:[#allocation2 + $0xa8] sm:$0xff]
          %v2656 = vld [vmem:[#allocation2 + $0xb0] sm:$0xff]
          %v2657 = vld [vmem:[#allocation2 + $0xb8] sm:$0xff]
          %v2658 = vld [vmem:[#allocation2 + $0xc0] sm:$0xff]
          %v2659 = vld [vmem:[#allocation2 + $0xc8] sm:$0xff]
          %v2660 = vld [vmem:[#allocation2 + $0xd0] sm:$0xff]
          %v2661 = vld [vmem:[#allocation2 + $0xd8] sm:$0xff]
          %v2662 = vld [vmem:[#allocation2 + $0xe0] sm:$0xff]
          %v2663 = vld [vmem:[#allocation2 + $0xe8] sm:$0xff]
          %v2664 = vld [vmem:[#allocation2 + $0xf0] sm:$0xff]
          %v2665 = vld [vmem:[#allocation2 + $0xf8] sm:$0xff]
          %v2666 = vld [vmem:[#allocation2 + $0x100] sm:$0xff]
          %v2667 = vld [vmem:[#allocation2 + $0x108] sm:$0xff]
          %v2668 = vld [vmem:[#allocation2 + $0x110] sm:$0xff]
          %v2669 = vld [vmem:[#allocation2 + $0x118] sm:$0xff]
          %v2670 = vld [vmem:[#allocation2 + $0x120] sm:$0xff]
          %v2671 = vld [vmem:[#allocation2 + $0x128] sm:$0xff]
          %v2672 = vld [vmem:[#allocation2 + $0x130] sm:$0xff]
          %v2673 = vld [vmem:[#allocation2 + $0x138] sm:$0xff]
          %v2674 = vld [vmem:[#allocation2 + $0x140] sm:$0xff]
          %v2675 = vld [vmem:[#allocation2 + $0x148] sm:$0xff]
          %v2676 = vld [vmem:[#allocation2 + $0x150] sm:$0xff]
          %v2677 = vld [vmem:[#allocation2 + $0x158] sm:$0xff]
          %v2678 = vld [vmem:[#allocation2 + $0x160] sm:$0xff]
          %v2679 = vld [vmem:[#allocation2 + $0x168] sm:$0xff]
          %v2680 = vld [vmem:[#allocation2 + $0x170] sm:$0xff]
          %v2681 = vld [vmem:[#allocation2 + $0x178] sm:$0xff]
          %v2682 = vld [vmem:[#allocation2 + $0x180] sm:$0xff]
          %v2683 = vld [vmem:[#allocation2 + $0x188] sm:$0xff]
          %v2684 = vld [vmem:[#allocation2 + $0x190] sm:$0xff]
          %v2685 = vld [vmem:[#allocation2 + $0x198] sm:$0xff]
          %v2686 = vld [vmem:[#allocation2 + $0x1a0] sm:$0xff]
          %v2687 = vld [vmem:[#allocation2 + $0x1a8] sm:$0xff]
          %v2688 = vld [vmem:[#allocation2 + $0x1b0] sm:$0xff]
          %v2689 = vld [vmem:[#allocation2 + $0x1b8] sm:$0xff]
          %v2690 = vld [vmem:[#allocation2 + $0x1c0] sm:$0xff]
          %v2691 = vld [vmem:[#allocation2 + $0x1c8] sm:$0xff]
          %v2692 = vld [vmem:[#allocation2 + $0x1d0] sm:$0xff]
          %v2693 = vld [vmem:[#allocation2 + $0x1d8] sm:$0xff]
          %v2694 = vld [vmem:[#allocation2 + $0x1e0] sm:$0xff]
          %v2695 = vld [vmem:[#allocation2 + $0x1e8] sm:$0xff]
          %v2696 = vld [vmem:[#allocation2 + $0x1f0] sm:$0xff]
          %v2697 = vld [vmem:[#allocation2 + $0x1f8] sm:$0xff]
          %v2698 = vld [vmem:[#allocation3] sm:$0xff]
          %v2699 = vld [vmem:[#allocation3 + $0x8] sm:$0xff]
          %v2700 = vld [vmem:[#allocation3 + $0x10] sm:$0xff]
          %v2701 = vld [vmem:[#allocation3 + $0x18] sm:$0xff]
          %v2702 = vld [vmem:[#allocation3 + $0x20] sm:$0xff]
          %v2703 = vld [vmem:[#allocation3 + $0x28] sm:$0xff]
          %v2704 = vld [vmem:[#allocation3 + $0x30] sm:$0xff]
          %v2705 = vld [vmem:[#allocation3 + $0x38] sm:$0xff]
          %v2706 = vld [vmem:[#allocation3 + $0x40] sm:$0xff]
          %v2707 = vld [vmem:[#allocation3 + $0x48] sm:$0xff]
          %v2708 = vld [vmem:[#allocation3 + $0x50] sm:$0xff]
          %v2709 = vld [vmem:[#allocation3 + $0x58] sm:$0xff]
          %v2710 = vld [vmem:[#allocation3 + $0x60] sm:$0xff]
          %v2711 = vld [vmem:[#allocation3 + $0x68] sm:$0xff]
          %v2712 = vld [vmem:[#allocation3 + $0x70] sm:$0xff]
          %v2713 = vld [vmem:[#allocation3 + $0x78] sm:$0xff]
          %v2714 = vld [vmem:[#allocation3 + $0x80] sm:$0xff]
          %v2715 = vld [vmem:[#allocation3 + $0x88] sm:$0xff]
          %v2716 = vld [vmem:[#allocation3 + $0x90] sm:$0xff]
          %v2717 = vld [vmem:[#allocation3 + $0x98] sm:$0xff]
          %v2718 = vld [vmem:[#allocation3 + $0xa0] sm:$0xff]
          %v2719 = vld [vmem:[#allocation3 + $0xa8] sm:$0xff]
          %v2720 = vld [vmem:[#allocation3 + $0xb0] sm:$0xff]
          %v2721 = vld [vmem:[#allocation3 + $0xb8] sm:$0xff]
          %v2722 = vld [vmem:[#allocation3 + $0xc0] sm:$0xff]
          %v2723 = vld [vmem:[#allocation3 + $0xc8] sm:$0xff]
          %v2724 = vld [vmem:[#allocation3 + $0xd0] sm:$0xff]
          %v2725 = vld [vmem:[#allocation3 + $0xd8] sm:$0xff]
          %v2726 = vld [vmem:[#allocation3 + $0xe0] sm:$0xff]
          %v2727 = vld [vmem:[#allocation3 + $0xe8] sm:$0xff]
          %v2728 = vld [vmem:[#allocation3 + $0xf0] sm:$0xff]
          %v2729 = vld [vmem:[#allocation3 + $0xf8] sm:$0xff]
          %v2730 = vld [vmem:[#allocation3 + $0x100] sm:$0xff]
          %v2731 = vld [vmem:[#allocation3 + $0x108] sm:$0xff]
          %v2732 = vld [vmem:[#allocation3 + $0x110] sm:$0xff]
          %v2733 = vld [vmem:[#allocation3 + $0x118] sm:$0xff]
          %v2734 = vld [vmem:[#allocation3 + $0x120] sm:$0xff]
          %v2735 = vld [vmem:[#allocation3 + $0x128] sm:$0xff]
          %v2736 = vld [vmem:[#allocation3 + $0x130] sm:$0xff]
          %v2737 = vld [vmem:[#allocation3 + $0x138] sm:$0xff]
          %v2738 = vld [vmem:[#allocation3 + $0x140] sm:$0xff]
          %v2739 = vld [vmem:[#allocation3 + $0x148] sm:$0xff]
          %v2740 = vld [vmem:[#allocation3 + $0x150] sm:$0xff]
          %v2741 = vld [vmem:[#allocation3 + $0x158] sm:$0xff]
          %v2742 = vld [vmem:[#allocation3 + $0x160] sm:$0xff]
          %v2743 = vld [vmem:[#allocation3 + $0x168] sm:$0xff]
          %v2744 = vld [vmem:[#allocation3 + $0x170] sm:$0xff]
          %v2745 = vld [vmem:[#allocation3 + $0x178] sm:$0xff]
          %v2746 = vld [vmem:[#allocation3 + $0x180] sm:$0xff]
          %v2747 = vld [vmem:[#allocation3 + $0x188] sm:$0xff]
          %v2748 = vld [vmem:[#allocation3 + $0x190] sm:$0xff]
          %v2749 = vld [vmem:[#allocation3 + $0x198] sm:$0xff]
          %v2750 = vld [vmem:[#allocation3 + $0x1a0] sm:$0xff]
          %v2751 = vld [vmem:[#allocation3 + $0x1a8] sm:$0xff]
          %v2752 = vld [vmem:[#allocation3 + $0x1b0] sm:$0xff]
          %v2753 = vld [vmem:[#allocation3 + $0x1b8] sm:$0xff]
          %v2754 = vld [vmem:[#allocation3 + $0x1c0] sm:$0xff]
          %v2755 = vld [vmem:[#allocation3 + $0x1c8] sm:$0xff]
          %v2756 = vld [vmem:[#allocation3 + $0x1d0] sm:$0xff]
          %v2757 = vld [vmem:[#allocation3 + $0x1d8] sm:$0xff]
          %v2758 = vld [vmem:[#allocation3 + $0x1e0] sm:$0xff]
          %v2759 = vld [vmem:[#allocation3 + $0x1e8] sm:$0xff]
          %v2760 = vld [vmem:[#allocation3 + $0x1f0] sm:$0xff]
          %v2761 = vld [vmem:[#allocation3 + $0x1f8] sm:$0xff]
          %v2762 = vmax.f32 %v2698, 0.0
          %v2763 = vmax.f32 %v2699, 0.0
          %v2764 = vmax.f32 %v2700, 0.0
          %v2765 = vmax.f32 %v2701, 0.0
          %v2766 = vmax.f32 %v2702, 0.0
          %v2767 = vmax.f32 %v2703, 0.0
          %v2768 = vmax.f32 %v2704, 0.0
          %v2769 = vmax.f32 %v2705, 0.0
          %v2770 = vmax.f32 %v2706, 0.0
          %v2771 = vmax.f32 %v2707, 0.0
          %v2772 = vmax.f32 %v2708, 0.0
          %v2773 = vmax.f32 %v2709, 0.0
          %v2774 = vmax.f32 %v2710, 0.0
          %v2775 = vmax.f32 %v2711, 0.0
          %v2776 = vmax.f32 %v2712, 0.0
          %v2777 = vmax.f32 %v2713, 0.0
          %v2778 = vmax.f32 %v2714, 0.0
          %v2779 = vmax.f32 %v2715, 0.0
          %v2780 = vmax.f32 %v2716, 0.0
          %v2781 = vmax.f32 %v2717, 0.0
          %v2782 = vmax.f32 %v2718, 0.0
          %v2783 = vmax.f32 %v2719, 0.0
          %v2784 = vmax.f32 %v2720, 0.0
          %v2785 = vmax.f32 %v2721, 0.0
          %v2786 = vmax.f32 %v2722, 0.0
          %v2787 = vmax.f32 %v2723, 0.0
          %v2788 = vmax.f32 %v2724, 0.0
          %v2789 = vmax.f32 %v2725, 0.0
          %v2790 = vmax.f32 %v2726, 0.0
          %v2791 = vmax.f32 %v2727, 0.0
          %v2792 = vmax.f32 %v2728, 0.0
          %v2793 = vmax.f32 %v2729, 0.0
          %v2794 = vmax.f32 %v2730, 0.0
          %v2795 = vmax.f32 %v2731, 0.0
          %v2796 = vmax.f32 %v2732, 0.0
          %v2797 = vmax.f32 %v2733, 0.0
          %v2798 = vmax.f32 %v2734, 0.0
          %v2799 = vmax.f32 %v2735, 0.0
          %v2800 = vmax.f32 %v2736, 0.0
          %v2801 = vmax.f32 %v2737, 0.0
          %v2802 = vmax.f32 %v2738, 0.0
          %v2803 = vmax.f32 %v2739, 0.0
          %v2804 = vmax.f32 %v2740, 0.0
          %v2805 = vmax.f32 %v2741, 0.0
          %v2806 = vmax.f32 %v2742, 0.0
          %v2807 = vmax.f32 %v2743, 0.0
          %v2808 = vmax.f32 %v2744, 0.0
          %v2809 = vmax.f32 %v2745, 0.0
          %v2810 = vmax.f32 %v2746, 0.0
          %v2811 = vmax.f32 %v2747, 0.0
          %v2812 = vmax.f32 %v2748, 0.0
          %v2813 = vmax.f32 %v2749, 0.0
          %v2814 = vmax.f32 %v2750, 0.0
          %v2815 = vmax.f32 %v2751, 0.0
          %v2816 = vmax.f32 %v2752, 0.0
          %v2817 = vmax.f32 %v2753, 0.0
          %v2818 = vmax.f32 %v2754, 0.0
          %v2819 = vmax.f32 %v2755, 0.0
          %v2820 = vmax.f32 %v2756, 0.0
          %v2821 = vmax.f32 %v2757, 0.0
          %v2822 = vmax.f32 %v2758, 0.0
          %v2823 = vmax.f32 %v2759, 0.0
          %v2824 = vmax.f32 %v2760, 0.0
          %v2825 = vmax.f32 %v2761, 0.0
          %vm2826 = vcmp.eq.f32.partialorder %v2762, 0.0
          %vm2827 = vcmp.eq.f32.partialorder %v2763, 0.0
          %vm2828 = vcmp.eq.f32.partialorder %v2764, 0.0
          %vm2829 = vcmp.eq.f32.partialorder %v2765, 0.0
          %vm2830 = vcmp.eq.f32.partialorder %v2766, 0.0
          %vm2831 = vcmp.eq.f32.partialorder %v2767, 0.0
          %vm2832 = vcmp.eq.f32.partialorder %v2768, 0.0
          %vm2833 = vcmp.eq.f32.partialorder %v2769, 0.0
          %vm2834 = vcmp.eq.f32.partialorder %v2770, 0.0
          %vm2835 = vcmp.eq.f32.partialorder %v2771, 0.0
          %vm2836 = vcmp.eq.f32.partialorder %v2772, 0.0
          %vm2837 = vcmp.eq.f32.partialorder %v2773, 0.0
          %vm2838 = vcmp.eq.f32.partialorder %v2774, 0.0
          %vm2839 = vcmp.eq.f32.partialorder %v2775, 0.0
          %vm2840 = vcmp.eq.f32.partialorder %v2776, 0.0
          %vm2841 = vcmp.eq.f32.partialorder %v2777, 0.0
          %vm2842 = vcmp.eq.f32.partialorder %v2778, 0.0
          %vm2843 = vcmp.eq.f32.partialorder %v2779, 0.0
          %vm2844 = vcmp.eq.f32.partialorder %v2780, 0.0
          %vm2845 = vcmp.eq.f32.partialorder %v2781, 0.0
          %vm2846 = vcmp.eq.f32.partialorder %v2782, 0.0
          %vm2847 = vcmp.eq.f32.partialorder %v2783, 0.0
          %vm2848 = vcmp.eq.f32.partialorder %v2784, 0.0
          %vm2849 = vcmp.eq.f32.partialorder %v2785, 0.0
          %vm2850 = vcmp.eq.f32.partialorder %v2786, 0.0
          %vm2851 = vcmp.eq.f32.partialorder %v2787, 0.0
          %vm2852 = vcmp.eq.f32.partialorder %v2788, 0.0
          %vm2853 = vcmp.eq.f32.partialorder %v2789, 0.0
          %vm2854 = vcmp.eq.f32.partialorder %v2790, 0.0
          %vm2855 = vcmp.eq.f32.partialorder %v2791, 0.0
          %vm2856 = vcmp.eq.f32.partialorder %v2792, 0.0
          %vm2857 = vcmp.eq.f32.partialorder %v2793, 0.0
          %vm2858 = vcmp.eq.f32.partialorder %v2794, 0.0
          %vm2859 = vcmp.eq.f32.partialorder %v2795, 0.0
          %vm2860 = vcmp.eq.f32.partialorder %v2796, 0.0
          %vm2861 = vcmp.eq.f32.partialorder %v2797, 0.0
          %vm2862 = vcmp.eq.f32.partialorder %v2798, 0.0
          %vm2863 = vcmp.eq.f32.partialorder %v2799, 0.0
          %vm2864 = vcmp.eq.f32.partialorder %v2800, 0.0
          %vm2865 = vcmp.eq.f32.partialorder %v2801, 0.0
          %vm2866 = vcmp.eq.f32.partialorder %v2802, 0.0
          %vm2867 = vcmp.eq.f32.partialorder %v2803, 0.0
          %vm2868 = vcmp.eq.f32.partialorder %v2804, 0.0
          %vm2869 = vcmp.eq.f32.partialorder %v2805, 0.0
          %vm2870 = vcmp.eq.f32.partialorder %v2806, 0.0
          %vm2871 = vcmp.eq.f32.partialorder %v2807, 0.0
          %vm2872 = vcmp.eq.f32.partialorder %v2808, 0.0
          %vm2873 = vcmp.eq.f32.partialorder %v2809, 0.0
          %vm2874 = vcmp.eq.f32.partialorder %v2810, 0.0
          %vm2875 = vcmp.eq.f32.partialorder %v2811, 0.0
          %vm2876 = vcmp.eq.f32.partialorder %v2812, 0.0
          %vm2877 = vcmp.eq.f32.partialorder %v2813, 0.0
          %vm2878 = vcmp.eq.f32.partialorder %v2814, 0.0
          %vm2879 = vcmp.eq.f32.partialorder %v2815, 0.0
          %vm2880 = vcmp.eq.f32.partialorder %v2816, 0.0
          %vm2881 = vcmp.eq.f32.partialorder %v2817, 0.0
          %vm2882 = vcmp.eq.f32.partialorder %v2818, 0.0
          %vm2883 = vcmp.eq.f32.partialorder %v2819, 0.0
          %vm2884 = vcmp.eq.f32.partialorder %v2820, 0.0
          %vm2885 = vcmp.eq.f32.partialorder %v2821, 0.0
          %vm2886 = vcmp.eq.f32.partialorder %v2822, 0.0
          %vm2887 = vcmp.eq.f32.partialorder %v2823, 0.0
          %vm2888 = vcmp.eq.f32.partialorder %v2824, 0.0
          %vm2889 = vcmp.eq.f32.partialorder %v2825, 0.0
          %v2890 = vsel %vm2826, 1e-10, %v2762
          %v2891 = vsel %vm2827, 1e-10, %v2763
          %v2892 = vsel %vm2828, 1e-10, %v2764
          %v2893 = vsel %vm2829, 1e-10, %v2765
          %v2894 = vsel %vm2830, 1e-10, %v2766
          %v2895 = vsel %vm2831, 1e-10, %v2767
          %v2896 = vsel %vm2832, 1e-10, %v2768
          %v2897 = vsel %vm2833, 1e-10, %v2769
          %v2898 = vsel %vm2834, 1e-10, %v2770
          %v2899 = vsel %vm2835, 1e-10, %v2771
          %v2900 = vsel %vm2836, 1e-10, %v2772
          %v2901 = vsel %vm2837, 1e-10, %v2773
          %v2902 = vsel %vm2838, 1e-10, %v2774
          %v2903 = vsel %vm2839, 1e-10, %v2775
          %v2904 = vsel %vm2840, 1e-10, %v2776
          %v2905 = vsel %vm2841, 1e-10, %v2777
          %v2906 = vsel %vm2842, 1e-10, %v2778
          %v2907 = vsel %vm2843, 1e-10, %v2779
          %v2908 = vsel %vm2844, 1e-10, %v2780
          %v2909 = vsel %vm2845, 1e-10, %v2781
          %v2910 = vsel %vm2846, 1e-10, %v2782
          %v2911 = vsel %vm2847, 1e-10, %v2783
          %v2912 = vsel %vm2848, 1e-10, %v2784
          %v2913 = vsel %vm2849, 1e-10, %v2785
          %v2914 = vsel %vm2850, 1e-10, %v2786
          %v2915 = vsel %vm2851, 1e-10, %v2787
          %v2916 = vsel %vm2852, 1e-10, %v2788
          %v2917 = vsel %vm2853, 1e-10, %v2789
          %v2918 = vsel %vm2854, 1e-10, %v2790
          %v2919 = vsel %vm2855, 1e-10, %v2791
          %v2920 = vsel %vm2856, 1e-10, %v2792
          %v2921 = vsel %vm2857, 1e-10, %v2793
          %v2922 = vsel %vm2858, 1e-10, %v2794
          %v2923 = vsel %vm2859, 1e-10, %v2795
          %v2924 = vsel %vm2860, 1e-10, %v2796
          %v2925 = vsel %vm2861, 1e-10, %v2797
          %v2926 = vsel %vm2862, 1e-10, %v2798
          %v2927 = vsel %vm2863, 1e-10, %v2799
          %v2928 = vsel %vm2864, 1e-10, %v2800
          %v2929 = vsel %vm2865, 1e-10, %v2801
          %v2930 = vsel %vm2866, 1e-10, %v2802
          %v2931 = vsel %vm2867, 1e-10, %v2803
          %v2932 = vsel %vm2868, 1e-10, %v2804
          %v2933 = vsel %vm2869, 1e-10, %v2805
          %v2934 = vsel %vm2870, 1e-10, %v2806
          %v2935 = vsel %vm2871, 1e-10, %v2807
          %v2936 = vsel %vm2872, 1e-10, %v2808
          %v2937 = vsel %vm2873, 1e-10, %v2809
          %v2938 = vsel %vm2874, 1e-10, %v2810
          %v2939 = vsel %vm2875, 1e-10, %v2811
          %v2940 = vsel %vm2876, 1e-10, %v2812
          %v2941 = vsel %vm2877, 1e-10, %v2813
          %v2942 = vsel %vm2878, 1e-10, %v2814
          %v2943 = vsel %vm2879, 1e-10, %v2815
          %v2944 = vsel %vm2880, 1e-10, %v2816
          %v2945 = vsel %vm2881, 1e-10, %v2817
          %v2946 = vsel %vm2882, 1e-10, %v2818
          %v2947 = vsel %vm2883, 1e-10, %v2819
          %v2948 = vsel %vm2884, 1e-10, %v2820
          %v2949 = vsel %vm2885, 1e-10, %v2821
          %v2950 = vsel %vm2886, 1e-10, %v2822
          %v2951 = vsel %vm2887, 1e-10, %v2823
          %v2952 = vsel %vm2888, 1e-10, %v2824
          %v2953 = vsel %vm2889, 1e-10, %v2825
          %v2954 = vrsqrt.pop %v2890
          %v2955 = vmul.f32 %v2954, %v2890
          %v2956 = vmul.f32 %v2955, %v2954
          %v2957 = vmul.f32 0.5, %v2956
          %v2958 = vsub.f32 1.5, %v2957
          %v2959 = vmul.f32 %v2954, %v2958
          %vm2960 = vweird.f32 %v2890
          %vm2961 = vweird.f32 %v2954
          %vm2962 = vmor %vm2960, %vm2961
          %v2963 = vsel %vm2962, %v2954, %v2959
          %v2964 = vrsqrt.pop %v2891
          %v2965 = vmul.f32 %v2964, %v2891
          %v2966 = vmul.f32 %v2965, %v2964
          %v2967 = vmul.f32 0.5, %v2966
          %v2968 = vsub.f32 1.5, %v2967
          %v2969 = vmul.f32 %v2964, %v2968
          %vm2970 = vweird.f32 %v2891
          %vm2971 = vweird.f32 %v2964
          %vm2972 = vmor %vm2970, %vm2971
          %v2973 = vsel %vm2972, %v2964, %v2969
          %v2974 = vrsqrt.pop %v2892
          %v2975 = vmul.f32 %v2974, %v2892
          %v2976 = vmul.f32 %v2975, %v2974
          %v2977 = vmul.f32 0.5, %v2976
          %v2978 = vsub.f32 1.5, %v2977
          %v2979 = vmul.f32 %v2974, %v2978
          %vm2980 = vweird.f32 %v2892
          %vm2981 = vweird.f32 %v2974
          %vm2982 = vmor %vm2980, %vm2981
          %v2983 = vsel %vm2982, %v2974, %v2979
          %v2984 = vrsqrt.pop %v2893
          %v2985 = vmul.f32 %v2984, %v2893
          %v2986 = vmul.f32 %v2985, %v2984
          %v2987 = vmul.f32 0.5, %v2986
          %v2988 = vsub.f32 1.5, %v2987
          %v2989 = vmul.f32 %v2984, %v2988
          %vm2990 = vweird.f32 %v2893
          %vm2991 = vweird.f32 %v2984
          %vm2992 = vmor %vm2990, %vm2991
          %v2993 = vsel %vm2992, %v2984, %v2989
          %v2994 = vrsqrt.pop %v2894
          %v2995 = vmul.f32 %v2994, %v2894
          %v2996 = vmul.f32 %v2995, %v2994
          %v2997 = vmul.f32 0.5, %v2996
          %v2998 = vsub.f32 1.5, %v2997
          %v2999 = vmul.f32 %v2994, %v2998
          %vm3000 = vweird.f32 %v2894
          %vm3001 = vweird.f32 %v2994
          %vm3002 = vmor %vm3000, %vm3001
          %v3003 = vsel %vm3002, %v2994, %v2999
          %v3004 = vrsqrt.pop %v2895
          %v3005 = vmul.f32 %v3004, %v2895
          %v3006 = vmul.f32 %v3005, %v3004
          %v3007 = vmul.f32 0.5, %v3006
          %v3008 = vsub.f32 1.5, %v3007
          %v3009 = vmul.f32 %v3004, %v3008
          %vm3010 = vweird.f32 %v2895
          %vm3011 = vweird.f32 %v3004
          %vm3012 = vmor %vm3010, %vm3011
          %v3013 = vsel %vm3012, %v3004, %v3009
          %v3014 = vrsqrt.pop %v2896
          %v3015 = vmul.f32 %v3014, %v2896
          %v3016 = vmul.f32 %v3015, %v3014
          %v3017 = vmul.f32 0.5, %v3016
          %v3018 = vsub.f32 1.5, %v3017
          %v3019 = vmul.f32 %v3014, %v3018
          %vm3020 = vweird.f32 %v2896
          %vm3021 = vweird.f32 %v3014
          %vm3022 = vmor %vm3020, %vm3021
          %v3023 = vsel %vm3022, %v3014, %v3019
          %v3024 = vrsqrt.pop %v2897
          %v3025 = vmul.f32 %v3024, %v2897
          %v3026 = vmul.f32 %v3025, %v3024
          %v3027 = vmul.f32 0.5, %v3026
          %v3028 = vsub.f32 1.5, %v3027
          %v3029 = vmul.f32 %v3024, %v3028
          %vm3030 = vweird.f32 %v2897
          %vm3031 = vweird.f32 %v3024
          %vm3032 = vmor %vm3030, %vm3031
          %v3033 = vsel %vm3032, %v3024, %v3029
          %v3034 = vrsqrt.pop %v2898
          %v3035 = vmul.f32 %v3034, %v2898
          %v3036 = vmul.f32 %v3035, %v3034
          %v3037 = vmul.f32 0.5, %v3036
          %v3038 = vsub.f32 1.5, %v3037
          %v3039 = vmul.f32 %v3034, %v3038
          %vm3040 = vweird.f32 %v2898
          %vm3041 = vweird.f32 %v3034
          %vm3042 = vmor %vm3040, %vm3041
          %v3043 = vsel %vm3042, %v3034, %v3039
          %v3044 = vrsqrt.pop %v2899
          %v3045 = vmul.f32 %v3044, %v2899
          %v3046 = vmul.f32 %v3045, %v3044
          %v3047 = vmul.f32 0.5, %v3046
          %v3048 = vsub.f32 1.5, %v3047
          %v3049 = vmul.f32 %v3044, %v3048
          %vm3050 = vweird.f32 %v2899
          %vm3051 = vweird.f32 %v3044
          %vm3052 = vmor %vm3050, %vm3051
          %v3053 = vsel %vm3052, %v3044, %v3049
          %v3054 = vrsqrt.pop %v2900
          %v3055 = vmul.f32 %v3054, %v2900
          %v3056 = vmul.f32 %v3055, %v3054
          %v3057 = vmul.f32 0.5, %v3056
          %v3058 = vsub.f32 1.5, %v3057
          %v3059 = vmul.f32 %v3054, %v3058
          %vm3060 = vweird.f32 %v2900
          %vm3061 = vweird.f32 %v3054
          %vm3062 = vmor %vm3060, %vm3061
          %v3063 = vsel %vm3062, %v3054, %v3059
          %v3064 = vrsqrt.pop %v2901
          %v3065 = vmul.f32 %v3064, %v2901
          %v3066 = vmul.f32 %v3065, %v3064
          %v3067 = vmul.f32 0.5, %v3066
          %v3068 = vsub.f32 1.5, %v3067
          %v3069 = vmul.f32 %v3064, %v3068
          %vm3070 = vweird.f32 %v2901
          %vm3071 = vweird.f32 %v3064
          %vm3072 = vmor %vm3070, %vm3071
          %v3073 = vsel %vm3072, %v3064, %v3069
          %v3074 = vrsqrt.pop %v2902
          %v3075 = vmul.f32 %v3074, %v2902
          %v3076 = vmul.f32 %v3075, %v3074
          %v3077 = vmul.f32 0.5, %v3076
          %v3078 = vsub.f32 1.5, %v3077
          %v3079 = vmul.f32 %v3074, %v3078
          %vm3080 = vweird.f32 %v2902
          %vm3081 = vweird.f32 %v3074
          %vm3082 = vmor %vm3080, %vm3081
          %v3083 = vsel %vm3082, %v3074, %v3079
          %v3084 = vrsqrt.pop %v2903
          %v3085 = vmul.f32 %v3084, %v2903
          %v3086 = vmul.f32 %v3085, %v3084
          %v3087 = vmul.f32 0.5, %v3086
          %v3088 = vsub.f32 1.5, %v3087
          %v3089 = vmul.f32 %v3084, %v3088
          %vm3090 = vweird.f32 %v2903
          %vm3091 = vweird.f32 %v3084
          %vm3092 = vmor %vm3090, %vm3091
          %v3093 = vsel %vm3092, %v3084, %v3089
          %v3094 = vrsqrt.pop %v2904
          %v3095 = vmul.f32 %v3094, %v2904
          %v3096 = vmul.f32 %v3095, %v3094
          %v3097 = vmul.f32 0.5, %v3096
          %v3098 = vsub.f32 1.5, %v3097
          %v3099 = vmul.f32 %v3094, %v3098
          %vm3100 = vweird.f32 %v2904
          %vm3101 = vweird.f32 %v3094
          %vm3102 = vmor %vm3100, %vm3101
          %v3103 = vsel %vm3102, %v3094, %v3099
          %v3104 = vrsqrt.pop %v2905
          %v3105 = vmul.f32 %v3104, %v2905
          %v3106 = vmul.f32 %v3105, %v3104
          %v3107 = vmul.f32 0.5, %v3106
          %v3108 = vsub.f32 1.5, %v3107
          %v3109 = vmul.f32 %v3104, %v3108
          %vm3110 = vweird.f32 %v2905
          %vm3111 = vweird.f32 %v3104
          %vm3112 = vmor %vm3110, %vm3111
          %v3113 = vsel %vm3112, %v3104, %v3109
          %v3114 = vrsqrt.pop %v2906
          %v3115 = vmul.f32 %v3114, %v2906
          %v3116 = vmul.f32 %v3115, %v3114
          %v3117 = vmul.f32 0.5, %v3116
          %v3118 = vsub.f32 1.5, %v3117
          %v3119 = vmul.f32 %v3114, %v3118
          %vm3120 = vweird.f32 %v2906
          %vm3121 = vweird.f32 %v3114
          %vm3122 = vmor %vm3120, %vm3121
          %v3123 = vsel %vm3122, %v3114, %v3119
          %v3124 = vrsqrt.pop %v2907
          %v3125 = vmul.f32 %v3124, %v2907
          %v3126 = vmul.f32 %v3125, %v3124
          %v3127 = vmul.f32 0.5, %v3126
          %v3128 = vsub.f32 1.5, %v3127
          %v3129 = vmul.f32 %v3124, %v3128
          %vm3130 = vweird.f32 %v2907
          %vm3131 = vweird.f32 %v3124
          %vm3132 = vmor %vm3130, %vm3131
          %v3133 = vsel %vm3132, %v3124, %v3129
          %v3134 = vrsqrt.pop %v2908
          %v3135 = vmul.f32 %v3134, %v2908
          %v3136 = vmul.f32 %v3135, %v3134
          %v3137 = vmul.f32 0.5, %v3136
          %v3138 = vsub.f32 1.5, %v3137
          %v3139 = vmul.f32 %v3134, %v3138
          %vm3140 = vweird.f32 %v2908
          %vm3141 = vweird.f32 %v3134
          %vm3142 = vmor %vm3140, %vm3141
          %v3143 = vsel %vm3142, %v3134, %v3139
          %v3144 = vrsqrt.pop %v2909
          %v3145 = vmul.f32 %v3144, %v2909
          %v3146 = vmul.f32 %v3145, %v3144
          %v3147 = vmul.f32 0.5, %v3146
          %v3148 = vsub.f32 1.5, %v3147
          %v3149 = vmul.f32 %v3144, %v3148
          %vm3150 = vweird.f32 %v2909
          %vm3151 = vweird.f32 %v3144
          %vm3152 = vmor %vm3150, %vm3151
          %v3153 = vsel %vm3152, %v3144, %v3149
          %v3154 = vrsqrt.pop %v2910
          %v3155 = vmul.f32 %v3154, %v2910
          %v3156 = vmul.f32 %v3155, %v3154
          %v3157 = vmul.f32 0.5, %v3156
          %v3158 = vsub.f32 1.5, %v3157
          %v3159 = vmul.f32 %v3154, %v3158
          %vm3160 = vweird.f32 %v2910
          %vm3161 = vweird.f32 %v3154
          %vm3162 = vmor %vm3160, %vm3161
          %v3163 = vsel %vm3162, %v3154, %v3159
          %v3164 = vrsqrt.pop %v2911
          %v3165 = vmul.f32 %v3164, %v2911
          %v3166 = vmul.f32 %v3165, %v3164
          %v3167 = vmul.f32 0.5, %v3166
          %v3168 = vsub.f32 1.5, %v3167
          %v3169 = vmul.f32 %v3164, %v3168
          %vm3170 = vweird.f32 %v2911
          %vm3171 = vweird.f32 %v3164
          %vm3172 = vmor %vm3170, %vm3171
          %v3173 = vsel %vm3172, %v3164, %v3169
          %v3174 = vrsqrt.pop %v2912
          %v3175 = vmul.f32 %v3174, %v2912
          %v3176 = vmul.f32 %v3175, %v3174
          %v3177 = vmul.f32 0.5, %v3176
          %v3178 = vsub.f32 1.5, %v3177
          %v3179 = vmul.f32 %v3174, %v3178
          %vm3180 = vweird.f32 %v2912
          %vm3181 = vweird.f32 %v3174
          %vm3182 = vmor %vm3180, %vm3181
          %v3183 = vsel %vm3182, %v3174, %v3179
          %v3184 = vrsqrt.pop %v2913
          %v3185 = vmul.f32 %v3184, %v2913
          %v3186 = vmul.f32 %v3185, %v3184
          %v3187 = vmul.f32 0.5, %v3186
          %v3188 = vsub.f32 1.5, %v3187
          %v3189 = vmul.f32 %v3184, %v3188
          %vm3190 = vweird.f32 %v2913
          %vm3191 = vweird.f32 %v3184
          %vm3192 = vmor %vm3190, %vm3191
          %v3193 = vsel %vm3192, %v3184, %v3189
          %v3194 = vrsqrt.pop %v2914
          %v3195 = vmul.f32 %v3194, %v2914
          %v3196 = vmul.f32 %v3195, %v3194
          %v3197 = vmul.f32 0.5, %v3196
          %v3198 = vsub.f32 1.5, %v3197
          %v3199 = vmul.f32 %v3194, %v3198
          %vm3200 = vweird.f32 %v2914
          %vm3201 = vweird.f32 %v3194
          %vm3202 = vmor %vm3200, %vm3201
          %v3203 = vsel %vm3202, %v3194, %v3199
          %v3204 = vrsqrt.pop %v2915
          %v3205 = vmul.f32 %v3204, %v2915
          %v3206 = vmul.f32 %v3205, %v3204
          %v3207 = vmul.f32 0.5, %v3206
          %v3208 = vsub.f32 1.5, %v3207
          %v3209 = vmul.f32 %v3204, %v3208
          %vm3210 = vweird.f32 %v2915
          %vm3211 = vweird.f32 %v3204
          %vm3212 = vmor %vm3210, %vm3211
          %v3213 = vsel %vm3212, %v3204, %v3209
          %v3214 = vrsqrt.pop %v2916
          %v3215 = vmul.f32 %v3214, %v2916
          %v3216 = vmul.f32 %v3215, %v3214
          %v3217 = vmul.f32 0.5, %v3216
          %v3218 = vsub.f32 1.5, %v3217
          %v3219 = vmul.f32 %v3214, %v3218
          %vm3220 = vweird.f32 %v2916
          %vm3221 = vweird.f32 %v3214
          %vm3222 = vmor %vm3220, %vm3221
          %v3223 = vsel %vm3222, %v3214, %v3219
          %v3224 = vrsqrt.pop %v2917
          %v3225 = vmul.f32 %v3224, %v2917
          %v3226 = vmul.f32 %v3225, %v3224
          %v3227 = vmul.f32 0.5, %v3226
          %v3228 = vsub.f32 1.5, %v3227
          %v3229 = vmul.f32 %v3224, %v3228
          %vm3230 = vweird.f32 %v2917
          %vm3231 = vweird.f32 %v3224
          %vm3232 = vmor %vm3230, %vm3231
          %v3233 = vsel %vm3232, %v3224, %v3229
          %v3234 = vrsqrt.pop %v2918
          %v3235 = vmul.f32 %v3234, %v2918
          %v3236 = vmul.f32 %v3235, %v3234
          %v3237 = vmul.f32 0.5, %v3236
          %v3238 = vsub.f32 1.5, %v3237
          %v3239 = vmul.f32 %v3234, %v3238
          %vm3240 = vweird.f32 %v2918
          %vm3241 = vweird.f32 %v3234
          %vm3242 = vmor %vm3240, %vm3241
          %v3243 = vsel %vm3242, %v3234, %v3239
          %v3244 = vrsqrt.pop %v2919
          %v3245 = vmul.f32 %v3244, %v2919
          %v3246 = vmul.f32 %v3245, %v3244
          %v3247 = vmul.f32 0.5, %v3246
          %v3248 = vsub.f32 1.5, %v3247
          %v3249 = vmul.f32 %v3244, %v3248
          %vm3250 = vweird.f32 %v2919
          %vm3251 = vweird.f32 %v3244
          %vm3252 = vmor %vm3250, %vm3251
          %v3253 = vsel %vm3252, %v3244, %v3249
          %v3254 = vrsqrt.pop %v2920
          %v3255 = vmul.f32 %v3254, %v2920
          %v3256 = vmul.f32 %v3255, %v3254
          %v3257 = vmul.f32 0.5, %v3256
          %v3258 = vsub.f32 1.5, %v3257
          %v3259 = vmul.f32 %v3254, %v3258
          %vm3260 = vweird.f32 %v2920
          %vm3261 = vweird.f32 %v3254
          %vm3262 = vmor %vm3260, %vm3261
          %v3263 = vsel %vm3262, %v3254, %v3259
          %v3264 = vrsqrt.pop %v2921
          %v3265 = vmul.f32 %v3264, %v2921
          %v3266 = vmul.f32 %v3265, %v3264
          %v3267 = vmul.f32 0.5, %v3266
          %v3268 = vsub.f32 1.5, %v3267
          %v3269 = vmul.f32 %v3264, %v3268
          %vm3270 = vweird.f32 %v2921
          %vm3271 = vweird.f32 %v3264
          %vm3272 = vmor %vm3270, %vm3271
          %v3273 = vsel %vm3272, %v3264, %v3269
          %v3274 = vrsqrt.pop %v2922
          %v3275 = vmul.f32 %v3274, %v2922
          %v3276 = vmul.f32 %v3275, %v3274
          %v3277 = vmul.f32 0.5, %v3276
          %v3278 = vsub.f32 1.5, %v3277
          %v3279 = vmul.f32 %v3274, %v3278
          %vm3280 = vweird.f32 %v2922
          %vm3281 = vweird.f32 %v3274
          %vm3282 = vmor %vm3280, %vm3281
          %v3283 = vsel %vm3282, %v3274, %v3279
          %v3284 = vrsqrt.pop %v2923
          %v3285 = vmul.f32 %v3284, %v2923
          %v3286 = vmul.f32 %v3285, %v3284
          %v3287 = vmul.f32 0.5, %v3286
          %v3288 = vsub.f32 1.5, %v3287
          %v3289 = vmul.f32 %v3284, %v3288
          %vm3290 = vweird.f32 %v2923
          %vm3291 = vweird.f32 %v3284
          %vm3292 = vmor %vm3290, %vm3291
          %v3293 = vsel %vm3292, %v3284, %v3289
          %v3294 = vrsqrt.pop %v2924
          %v3295 = vmul.f32 %v3294, %v2924
          %v3296 = vmul.f32 %v3295, %v3294
          %v3297 = vmul.f32 0.5, %v3296
          %v3298 = vsub.f32 1.5, %v3297
          %v3299 = vmul.f32 %v3294, %v3298
          %vm3300 = vweird.f32 %v2924
          %vm3301 = vweird.f32 %v3294
          %vm3302 = vmor %vm3300, %vm3301
          %v3303 = vsel %vm3302, %v3294, %v3299
          %v3304 = vrsqrt.pop %v2925
          %v3305 = vmul.f32 %v3304, %v2925
          %v3306 = vmul.f32 %v3305, %v3304
          %v3307 = vmul.f32 0.5, %v3306
          %v3308 = vsub.f32 1.5, %v3307
          %v3309 = vmul.f32 %v3304, %v3308
          %vm3310 = vweird.f32 %v2925
          %vm3311 = vweird.f32 %v3304
          %vm3312 = vmor %vm3310, %vm3311
          %v3313 = vsel %vm3312, %v3304, %v3309
          %v3314 = vrsqrt.pop %v2926
          %v3315 = vmul.f32 %v3314, %v2926
          %v3316 = vmul.f32 %v3315, %v3314
          %v3317 = vmul.f32 0.5, %v3316
          %v3318 = vsub.f32 1.5, %v3317
          %v3319 = vmul.f32 %v3314, %v3318
          %vm3320 = vweird.f32 %v2926
          %vm3321 = vweird.f32 %v3314
          %vm3322 = vmor %vm3320, %vm3321
          %v3323 = vsel %vm3322, %v3314, %v3319
          %v3324 = vrsqrt.pop %v2927
          %v3325 = vmul.f32 %v3324, %v2927
          %v3326 = vmul.f32 %v3325, %v3324
          %v3327 = vmul.f32 0.5, %v3326
          %v3328 = vsub.f32 1.5, %v3327
          %v3329 = vmul.f32 %v3324, %v3328
          %vm3330 = vweird.f32 %v2927
          %vm3331 = vweird.f32 %v3324
          %vm3332 = vmor %vm3330, %vm3331
          %v3333 = vsel %vm3332, %v3324, %v3329
          %v3334 = vrsqrt.pop %v2928
          %v3335 = vmul.f32 %v3334, %v2928
          %v3336 = vmul.f32 %v3335, %v3334
          %v3337 = vmul.f32 0.5, %v3336
          %v3338 = vsub.f32 1.5, %v3337
          %v3339 = vmul.f32 %v3334, %v3338
          %vm3340 = vweird.f32 %v2928
          %vm3341 = vweird.f32 %v3334
          %vm3342 = vmor %vm3340, %vm3341
          %v3343 = vsel %vm3342, %v3334, %v3339
          %v3344 = vrsqrt.pop %v2929
          %v3345 = vmul.f32 %v3344, %v2929
          %v3346 = vmul.f32 %v3345, %v3344
          %v3347 = vmul.f32 0.5, %v3346
          %v3348 = vsub.f32 1.5, %v3347
          %v3349 = vmul.f32 %v3344, %v3348
          %vm3350 = vweird.f32 %v2929
          %vm3351 = vweird.f32 %v3344
          %vm3352 = vmor %vm3350, %vm3351
          %v3353 = vsel %vm3352, %v3344, %v3349
          %v3354 = vrsqrt.pop %v2930
          %v3355 = vmul.f32 %v3354, %v2930
          %v3356 = vmul.f32 %v3355, %v3354
          %v3357 = vmul.f32 0.5, %v3356
          %v3358 = vsub.f32 1.5, %v3357
          %v3359 = vmul.f32 %v3354, %v3358
          %vm3360 = vweird.f32 %v2930
          %vm3361 = vweird.f32 %v3354
          %vm3362 = vmor %vm3360, %vm3361
          %v3363 = vsel %vm3362, %v3354, %v3359
          %v3364 = vrsqrt.pop %v2931
          %v3365 = vmul.f32 %v3364, %v2931
          %v3366 = vmul.f32 %v3365, %v3364
          %v3367 = vmul.f32 0.5, %v3366
          %v3368 = vsub.f32 1.5, %v3367
          %v3369 = vmul.f32 %v3364, %v3368
          %vm3370 = vweird.f32 %v2931
          %vm3371 = vweird.f32 %v3364
          %vm3372 = vmor %vm3370, %vm3371
          %v3373 = vsel %vm3372, %v3364, %v3369
          %v3374 = vrsqrt.pop %v2932
          %v3375 = vmul.f32 %v3374, %v2932
          %v3376 = vmul.f32 %v3375, %v3374
          %v3377 = vmul.f32 0.5, %v3376
          %v3378 = vsub.f32 1.5, %v3377
          %v3379 = vmul.f32 %v3374, %v3378
          %vm3380 = vweird.f32 %v2932
          %vm3381 = vweird.f32 %v3374
          %vm3382 = vmor %vm3380, %vm3381
          %v3383 = vsel %vm3382, %v3374, %v3379
          %v3384 = vrsqrt.pop %v2933
          %v3385 = vmul.f32 %v3384, %v2933
          %v3386 = vmul.f32 %v3385, %v3384
          %v3387 = vmul.f32 0.5, %v3386
          %v3388 = vsub.f32 1.5, %v3387
          %v3389 = vmul.f32 %v3384, %v3388
          %vm3390 = vweird.f32 %v2933
          %vm3391 = vweird.f32 %v3384
          %vm3392 = vmor %vm3390, %vm3391
          %v3393 = vsel %vm3392, %v3384, %v3389
          %v3394 = vrsqrt.pop %v2934
          %v3395 = vmul.f32 %v3394, %v2934
          %v3396 = vmul.f32 %v3395, %v3394
          %v3397 = vmul.f32 0.5, %v3396
          %v3398 = vsub.f32 1.5, %v3397
          %v3399 = vmul.f32 %v3394, %v3398
          %vm3400 = vweird.f32 %v2934
          %vm3401 = vweird.f32 %v3394
          %vm3402 = vmor %vm3400, %vm3401
          %v3403 = vsel %vm3402, %v3394, %v3399
          %v3404 = vrsqrt.pop %v2935
          %v3405 = vmul.f32 %v3404, %v2935
          %v3406 = vmul.f32 %v3405, %v3404
          %v3407 = vmul.f32 0.5, %v3406
          %v3408 = vsub.f32 1.5, %v3407
          %v3409 = vmul.f32 %v3404, %v3408
          %vm3410 = vweird.f32 %v2935
          %vm3411 = vweird.f32 %v3404
          %vm3412 = vmor %vm3410, %vm3411
          %v3413 = vsel %vm3412, %v3404, %v3409
          %v3414 = vrsqrt.pop %v2936
          %v3415 = vmul.f32 %v3414, %v2936
          %v3416 = vmul.f32 %v3415, %v3414
          %v3417 = vmul.f32 0.5, %v3416
          %v3418 = vsub.f32 1.5, %v3417
          %v3419 = vmul.f32 %v3414, %v3418
          %vm3420 = vweird.f32 %v2936
          %vm3421 = vweird.f32 %v3414
          %vm3422 = vmor %vm3420, %vm3421
          %v3423 = vsel %vm3422, %v3414, %v3419
          %v3424 = vrsqrt.pop %v2937
          %v3425 = vmul.f32 %v3424, %v2937
          %v3426 = vmul.f32 %v3425, %v3424
          %v3427 = vmul.f32 0.5, %v3426
          %v3428 = vsub.f32 1.5, %v3427
          %v3429 = vmul.f32 %v3424, %v3428
          %vm3430 = vweird.f32 %v2937
          %vm3431 = vweird.f32 %v3424
          %vm3432 = vmor %vm3430, %vm3431
          %v3433 = vsel %vm3432, %v3424, %v3429
          %v3434 = vrsqrt.pop %v2938
          %v3435 = vmul.f32 %v3434, %v2938
          %v3436 = vmul.f32 %v3435, %v3434
          %v3437 = vmul.f32 0.5, %v3436
          %v3438 = vsub.f32 1.5, %v3437
          %v3439 = vmul.f32 %v3434, %v3438
          %vm3440 = vweird.f32 %v2938
          %vm3441 = vweird.f32 %v3434
          %vm3442 = vmor %vm3440, %vm3441
          %v3443 = vsel %vm3442, %v3434, %v3439
          %v3444 = vrsqrt.pop %v2939
          %v3445 = vmul.f32 %v3444, %v2939
          %v3446 = vmul.f32 %v3445, %v3444
          %v3447 = vmul.f32 0.5, %v3446
          %v3448 = vsub.f32 1.5, %v3447
          %v3449 = vmul.f32 %v3444, %v3448
          %vm3450 = vweird.f32 %v2939
          %vm3451 = vweird.f32 %v3444
          %vm3452 = vmor %vm3450, %vm3451
          %v3453 = vsel %vm3452, %v3444, %v3449
          %v3454 = vrsqrt.pop %v2940
          %v3455 = vmul.f32 %v3454, %v2940
          %v3456 = vmul.f32 %v3455, %v3454
          %v3457 = vmul.f32 0.5, %v3456
          %v3458 = vsub.f32 1.5, %v3457
          %v3459 = vmul.f32 %v3454, %v3458
          %vm3460 = vweird.f32 %v2940
          %vm3461 = vweird.f32 %v3454
          %vm3462 = vmor %vm3460, %vm3461
          %v3463 = vsel %vm3462, %v3454, %v3459
          %v3464 = vrsqrt.pop %v2941
          %v3465 = vmul.f32 %v3464, %v2941
          %v3466 = vmul.f32 %v3465, %v3464
          %v3467 = vmul.f32 0.5, %v3466
          %v3468 = vsub.f32 1.5, %v3467
          %v3469 = vmul.f32 %v3464, %v3468
          %vm3470 = vweird.f32 %v2941
          %vm3471 = vweird.f32 %v3464
          %vm3472 = vmor %vm3470, %vm3471
          %v3473 = vsel %vm3472, %v3464, %v3469
          %v3474 = vrsqrt.pop %v2942
          %v3475 = vmul.f32 %v3474, %v2942
          %v3476 = vmul.f32 %v3475, %v3474
          %v3477 = vmul.f32 0.5, %v3476
          %v3478 = vsub.f32 1.5, %v3477
          %v3479 = vmul.f32 %v3474, %v3478
          %vm3480 = vweird.f32 %v2942
          %vm3481 = vweird.f32 %v3474
          %vm3482 = vmor %vm3480, %vm3481
          %v3483 = vsel %vm3482, %v3474, %v3479
          %v3484 = vrsqrt.pop %v2943
          %v3485 = vmul.f32 %v3484, %v2943
          %v3486 = vmul.f32 %v3485, %v3484
          %v3487 = vmul.f32 0.5, %v3486
          %v3488 = vsub.f32 1.5, %v3487
          %v3489 = vmul.f32 %v3484, %v3488
          %vm3490 = vweird.f32 %v2943
          %vm3491 = vweird.f32 %v3484
          %vm3492 = vmor %vm3490, %vm3491
          %v3493 = vsel %vm3492, %v3484, %v3489
          %v3494 = vrsqrt.pop %v2944
          %v3495 = vmul.f32 %v3494, %v2944
          %v3496 = vmul.f32 %v3495, %v3494
          %v3497 = vmul.f32 0.5, %v3496
          %v3498 = vsub.f32 1.5, %v3497
          %v3499 = vmul.f32 %v3494, %v3498
          %vm3500 = vweird.f32 %v2944
          %vm3501 = vweird.f32 %v3494
          %vm3502 = vmor %vm3500, %vm3501
          %v3503 = vsel %vm3502, %v3494, %v3499
          %v3504 = vrsqrt.pop %v2945
          %v3505 = vmul.f32 %v3504, %v2945
          %v3506 = vmul.f32 %v3505, %v3504
          %v3507 = vmul.f32 0.5, %v3506
          %v3508 = vsub.f32 1.5, %v3507
          %v3509 = vmul.f32 %v3504, %v3508
          %vm3510 = vweird.f32 %v2945
          %vm3511 = vweird.f32 %v3504
          %vm3512 = vmor %vm3510, %vm3511
          %v3513 = vsel %vm3512, %v3504, %v3509
          %v3514 = vrsqrt.pop %v2946
          %v3515 = vmul.f32 %v3514, %v2946
          %v3516 = vmul.f32 %v3515, %v3514
          %v3517 = vmul.f32 0.5, %v3516
          %v3518 = vsub.f32 1.5, %v3517
          %v3519 = vmul.f32 %v3514, %v3518
          %vm3520 = vweird.f32 %v2946
          %vm3521 = vweird.f32 %v3514
          %vm3522 = vmor %vm3520, %vm3521
          %v3523 = vsel %vm3522, %v3514, %v3519
          %v3524 = vrsqrt.pop %v2947
          %v3525 = vmul.f32 %v3524, %v2947
          %v3526 = vmul.f32 %v3525, %v3524
          %v3527 = vmul.f32 0.5, %v3526
          %v3528 = vsub.f32 1.5, %v3527
          %v3529 = vmul.f32 %v3524, %v3528
          %vm3530 = vweird.f32 %v2947
          %vm3531 = vweird.f32 %v3524
          %vm3532 = vmor %vm3530, %vm3531
          %v3533 = vsel %vm3532, %v3524, %v3529
          %v3534 = vrsqrt.pop %v2948
          %v3535 = vmul.f32 %v3534, %v2948
          %v3536 = vmul.f32 %v3535, %v3534
          %v3537 = vmul.f32 0.5, %v3536
          %v3538 = vsub.f32 1.5, %v3537
          %v3539 = vmul.f32 %v3534, %v3538
          %vm3540 = vweird.f32 %v2948
          %vm3541 = vweird.f32 %v3534
          %vm3542 = vmor %vm3540, %vm3541
          %v3543 = vsel %vm3542, %v3534, %v3539
          %v3544 = vrsqrt.pop %v2949
          %v3545 = vmul.f32 %v3544, %v2949
          %v3546 = vmul.f32 %v3545, %v3544
          %v3547 = vmul.f32 0.5, %v3546
          %v3548 = vsub.f32 1.5, %v3547
          %v3549 = vmul.f32 %v3544, %v3548
          %vm3550 = vweird.f32 %v2949
          %vm3551 = vweird.f32 %v3544
          %vm3552 = vmor %vm3550, %vm3551
          %v3553 = vsel %vm3552, %v3544, %v3549
          %v3554 = vrsqrt.pop %v2950
          %v3555 = vmul.f32 %v3554, %v2950
          %v3556 = vmul.f32 %v3555, %v3554
          %v3557 = vmul.f32 0.5, %v3556
          %v3558 = vsub.f32 1.5, %v3557
          %v3559 = vmul.f32 %v3554, %v3558
          %vm3560 = vweird.f32 %v2950
          %vm3561 = vweird.f32 %v3554
          %vm3562 = vmor %vm3560, %vm3561
          %v3563 = vsel %vm3562, %v3554, %v3559
          %v3564 = vrsqrt.pop %v2951
          %v3565 = vmul.f32 %v3564, %v2951
          %v3566 = vmul.f32 %v3565, %v3564
          %v3567 = vmul.f32 0.5, %v3566
          %v3568 = vsub.f32 1.5, %v3567
          %v3569 = vmul.f32 %v3564, %v3568
          %vm3570 = vweird.f32 %v2951
          %vm3571 = vweird.f32 %v3564
          %vm3572 = vmor %vm3570, %vm3571
          %v3573 = vsel %vm3572, %v3564, %v3569
          %v3574 = vrsqrt.pop %v2952
          %v3575 = vmul.f32 %v3574, %v2952
          %v3576 = vmul.f32 %v3575, %v3574
          %v3577 = vmul.f32 0.5, %v3576
          %v3578 = vsub.f32 1.5, %v3577
          %v3579 = vmul.f32 %v3574, %v3578
          %vm3580 = vweird.f32 %v2952
          %vm3581 = vweird.f32 %v3574
          %vm3582 = vmor %vm3580, %vm3581
          %v3583 = vsel %vm3582, %v3574, %v3579
          %v3584 = vrsqrt.pop %v2953
          %v3585 = vmul.f32 %v3584, %v2953
          %v3586 = vmul.f32 %v3585, %v3584
          %v3587 = vmul.f32 0.5, %v3586
          %v3588 = vsub.f32 1.5, %v3587
          %v3589 = vmul.f32 %v3584, %v3588
          %vm3590 = vweird.f32 %v2953
          %vm3591 = vweird.f32 %v3584
          %vm3592 = vmor %vm3590, %vm3591
          %v3593 = vsel %vm3592, %v3584, %v3589
          %v3594 = vmul.f32 %v2890, %v2963
          %v3595 = vmul.f32 %v2891, %v2973
          %v3596 = vmul.f32 %v2892, %v2983
          %v3597 = vmul.f32 %v2893, %v2993
          %v3598 = vmul.f32 %v2894, %v3003
          %v3599 = vmul.f32 %v2895, %v3013
          %v3600 = vmul.f32 %v2896, %v3023
          %v3601 = vmul.f32 %v2897, %v3033
          %v3602 = vmul.f32 %v2898, %v3043
          %v3603 = vmul.f32 %v2899, %v3053
          %v3604 = vmul.f32 %v2900, %v3063
          %v3605 = vmul.f32 %v2901, %v3073
          %v3606 = vmul.f32 %v2902, %v3083
          %v3607 = vmul.f32 %v2903, %v3093
          %v3608 = vmul.f32 %v2904, %v3103
          %v3609 = vmul.f32 %v2905, %v3113
          %v3610 = vmul.f32 %v2906, %v3123
          %v3611 = vmul.f32 %v2907, %v3133
          %v3612 = vmul.f32 %v2908, %v3143
          %v3613 = vmul.f32 %v2909, %v3153
          %v3614 = vmul.f32 %v2910, %v3163
          %v3615 = vmul.f32 %v2911, %v3173
          %v3616 = vmul.f32 %v2912, %v3183
          %v3617 = vmul.f32 %v2913, %v3193
          %v3618 = vmul.f32 %v2914, %v3203
          %v3619 = vmul.f32 %v2915, %v3213
          %v3620 = vmul.f32 %v2916, %v3223
          %v3621 = vmul.f32 %v2917, %v3233
          %v3622 = vmul.f32 %v2918, %v3243
          %v3623 = vmul.f32 %v2919, %v3253
          %v3624 = vmul.f32 %v2920, %v3263
          %v3625 = vmul.f32 %v2921, %v3273
          %v3626 = vmul.f32 %v2922, %v3283
          %v3627 = vmul.f32 %v2923, %v3293
          %v3628 = vmul.f32 %v2924, %v3303
          %v3629 = vmul.f32 %v2925, %v3313
          %v3630 = vmul.f32 %v2926, %v3323
          %v3631 = vmul.f32 %v2927, %v3333
          %v3632 = vmul.f32 %v2928, %v3343
          %v3633 = vmul.f32 %v2929, %v3353
          %v3634 = vmul.f32 %v2930, %v3363
          %v3635 = vmul.f32 %v2931, %v3373
          %v3636 = vmul.f32 %v2932, %v3383
          %v3637 = vmul.f32 %v2933, %v3393
          %v3638 = vmul.f32 %v2934, %v3403
          %v3639 = vmul.f32 %v2935, %v3413
          %v3640 = vmul.f32 %v2936, %v3423
          %v3641 = vmul.f32 %v2937, %v3433
          %v3642 = vmul.f32 %v2938, %v3443
          %v3643 = vmul.f32 %v2939, %v3453
          %v3644 = vmul.f32 %v2940, %v3463
          %v3645 = vmul.f32 %v2941, %v3473
          %v3646 = vmul.f32 %v2942, %v3483
          %v3647 = vmul.f32 %v2943, %v3493
          %v3648 = vmul.f32 %v2944, %v3503
          %v3649 = vmul.f32 %v2945, %v3513
          %v3650 = vmul.f32 %v2946, %v3523
          %v3651 = vmul.f32 %v2947, %v3533
          %v3652 = vmul.f32 %v2948, %v3543
          %v3653 = vmul.f32 %v2949, %v3553
          %v3654 = vmul.f32 %v2950, %v3563
          %v3655 = vmul.f32 %v2951, %v3573
          %v3656 = vmul.f32 %v2952, %v3583
          %v3657 = vmul.f32 %v2953, %v3593
          %v3658 = vmul.f32 %v2634, %v2963
          %v3659 = vmul.f32 %v2635, %v2973
          %v3660 = vmul.f32 %v2636, %v2983
          %v3661 = vmul.f32 %v2637, %v2993
          %v3662 = vmul.f32 %v2638, %v3003
          %v3663 = vmul.f32 %v2639, %v3013
          %v3664 = vmul.f32 %v2640, %v3023
          %v3665 = vmul.f32 %v2641, %v3033
          %v3666 = vmul.f32 %v2642, %v3043
          %v3667 = vmul.f32 %v2643, %v3053
          %v3668 = vmul.f32 %v2644, %v3063
          %v3669 = vmul.f32 %v2645, %v3073
          %v3670 = vmul.f32 %v2646, %v3083
          %v3671 = vmul.f32 %v2647, %v3093
          %v3672 = vmul.f32 %v2648, %v3103
          %v3673 = vmul.f32 %v2649, %v3113
          %v3674 = vmul.f32 %v2650, %v3123
          %v3675 = vmul.f32 %v2651, %v3133
          %v3676 = vmul.f32 %v2652, %v3143
          %v3677 = vmul.f32 %v2653, %v3153
          %v3678 = vmul.f32 %v2654, %v3163
          %v3679 = vmul.f32 %v2655, %v3173
          %v3680 = vmul.f32 %v2656, %v3183
          %v3681 = vmul.f32 %v2657, %v3193
          %v3682 = vmul.f32 %v2658, %v3203
          %v3683 = vmul.f32 %v2659, %v3213
          %v3684 = vmul.f32 %v2660, %v3223
          %v3685 = vmul.f32 %v2661, %v3233
          %v3686 = vmul.f32 %v2662, %v3243
          %v3687 = vmul.f32 %v2663, %v3253
          %v3688 = vmul.f32 %v2664, %v3263
          %v3689 = vmul.f32 %v2665, %v3273
          %v3690 = vmul.f32 %v2666, %v3283
          %v3691 = vmul.f32 %v2667, %v3293
          %v3692 = vmul.f32 %v2668, %v3303
          %v3693 = vmul.f32 %v2669, %v3313
          %v3694 = vmul.f32 %v2670, %v3323
          %v3695 = vmul.f32 %v2671, %v3333
          %v3696 = vmul.f32 %v2672, %v3343
          %v3697 = vmul.f32 %v2673, %v3353
          %v3698 = vmul.f32 %v2674, %v3363
          %v3699 = vmul.f32 %v2675, %v3373
          %v3700 = vmul.f32 %v2676, %v3383
          %v3701 = vmul.f32 %v2677, %v3393
          %v3702 = vmul.f32 %v2678, %v3403
          %v3703 = vmul.f32 %v2679, %v3413
          %v3704 = vmul.f32 %v2680, %v3423
          %v3705 = vmul.f32 %v2681, %v3433
          %v3706 = vmul.f32 %v2682, %v3443
          %v3707 = vmul.f32 %v2683, %v3453
          %v3708 = vmul.f32 %v2684, %v3463
          %v3709 = vmul.f32 %v2685, %v3473
          %v3710 = vmul.f32 %v2686, %v3483
          %v3711 = vmul.f32 %v2687, %v3493
          %v3712 = vmul.f32 %v2688, %v3503
          %v3713 = vmul.f32 %v2689, %v3513
          %v3714 = vmul.f32 %v2690, %v3523
          %v3715 = vmul.f32 %v2691, %v3533
          %v3716 = vmul.f32 %v2692, %v3543
          %v3717 = vmul.f32 %v2693, %v3553
          %v3718 = vmul.f32 %v2694, %v3563
          %v3719 = vmul.f32 %v2695, %v3573
          %v3720 = vmul.f32 %v2696, %v3583
          %v3721 = vmul.f32 %v2697, %v3593
          %v3722 = vmul.f32 %v3658, -0.5
          %v3723 = vmul.f32 %v3659, -0.5
          %v3724 = vmul.f32 %v3660, -0.5
          %v3725 = vmul.f32 %v3661, -0.5
          %v3726 = vmul.f32 %v3662, -0.5
          %v3727 = vmul.f32 %v3663, -0.5
          %v3728 = vmul.f32 %v3664, -0.5
          %v3729 = vmul.f32 %v3665, -0.5
          %v3730 = vmul.f32 %v3666, -0.5
          %v3731 = vmul.f32 %v3667, -0.5
          %v3732 = vmul.f32 %v3668, -0.5
          %v3733 = vmul.f32 %v3669, -0.5
          %v3734 = vmul.f32 %v3670, -0.5
          %v3735 = vmul.f32 %v3671, -0.5
          %v3736 = vmul.f32 %v3672, -0.5
          %v3737 = vmul.f32 %v3673, -0.5
          %v3738 = vmul.f32 %v3674, -0.5
          %v3739 = vmul.f32 %v3675, -0.5
          %v3740 = vmul.f32 %v3676, -0.5
          %v3741 = vmul.f32 %v3677, -0.5
          %v3742 = vmul.f32 %v3678, -0.5
          %v3743 = vmul.f32 %v3679, -0.5
          %v3744 = vmul.f32 %v3680, -0.5
          %v3745 = vmul.f32 %v3681, -0.5
          %v3746 = vmul.f32 %v3682, -0.5
          %v3747 = vmul.f32 %v3683, -0.5
          %v3748 = vmul.f32 %v3684, -0.5
          %v3749 = vmul.f32 %v3685, -0.5
          %v3750 = vmul.f32 %v3686, -0.5
          %v3751 = vmul.f32 %v3687, -0.5
          %v3752 = vmul.f32 %v3688, -0.5
          %v3753 = vmul.f32 %v3689, -0.5
          %v3754 = vmul.f32 %v3690, -0.5
          %v3755 = vmul.f32 %v3691, -0.5
          %v3756 = vmul.f32 %v3692, -0.5
          %v3757 = vmul.f32 %v3693, -0.5
          %v3758 = vmul.f32 %v3694, -0.5
          %v3759 = vmul.f32 %v3695, -0.5
          %v3760 = vmul.f32 %v3696, -0.5
          %v3761 = vmul.f32 %v3697, -0.5
          %v3762 = vmul.f32 %v3698, -0.5
          %v3763 = vmul.f32 %v3699, -0.5
          %v3764 = vmul.f32 %v3700, -0.5
          %v3765 = vmul.f32 %v3701, -0.5
          %v3766 = vmul.f32 %v3702, -0.5
          %v3767 = vmul.f32 %v3703, -0.5
          %v3768 = vmul.f32 %v3704, -0.5
          %v3769 = vmul.f32 %v3705, -0.5
          %v3770 = vmul.f32 %v3706, -0.5
          %v3771 = vmul.f32 %v3707, -0.5
          %v3772 = vmul.f32 %v3708, -0.5
          %v3773 = vmul.f32 %v3709, -0.5
          %v3774 = vmul.f32 %v3710, -0.5
          %v3775 = vmul.f32 %v3711, -0.5
          %v3776 = vmul.f32 %v3712, -0.5
          %v3777 = vmul.f32 %v3713, -0.5
          %v3778 = vmul.f32 %v3714, -0.5
          %v3779 = vmul.f32 %v3715, -0.5
          %v3780 = vmul.f32 %v3716, -0.5
          %v3781 = vmul.f32 %v3717, -0.5
          %v3782 = vmul.f32 %v3718, -0.5
          %v3783 = vmul.f32 %v3719, -0.5
          %v3784 = vmul.f32 %v3720, -0.5
          %v3785 = vmul.f32 %v3721, -0.5
          %v3786 = vmul.f32 %v3722, %v3658
          %v3787 = vmul.f32 %v3723, %v3659
          %v3788 = vmul.f32 %v3724, %v3660
          %v3789 = vmul.f32 %v3725, %v3661
          %v3790 = vmul.f32 %v3726, %v3662
          %v3791 = vmul.f32 %v3727, %v3663
          %v3792 = vmul.f32 %v3728, %v3664
          %v3793 = vmul.f32 %v3729, %v3665
          %v3794 = vmul.f32 %v3730, %v3666
          %v3795 = vmul.f32 %v3731, %v3667
          %v3796 = vmul.f32 %v3732, %v3668
          %v3797 = vmul.f32 %v3733, %v3669
          %v3798 = vmul.f32 %v3734, %v3670
          %v3799 = vmul.f32 %v3735, %v3671
          %v3800 = vmul.f32 %v3736, %v3672
          %v3801 = vmul.f32 %v3737, %v3673
          %v3802 = vmul.f32 %v3738, %v3674
          %v3803 = vmul.f32 %v3739, %v3675
          %v3804 = vmul.f32 %v3740, %v3676
          %v3805 = vmul.f32 %v3741, %v3677
          %v3806 = vmul.f32 %v3742, %v3678
          %v3807 = vmul.f32 %v3743, %v3679
          %v3808 = vmul.f32 %v3744, %v3680
          %v3809 = vmul.f32 %v3745, %v3681
          %v3810 = vmul.f32 %v3746, %v3682
          %v3811 = vmul.f32 %v3747, %v3683
          %v3812 = vmul.f32 %v3748, %v3684
          %v3813 = vmul.f32 %v3749, %v3685
          %v3814 = vmul.f32 %v3750, %v3686
          %v3815 = vmul.f32 %v3751, %v3687
          %v3816 = vmul.f32 %v3752, %v3688
          %v3817 = vmul.f32 %v3753, %v3689
          %v3818 = vmul.f32 %v3754, %v3690
          %v3819 = vmul.f32 %v3755, %v3691
          %v3820 = vmul.f32 %v3756, %v3692
          %v3821 = vmul.f32 %v3757, %v3693
          %v3822 = vmul.f32 %v3758, %v3694
          %v3823 = vmul.f32 %v3759, %v3695
          %v3824 = vmul.f32 %v3760, %v3696
          %v3825 = vmul.f32 %v3761, %v3697
          %v3826 = vmul.f32 %v3762, %v3698
          %v3827 = vmul.f32 %v3763, %v3699
          %v3828 = vmul.f32 %v3764, %v3700
          %v3829 = vmul.f32 %v3765, %v3701
          %v3830 = vmul.f32 %v3766, %v3702
          %v3831 = vmul.f32 %v3767, %v3703
          %v3832 = vmul.f32 %v3768, %v3704
          %v3833 = vmul.f32 %v3769, %v3705
          %v3834 = vmul.f32 %v3770, %v3706
          %v3835 = vmul.f32 %v3771, %v3707
          %v3836 = vmul.f32 %v3772, %v3708
          %v3837 = vmul.f32 %v3773, %v3709
          %v3838 = vmul.f32 %v3774, %v3710
          %v3839 = vmul.f32 %v3775, %v3711
          %v3840 = vmul.f32 %v3776, %v3712
          %v3841 = vmul.f32 %v3777, %v3713
          %v3842 = vmul.f32 %v3778, %v3714
          %v3843 = vmul.f32 %v3779, %v3715
          %v3844 = vmul.f32 %v3780, %v3716
          %v3845 = vmul.f32 %v3781, %v3717
          %v3846 = vmul.f32 %v3782, %v3718
          %v3847 = vmul.f32 %v3783, %v3719
          %v3848 = vmul.f32 %v3784, %v3720
          %v3849 = vmul.f32 %v3785, %v3721
          %v3850 = vmul.f32 %v3786, 1.442695
          %v3851 = vpow.pop %v3850
          %v3852 = vmul.f32 %v3787, 1.442695
          %v3853 = vpow.pop %v3852
          %v3854 = vmul.f32 %v3788, 1.442695
          %v3855 = vpow.pop %v3854
          %v3856 = vmul.f32 %v3789, 1.442695
          %v3857 = vpow.pop %v3856
          %v3858 = vmul.f32 %v3790, 1.442695
          %v3859 = vpow.pop %v3858
          %v3860 = vmul.f32 %v3791, 1.442695
          %v3861 = vpow.pop %v3860
          %v3862 = vmul.f32 %v3792, 1.442695
          %v3863 = vpow.pop %v3862
          %v3864 = vmul.f32 %v3793, 1.442695
          %v3865 = vpow.pop %v3864
          %v3866 = vmul.f32 %v3794, 1.442695
          %v3867 = vpow.pop %v3866
          %v3868 = vmul.f32 %v3795, 1.442695
          %v3869 = vpow.pop %v3868
          %v3870 = vmul.f32 %v3796, 1.442695
          %v3871 = vpow.pop %v3870
          %v3872 = vmul.f32 %v3797, 1.442695
          %v3873 = vpow.pop %v3872
          %v3874 = vmul.f32 %v3798, 1.442695
          %v3875 = vpow.pop %v3874
          %v3876 = vmul.f32 %v3799, 1.442695
          %v3877 = vpow.pop %v3876
          %v3878 = vmul.f32 %v3800, 1.442695
          %v3879 = vpow.pop %v3878
          %v3880 = vmul.f32 %v3801, 1.442695
          %v3881 = vpow.pop %v3880
          %v3882 = vmul.f32 %v3802, 1.442695
          %v3883 = vpow.pop %v3882
          %v3884 = vmul.f32 %v3803, 1.442695
          %v3885 = vpow.pop %v3884
          %v3886 = vmul.f32 %v3804, 1.442695
          %v3887 = vpow.pop %v3886
          %v3888 = vmul.f32 %v3805, 1.442695
          %v3889 = vpow.pop %v3888
          %v3890 = vmul.f32 %v3806, 1.442695
          %v3891 = vpow.pop %v3890
          %v3892 = vmul.f32 %v3807, 1.442695
          %v3893 = vpow.pop %v3892
          %v3894 = vmul.f32 %v3808, 1.442695
          %v3895 = vpow.pop %v3894
          %v3896 = vmul.f32 %v3809, 1.442695
          %v3897 = vpow.pop %v3896
          %v3898 = vmul.f32 %v3810, 1.442695
          %v3899 = vpow.pop %v3898
          %v3900 = vmul.f32 %v3811, 1.442695
          %v3901 = vpow.pop %v3900
          %v3902 = vmul.f32 %v3812, 1.442695
          %v3903 = vpow.pop %v3902
          %v3904 = vmul.f32 %v3813, 1.442695
          %v3905 = vpow.pop %v3904
          %v3906 = vmul.f32 %v3814, 1.442695
          %v3907 = vpow.pop %v3906
          %v3908 = vmul.f32 %v3815, 1.442695
          %v3909 = vpow.pop %v3908
          %v3910 = vmul.f32 %v3816, 1.442695
          %v3911 = vpow.pop %v3910
          %v3912 = vmul.f32 %v3817, 1.442695
          %v3913 = vpow.pop %v3912
          %v3914 = vmul.f32 %v3818, 1.442695
          %v3915 = vpow.pop %v3914
          %v3916 = vmul.f32 %v3819, 1.442695
          %v3917 = vpow.pop %v3916
          %v3918 = vmul.f32 %v3820, 1.442695
          %v3919 = vpow.pop %v3918
          %v3920 = vmul.f32 %v3821, 1.442695
          %v3921 = vpow.pop %v3920
          %v3922 = vmul.f32 %v3822, 1.442695
          %v3923 = vpow.pop %v3922
          %v3924 = vmul.f32 %v3823, 1.442695
          %v3925 = vpow.pop %v3924
          %v3926 = vmul.f32 %v3824, 1.442695
          %v3927 = vpow.pop %v3926
          %v3928 = vmul.f32 %v3825, 1.442695
          %v3929 = vpow.pop %v3928
          %v3930 = vmul.f32 %v3826, 1.442695
          %v3931 = vpow.pop %v3930
          %v3932 = vmul.f32 %v3827, 1.442695
          %v3933 = vpow.pop %v3932
          %v3934 = vmul.f32 %v3828, 1.442695
          %v3935 = vpow.pop %v3934
          %v3936 = vmul.f32 %v3829, 1.442695
          %v3937 = vpow.pop %v3936
          %v3938 = vmul.f32 %v3830, 1.442695
          %v3939 = vpow.pop %v3938
          %v3940 = vmul.f32 %v3831, 1.442695
          %v3941 = vpow.pop %v3940
          %v3942 = vmul.f32 %v3832, 1.442695
          %v3943 = vpow.pop %v3942
          %v3944 = vmul.f32 %v3833, 1.442695
          %v3945 = vpow.pop %v3944
          %v3946 = vmul.f32 %v3834, 1.442695
          %v3947 = vpow.pop %v3946
          %v3948 = vmul.f32 %v3835, 1.442695
          %v3949 = vpow.pop %v3948
          %v3950 = vmul.f32 %v3836, 1.442695
          %v3951 = vpow.pop %v3950
          %v3952 = vmul.f32 %v3837, 1.442695
          %v3953 = vpow.pop %v3952
          %v3954 = vmul.f32 %v3838, 1.442695
          %v3955 = vpow.pop %v3954
          %v3956 = vmul.f32 %v3839, 1.442695
          %v3957 = vpow.pop %v3956
          %v3958 = vmul.f32 %v3840, 1.442695
          %v3959 = vpow.pop %v3958
          %v3960 = vmul.f32 %v3841, 1.442695
          %v3961 = vpow.pop %v3960
          %v3962 = vmul.f32 %v3842, 1.442695
          %v3963 = vpow.pop %v3962
          %v3964 = vmul.f32 %v3843, 1.442695
          %v3965 = vpow.pop %v3964
          %v3966 = vmul.f32 %v3844, 1.442695
          %v3967 = vpow.pop %v3966
          %v3968 = vmul.f32 %v3845, 1.442695
          %v3969 = vpow.pop %v3968
          %v3970 = vmul.f32 %v3846, 1.442695
          %v3971 = vpow.pop %v3970
          %v3972 = vmul.f32 %v3847, 1.442695
          %v3973 = vpow.pop %v3972
          %v3974 = vmul.f32 %v3848, 1.442695
          %v3975 = vpow.pop %v3974
          %v3976 = vmul.f32 %v3849, 1.442695
          %v3977 = vpow.pop %v3976
          %v3978 = vmul.f32 %v3851, 0.3989423
          %v3979 = vmul.f32 %v3853, 0.3989423
          %v3980 = vmul.f32 %v3855, 0.3989423
          %v3981 = vmul.f32 %v3857, 0.3989423
          %v3982 = vmul.f32 %v3859, 0.3989423
          %v3983 = vmul.f32 %v3861, 0.3989423
          %v3984 = vmul.f32 %v3863, 0.3989423
          %v3985 = vmul.f32 %v3865, 0.3989423
          %v3986 = vmul.f32 %v3867, 0.3989423
          %v3987 = vmul.f32 %v3869, 0.3989423
          %v3988 = vmul.f32 %v3871, 0.3989423
          %v3989 = vmul.f32 %v3873, 0.3989423
          %v3990 = vmul.f32 %v3875, 0.3989423
          %v3991 = vmul.f32 %v3877, 0.3989423
          %v3992 = vmul.f32 %v3879, 0.3989423
          %v3993 = vmul.f32 %v3881, 0.3989423
          %v3994 = vmul.f32 %v3883, 0.3989423
          %v3995 = vmul.f32 %v3885, 0.3989423
          %v3996 = vmul.f32 %v3887, 0.3989423
          %v3997 = vmul.f32 %v3889, 0.3989423
          %v3998 = vmul.f32 %v3891, 0.3989423
          %v3999 = vmul.f32 %v3893, 0.3989423
          %v4000 = vmul.f32 %v3895, 0.3989423
          %v4001 = vmul.f32 %v3897, 0.3989423
          %v4002 = vmul.f32 %v3899, 0.3989423
          %v4003 = vmul.f32 %v3901, 0.3989423
          %v4004 = vmul.f32 %v3903, 0.3989423
          %v4005 = vmul.f32 %v3905, 0.3989423
          %v4006 = vmul.f32 %v3907, 0.3989423
          %v4007 = vmul.f32 %v3909, 0.3989423
          %v4008 = vmul.f32 %v3911, 0.3989423
          %v4009 = vmul.f32 %v3913, 0.3989423
          %v4010 = vmul.f32 %v3915, 0.3989423
          %v4011 = vmul.f32 %v3917, 0.3989423
          %v4012 = vmul.f32 %v3919, 0.3989423
          %v4013 = vmul.f32 %v3921, 0.3989423
          %v4014 = vmul.f32 %v3923, 0.3989423
          %v4015 = vmul.f32 %v3925, 0.3989423
          %v4016 = vmul.f32 %v3927, 0.3989423
          %v4017 = vmul.f32 %v3929, 0.3989423
          %v4018 = vmul.f32 %v3931, 0.3989423
          %v4019 = vmul.f32 %v3933, 0.3989423
          %v4020 = vmul.f32 %v3935, 0.3989423
          %v4021 = vmul.f32 %v3937, 0.3989423
          %v4022 = vmul.f32 %v3939, 0.3989423
          %v4023 = vmul.f32 %v3941, 0.3989423
          %v4024 = vmul.f32 %v3943, 0.3989423
          %v4025 = vmul.f32 %v3945, 0.3989423
          %v4026 = vmul.f32 %v3947, 0.3989423
          %v4027 = vmul.f32 %v3949, 0.3989423
          %v4028 = vmul.f32 %v3951, 0.3989423
          %v4029 = vmul.f32 %v3953, 0.3989423
          %v4030 = vmul.f32 %v3955, 0.3989423
          %v4031 = vmul.f32 %v3957, 0.3989423
          %v4032 = vmul.f32 %v3959, 0.3989423
          %v4033 = vmul.f32 %v3961, 0.3989423
          %v4034 = vmul.f32 %v3963, 0.3989423
          %v4035 = vmul.f32 %v3965, 0.3989423
          %v4036 = vmul.f32 %v3967, 0.3989423
          %v4037 = vmul.f32 %v3969, 0.3989423
          %v4038 = vmul.f32 %v3971, 0.3989423
          %v4039 = vmul.f32 %v3973, 0.3989423
          %v4040 = vmul.f32 %v3975, 0.3989423
          %v4041 = vmul.f32 %v3977, 0.3989423
          %v4042 = vmul.f32 %v3658, 0.5
          %v4043 = vmul.f32 %v3659, 0.5
          %v4044 = vmul.f32 %v3660, 0.5
          %v4045 = vmul.f32 %v3661, 0.5
          %v4046 = vmul.f32 %v3662, 0.5
          %v4047 = vmul.f32 %v3663, 0.5
          %v4048 = vmul.f32 %v3664, 0.5
          %v4049 = vmul.f32 %v3665, 0.5
          %v4050 = vmul.f32 %v3666, 0.5
          %v4051 = vmul.f32 %v3667, 0.5
          %v4052 = vmul.f32 %v3668, 0.5
          %v4053 = vmul.f32 %v3669, 0.5
          %v4054 = vmul.f32 %v3670, 0.5
          %v4055 = vmul.f32 %v3671, 0.5
          %v4056 = vmul.f32 %v3672, 0.5
          %v4057 = vmul.f32 %v3673, 0.5
          %v4058 = vmul.f32 %v3674, 0.5
          %v4059 = vmul.f32 %v3675, 0.5
          %v4060 = vmul.f32 %v3676, 0.5
          %v4061 = vmul.f32 %v3677, 0.5
          %v4062 = vmul.f32 %v3678, 0.5
          %v4063 = vmul.f32 %v3679, 0.5
          %v4064 = vmul.f32 %v3680, 0.5
          %v4065 = vmul.f32 %v3681, 0.5
          %v4066 = vmul.f32 %v3682, 0.5
          %v4067 = vmul.f32 %v3683, 0.5
          %v4068 = vmul.f32 %v3684, 0.5
          %v4069 = vmul.f32 %v3685, 0.5
          %v4070 = vmul.f32 %v3686, 0.5
          %v4071 = vmul.f32 %v3687, 0.5
          %v4072 = vmul.f32 %v3688, 0.5
          %v4073 = vmul.f32 %v3689, 0.5
          %v4074 = vmul.f32 %v3690, 0.5
          %v4075 = vmul.f32 %v3691, 0.5
          %v4076 = vmul.f32 %v3692, 0.5
          %v4077 = vmul.f32 %v3693, 0.5
          %v4078 = vmul.f32 %v3694, 0.5
          %v4079 = vmul.f32 %v3695, 0.5
          %v4080 = vmul.f32 %v3696, 0.5
          %v4081 = vmul.f32 %v3697, 0.5
          %v4082 = vmul.f32 %v3698, 0.5
          %v4083 = vmul.f32 %v3699, 0.5
          %v4084 = vmul.f32 %v3700, 0.5
          %v4085 = vmul.f32 %v3701, 0.5
          %v4086 = vmul.f32 %v3702, 0.5
          %v4087 = vmul.f32 %v3703, 0.5
          %v4088 = vmul.f32 %v3704, 0.5
          %v4089 = vmul.f32 %v3705, 0.5
          %v4090 = vmul.f32 %v3706, 0.5
          %v4091 = vmul.f32 %v3707, 0.5
          %v4092 = vmul.f32 %v3708, 0.5
          %v4093 = vmul.f32 %v3709, 0.5
          %v4094 = vmul.f32 %v3710, 0.5
          %v4095 = vmul.f32 %v3711, 0.5
          %v4096 = vmul.f32 %v3712, 0.5
          %v4097 = vmul.f32 %v3713, 0.5
          %v4098 = vmul.f32 %v3714, 0.5
          %v4099 = vmul.f32 %v3715, 0.5
          %v4100 = vmul.f32 %v3716, 0.5
          %v4101 = vmul.f32 %v3717, 0.5
          %v4102 = vmul.f32 %v3718, 0.5
          %v4103 = vmul.f32 %v3719, 0.5
          %v4104 = vmul.f32 %v3720, 0.5
          %v4105 = vmul.f32 %v3721, 0.5
          %v4106 = vmul.f32 %v3658, 0.70710677
          %v4107 = vmul.f32 %v3659, 0.70710677
          %v4108 = vmul.f32 %v3660, 0.70710677
          %v4109 = vmul.f32 %v3661, 0.70710677
          %v4110 = vmul.f32 %v3662, 0.70710677
          %v4111 = vmul.f32 %v3663, 0.70710677
          %v4112 = vmul.f32 %v3664, 0.70710677
          %v4113 = vmul.f32 %v3665, 0.70710677
          %v4114 = vmul.f32 %v3666, 0.70710677
          %v4115 = vmul.f32 %v3667, 0.70710677
          %v4116 = vmul.f32 %v3668, 0.70710677
          %v4117 = vmul.f32 %v3669, 0.70710677
          %v4118 = vmul.f32 %v3670, 0.70710677
          %v4119 = vmul.f32 %v3671, 0.70710677
          %v4120 = vmul.f32 %v3672, 0.70710677
          %v4121 = vmul.f32 %v3673, 0.70710677
          %v4122 = vmul.f32 %v3674, 0.70710677
          %v4123 = vmul.f32 %v3675, 0.70710677
          %v4124 = vmul.f32 %v3676, 0.70710677
          %v4125 = vmul.f32 %v3677, 0.70710677
          %v4126 = vmul.f32 %v3678, 0.70710677
          %v4127 = vmul.f32 %v3679, 0.70710677
          %v4128 = vmul.f32 %v3680, 0.70710677
          %v4129 = vmul.f32 %v3681, 0.70710677
          %v4130 = vmul.f32 %v3682, 0.70710677
          %v4131 = vmul.f32 %v3683, 0.70710677
          %v4132 = vmul.f32 %v3684, 0.70710677
          %v4133 = vmul.f32 %v3685, 0.70710677
          %v4134 = vmul.f32 %v3686, 0.70710677
          %v4135 = vmul.f32 %v3687, 0.70710677
          %v4136 = vmul.f32 %v3688, 0.70710677
          %v4137 = vmul.f32 %v3689, 0.70710677
          %v4138 = vmul.f32 %v3690, 0.70710677
          %v4139 = vmul.f32 %v3691, 0.70710677
          %v4140 = vmul.f32 %v3692, 0.70710677
          %v4141 = vmul.f32 %v3693, 0.70710677
          %v4142 = vmul.f32 %v3694, 0.70710677
          %v4143 = vmul.f32 %v3695, 0.70710677
          %v4144 = vmul.f32 %v3696, 0.70710677
          %v4145 = vmul.f32 %v3697, 0.70710677
          %v4146 = vmul.f32 %v3698, 0.70710677
          %v4147 = vmul.f32 %v3699, 0.70710677
          %v4148 = vmul.f32 %v3700, 0.70710677
          %v4149 = vmul.f32 %v3701, 0.70710677
          %v4150 = vmul.f32 %v3702, 0.70710677
          %v4151 = vmul.f32 %v3703, 0.70710677
          %v4152 = vmul.f32 %v3704, 0.70710677
          %v4153 = vmul.f32 %v3705, 0.70710677
          %v4154 = vmul.f32 %v3706, 0.70710677
          %v4155 = vmul.f32 %v3707, 0.70710677
          %v4156 = vmul.f32 %v3708, 0.70710677
          %v4157 = vmul.f32 %v3709, 0.70710677
          %v4158 = vmul.f32 %v3710, 0.70710677
          %v4159 = vmul.f32 %v3711, 0.70710677
          %v4160 = vmul.f32 %v3712, 0.70710677
          %v4161 = vmul.f32 %v3713, 0.70710677
          %v4162 = vmul.f32 %v3714, 0.70710677
          %v4163 = vmul.f32 %v3715, 0.70710677
          %v4164 = vmul.f32 %v3716, 0.70710677
          %v4165 = vmul.f32 %v3717, 0.70710677
          %v4166 = vmul.f32 %v3718, 0.70710677
          %v4167 = vmul.f32 %v3719, 0.70710677
          %v4168 = vmul.f32 %v3720, 0.70710677
          %v4169 = vmul.f32 %v3721, 0.70710677
          %vm4170 = vcmp.ge.f32.partialorder %v4106, 0.0
          %vm4171 = vcmp.ge.f32.partialorder %v4107, 0.0
          %vm4172 = vcmp.ge.f32.partialorder %v4108, 0.0
          %vm4173 = vcmp.ge.f32.partialorder %v4109, 0.0
          %vm4174 = vcmp.ge.f32.partialorder %v4110, 0.0
          %vm4175 = vcmp.ge.f32.partialorder %v4111, 0.0
          %vm4176 = vcmp.ge.f32.partialorder %v4112, 0.0
          %vm4177 = vcmp.ge.f32.partialorder %v4113, 0.0
          %vm4178 = vcmp.ge.f32.partialorder %v4114, 0.0
          %vm4179 = vcmp.ge.f32.partialorder %v4115, 0.0
          %vm4180 = vcmp.ge.f32.partialorder %v4116, 0.0
          %vm4181 = vcmp.ge.f32.partialorder %v4117, 0.0
          %vm4182 = vcmp.ge.f32.partialorder %v4118, 0.0
          %vm4183 = vcmp.ge.f32.partialorder %v4119, 0.0
          %vm4184 = vcmp.ge.f32.partialorder %v4120, 0.0
          %vm4185 = vcmp.ge.f32.partialorder %v4121, 0.0
          %vm4186 = vcmp.ge.f32.partialorder %v4122, 0.0
          %vm4187 = vcmp.ge.f32.partialorder %v4123, 0.0
          %vm4188 = vcmp.ge.f32.partialorder %v4124, 0.0
          %vm4189 = vcmp.ge.f32.partialorder %v4125, 0.0
          %vm4190 = vcmp.ge.f32.partialorder %v4126, 0.0
          %vm4191 = vcmp.ge.f32.partialorder %v4127, 0.0
          %vm4192 = vcmp.ge.f32.partialorder %v4128, 0.0
          %vm4193 = vcmp.ge.f32.partialorder %v4129, 0.0
          %vm4194 = vcmp.ge.f32.partialorder %v4130, 0.0
          %vm4195 = vcmp.ge.f32.partialorder %v4131, 0.0
          %vm4196 = vcmp.ge.f32.partialorder %v4132, 0.0
          %vm4197 = vcmp.ge.f32.partialorder %v4133, 0.0
          %vm4198 = vcmp.ge.f32.partialorder %v4134, 0.0
          %vm4199 = vcmp.ge.f32.partialorder %v4135, 0.0
          %vm4200 = vcmp.ge.f32.partialorder %v4136, 0.0
          %vm4201 = vcmp.ge.f32.partialorder %v4137, 0.0
          %vm4202 = vcmp.ge.f32.partialorder %v4138, 0.0
          %vm4203 = vcmp.ge.f32.partialorder %v4139, 0.0
          %vm4204 = vcmp.ge.f32.partialorder %v4140, 0.0
          %vm4205 = vcmp.ge.f32.partialorder %v4141, 0.0
          %vm4206 = vcmp.ge.f32.partialorder %v4142, 0.0
          %vm4207 = vcmp.ge.f32.partialorder %v4143, 0.0
          %vm4208 = vcmp.ge.f32.partialorder %v4144, 0.0
          %vm4209 = vcmp.ge.f32.partialorder %v4145, 0.0
          %vm4210 = vcmp.ge.f32.partialorder %v4146, 0.0
          %vm4211 = vcmp.ge.f32.partialorder %v4147, 0.0
          %vm4212 = vcmp.ge.f32.partialorder %v4148, 0.0
          %vm4213 = vcmp.ge.f32.partialorder %v4149, 0.0
          %vm4214 = vcmp.ge.f32.partialorder %v4150, 0.0
          %vm4215 = vcmp.ge.f32.partialorder %v4151, 0.0
          %vm4216 = vcmp.ge.f32.partialorder %v4152, 0.0
          %vm4217 = vcmp.ge.f32.partialorder %v4153, 0.0
          %vm4218 = vcmp.ge.f32.partialorder %v4154, 0.0
          %vm4219 = vcmp.ge.f32.partialorder %v4155, 0.0
          %vm4220 = vcmp.ge.f32.partialorder %v4156, 0.0
          %vm4221 = vcmp.ge.f32.partialorder %v4157, 0.0
          %vm4222 = vcmp.ge.f32.partialorder %v4158, 0.0
          %vm4223 = vcmp.ge.f32.partialorder %v4159, 0.0
          %vm4224 = vcmp.ge.f32.partialorder %v4160, 0.0
          %vm4225 = vcmp.ge.f32.partialorder %v4161, 0.0
          %vm4226 = vcmp.ge.f32.partialorder %v4162, 0.0
          %vm4227 = vcmp.ge.f32.partialorder %v4163, 0.0
          %vm4228 = vcmp.ge.f32.partialorder %v4164, 0.0
          %vm4229 = vcmp.ge.f32.partialorder %v4165, 0.0
          %vm4230 = vcmp.ge.f32.partialorder %v4166, 0.0
          %vm4231 = vcmp.ge.f32.partialorder %v4167, 0.0
          %vm4232 = vcmp.ge.f32.partialorder %v4168, 0.0
          %vm4233 = vcmp.ge.f32.partialorder %v4169, 0.0
          %v4234 = vsel %vm4170, 1.0, -1.0
          %v4235 = vsel %vm4171, 1.0, -1.0
          %v4236 = vsel %vm4172, 1.0, -1.0
          %v4237 = vsel %vm4173, 1.0, -1.0
          %v4238 = vsel %vm4174, 1.0, -1.0
          %v4239 = vsel %vm4175, 1.0, -1.0
          %v4240 = vsel %vm4176, 1.0, -1.0
          %v4241 = vsel %vm4177, 1.0, -1.0
          %v4242 = vsel %vm4178, 1.0, -1.0
          %v4243 = vsel %vm4179, 1.0, -1.0
          %v4244 = vsel %vm4180, 1.0, -1.0
          %v4245 = vsel %vm4181, 1.0, -1.0
          %v4246 = vsel %vm4182, 1.0, -1.0
          %v4247 = vsel %vm4183, 1.0, -1.0
          %v4248 = vsel %vm4184, 1.0, -1.0
          %v4249 = vsel %vm4185, 1.0, -1.0
          %v4250 = vsel %vm4186, 1.0, -1.0
          %v4251 = vsel %vm4187, 1.0, -1.0
          %v4252 = vsel %vm4188, 1.0, -1.0
          %v4253 = vsel %vm4189, 1.0, -1.0
          %v4254 = vsel %vm4190, 1.0, -1.0
          %v4255 = vsel %vm4191, 1.0, -1.0
          %v4256 = vsel %vm4192, 1.0, -1.0
          %v4257 = vsel %vm4193, 1.0, -1.0
          %v4258 = vsel %vm4194, 1.0, -1.0
          %v4259 = vsel %vm4195, 1.0, -1.0
          %v4260 = vsel %vm4196, 1.0, -1.0
          %v4261 = vsel %vm4197, 1.0, -1.0
          %v4262 = vsel %vm4198, 1.0, -1.0
          %v4263 = vsel %vm4199, 1.0, -1.0
          %v4264 = vsel %vm4200, 1.0, -1.0
          %v4265 = vsel %vm4201, 1.0, -1.0
          %v4266 = vsel %vm4202, 1.0, -1.0
          %v4267 = vsel %vm4203, 1.0, -1.0
          %v4268 = vsel %vm4204, 1.0, -1.0
          %v4269 = vsel %vm4205, 1.0, -1.0
          %v4270 = vsel %vm4206, 1.0, -1.0
          %v4271 = vsel %vm4207, 1.0, -1.0
          %v4272 = vsel %vm4208, 1.0, -1.0
          %v4273 = vsel %vm4209, 1.0, -1.0
          %v4274 = vsel %vm4210, 1.0, -1.0
          %v4275 = vsel %vm4211, 1.0, -1.0
          %v4276 = vsel %vm4212, 1.0, -1.0
          %v4277 = vsel %vm4213, 1.0, -1.0
          %v4278 = vsel %vm4214, 1.0, -1.0
          %v4279 = vsel %vm4215, 1.0, -1.0
          %v4280 = vsel %vm4216, 1.0, -1.0
          %v4281 = vsel %vm4217, 1.0, -1.0
          %v4282 = vsel %vm4218, 1.0, -1.0
          %v4283 = vsel %vm4219, 1.0, -1.0
          %v4284 = vsel %vm4220, 1.0, -1.0
          %v4285 = vsel %vm4221, 1.0, -1.0
          %v4286 = vsel %vm4222, 1.0, -1.0
          %v4287 = vsel %vm4223, 1.0, -1.0
          %v4288 = vsel %vm4224, 1.0, -1.0
          %v4289 = vsel %vm4225, 1.0, -1.0
          %v4290 = vsel %vm4226, 1.0, -1.0
          %v4291 = vsel %vm4227, 1.0, -1.0
          %v4292 = vsel %vm4228, 1.0, -1.0
          %v4293 = vsel %vm4229, 1.0, -1.0
          %v4294 = vsel %vm4230, 1.0, -1.0
          %v4295 = vsel %vm4231, 1.0, -1.0
          %v4296 = vsel %vm4232, 1.0, -1.0
          %v4297 = vsel %vm4233, 1.0, -1.0
          %v4298 = vand.u32 2147483647, %v4106
          %v4299 = vand.u32 2147483647, %v4107
          %v4300 = vand.u32 2147483647, %v4108
          %v4301 = vand.u32 2147483647, %v4109
          %v4302 = vand.u32 2147483647, %v4110
          %v4303 = vand.u32 2147483647, %v4111
          %v4304 = vand.u32 2147483647, %v4112
          %v4305 = vand.u32 2147483647, %v4113
          %v4306 = vand.u32 2147483647, %v4114
          %v4307 = vand.u32 2147483647, %v4115
          %v4308 = vand.u32 2147483647, %v4116
          %v4309 = vand.u32 2147483647, %v4117
          %v4310 = vand.u32 2147483647, %v4118
          %v4311 = vand.u32 2147483647, %v4119
          %v4312 = vand.u32 2147483647, %v4120
          %v4313 = vand.u32 2147483647, %v4121
          %v4314 = vand.u32 2147483647, %v4122
          %v4315 = vand.u32 2147483647, %v4123
          %v4316 = vand.u32 2147483647, %v4124
          %v4317 = vand.u32 2147483647, %v4125
          %v4318 = vand.u32 2147483647, %v4126
          %v4319 = vand.u32 2147483647, %v4127
          %v4320 = vand.u32 2147483647, %v4128
          %v4321 = vand.u32 2147483647, %v4129
          %v4322 = vand.u32 2147483647, %v4130
          %v4323 = vand.u32 2147483647, %v4131
          %v4324 = vand.u32 2147483647, %v4132
          %v4325 = vand.u32 2147483647, %v4133
          %v4326 = vand.u32 2147483647, %v4134
          %v4327 = vand.u32 2147483647, %v4135
          %v4328 = vand.u32 2147483647, %v4136
          %v4329 = vand.u32 2147483647, %v4137
          %v4330 = vand.u32 2147483647, %v4138
          %v4331 = vand.u32 2147483647, %v4139
          %v4332 = vand.u32 2147483647, %v4140
          %v4333 = vand.u32 2147483647, %v4141
          %v4334 = vand.u32 2147483647, %v4142
          %v4335 = vand.u32 2147483647, %v4143
          %v4336 = vand.u32 2147483647, %v4144
          %v4337 = vand.u32 2147483647, %v4145
          %v4338 = vand.u32 2147483647, %v4146
          %v4339 = vand.u32 2147483647, %v4147
          %v4340 = vand.u32 2147483647, %v4148
          %v4341 = vand.u32 2147483647, %v4149
          %v4342 = vand.u32 2147483647, %v4150
          %v4343 = vand.u32 2147483647, %v4151
          %v4344 = vand.u32 2147483647, %v4152
          %v4345 = vand.u32 2147483647, %v4153
          %v4346 = vand.u32 2147483647, %v4154
          %v4347 = vand.u32 2147483647, %v4155
          %v4348 = vand.u32 2147483647, %v4156
          %v4349 = vand.u32 2147483647, %v4157
          %v4350 = vand.u32 2147483647, %v4158
          %v4351 = vand.u32 2147483647, %v4159
          %v4352 = vand.u32 2147483647, %v4160
          %v4353 = vand.u32 2147483647, %v4161
          %v4354 = vand.u32 2147483647, %v4162
          %v4355 = vand.u32 2147483647, %v4163
          %v4356 = vand.u32 2147483647, %v4164
          %v4357 = vand.u32 2147483647, %v4165
          %v4358 = vand.u32 2147483647, %v4166
          %v4359 = vand.u32 2147483647, %v4167
          %v4360 = vand.u32 2147483647, %v4168
          %v4361 = vand.u32 2147483647, %v4169
          %v4362 = vmul.f32 %v4298, 0.3275911
          %v4363 = vmul.f32 %v4299, 0.3275911
          %v4364 = vmul.f32 %v4300, 0.3275911
          %v4365 = vmul.f32 %v4301, 0.3275911
          %v4366 = vmul.f32 %v4302, 0.3275911
          %v4367 = vmul.f32 %v4303, 0.3275911
          %v4368 = vmul.f32 %v4304, 0.3275911
          %v4369 = vmul.f32 %v4305, 0.3275911
          %v4370 = vmul.f32 %v4306, 0.3275911
          %v4371 = vmul.f32 %v4307, 0.3275911
          %v4372 = vmul.f32 %v4308, 0.3275911
          %v4373 = vmul.f32 %v4309, 0.3275911
          %v4374 = vmul.f32 %v4310, 0.3275911
          %v4375 = vmul.f32 %v4311, 0.3275911
          %v4376 = vmul.f32 %v4312, 0.3275911
          %v4377 = vmul.f32 %v4313, 0.3275911
          %v4378 = vmul.f32 %v4314, 0.3275911
          %v4379 = vmul.f32 %v4315, 0.3275911
          %v4380 = vmul.f32 %v4316, 0.3275911
          %v4381 = vmul.f32 %v4317, 0.3275911
          %v4382 = vmul.f32 %v4318, 0.3275911
          %v4383 = vmul.f32 %v4319, 0.3275911
          %v4384 = vmul.f32 %v4320, 0.3275911
          %v4385 = vmul.f32 %v4321, 0.3275911
          %v4386 = vmul.f32 %v4322, 0.3275911
          %v4387 = vmul.f32 %v4323, 0.3275911
          %v4388 = vmul.f32 %v4324, 0.3275911
          %v4389 = vmul.f32 %v4325, 0.3275911
          %v4390 = vmul.f32 %v4326, 0.3275911
          %v4391 = vmul.f32 %v4327, 0.3275911
          %v4392 = vmul.f32 %v4328, 0.3275911
          %v4393 = vmul.f32 %v4329, 0.3275911
          %v4394 = vmul.f32 %v4330, 0.3275911
          %v4395 = vmul.f32 %v4331, 0.3275911
          %v4396 = vmul.f32 %v4332, 0.3275911
          %v4397 = vmul.f32 %v4333, 0.3275911
          %v4398 = vmul.f32 %v4334, 0.3275911
          %v4399 = vmul.f32 %v4335, 0.3275911
          %v4400 = vmul.f32 %v4336, 0.3275911
          %v4401 = vmul.f32 %v4337, 0.3275911
          %v4402 = vmul.f32 %v4338, 0.3275911
          %v4403 = vmul.f32 %v4339, 0.3275911
          %v4404 = vmul.f32 %v4340, 0.3275911
          %v4405 = vmul.f32 %v4341, 0.3275911
          %v4406 = vmul.f32 %v4342, 0.3275911
          %v4407 = vmul.f32 %v4343, 0.3275911
          %v4408 = vmul.f32 %v4344, 0.3275911
          %v4409 = vmul.f32 %v4345, 0.3275911
          %v4410 = vmul.f32 %v4346, 0.3275911
          %v4411 = vmul.f32 %v4347, 0.3275911
          %v4412 = vmul.f32 %v4348, 0.3275911
          %v4413 = vmul.f32 %v4349, 0.3275911
          %v4414 = vmul.f32 %v4350, 0.3275911
          %v4415 = vmul.f32 %v4351, 0.3275911
          %v4416 = vmul.f32 %v4352, 0.3275911
          %v4417 = vmul.f32 %v4353, 0.3275911
          %v4418 = vmul.f32 %v4354, 0.3275911
          %v4419 = vmul.f32 %v4355, 0.3275911
          %v4420 = vmul.f32 %v4356, 0.3275911
          %v4421 = vmul.f32 %v4357, 0.3275911
          %v4422 = vmul.f32 %v4358, 0.3275911
          %v4423 = vmul.f32 %v4359, 0.3275911
          %v4424 = vmul.f32 %v4360, 0.3275911
          %v4425 = vmul.f32 %v4361, 0.3275911
          %v4426 = vadd.f32 %v4362, 1.0
          %v4427 = vadd.f32 %v4363, 1.0
          %v4428 = vadd.f32 %v4364, 1.0
          %v4429 = vadd.f32 %v4365, 1.0
          %v4430 = vadd.f32 %v4366, 1.0
          %v4431 = vadd.f32 %v4367, 1.0
          %v4432 = vadd.f32 %v4368, 1.0
          %v4433 = vadd.f32 %v4369, 1.0
          %v4434 = vadd.f32 %v4370, 1.0
          %v4435 = vadd.f32 %v4371, 1.0
          %v4436 = vadd.f32 %v4372, 1.0
          %v4437 = vadd.f32 %v4373, 1.0
          %v4438 = vadd.f32 %v4374, 1.0
          %v4439 = vadd.f32 %v4375, 1.0
          %v4440 = vadd.f32 %v4376, 1.0
          %v4441 = vadd.f32 %v4377, 1.0
          %v4442 = vadd.f32 %v4378, 1.0
          %v4443 = vadd.f32 %v4379, 1.0
          %v4444 = vadd.f32 %v4380, 1.0
          %v4445 = vadd.f32 %v4381, 1.0
          %v4446 = vadd.f32 %v4382, 1.0
          %v4447 = vadd.f32 %v4383, 1.0
          %v4448 = vadd.f32 %v4384, 1.0
          %v4449 = vadd.f32 %v4385, 1.0
          %v4450 = vadd.f32 %v4386, 1.0
          %v4451 = vadd.f32 %v4387, 1.0
          %v4452 = vadd.f32 %v4388, 1.0
          %v4453 = vadd.f32 %v4389, 1.0
          %v4454 = vadd.f32 %v4390, 1.0
          %v4455 = vadd.f32 %v4391, 1.0
          %v4456 = vadd.f32 %v4392, 1.0
          %v4457 = vadd.f32 %v4393, 1.0
          %v4458 = vadd.f32 %v4394, 1.0
          %v4459 = vadd.f32 %v4395, 1.0
          %v4460 = vadd.f32 %v4396, 1.0
          %v4461 = vadd.f32 %v4397, 1.0
          %v4462 = vadd.f32 %v4398, 1.0
          %v4463 = vadd.f32 %v4399, 1.0
          %v4464 = vadd.f32 %v4400, 1.0
          %v4465 = vadd.f32 %v4401, 1.0
          %v4466 = vadd.f32 %v4402, 1.0
          %v4467 = vadd.f32 %v4403, 1.0
          %v4468 = vadd.f32 %v4404, 1.0
          %v4469 = vadd.f32 %v4405, 1.0
          %v4470 = vadd.f32 %v4406, 1.0
          %v4471 = vadd.f32 %v4407, 1.0
          %v4472 = vadd.f32 %v4408, 1.0
          %v4473 = vadd.f32 %v4409, 1.0
          %v4474 = vadd.f32 %v4410, 1.0
          %v4475 = vadd.f32 %v4411, 1.0
          %v4476 = vadd.f32 %v4412, 1.0
          %v4477 = vadd.f32 %v4413, 1.0
          %v4478 = vadd.f32 %v4414, 1.0
          %v4479 = vadd.f32 %v4415, 1.0
          %v4480 = vadd.f32 %v4416, 1.0
          %v4481 = vadd.f32 %v4417, 1.0
          %v4482 = vadd.f32 %v4418, 1.0
          %v4483 = vadd.f32 %v4419, 1.0
          %v4484 = vadd.f32 %v4420, 1.0
          %v4485 = vadd.f32 %v4421, 1.0
          %v4486 = vadd.f32 %v4422, 1.0
          %v4487 = vadd.f32 %v4423, 1.0
          %v4488 = vadd.f32 %v4424, 1.0
          %v4489 = vadd.f32 %v4425, 1.0
          %v4490 = vrcp.pop %v4426
          %v4491 = vrcp.pop %v4427
          %v4492 = vrcp.pop %v4428
          %v4493 = vrcp.pop %v4429
          %v4494 = vrcp.pop %v4430
          %v4495 = vrcp.pop %v4431
          %v4496 = vrcp.pop %v4432
          %v4497 = vrcp.pop %v4433
          %v4498 = vrcp.pop %v4434
          %v4499 = vrcp.pop %v4435
          %v4500 = vrcp.pop %v4436
          %v4501 = vrcp.pop %v4437
          %v4502 = vrcp.pop %v4438
          %v4503 = vrcp.pop %v4439
          %v4504 = vrcp.pop %v4440
          %v4505 = vrcp.pop %v4441
          %v4506 = vrcp.pop %v4442
          %v4507 = vrcp.pop %v4443
          %v4508 = vrcp.pop %v4444
          %v4509 = vrcp.pop %v4445
          %v4510 = vrcp.pop %v4446
          %v4511 = vrcp.pop %v4447
          %v4512 = vrcp.pop %v4448
          %v4513 = vrcp.pop %v4449
          %v4514 = vrcp.pop %v4450
          %v4515 = vrcp.pop %v4451
          %v4516 = vrcp.pop %v4452
          %v4517 = vrcp.pop %v4453
          %v4518 = vrcp.pop %v4454
          %v4519 = vrcp.pop %v4455
          %v4520 = vrcp.pop %v4456
          %v4521 = vrcp.pop %v4457
          %v4522 = vrcp.pop %v4458
          %v4523 = vrcp.pop %v4459
          %v4524 = vrcp.pop %v4460
          %v4525 = vrcp.pop %v4461
          %v4526 = vrcp.pop %v4462
          %v4527 = vrcp.pop %v4463
          %v4528 = vrcp.pop %v4464
          %v4529 = vrcp.pop %v4465
          %v4530 = vrcp.pop %v4466
          %v4531 = vrcp.pop %v4467
          %v4532 = vrcp.pop %v4468
          %v4533 = vrcp.pop %v4469
          %v4534 = vrcp.pop %v4470
          %v4535 = vrcp.pop %v4471
          %v4536 = vrcp.pop %v4472
          %v4537 = vrcp.pop %v4473
          %v4538 = vrcp.pop %v4474
          %v4539 = vrcp.pop %v4475
          %v4540 = vrcp.pop %v4476
          %v4541 = vrcp.pop %v4477
          %v4542 = vrcp.pop %v4478
          %v4543 = vrcp.pop %v4479
          %v4544 = vrcp.pop %v4480
          %v4545 = vrcp.pop %v4481
          %v4546 = vrcp.pop %v4482
          %v4547 = vrcp.pop %v4483
          %v4548 = vrcp.pop %v4484
          %v4549 = vrcp.pop %v4485
          %v4550 = vrcp.pop %v4486
          %v4551 = vrcp.pop %v4487
          %v4552 = vrcp.pop %v4488
          %v4553 = vrcp.pop %v4489
          %v4554 = vmul.f32 %v4490, 1.0614054
          %v4555 = vmul.f32 %v4491, 1.0614054
          %v4556 = vmul.f32 %v4492, 1.0614054
          %v4557 = vmul.f32 %v4493, 1.0614054
          %v4558 = vmul.f32 %v4494, 1.0614054
          %v4559 = vmul.f32 %v4495, 1.0614054
          %v4560 = vmul.f32 %v4496, 1.0614054
          %v4561 = vmul.f32 %v4497, 1.0614054
          %v4562 = vmul.f32 %v4498, 1.0614054
          %v4563 = vmul.f32 %v4499, 1.0614054
          %v4564 = vmul.f32 %v4500, 1.0614054
          %v4565 = vmul.f32 %v4501, 1.0614054
          %v4566 = vmul.f32 %v4502, 1.0614054
          %v4567 = vmul.f32 %v4503, 1.0614054
          %v4568 = vmul.f32 %v4504, 1.0614054
          %v4569 = vmul.f32 %v4505, 1.0614054
          %v4570 = vmul.f32 %v4506, 1.0614054
          %v4571 = vmul.f32 %v4507, 1.0614054
          %v4572 = vmul.f32 %v4508, 1.0614054
          %v4573 = vmul.f32 %v4509, 1.0614054
          %v4574 = vmul.f32 %v4510, 1.0614054
          %v4575 = vmul.f32 %v4511, 1.0614054
          %v4576 = vmul.f32 %v4512, 1.0614054
          %v4577 = vmul.f32 %v4513, 1.0614054
          %v4578 = vmul.f32 %v4514, 1.0614054
          %v4579 = vmul.f32 %v4515, 1.0614054
          %v4580 = vmul.f32 %v4516, 1.0614054
          %v4581 = vmul.f32 %v4517, 1.0614054
          %v4582 = vmul.f32 %v4518, 1.0614054
          %v4583 = vmul.f32 %v4519, 1.0614054
          %v4584 = vmul.f32 %v4520, 1.0614054
          %v4585 = vmul.f32 %v4521, 1.0614054
          %v4586 = vmul.f32 %v4522, 1.0614054
          %v4587 = vmul.f32 %v4523, 1.0614054
          %v4588 = vmul.f32 %v4524, 1.0614054
          %v4589 = vmul.f32 %v4525, 1.0614054
          %v4590 = vmul.f32 %v4526, 1.0614054
          %v4591 = vmul.f32 %v4527, 1.0614054
          %v4592 = vmul.f32 %v4528, 1.0614054
          %v4593 = vmul.f32 %v4529, 1.0614054
          %v4594 = vmul.f32 %v4530, 1.0614054
          %v4595 = vmul.f32 %v4531, 1.0614054
          %v4596 = vmul.f32 %v4532, 1.0614054
          %v4597 = vmul.f32 %v4533, 1.0614054
          %v4598 = vmul.f32 %v4534, 1.0614054
          %v4599 = vmul.f32 %v4535, 1.0614054
          %v4600 = vmul.f32 %v4536, 1.0614054
          %v4601 = vmul.f32 %v4537, 1.0614054
          %v4602 = vmul.f32 %v4538, 1.0614054
          %v4603 = vmul.f32 %v4539, 1.0614054
          %v4604 = vmul.f32 %v4540, 1.0614054
          %v4605 = vmul.f32 %v4541, 1.0614054
          %v4606 = vmul.f32 %v4542, 1.0614054
          %v4607 = vmul.f32 %v4543, 1.0614054
          %v4608 = vmul.f32 %v4544, 1.0614054
          %v4609 = vmul.f32 %v4545, 1.0614054
          %v4610 = vmul.f32 %v4546, 1.0614054
          %v4611 = vmul.f32 %v4547, 1.0614054
          %v4612 = vmul.f32 %v4548, 1.0614054
          %v4613 = vmul.f32 %v4549, 1.0614054
          %v4614 = vmul.f32 %v4550, 1.0614054
          %v4615 = vmul.f32 %v4551, 1.0614054
          %v4616 = vmul.f32 %v4552, 1.0614054
          %v4617 = vmul.f32 %v4553, 1.0614054
          %v4618 = vadd.f32 %v4554, -1.4531521
          %v4619 = vadd.f32 %v4555, -1.4531521
          %v4620 = vadd.f32 %v4556, -1.4531521
          %v4621 = vadd.f32 %v4557, -1.4531521
          %v4622 = vadd.f32 %v4558, -1.4531521
          %v4623 = vadd.f32 %v4559, -1.4531521
          %v4624 = vadd.f32 %v4560, -1.4531521
          %v4625 = vadd.f32 %v4561, -1.4531521
          %v4626 = vadd.f32 %v4562, -1.4531521
          %v4627 = vadd.f32 %v4563, -1.4531521
          %v4628 = vadd.f32 %v4564, -1.4531521
          %v4629 = vadd.f32 %v4565, -1.4531521
          %v4630 = vadd.f32 %v4566, -1.4531521
          %v4631 = vadd.f32 %v4567, -1.4531521
          %v4632 = vadd.f32 %v4568, -1.4531521
          %v4633 = vadd.f32 %v4569, -1.4531521
          %v4634 = vadd.f32 %v4570, -1.4531521
          %v4635 = vadd.f32 %v4571, -1.4531521
          %v4636 = vadd.f32 %v4572, -1.4531521
          %v4637 = vadd.f32 %v4573, -1.4531521
          %v4638 = vadd.f32 %v4574, -1.4531521
          %v4639 = vadd.f32 %v4575, -1.4531521
          %v4640 = vadd.f32 %v4576, -1.4531521
          %v4641 = vadd.f32 %v4577, -1.4531521
          %v4642 = vadd.f32 %v4578, -1.4531521
          %v4643 = vadd.f32 %v4579, -1.4531521
          %v4644 = vadd.f32 %v4580, -1.4531521
          %v4645 = vadd.f32 %v4581, -1.4531521
          %v4646 = vadd.f32 %v4582, -1.4531521
          %v4647 = vadd.f32 %v4583, -1.4531521
          %v4648 = vadd.f32 %v4584, -1.4531521
          %v4649 = vadd.f32 %v4585, -1.4531521
          %v4650 = vadd.f32 %v4586, -1.4531521
          %v4651 = vadd.f32 %v4587, -1.4531521
          %v4652 = vadd.f32 %v4588, -1.4531521
          %v4653 = vadd.f32 %v4589, -1.4531521
          %v4654 = vadd.f32 %v4590, -1.4531521
          %v4655 = vadd.f32 %v4591, -1.4531521
          %v4656 = vadd.f32 %v4592, -1.4531521
          %v4657 = vadd.f32 %v4593, -1.4531521
          %v4658 = vadd.f32 %v4594, -1.4531521
          %v4659 = vadd.f32 %v4595, -1.4531521
          %v4660 = vadd.f32 %v4596, -1.4531521
          %v4661 = vadd.f32 %v4597, -1.4531521
          %v4662 = vadd.f32 %v4598, -1.4531521
          %v4663 = vadd.f32 %v4599, -1.4531521
          %v4664 = vadd.f32 %v4600, -1.4531521
          %v4665 = vadd.f32 %v4601, -1.4531521
          %v4666 = vadd.f32 %v4602, -1.4531521
          %v4667 = vadd.f32 %v4603, -1.4531521
          %v4668 = vadd.f32 %v4604, -1.4531521
          %v4669 = vadd.f32 %v4605, -1.4531521
          %v4670 = vadd.f32 %v4606, -1.4531521
          %v4671 = vadd.f32 %v4607, -1.4531521
          %v4672 = vadd.f32 %v4608, -1.4531521
          %v4673 = vadd.f32 %v4609, -1.4531521
          %v4674 = vadd.f32 %v4610, -1.4531521
          %v4675 = vadd.f32 %v4611, -1.4531521
          %v4676 = vadd.f32 %v4612, -1.4531521
          %v4677 = vadd.f32 %v4613, -1.4531521
          %v4678 = vadd.f32 %v4614, -1.4531521
          %v4679 = vadd.f32 %v4615, -1.4531521
          %v4680 = vadd.f32 %v4616, -1.4531521
          %v4681 = vadd.f32 %v4617, -1.4531521
          %v4682 = vmul.f32 %v4618, %v4490
          %v4683 = vmul.f32 %v4619, %v4491
          %v4684 = vmul.f32 %v4620, %v4492
          %v4685 = vmul.f32 %v4621, %v4493
          %v4686 = vmul.f32 %v4622, %v4494
          %v4687 = vmul.f32 %v4623, %v4495
          %v4688 = vmul.f32 %v4624, %v4496
          %v4689 = vmul.f32 %v4625, %v4497
          %v4690 = vmul.f32 %v4626, %v4498
          %v4691 = vmul.f32 %v4627, %v4499
          %v4692 = vmul.f32 %v4628, %v4500
          %v4693 = vmul.f32 %v4629, %v4501
          %v4694 = vmul.f32 %v4630, %v4502
          %v4695 = vmul.f32 %v4631, %v4503
          %v4696 = vmul.f32 %v4632, %v4504
          %v4697 = vmul.f32 %v4633, %v4505
          %v4698 = vmul.f32 %v4634, %v4506
          %v4699 = vmul.f32 %v4635, %v4507
          %v4700 = vmul.f32 %v4636, %v4508
          %v4701 = vmul.f32 %v4637, %v4509
          %v4702 = vmul.f32 %v4638, %v4510
          %v4703 = vmul.f32 %v4639, %v4511
          %v4704 = vmul.f32 %v4640, %v4512
          %v4705 = vmul.f32 %v4641, %v4513
          %v4706 = vmul.f32 %v4642, %v4514
          %v4707 = vmul.f32 %v4643, %v4515
          %v4708 = vmul.f32 %v4644, %v4516
          %v4709 = vmul.f32 %v4645, %v4517
          %v4710 = vmul.f32 %v4646, %v4518
          %v4711 = vmul.f32 %v4647, %v4519
          %v4712 = vmul.f32 %v4648, %v4520
          %v4713 = vmul.f32 %v4649, %v4521
          %v4714 = vmul.f32 %v4650, %v4522
          %v4715 = vmul.f32 %v4651, %v4523
          %v4716 = vmul.f32 %v4652, %v4524
          %v4717 = vmul.f32 %v4653, %v4525
          %v4718 = vmul.f32 %v4654, %v4526
          %v4719 = vmul.f32 %v4655, %v4527
          %v4720 = vmul.f32 %v4656, %v4528
          %v4721 = vmul.f32 %v4657, %v4529
          %v4722 = vmul.f32 %v4658, %v4530
          %v4723 = vmul.f32 %v4659, %v4531
          %v4724 = vmul.f32 %v4660, %v4532
          %v4725 = vmul.f32 %v4661, %v4533
          %v4726 = vmul.f32 %v4662, %v4534
          %v4727 = vmul.f32 %v4663, %v4535
          %v4728 = vmul.f32 %v4664, %v4536
          %v4729 = vmul.f32 %v4665, %v4537
          %v4730 = vmul.f32 %v4666, %v4538
          %v4731 = vmul.f32 %v4667, %v4539
          %v4732 = vmul.f32 %v4668, %v4540
          %v4733 = vmul.f32 %v4669, %v4541
          %v4734 = vmul.f32 %v4670, %v4542
          %v4735 = vmul.f32 %v4671, %v4543
          %v4736 = vmul.f32 %v4672, %v4544
          %v4737 = vmul.f32 %v4673, %v4545
          %v4738 = vmul.f32 %v4674, %v4546
          %v4739 = vmul.f32 %v4675, %v4547
          %v4740 = vmul.f32 %v4676, %v4548
          %v4741 = vmul.f32 %v4677, %v4549
          %v4742 = vmul.f32 %v4678, %v4550
          %v4743 = vmul.f32 %v4679, %v4551
          %v4744 = vmul.f32 %v4680, %v4552
          %v4745 = vmul.f32 %v4681, %v4553
          %v4746 = vadd.f32 %v4682, 1.4214138
          %v4747 = vadd.f32 %v4683, 1.4214138
          %v4748 = vadd.f32 %v4684, 1.4214138
          %v4749 = vadd.f32 %v4685, 1.4214138
          %v4750 = vadd.f32 %v4686, 1.4214138
          %v4751 = vadd.f32 %v4687, 1.4214138
          %v4752 = vadd.f32 %v4688, 1.4214138
          %v4753 = vadd.f32 %v4689, 1.4214138
          %v4754 = vadd.f32 %v4690, 1.4214138
          %v4755 = vadd.f32 %v4691, 1.4214138
          %v4756 = vadd.f32 %v4692, 1.4214138
          %v4757 = vadd.f32 %v4693, 1.4214138
          %v4758 = vadd.f32 %v4694, 1.4214138
          %v4759 = vadd.f32 %v4695, 1.4214138
          %v4760 = vadd.f32 %v4696, 1.4214138
          %v4761 = vadd.f32 %v4697, 1.4214138
          %v4762 = vadd.f32 %v4698, 1.4214138
          %v4763 = vadd.f32 %v4699, 1.4214138
          %v4764 = vadd.f32 %v4700, 1.4214138
          %v4765 = vadd.f32 %v4701, 1.4214138
          %v4766 = vadd.f32 %v4702, 1.4214138
          %v4767 = vadd.f32 %v4703, 1.4214138
          %v4768 = vadd.f32 %v4704, 1.4214138
          %v4769 = vadd.f32 %v4705, 1.4214138
          %v4770 = vadd.f32 %v4706, 1.4214138
          %v4771 = vadd.f32 %v4707, 1.4214138
          %v4772 = vadd.f32 %v4708, 1.4214138
          %v4773 = vadd.f32 %v4709, 1.4214138
          %v4774 = vadd.f32 %v4710, 1.4214138
          %v4775 = vadd.f32 %v4711, 1.4214138
          %v4776 = vadd.f32 %v4712, 1.4214138
          %v4777 = vadd.f32 %v4713, 1.4214138
          %v4778 = vadd.f32 %v4714, 1.4214138
          %v4779 = vadd.f32 %v4715, 1.4214138
          %v4780 = vadd.f32 %v4716, 1.4214138
          %v4781 = vadd.f32 %v4717, 1.4214138
          %v4782 = vadd.f32 %v4718, 1.4214138
          %v4783 = vadd.f32 %v4719, 1.4214138
          %v4784 = vadd.f32 %v4720, 1.4214138
          %v4785 = vadd.f32 %v4721, 1.4214138
          %v4786 = vadd.f32 %v4722, 1.4214138
          %v4787 = vadd.f32 %v4723, 1.4214138
          %v4788 = vadd.f32 %v4724, 1.4214138
          %v4789 = vadd.f32 %v4725, 1.4214138
          %v4790 = vadd.f32 %v4726, 1.4214138
          %v4791 = vadd.f32 %v4727, 1.4214138
          %v4792 = vadd.f32 %v4728, 1.4214138
          %v4793 = vadd.f32 %v4729, 1.4214138
          %v4794 = vadd.f32 %v4730, 1.4214138
          %v4795 = vadd.f32 %v4731, 1.4214138
          %v4796 = vadd.f32 %v4732, 1.4214138
          %v4797 = vadd.f32 %v4733, 1.4214138
          %v4798 = vadd.f32 %v4734, 1.4214138
          %v4799 = vadd.f32 %v4735, 1.4214138
          %v4800 = vadd.f32 %v4736, 1.4214138
          %v4801 = vadd.f32 %v4737, 1.4214138
          %v4802 = vadd.f32 %v4738, 1.4214138
          %v4803 = vadd.f32 %v4739, 1.4214138
          %v4804 = vadd.f32 %v4740, 1.4214138
          %v4805 = vadd.f32 %v4741, 1.4214138
          %v4806 = vadd.f32 %v4742, 1.4214138
          %v4807 = vadd.f32 %v4743, 1.4214138
          %v4808 = vadd.f32 %v4744, 1.4214138
          %v4809 = vadd.f32 %v4745, 1.4214138
          %v4810 = vmul.f32 %v4746, %v4490
          %v4811 = vmul.f32 %v4747, %v4491
          %v4812 = vmul.f32 %v4748, %v4492
          %v4813 = vmul.f32 %v4749, %v4493
          %v4814 = vmul.f32 %v4750, %v4494
          %v4815 = vmul.f32 %v4751, %v4495
          %v4816 = vmul.f32 %v4752, %v4496
          %v4817 = vmul.f32 %v4753, %v4497
          %v4818 = vmul.f32 %v4754, %v4498
          %v4819 = vmul.f32 %v4755, %v4499
          %v4820 = vmul.f32 %v4756, %v4500
          %v4821 = vmul.f32 %v4757, %v4501
          %v4822 = vmul.f32 %v4758, %v4502
          %v4823 = vmul.f32 %v4759, %v4503
          %v4824 = vmul.f32 %v4760, %v4504
          %v4825 = vmul.f32 %v4761, %v4505
          %v4826 = vmul.f32 %v4762, %v4506
          %v4827 = vmul.f32 %v4763, %v4507
          %v4828 = vmul.f32 %v4764, %v4508
          %v4829 = vmul.f32 %v4765, %v4509
          %v4830 = vmul.f32 %v4766, %v4510
          %v4831 = vmul.f32 %v4767, %v4511
          %v4832 = vmul.f32 %v4768, %v4512
          %v4833 = vmul.f32 %v4769, %v4513
          %v4834 = vmul.f32 %v4770, %v4514
          %v4835 = vmul.f32 %v4771, %v4515
          %v4836 = vmul.f32 %v4772, %v4516
          %v4837 = vmul.f32 %v4773, %v4517
          %v4838 = vmul.f32 %v4774, %v4518
          %v4839 = vmul.f32 %v4775, %v4519
          %v4840 = vmul.f32 %v4776, %v4520
          %v4841 = vmul.f32 %v4777, %v4521
          %v4842 = vmul.f32 %v4778, %v4522
          %v4843 = vmul.f32 %v4779, %v4523
          %v4844 = vmul.f32 %v4780, %v4524
          %v4845 = vmul.f32 %v4781, %v4525
          %v4846 = vmul.f32 %v4782, %v4526
          %v4847 = vmul.f32 %v4783, %v4527
          %v4848 = vmul.f32 %v4784, %v4528
          %v4849 = vmul.f32 %v4785, %v4529
          %v4850 = vmul.f32 %v4786, %v4530
          %v4851 = vmul.f32 %v4787, %v4531
          %v4852 = vmul.f32 %v4788, %v4532
          %v4853 = vmul.f32 %v4789, %v4533
          %v4854 = vmul.f32 %v4790, %v4534
          %v4855 = vmul.f32 %v4791, %v4535
          %v4856 = vmul.f32 %v4792, %v4536
          %v4857 = vmul.f32 %v4793, %v4537
          %v4858 = vmul.f32 %v4794, %v4538
          %v4859 = vmul.f32 %v4795, %v4539
          %v4860 = vmul.f32 %v4796, %v4540
          %v4861 = vmul.f32 %v4797, %v4541
          %v4862 = vmul.f32 %v4798, %v4542
          %v4863 = vmul.f32 %v4799, %v4543
          %v4864 = vmul.f32 %v4800, %v4544
          %v4865 = vmul.f32 %v4801, %v4545
          %v4866 = vmul.f32 %v4802, %v4546
          %v4867 = vmul.f32 %v4803, %v4547
          %v4868 = vmul.f32 %v4804, %v4548
          %v4869 = vmul.f32 %v4805, %v4549
          %v4870 = vmul.f32 %v4806, %v4550
          %v4871 = vmul.f32 %v4807, %v4551
          %v4872 = vmul.f32 %v4808, %v4552
          %v4873 = vmul.f32 %v4809, %v4553
          %v4874 = vadd.f32 %v4810, -0.28449672
          %v4875 = vadd.f32 %v4811, -0.28449672
          %v4876 = vadd.f32 %v4812, -0.28449672
          %v4877 = vadd.f32 %v4813, -0.28449672
          %v4878 = vadd.f32 %v4814, -0.28449672
          %v4879 = vadd.f32 %v4815, -0.28449672
          %v4880 = vadd.f32 %v4816, -0.28449672
          %v4881 = vadd.f32 %v4817, -0.28449672
          %v4882 = vadd.f32 %v4818, -0.28449672
          %v4883 = vadd.f32 %v4819, -0.28449672
          %v4884 = vadd.f32 %v4820, -0.28449672
          %v4885 = vadd.f32 %v4821, -0.28449672
          %v4886 = vadd.f32 %v4822, -0.28449672
          %v4887 = vadd.f32 %v4823, -0.28449672
          %v4888 = vadd.f32 %v4824, -0.28449672
          %v4889 = vadd.f32 %v4825, -0.28449672
          %v4890 = vadd.f32 %v4826, -0.28449672
          %v4891 = vadd.f32 %v4827, -0.28449672
          %v4892 = vadd.f32 %v4828, -0.28449672
          %v4893 = vadd.f32 %v4829, -0.28449672
          %v4894 = vadd.f32 %v4830, -0.28449672
          %v4895 = vadd.f32 %v4831, -0.28449672
          %v4896 = vadd.f32 %v4832, -0.28449672
          %v4897 = vadd.f32 %v4833, -0.28449672
          %v4898 = vadd.f32 %v4834, -0.28449672
          %v4899 = vadd.f32 %v4835, -0.28449672
          %v4900 = vadd.f32 %v4836, -0.28449672
          %v4901 = vadd.f32 %v4837, -0.28449672
          %v4902 = vadd.f32 %v4838, -0.28449672
          %v4903 = vadd.f32 %v4839, -0.28449672
          %v4904 = vadd.f32 %v4840, -0.28449672
          %v4905 = vadd.f32 %v4841, -0.28449672
          %v4906 = vadd.f32 %v4842, -0.28449672
          %v4907 = vadd.f32 %v4843, -0.28449672
          %v4908 = vadd.f32 %v4844, -0.28449672
          %v4909 = vadd.f32 %v4845, -0.28449672
          %v4910 = vadd.f32 %v4846, -0.28449672
          %v4911 = vadd.f32 %v4847, -0.28449672
          %v4912 = vadd.f32 %v4848, -0.28449672
          %v4913 = vadd.f32 %v4849, -0.28449672
          %v4914 = vadd.f32 %v4850, -0.28449672
          %v4915 = vadd.f32 %v4851, -0.28449672
          %v4916 = vadd.f32 %v4852, -0.28449672
          %v4917 = vadd.f32 %v4853, -0.28449672
          %v4918 = vadd.f32 %v4854, -0.28449672
          %v4919 = vadd.f32 %v4855, -0.28449672
          %v4920 = vadd.f32 %v4856, -0.28449672
          %v4921 = vadd.f32 %v4857, -0.28449672
          %v4922 = vadd.f32 %v4858, -0.28449672
          %v4923 = vadd.f32 %v4859, -0.28449672
          %v4924 = vadd.f32 %v4860, -0.28449672
          %v4925 = vadd.f32 %v4861, -0.28449672
          %v4926 = vadd.f32 %v4862, -0.28449672
          %v4927 = vadd.f32 %v4863, -0.28449672
          %v4928 = vadd.f32 %v4864, -0.28449672
          %v4929 = vadd.f32 %v4865, -0.28449672
          %v4930 = vadd.f32 %v4866, -0.28449672
          %v4931 = vadd.f32 %v4867, -0.28449672
          %v4932 = vadd.f32 %v4868, -0.28449672
          %v4933 = vadd.f32 %v4869, -0.28449672
          %v4934 = vadd.f32 %v4870, -0.28449672
          %v4935 = vadd.f32 %v4871, -0.28449672
          %v4936 = vadd.f32 %v4872, -0.28449672
          %v4937 = vadd.f32 %v4873, -0.28449672
          %v4938 = vmul.f32 %v4874, %v4490
          %v4939 = vmul.f32 %v4875, %v4491
          %v4940 = vmul.f32 %v4876, %v4492
          %v4941 = vmul.f32 %v4877, %v4493
          %v4942 = vmul.f32 %v4878, %v4494
          %v4943 = vmul.f32 %v4879, %v4495
          %v4944 = vmul.f32 %v4880, %v4496
          %v4945 = vmul.f32 %v4881, %v4497
          %v4946 = vmul.f32 %v4882, %v4498
          %v4947 = vmul.f32 %v4883, %v4499
          %v4948 = vmul.f32 %v4884, %v4500
          %v4949 = vmul.f32 %v4885, %v4501
          %v4950 = vmul.f32 %v4886, %v4502
          %v4951 = vmul.f32 %v4887, %v4503
          %v4952 = vmul.f32 %v4888, %v4504
          %v4953 = vmul.f32 %v4889, %v4505
          %v4954 = vmul.f32 %v4890, %v4506
          %v4955 = vmul.f32 %v4891, %v4507
          %v4956 = vmul.f32 %v4892, %v4508
          %v4957 = vmul.f32 %v4893, %v4509
          %v4958 = vmul.f32 %v4894, %v4510
          %v4959 = vmul.f32 %v4895, %v4511
          %v4960 = vmul.f32 %v4896, %v4512
          %v4961 = vmul.f32 %v4897, %v4513
          %v4962 = vmul.f32 %v4898, %v4514
          %v4963 = vmul.f32 %v4899, %v4515
          %v4964 = vmul.f32 %v4900, %v4516
          %v4965 = vmul.f32 %v4901, %v4517
          %v4966 = vmul.f32 %v4902, %v4518
          %v4967 = vmul.f32 %v4903, %v4519
          %v4968 = vmul.f32 %v4904, %v4520
          %v4969 = vmul.f32 %v4905, %v4521
          %v4970 = vmul.f32 %v4906, %v4522
          %v4971 = vmul.f32 %v4907, %v4523
          %v4972 = vmul.f32 %v4908, %v4524
          %v4973 = vmul.f32 %v4909, %v4525
          %v4974 = vmul.f32 %v4910, %v4526
          %v4975 = vmul.f32 %v4911, %v4527
          %v4976 = vmul.f32 %v4912, %v4528
          %v4977 = vmul.f32 %v4913, %v4529
          %v4978 = vmul.f32 %v4914, %v4530
          %v4979 = vmul.f32 %v4915, %v4531
          %v4980 = vmul.f32 %v4916, %v4532
          %v4981 = vmul.f32 %v4917, %v4533
          %v4982 = vmul.f32 %v4918, %v4534
          %v4983 = vmul.f32 %v4919, %v4535
          %v4984 = vmul.f32 %v4920, %v4536
          %v4985 = vmul.f32 %v4921, %v4537
          %v4986 = vmul.f32 %v4922, %v4538
          %v4987 = vmul.f32 %v4923, %v4539
          %v4988 = vmul.f32 %v4924, %v4540
          %v4989 = vmul.f32 %v4925, %v4541
          %v4990 = vmul.f32 %v4926, %v4542
          %v4991 = vmul.f32 %v4927, %v4543
          %v4992 = vmul.f32 %v4928, %v4544
          %v4993 = vmul.f32 %v4929, %v4545
          %v4994 = vmul.f32 %v4930, %v4546
          %v4995 = vmul.f32 %v4931, %v4547
          %v4996 = vmul.f32 %v4932, %v4548
          %v4997 = vmul.f32 %v4933, %v4549
          %v4998 = vmul.f32 %v4934, %v4550
          %v4999 = vmul.f32 %v4935, %v4551
          %v5000 = vmul.f32 %v4936, %v4552
          %v5001 = vmul.f32 %v4937, %v4553
          %v5002 = vadd.f32 %v4938, 0.2548296
          %v5003 = vadd.f32 %v4939, 0.2548296
          %v5004 = vadd.f32 %v4940, 0.2548296
          %v5005 = vadd.f32 %v4941, 0.2548296
          %v5006 = vadd.f32 %v4942, 0.2548296
          %v5007 = vadd.f32 %v4943, 0.2548296
          %v5008 = vadd.f32 %v4944, 0.2548296
          %v5009 = vadd.f32 %v4945, 0.2548296
          %v5010 = vadd.f32 %v4946, 0.2548296
          %v5011 = vadd.f32 %v4947, 0.2548296
          %v5012 = vadd.f32 %v4948, 0.2548296
          %v5013 = vadd.f32 %v4949, 0.2548296
          %v5014 = vadd.f32 %v4950, 0.2548296
          %v5015 = vadd.f32 %v4951, 0.2548296
          %v5016 = vadd.f32 %v4952, 0.2548296
          %v5017 = vadd.f32 %v4953, 0.2548296
          %v5018 = vadd.f32 %v4954, 0.2548296
          %v5019 = vadd.f32 %v4955, 0.2548296
          %v5020 = vadd.f32 %v4956, 0.2548296
          %v5021 = vadd.f32 %v4957, 0.2548296
          %v5022 = vadd.f32 %v4958, 0.2548296
          %v5023 = vadd.f32 %v4959, 0.2548296
          %v5024 = vadd.f32 %v4960, 0.2548296
          %v5025 = vadd.f32 %v4961, 0.2548296
          %v5026 = vadd.f32 %v4962, 0.2548296
          %v5027 = vadd.f32 %v4963, 0.2548296
          %v5028 = vadd.f32 %v4964, 0.2548296
          %v5029 = vadd.f32 %v4965, 0.2548296
          %v5030 = vadd.f32 %v4966, 0.2548296
          %v5031 = vadd.f32 %v4967, 0.2548296
          %v5032 = vadd.f32 %v4968, 0.2548296
          %v5033 = vadd.f32 %v4969, 0.2548296
          %v5034 = vadd.f32 %v4970, 0.2548296
          %v5035 = vadd.f32 %v4971, 0.2548296
          %v5036 = vadd.f32 %v4972, 0.2548296
          %v5037 = vadd.f32 %v4973, 0.2548296
          %v5038 = vadd.f32 %v4974, 0.2548296
          %v5039 = vadd.f32 %v4975, 0.2548296
          %v5040 = vadd.f32 %v4976, 0.2548296
          %v5041 = vadd.f32 %v4977, 0.2548296
          %v5042 = vadd.f32 %v4978, 0.2548296
          %v5043 = vadd.f32 %v4979, 0.2548296
          %v5044 = vadd.f32 %v4980, 0.2548296
          %v5045 = vadd.f32 %v4981, 0.2548296
          %v5046 = vadd.f32 %v4982, 0.2548296
          %v5047 = vadd.f32 %v4983, 0.2548296
          %v5048 = vadd.f32 %v4984, 0.2548296
          %v5049 = vadd.f32 %v4985, 0.2548296
          %v5050 = vadd.f32 %v4986, 0.2548296
          %v5051 = vadd.f32 %v4987, 0.2548296
          %v5052 = vadd.f32 %v4988, 0.2548296
          %v5053 = vadd.f32 %v4989, 0.2548296
          %v5054 = vadd.f32 %v4990, 0.2548296
          %v5055 = vadd.f32 %v4991, 0.2548296
          %v5056 = vadd.f32 %v4992, 0.2548296
          %v5057 = vadd.f32 %v4993, 0.2548296
          %v5058 = vadd.f32 %v4994, 0.2548296
          %v5059 = vadd.f32 %v4995, 0.2548296
          %v5060 = vadd.f32 %v4996, 0.2548296
          %v5061 = vadd.f32 %v4997, 0.2548296
          %v5062 = vadd.f32 %v4998, 0.2548296
          %v5063 = vadd.f32 %v4999, 0.2548296
          %v5064 = vadd.f32 %v5000, 0.2548296
          %v5065 = vadd.f32 %v5001, 0.2548296
          %v5066 = vmul.f32 %v5002, %v4490
          %v5067 = vmul.f32 %v5003, %v4491
          %v5068 = vmul.f32 %v5004, %v4492
          %v5069 = vmul.f32 %v5005, %v4493
          %v5070 = vmul.f32 %v5006, %v4494
          %v5071 = vmul.f32 %v5007, %v4495
          %v5072 = vmul.f32 %v5008, %v4496
          %v5073 = vmul.f32 %v5009, %v4497
          %v5074 = vmul.f32 %v5010, %v4498
          %v5075 = vmul.f32 %v5011, %v4499
          %v5076 = vmul.f32 %v5012, %v4500
          %v5077 = vmul.f32 %v5013, %v4501
          %v5078 = vmul.f32 %v5014, %v4502
          %v5079 = vmul.f32 %v5015, %v4503
          %v5080 = vmul.f32 %v5016, %v4504
          %v5081 = vmul.f32 %v5017, %v4505
          %v5082 = vmul.f32 %v5018, %v4506
          %v5083 = vmul.f32 %v5019, %v4507
          %v5084 = vmul.f32 %v5020, %v4508
          %v5085 = vmul.f32 %v5021, %v4509
          %v5086 = vmul.f32 %v5022, %v4510
          %v5087 = vmul.f32 %v5023, %v4511
          %v5088 = vmul.f32 %v5024, %v4512
          %v5089 = vmul.f32 %v5025, %v4513
          %v5090 = vmul.f32 %v5026, %v4514
          %v5091 = vmul.f32 %v5027, %v4515
          %v5092 = vmul.f32 %v5028, %v4516
          %v5093 = vmul.f32 %v5029, %v4517
          %v5094 = vmul.f32 %v5030, %v4518
          %v5095 = vmul.f32 %v5031, %v4519
          %v5096 = vmul.f32 %v5032, %v4520
          %v5097 = vmul.f32 %v5033, %v4521
          %v5098 = vmul.f32 %v5034, %v4522
          %v5099 = vmul.f32 %v5035, %v4523
          %v5100 = vmul.f32 %v5036, %v4524
          %v5101 = vmul.f32 %v5037, %v4525
          %v5102 = vmul.f32 %v5038, %v4526
          %v5103 = vmul.f32 %v5039, %v4527
          %v5104 = vmul.f32 %v5040, %v4528
          %v5105 = vmul.f32 %v5041, %v4529
          %v5106 = vmul.f32 %v5042, %v4530
          %v5107 = vmul.f32 %v5043, %v4531
          %v5108 = vmul.f32 %v5044, %v4532
          %v5109 = vmul.f32 %v5045, %v4533
          %v5110 = vmul.f32 %v5046, %v4534
          %v5111 = vmul.f32 %v5047, %v4535
          %v5112 = vmul.f32 %v5048, %v4536
          %v5113 = vmul.f32 %v5049, %v4537
          %v5114 = vmul.f32 %v5050, %v4538
          %v5115 = vmul.f32 %v5051, %v4539
          %v5116 = vmul.f32 %v5052, %v4540
          %v5117 = vmul.f32 %v5053, %v4541
          %v5118 = vmul.f32 %v5054, %v4542
          %v5119 = vmul.f32 %v5055, %v4543
          %v5120 = vmul.f32 %v5056, %v4544
          %v5121 = vmul.f32 %v5057, %v4545
          %v5122 = vmul.f32 %v5058, %v4546
          %v5123 = vmul.f32 %v5059, %v4547
          %v5124 = vmul.f32 %v5060, %v4548
          %v5125 = vmul.f32 %v5061, %v4549
          %v5126 = vmul.f32 %v5062, %v4550
          %v5127 = vmul.f32 %v5063, %v4551
          %v5128 = vmul.f32 %v5064, %v4552
          %v5129 = vmul.f32 %v5065, %v4553
          %v5130 = vsub.f32 0.0, %v4298
          %v5131 = vsub.f32 0.0, %v4299
          %v5132 = vsub.f32 0.0, %v4300
          %v5133 = vsub.f32 0.0, %v4301
          %v5134 = vsub.f32 0.0, %v4302
          %v5135 = vsub.f32 0.0, %v4303
          %v5136 = vsub.f32 0.0, %v4304
          %v5137 = vsub.f32 0.0, %v4305
          %v5138 = vsub.f32 0.0, %v4306
          %v5139 = vsub.f32 0.0, %v4307
          %v5140 = vsub.f32 0.0, %v4308
          %v5141 = vsub.f32 0.0, %v4309
          %v5142 = vsub.f32 0.0, %v4310
          %v5143 = vsub.f32 0.0, %v4311
          %v5144 = vsub.f32 0.0, %v4312
          %v5145 = vsub.f32 0.0, %v4313
          %v5146 = vsub.f32 0.0, %v4314
          %v5147 = vsub.f32 0.0, %v4315
          %v5148 = vsub.f32 0.0, %v4316
          %v5149 = vsub.f32 0.0, %v4317
          %v5150 = vsub.f32 0.0, %v4318
          %v5151 = vsub.f32 0.0, %v4319
          %v5152 = vsub.f32 0.0, %v4320
          %v5153 = vsub.f32 0.0, %v4321
          %v5154 = vsub.f32 0.0, %v4322
          %v5155 = vsub.f32 0.0, %v4323
          %v5156 = vsub.f32 0.0, %v4324
          %v5157 = vsub.f32 0.0, %v4325
          %v5158 = vsub.f32 0.0, %v4326
          %v5159 = vsub.f32 0.0, %v4327
          %v5160 = vsub.f32 0.0, %v4328
          %v5161 = vsub.f32 0.0, %v4329
          %v5162 = vsub.f32 0.0, %v4330
          %v5163 = vsub.f32 0.0, %v4331
          %v5164 = vsub.f32 0.0, %v4332
          %v5165 = vsub.f32 0.0, %v4333
          %v5166 = vsub.f32 0.0, %v4334
          %v5167 = vsub.f32 0.0, %v4335
          %v5168 = vsub.f32 0.0, %v4336
          %v5169 = vsub.f32 0.0, %v4337
          %v5170 = vsub.f32 0.0, %v4338
          %v5171 = vsub.f32 0.0, %v4339
          %v5172 = vsub.f32 0.0, %v4340
          %v5173 = vsub.f32 0.0, %v4341
          %v5174 = vsub.f32 0.0, %v4342
          %v5175 = vsub.f32 0.0, %v4343
          %v5176 = vsub.f32 0.0, %v4344
          %v5177 = vsub.f32 0.0, %v4345
          %v5178 = vsub.f32 0.0, %v4346
          %v5179 = vsub.f32 0.0, %v4347
          %v5180 = vsub.f32 0.0, %v4348
          %v5181 = vsub.f32 0.0, %v4349
          %v5182 = vsub.f32 0.0, %v4350
          %v5183 = vsub.f32 0.0, %v4351
          %v5184 = vsub.f32 0.0, %v4352
          %v5185 = vsub.f32 0.0, %v4353
          %v5186 = vsub.f32 0.0, %v4354
          %v5187 = vsub.f32 0.0, %v4355
          %v5188 = vsub.f32 0.0, %v4356
          %v5189 = vsub.f32 0.0, %v4357
          %v5190 = vsub.f32 0.0, %v4358
          %v5191 = vsub.f32 0.0, %v4359
          %v5192 = vsub.f32 0.0, %v4360
          %v5193 = vsub.f32 0.0, %v4361
          %v5194 = vmul.f32 %v5130, %v4298
          %v5195 = vmul.f32 %v5131, %v4299
          %v5196 = vmul.f32 %v5132, %v4300
          %v5197 = vmul.f32 %v5133, %v4301
          %v5198 = vmul.f32 %v5134, %v4302
          %v5199 = vmul.f32 %v5135, %v4303
          %v5200 = vmul.f32 %v5136, %v4304
          %v5201 = vmul.f32 %v5137, %v4305
          %v5202 = vmul.f32 %v5138, %v4306
          %v5203 = vmul.f32 %v5139, %v4307
          %v5204 = vmul.f32 %v5140, %v4308
          %v5205 = vmul.f32 %v5141, %v4309
          %v5206 = vmul.f32 %v5142, %v4310
          %v5207 = vmul.f32 %v5143, %v4311
          %v5208 = vmul.f32 %v5144, %v4312
          %v5209 = vmul.f32 %v5145, %v4313
          %v5210 = vmul.f32 %v5146, %v4314
          %v5211 = vmul.f32 %v5147, %v4315
          %v5212 = vmul.f32 %v5148, %v4316
          %v5213 = vmul.f32 %v5149, %v4317
          %v5214 = vmul.f32 %v5150, %v4318
          %v5215 = vmul.f32 %v5151, %v4319
          %v5216 = vmul.f32 %v5152, %v4320
          %v5217 = vmul.f32 %v5153, %v4321
          %v5218 = vmul.f32 %v5154, %v4322
          %v5219 = vmul.f32 %v5155, %v4323
          %v5220 = vmul.f32 %v5156, %v4324
          %v5221 = vmul.f32 %v5157, %v4325
          %v5222 = vmul.f32 %v5158, %v4326
          %v5223 = vmul.f32 %v5159, %v4327
          %v5224 = vmul.f32 %v5160, %v4328
          %v5225 = vmul.f32 %v5161, %v4329
          %v5226 = vmul.f32 %v5162, %v4330
          %v5227 = vmul.f32 %v5163, %v4331
          %v5228 = vmul.f32 %v5164, %v4332
          %v5229 = vmul.f32 %v5165, %v4333
          %v5230 = vmul.f32 %v5166, %v4334
          %v5231 = vmul.f32 %v5167, %v4335
          %v5232 = vmul.f32 %v5168, %v4336
          %v5233 = vmul.f32 %v5169, %v4337
          %v5234 = vmul.f32 %v5170, %v4338
          %v5235 = vmul.f32 %v5171, %v4339
          %v5236 = vmul.f32 %v5172, %v4340
          %v5237 = vmul.f32 %v5173, %v4341
          %v5238 = vmul.f32 %v5174, %v4342
          %v5239 = vmul.f32 %v5175, %v4343
          %v5240 = vmul.f32 %v5176, %v4344
          %v5241 = vmul.f32 %v5177, %v4345
          %v5242 = vmul.f32 %v5178, %v4346
          %v5243 = vmul.f32 %v5179, %v4347
          %v5244 = vmul.f32 %v5180, %v4348
          %v5245 = vmul.f32 %v5181, %v4349
          %v5246 = vmul.f32 %v5182, %v4350
          %v5247 = vmul.f32 %v5183, %v4351
          %v5248 = vmul.f32 %v5184, %v4352
          %v5249 = vmul.f32 %v5185, %v4353
          %v5250 = vmul.f32 %v5186, %v4354
          %v5251 = vmul.f32 %v5187, %v4355
          %v5252 = vmul.f32 %v5188, %v4356
          %v5253 = vmul.f32 %v5189, %v4357
          %v5254 = vmul.f32 %v5190, %v4358
          %v5255 = vmul.f32 %v5191, %v4359
          %v5256 = vmul.f32 %v5192, %v4360
          %v5257 = vmul.f32 %v5193, %v4361
          %v5258 = vmul.f32 %v5194, 1.442695
          %v5259 = vpow.pop %v5258
          %v5260 = vmul.f32 %v5195, 1.442695
          %v5261 = vpow.pop %v5260
          %v5262 = vmul.f32 %v5196, 1.442695
          %v5263 = vpow.pop %v5262
          %v5264 = vmul.f32 %v5197, 1.442695
          %v5265 = vpow.pop %v5264
          %v5266 = vmul.f32 %v5198, 1.442695
          %v5267 = vpow.pop %v5266
          %v5268 = vmul.f32 %v5199, 1.442695
          %v5269 = vpow.pop %v5268
          %v5270 = vmul.f32 %v5200, 1.442695
          %v5271 = vpow.pop %v5270
          %v5272 = vmul.f32 %v5201, 1.442695
          %v5273 = vpow.pop %v5272
          %v5274 = vmul.f32 %v5202, 1.442695
          %v5275 = vpow.pop %v5274
          %v5276 = vmul.f32 %v5203, 1.442695
          %v5277 = vpow.pop %v5276
          %v5278 = vmul.f32 %v5204, 1.442695
          %v5279 = vpow.pop %v5278
          %v5280 = vmul.f32 %v5205, 1.442695
          %v5281 = vpow.pop %v5280
          %v5282 = vmul.f32 %v5206, 1.442695
          %v5283 = vpow.pop %v5282
          %v5284 = vmul.f32 %v5207, 1.442695
          %v5285 = vpow.pop %v5284
          %v5286 = vmul.f32 %v5208, 1.442695
          %v5287 = vpow.pop %v5286
          %v5288 = vmul.f32 %v5209, 1.442695
          %v5289 = vpow.pop %v5288
          %v5290 = vmul.f32 %v5210, 1.442695
          %v5291 = vpow.pop %v5290
          %v5292 = vmul.f32 %v5211, 1.442695
          %v5293 = vpow.pop %v5292
          %v5294 = vmul.f32 %v5212, 1.442695
          %v5295 = vpow.pop %v5294
          %v5296 = vmul.f32 %v5213, 1.442695
          %v5297 = vpow.pop %v5296
          %v5298 = vmul.f32 %v5214, 1.442695
          %v5299 = vpow.pop %v5298
          %v5300 = vmul.f32 %v5215, 1.442695
          %v5301 = vpow.pop %v5300
          %v5302 = vmul.f32 %v5216, 1.442695
          %v5303 = vpow.pop %v5302
          %v5304 = vmul.f32 %v5217, 1.442695
          %v5305 = vpow.pop %v5304
          %v5306 = vmul.f32 %v5218, 1.442695
          %v5307 = vpow.pop %v5306
          %v5308 = vmul.f32 %v5219, 1.442695
          %v5309 = vpow.pop %v5308
          %v5310 = vmul.f32 %v5220, 1.442695
          %v5311 = vpow.pop %v5310
          %v5312 = vmul.f32 %v5221, 1.442695
          %v5313 = vpow.pop %v5312
          %v5314 = vmul.f32 %v5222, 1.442695
          %v5315 = vpow.pop %v5314
          %v5316 = vmul.f32 %v5223, 1.442695
          %v5317 = vpow.pop %v5316
          %v5318 = vmul.f32 %v5224, 1.442695
          %v5319 = vpow.pop %v5318
          %v5320 = vmul.f32 %v5225, 1.442695
          %v5321 = vpow.pop %v5320
          %v5322 = vmul.f32 %v5226, 1.442695
          %v5323 = vpow.pop %v5322
          %v5324 = vmul.f32 %v5227, 1.442695
          %v5325 = vpow.pop %v5324
          %v5326 = vmul.f32 %v5228, 1.442695
          %v5327 = vpow.pop %v5326
          %v5328 = vmul.f32 %v5229, 1.442695
          %v5329 = vpow.pop %v5328
          %v5330 = vmul.f32 %v5230, 1.442695
          %v5331 = vpow.pop %v5330
          %v5332 = vmul.f32 %v5231, 1.442695
          %v5333 = vpow.pop %v5332
          %v5334 = vmul.f32 %v5232, 1.442695
          %v5335 = vpow.pop %v5334
          %v5336 = vmul.f32 %v5233, 1.442695
          %v5337 = vpow.pop %v5336
          %v5338 = vmul.f32 %v5234, 1.442695
          %v5339 = vpow.pop %v5338
          %v5340 = vmul.f32 %v5235, 1.442695
          %v5341 = vpow.pop %v5340
          %v5342 = vmul.f32 %v5236, 1.442695
          %v5343 = vpow.pop %v5342
          %v5344 = vmul.f32 %v5237, 1.442695
          %v5345 = vpow.pop %v5344
          %v5346 = vmul.f32 %v5238, 1.442695
          %v5347 = vpow.pop %v5346
          %v5348 = vmul.f32 %v5239, 1.442695
          %v5349 = vpow.pop %v5348
          %v5350 = vmul.f32 %v5240, 1.442695
          %v5351 = vpow.pop %v5350
          %v5352 = vmul.f32 %v5241, 1.442695
          %v5353 = vpow.pop %v5352
          %v5354 = vmul.f32 %v5242, 1.442695
          %v5355 = vpow.pop %v5354
          %v5356 = vmul.f32 %v5243, 1.442695
          %v5357 = vpow.pop %v5356
          %v5358 = vmul.f32 %v5244, 1.442695
          %v5359 = vpow.pop %v5358
          %v5360 = vmul.f32 %v5245, 1.442695
          %v5361 = vpow.pop %v5360
          %v5362 = vmul.f32 %v5246, 1.442695
          %v5363 = vpow.pop %v5362
          %v5364 = vmul.f32 %v5247, 1.442695
          %v5365 = vpow.pop %v5364
          %v5366 = vmul.f32 %v5248, 1.442695
          %v5367 = vpow.pop %v5366
          %v5368 = vmul.f32 %v5249, 1.442695
          %v5369 = vpow.pop %v5368
          %v5370 = vmul.f32 %v5250, 1.442695
          %v5371 = vpow.pop %v5370
          %v5372 = vmul.f32 %v5251, 1.442695
          %v5373 = vpow.pop %v5372
          %v5374 = vmul.f32 %v5252, 1.442695
          %v5375 = vpow.pop %v5374
          %v5376 = vmul.f32 %v5253, 1.442695
          %v5377 = vpow.pop %v5376
          %v5378 = vmul.f32 %v5254, 1.442695
          %v5379 = vpow.pop %v5378
          %v5380 = vmul.f32 %v5255, 1.442695
          %v5381 = vpow.pop %v5380
          %v5382 = vmul.f32 %v5256, 1.442695
          %v5383 = vpow.pop %v5382
          %v5384 = vmul.f32 %v5257, 1.442695
          %v5385 = vpow.pop %v5384
          %v5386 = vmul.f32 %v5066, %v5259
          %v5387 = vmul.f32 %v5067, %v5261
          %v5388 = vmul.f32 %v5068, %v5263
          %v5389 = vmul.f32 %v5069, %v5265
          %v5390 = vmul.f32 %v5070, %v5267
          %v5391 = vmul.f32 %v5071, %v5269
          %v5392 = vmul.f32 %v5072, %v5271
          %v5393 = vmul.f32 %v5073, %v5273
          %v5394 = vmul.f32 %v5074, %v5275
          %v5395 = vmul.f32 %v5075, %v5277
          %v5396 = vmul.f32 %v5076, %v5279
          %v5397 = vmul.f32 %v5077, %v5281
          %v5398 = vmul.f32 %v5078, %v5283
          %v5399 = vmul.f32 %v5079, %v5285
          %v5400 = vmul.f32 %v5080, %v5287
          %v5401 = vmul.f32 %v5081, %v5289
          %v5402 = vmul.f32 %v5082, %v5291
          %v5403 = vmul.f32 %v5083, %v5293
          %v5404 = vmul.f32 %v5084, %v5295
          %v5405 = vmul.f32 %v5085, %v5297
          %v5406 = vmul.f32 %v5086, %v5299
          %v5407 = vmul.f32 %v5087, %v5301
          %v5408 = vmul.f32 %v5088, %v5303
          %v5409 = vmul.f32 %v5089, %v5305
          %v5410 = vmul.f32 %v5090, %v5307
          %v5411 = vmul.f32 %v5091, %v5309
          %v5412 = vmul.f32 %v5092, %v5311
          %v5413 = vmul.f32 %v5093, %v5313
          %v5414 = vmul.f32 %v5094, %v5315
          %v5415 = vmul.f32 %v5095, %v5317
          %v5416 = vmul.f32 %v5096, %v5319
          %v5417 = vmul.f32 %v5097, %v5321
          %v5418 = vmul.f32 %v5098, %v5323
          %v5419 = vmul.f32 %v5099, %v5325
          %v5420 = vmul.f32 %v5100, %v5327
          %v5421 = vmul.f32 %v5101, %v5329
          %v5422 = vmul.f32 %v5102, %v5331
          %v5423 = vmul.f32 %v5103, %v5333
          %v5424 = vmul.f32 %v5104, %v5335
          %v5425 = vmul.f32 %v5105, %v5337
          %v5426 = vmul.f32 %v5106, %v5339
          %v5427 = vmul.f32 %v5107, %v5341
          %v5428 = vmul.f32 %v5108, %v5343
          %v5429 = vmul.f32 %v5109, %v5345
          %v5430 = vmul.f32 %v5110, %v5347
          %v5431 = vmul.f32 %v5111, %v5349
          %v5432 = vmul.f32 %v5112, %v5351
          %v5433 = vmul.f32 %v5113, %v5353
          %v5434 = vmul.f32 %v5114, %v5355
          %v5435 = vmul.f32 %v5115, %v5357
          %v5436 = vmul.f32 %v5116, %v5359
          %v5437 = vmul.f32 %v5117, %v5361
          %v5438 = vmul.f32 %v5118, %v5363
          %v5439 = vmul.f32 %v5119, %v5365
          %v5440 = vmul.f32 %v5120, %v5367
          %v5441 = vmul.f32 %v5121, %v5369
          %v5442 = vmul.f32 %v5122, %v5371
          %v5443 = vmul.f32 %v5123, %v5373
          %v5444 = vmul.f32 %v5124, %v5375
          %v5445 = vmul.f32 %v5125, %v5377
          %v5446 = vmul.f32 %v5126, %v5379
          %v5447 = vmul.f32 %v5127, %v5381
          %v5448 = vmul.f32 %v5128, %v5383
          %v5449 = vmul.f32 %v5129, %v5385
          %v5450 = vsub.f32 1.0, %v5386
          %v5451 = vsub.f32 1.0, %v5387
          %v5452 = vsub.f32 1.0, %v5388
          %v5453 = vsub.f32 1.0, %v5389
          %v5454 = vsub.f32 1.0, %v5390
          %v5455 = vsub.f32 1.0, %v5391
          %v5456 = vsub.f32 1.0, %v5392
          %v5457 = vsub.f32 1.0, %v5393
          %v5458 = vsub.f32 1.0, %v5394
          %v5459 = vsub.f32 1.0, %v5395
          %v5460 = vsub.f32 1.0, %v5396
          %v5461 = vsub.f32 1.0, %v5397
          %v5462 = vsub.f32 1.0, %v5398
          %v5463 = vsub.f32 1.0, %v5399
          %v5464 = vsub.f32 1.0, %v5400
          %v5465 = vsub.f32 1.0, %v5401
          %v5466 = vsub.f32 1.0, %v5402
          %v5467 = vsub.f32 1.0, %v5403
          %v5468 = vsub.f32 1.0, %v5404
          %v5469 = vsub.f32 1.0, %v5405
          %v5470 = vsub.f32 1.0, %v5406
          %v5471 = vsub.f32 1.0, %v5407
          %v5472 = vsub.f32 1.0, %v5408
          %v5473 = vsub.f32 1.0, %v5409
          %v5474 = vsub.f32 1.0, %v5410
          %v5475 = vsub.f32 1.0, %v5411
          %v5476 = vsub.f32 1.0, %v5412
          %v5477 = vsub.f32 1.0, %v5413
          %v5478 = vsub.f32 1.0, %v5414
          %v5479 = vsub.f32 1.0, %v5415
          %v5480 = vsub.f32 1.0, %v5416
          %v5481 = vsub.f32 1.0, %v5417
          %v5482 = vsub.f32 1.0, %v5418
          %v5483 = vsub.f32 1.0, %v5419
          %v5484 = vsub.f32 1.0, %v5420
          %v5485 = vsub.f32 1.0, %v5421
          %v5486 = vsub.f32 1.0, %v5422
          %v5487 = vsub.f32 1.0, %v5423
          %v5488 = vsub.f32 1.0, %v5424
          %v5489 = vsub.f32 1.0, %v5425
          %v5490 = vsub.f32 1.0, %v5426
          %v5491 = vsub.f32 1.0, %v5427
          %v5492 = vsub.f32 1.0, %v5428
          %v5493 = vsub.f32 1.0, %v5429
          %v5494 = vsub.f32 1.0, %v5430
          %v5495 = vsub.f32 1.0, %v5431
          %v5496 = vsub.f32 1.0, %v5432
          %v5497 = vsub.f32 1.0, %v5433
          %v5498 = vsub.f32 1.0, %v5434
          %v5499 = vsub.f32 1.0, %v5435
          %v5500 = vsub.f32 1.0, %v5436
          %v5501 = vsub.f32 1.0, %v5437
          %v5502 = vsub.f32 1.0, %v5438
          %v5503 = vsub.f32 1.0, %v5439
          %v5504 = vsub.f32 1.0, %v5440
          %v5505 = vsub.f32 1.0, %v5441
          %v5506 = vsub.f32 1.0, %v5442
          %v5507 = vsub.f32 1.0, %v5443
          %v5508 = vsub.f32 1.0, %v5444
          %v5509 = vsub.f32 1.0, %v5445
          %v5510 = vsub.f32 1.0, %v5446
          %v5511 = vsub.f32 1.0, %v5447
          %v5512 = vsub.f32 1.0, %v5448
          %v5513 = vsub.f32 1.0, %v5449
          %v5514 = vmul.f32 %v4234, %v5450
          %v5515 = vmul.f32 %v4235, %v5451
          %v5516 = vmul.f32 %v4236, %v5452
          %v5517 = vmul.f32 %v4237, %v5453
          %v5518 = vmul.f32 %v4238, %v5454
          %v5519 = vmul.f32 %v4239, %v5455
          %v5520 = vmul.f32 %v4240, %v5456
          %v5521 = vmul.f32 %v4241, %v5457
          %v5522 = vmul.f32 %v4242, %v5458
          %v5523 = vmul.f32 %v4243, %v5459
          %v5524 = vmul.f32 %v4244, %v5460
          %v5525 = vmul.f32 %v4245, %v5461
          %v5526 = vmul.f32 %v4246, %v5462
          %v5527 = vmul.f32 %v4247, %v5463
          %v5528 = vmul.f32 %v4248, %v5464
          %v5529 = vmul.f32 %v4249, %v5465
          %v5530 = vmul.f32 %v4250, %v5466
          %v5531 = vmul.f32 %v4251, %v5467
          %v5532 = vmul.f32 %v4252, %v5468
          %v5533 = vmul.f32 %v4253, %v5469
          %v5534 = vmul.f32 %v4254, %v5470
          %v5535 = vmul.f32 %v4255, %v5471
          %v5536 = vmul.f32 %v4256, %v5472
          %v5537 = vmul.f32 %v4257, %v5473
          %v5538 = vmul.f32 %v4258, %v5474
          %v5539 = vmul.f32 %v4259, %v5475
          %v5540 = vmul.f32 %v4260, %v5476
          %v5541 = vmul.f32 %v4261, %v5477
          %v5542 = vmul.f32 %v4262, %v5478
          %v5543 = vmul.f32 %v4263, %v5479
          %v5544 = vmul.f32 %v4264, %v5480
          %v5545 = vmul.f32 %v4265, %v5481
          %v5546 = vmul.f32 %v4266, %v5482
          %v5547 = vmul.f32 %v4267, %v5483
          %v5548 = vmul.f32 %v4268, %v5484
          %v5549 = vmul.f32 %v4269, %v5485
          %v5550 = vmul.f32 %v4270, %v5486
          %v5551 = vmul.f32 %v4271, %v5487
          %v5552 = vmul.f32 %v4272, %v5488
          %v5553 = vmul.f32 %v4273, %v5489
          %v5554 = vmul.f32 %v4274, %v5490
          %v5555 = vmul.f32 %v4275, %v5491
          %v5556 = vmul.f32 %v4276, %v5492
          %v5557 = vmul.f32 %v4277, %v5493
          %v5558 = vmul.f32 %v4278, %v5494
          %v5559 = vmul.f32 %v4279, %v5495
          %v5560 = vmul.f32 %v4280, %v5496
          %v5561 = vmul.f32 %v4281, %v5497
          %v5562 = vmul.f32 %v4282, %v5498
          %v5563 = vmul.f32 %v4283, %v5499
          %v5564 = vmul.f32 %v4284, %v5500
          %v5565 = vmul.f32 %v4285, %v5501
          %v5566 = vmul.f32 %v4286, %v5502
          %v5567 = vmul.f32 %v4287, %v5503
          %v5568 = vmul.f32 %v4288, %v5504
          %v5569 = vmul.f32 %v4289, %v5505
          %v5570 = vmul.f32 %v4290, %v5506
          %v5571 = vmul.f32 %v4291, %v5507
          %v5572 = vmul.f32 %v4292, %v5508
          %v5573 = vmul.f32 %v4293, %v5509
          %v5574 = vmul.f32 %v4294, %v5510
          %v5575 = vmul.f32 %v4295, %v5511
          %v5576 = vmul.f32 %v4296, %v5512
          %v5577 = vmul.f32 %v4297, %v5513
          %v5578 = vadd.f32 %v5514, 1.0
          %v5579 = vadd.f32 %v5515, 1.0
          %v5580 = vadd.f32 %v5516, 1.0
          %v5581 = vadd.f32 %v5517, 1.0
          %v5582 = vadd.f32 %v5518, 1.0
          %v5583 = vadd.f32 %v5519, 1.0
          %v5584 = vadd.f32 %v5520, 1.0
          %v5585 = vadd.f32 %v5521, 1.0
          %v5586 = vadd.f32 %v5522, 1.0
          %v5587 = vadd.f32 %v5523, 1.0
          %v5588 = vadd.f32 %v5524, 1.0
          %v5589 = vadd.f32 %v5525, 1.0
          %v5590 = vadd.f32 %v5526, 1.0
          %v5591 = vadd.f32 %v5527, 1.0
          %v5592 = vadd.f32 %v5528, 1.0
          %v5593 = vadd.f32 %v5529, 1.0
          %v5594 = vadd.f32 %v5530, 1.0
          %v5595 = vadd.f32 %v5531, 1.0
          %v5596 = vadd.f32 %v5532, 1.0
          %v5597 = vadd.f32 %v5533, 1.0
          %v5598 = vadd.f32 %v5534, 1.0
          %v5599 = vadd.f32 %v5535, 1.0
          %v5600 = vadd.f32 %v5536, 1.0
          %v5601 = vadd.f32 %v5537, 1.0
          %v5602 = vadd.f32 %v5538, 1.0
          %v5603 = vadd.f32 %v5539, 1.0
          %v5604 = vadd.f32 %v5540, 1.0
          %v5605 = vadd.f32 %v5541, 1.0
          %v5606 = vadd.f32 %v5542, 1.0
          %v5607 = vadd.f32 %v5543, 1.0
          %v5608 = vadd.f32 %v5544, 1.0
          %v5609 = vadd.f32 %v5545, 1.0
          %v5610 = vadd.f32 %v5546, 1.0
          %v5611 = vadd.f32 %v5547, 1.0
          %v5612 = vadd.f32 %v5548, 1.0
          %v5613 = vadd.f32 %v5549, 1.0
          %v5614 = vadd.f32 %v5550, 1.0
          %v5615 = vadd.f32 %v5551, 1.0
          %v5616 = vadd.f32 %v5552, 1.0
          %v5617 = vadd.f32 %v5553, 1.0
          %v5618 = vadd.f32 %v5554, 1.0
          %v5619 = vadd.f32 %v5555, 1.0
          %v5620 = vadd.f32 %v5556, 1.0
          %v5621 = vadd.f32 %v5557, 1.0
          %v5622 = vadd.f32 %v5558, 1.0
          %v5623 = vadd.f32 %v5559, 1.0
          %v5624 = vadd.f32 %v5560, 1.0
          %v5625 = vadd.f32 %v5561, 1.0
          %v5626 = vadd.f32 %v5562, 1.0
          %v5627 = vadd.f32 %v5563, 1.0
          %v5628 = vadd.f32 %v5564, 1.0
          %v5629 = vadd.f32 %v5565, 1.0
          %v5630 = vadd.f32 %v5566, 1.0
          %v5631 = vadd.f32 %v5567, 1.0
          %v5632 = vadd.f32 %v5568, 1.0
          %v5633 = vadd.f32 %v5569, 1.0
          %v5634 = vadd.f32 %v5570, 1.0
          %v5635 = vadd.f32 %v5571, 1.0
          %v5636 = vadd.f32 %v5572, 1.0
          %v5637 = vadd.f32 %v5573, 1.0
          %v5638 = vadd.f32 %v5574, 1.0
          %v5639 = vadd.f32 %v5575, 1.0
          %v5640 = vadd.f32 %v5576, 1.0
          %v5641 = vadd.f32 %v5577, 1.0
          %v5642 = vmul.f32 %v4042, %v5578
          %v5643 = vmul.f32 %v4043, %v5579
          %v5644 = vmul.f32 %v4044, %v5580
          %v5645 = vmul.f32 %v4045, %v5581
          %v5646 = vmul.f32 %v4046, %v5582
          %v5647 = vmul.f32 %v4047, %v5583
          %v5648 = vmul.f32 %v4048, %v5584
          %v5649 = vmul.f32 %v4049, %v5585
          %v5650 = vmul.f32 %v4050, %v5586
          %v5651 = vmul.f32 %v4051, %v5587
          %v5652 = vmul.f32 %v4052, %v5588
          %v5653 = vmul.f32 %v4053, %v5589
          %v5654 = vmul.f32 %v4054, %v5590
          %v5655 = vmul.f32 %v4055, %v5591
          %v5656 = vmul.f32 %v4056, %v5592
          %v5657 = vmul.f32 %v4057, %v5593
          %v5658 = vmul.f32 %v4058, %v5594
          %v5659 = vmul.f32 %v4059, %v5595
          %v5660 = vmul.f32 %v4060, %v5596
          %v5661 = vmul.f32 %v4061, %v5597
          %v5662 = vmul.f32 %v4062, %v5598
          %v5663 = vmul.f32 %v4063, %v5599
          %v5664 = vmul.f32 %v4064, %v5600
          %v5665 = vmul.f32 %v4065, %v5601
          %v5666 = vmul.f32 %v4066, %v5602
          %v5667 = vmul.f32 %v4067, %v5603
          %v5668 = vmul.f32 %v4068, %v5604
          %v5669 = vmul.f32 %v4069, %v5605
          %v5670 = vmul.f32 %v4070, %v5606
          %v5671 = vmul.f32 %v4071, %v5607
          %v5672 = vmul.f32 %v4072, %v5608
          %v5673 = vmul.f32 %v4073, %v5609
          %v5674 = vmul.f32 %v4074, %v5610
          %v5675 = vmul.f32 %v4075, %v5611
          %v5676 = vmul.f32 %v4076, %v5612
          %v5677 = vmul.f32 %v4077, %v5613
          %v5678 = vmul.f32 %v4078, %v5614
          %v5679 = vmul.f32 %v4079, %v5615
          %v5680 = vmul.f32 %v4080, %v5616
          %v5681 = vmul.f32 %v4081, %v5617
          %v5682 = vmul.f32 %v4082, %v5618
          %v5683 = vmul.f32 %v4083, %v5619
          %v5684 = vmul.f32 %v4084, %v5620
          %v5685 = vmul.f32 %v4085, %v5621
          %v5686 = vmul.f32 %v4086, %v5622
          %v5687 = vmul.f32 %v4087, %v5623
          %v5688 = vmul.f32 %v4088, %v5624
          %v5689 = vmul.f32 %v4089, %v5625
          %v5690 = vmul.f32 %v4090, %v5626
          %v5691 = vmul.f32 %v4091, %v5627
          %v5692 = vmul.f32 %v4092, %v5628
          %v5693 = vmul.f32 %v4093, %v5629
          %v5694 = vmul.f32 %v4094, %v5630
          %v5695 = vmul.f32 %v4095, %v5631
          %v5696 = vmul.f32 %v4096, %v5632
          %v5697 = vmul.f32 %v4097, %v5633
          %v5698 = vmul.f32 %v4098, %v5634
          %v5699 = vmul.f32 %v4099, %v5635
          %v5700 = vmul.f32 %v4100, %v5636
          %v5701 = vmul.f32 %v4101, %v5637
          %v5702 = vmul.f32 %v4102, %v5638
          %v5703 = vmul.f32 %v4103, %v5639
          %v5704 = vmul.f32 %v4104, %v5640
          %v5705 = vmul.f32 %v4105, %v5641
          %v5706 = vadd.f32 %v3978, %v5642
          %v5707 = vadd.f32 %v3979, %v5643
          %v5708 = vadd.f32 %v3980, %v5644
          %v5709 = vadd.f32 %v3981, %v5645
          %v5710 = vadd.f32 %v3982, %v5646
          %v5711 = vadd.f32 %v3983, %v5647
          %v5712 = vadd.f32 %v3984, %v5648
          %v5713 = vadd.f32 %v3985, %v5649
          %v5714 = vadd.f32 %v3986, %v5650
          %v5715 = vadd.f32 %v3987, %v5651
          %v5716 = vadd.f32 %v3988, %v5652
          %v5717 = vadd.f32 %v3989, %v5653
          %v5718 = vadd.f32 %v3990, %v5654
          %v5719 = vadd.f32 %v3991, %v5655
          %v5720 = vadd.f32 %v3992, %v5656
          %v5721 = vadd.f32 %v3993, %v5657
          %v5722 = vadd.f32 %v3994, %v5658
          %v5723 = vadd.f32 %v3995, %v5659
          %v5724 = vadd.f32 %v3996, %v5660
          %v5725 = vadd.f32 %v3997, %v5661
          %v5726 = vadd.f32 %v3998, %v5662
          %v5727 = vadd.f32 %v3999, %v5663
          %v5728 = vadd.f32 %v4000, %v5664
          %v5729 = vadd.f32 %v4001, %v5665
          %v5730 = vadd.f32 %v4002, %v5666
          %v5731 = vadd.f32 %v4003, %v5667
          %v5732 = vadd.f32 %v4004, %v5668
          %v5733 = vadd.f32 %v4005, %v5669
          %v5734 = vadd.f32 %v4006, %v5670
          %v5735 = vadd.f32 %v4007, %v5671
          %v5736 = vadd.f32 %v4008, %v5672
          %v5737 = vadd.f32 %v4009, %v5673
          %v5738 = vadd.f32 %v4010, %v5674
          %v5739 = vadd.f32 %v4011, %v5675
          %v5740 = vadd.f32 %v4012, %v5676
          %v5741 = vadd.f32 %v4013, %v5677
          %v5742 = vadd.f32 %v4014, %v5678
          %v5743 = vadd.f32 %v4015, %v5679
          %v5744 = vadd.f32 %v4016, %v5680
          %v5745 = vadd.f32 %v4017, %v5681
          %v5746 = vadd.f32 %v4018, %v5682
          %v5747 = vadd.f32 %v4019, %v5683
          %v5748 = vadd.f32 %v4020, %v5684
          %v5749 = vadd.f32 %v4021, %v5685
          %v5750 = vadd.f32 %v4022, %v5686
          %v5751 = vadd.f32 %v4023, %v5687
          %v5752 = vadd.f32 %v4024, %v5688
          %v5753 = vadd.f32 %v4025, %v5689
          %v5754 = vadd.f32 %v4026, %v5690
          %v5755 = vadd.f32 %v4027, %v5691
          %v5756 = vadd.f32 %v4028, %v5692
          %v5757 = vadd.f32 %v4029, %v5693
          %v5758 = vadd.f32 %v4030, %v5694
          %v5759 = vadd.f32 %v4031, %v5695
          %v5760 = vadd.f32 %v4032, %v5696
          %v5761 = vadd.f32 %v4033, %v5697
          %v5762 = vadd.f32 %v4034, %v5698
          %v5763 = vadd.f32 %v4035, %v5699
          %v5764 = vadd.f32 %v4036, %v5700
          %v5765 = vadd.f32 %v4037, %v5701
          %v5766 = vadd.f32 %v4038, %v5702
          %v5767 = vadd.f32 %v4039, %v5703
          %v5768 = vadd.f32 %v4040, %v5704
          %v5769 = vadd.f32 %v4041, %v5705
          %v5770 = vmul.f32 %v3594, %v5706
          %v5771 = vmul.f32 %v3595, %v5707
          %v5772 = vmul.f32 %v3596, %v5708
          %v5773 = vmul.f32 %v3597, %v5709
          %v5774 = vmul.f32 %v3598, %v5710
          %v5775 = vmul.f32 %v3599, %v5711
          %v5776 = vmul.f32 %v3600, %v5712
          %v5777 = vmul.f32 %v3601, %v5713
          %v5778 = vmul.f32 %v3602, %v5714
          %v5779 = vmul.f32 %v3603, %v5715
          %v5780 = vmul.f32 %v3604, %v5716
          %v5781 = vmul.f32 %v3605, %v5717
          %v5782 = vmul.f32 %v3606, %v5718
          %v5783 = vmul.f32 %v3607, %v5719
          %v5784 = vmul.f32 %v3608, %v5720
          %v5785 = vmul.f32 %v3609, %v5721
          %v5786 = vmul.f32 %v3610, %v5722
          %v5787 = vmul.f32 %v3611, %v5723
          %v5788 = vmul.f32 %v3612, %v5724
          %v5789 = vmul.f32 %v3613, %v5725
          %v5790 = vmul.f32 %v3614, %v5726
          %v5791 = vmul.f32 %v3615, %v5727
          %v5792 = vmul.f32 %v3616, %v5728
          %v5793 = vmul.f32 %v3617, %v5729
          %v5794 = vmul.f32 %v3618, %v5730
          %v5795 = vmul.f32 %v3619, %v5731
          %v5796 = vmul.f32 %v3620, %v5732
          %v5797 = vmul.f32 %v3621, %v5733
          %v5798 = vmul.f32 %v3622, %v5734
          %v5799 = vmul.f32 %v3623, %v5735
          %v5800 = vmul.f32 %v3624, %v5736
          %v5801 = vmul.f32 %v3625, %v5737
          %v5802 = vmul.f32 %v3626, %v5738
          %v5803 = vmul.f32 %v3627, %v5739
          %v5804 = vmul.f32 %v3628, %v5740
          %v5805 = vmul.f32 %v3629, %v5741
          %v5806 = vmul.f32 %v3630, %v5742
          %v5807 = vmul.f32 %v3631, %v5743
          %v5808 = vmul.f32 %v3632, %v5744
          %v5809 = vmul.f32 %v3633, %v5745
          %v5810 = vmul.f32 %v3634, %v5746
          %v5811 = vmul.f32 %v3635, %v5747
          %v5812 = vmul.f32 %v3636, %v5748
          %v5813 = vmul.f32 %v3637, %v5749
          %v5814 = vmul.f32 %v3638, %v5750
          %v5815 = vmul.f32 %v3639, %v5751
          %v5816 = vmul.f32 %v3640, %v5752
          %v5817 = vmul.f32 %v3641, %v5753
          %v5818 = vmul.f32 %v3642, %v5754
          %v5819 = vmul.f32 %v3643, %v5755
          %v5820 = vmul.f32 %v3644, %v5756
          %v5821 = vmul.f32 %v3645, %v5757
          %v5822 = vmul.f32 %v3646, %v5758
          %v5823 = vmul.f32 %v3647, %v5759
          %v5824 = vmul.f32 %v3648, %v5760
          %v5825 = vmul.f32 %v3649, %v5761
          %v5826 = vmul.f32 %v3650, %v5762
          %v5827 = vmul.f32 %v3651, %v5763
          %v5828 = vmul.f32 %v3652, %v5764
          %v5829 = vmul.f32 %v3653, %v5765
          %v5830 = vmul.f32 %v3654, %v5766
          %v5831 = vmul.f32 %v3655, %v5767
          %v5832 = vmul.f32 %v3656, %v5768
          %v5833 = vmul.f32 %v3657, %v5769
          %v5834 = vmax.f32 %v2634, 0.0
          %v5835 = vmax.f32 %v2635, 0.0
          %v5836 = vmax.f32 %v2636, 0.0
          %v5837 = vmax.f32 %v2637, 0.0
          %v5838 = vmax.f32 %v2638, 0.0
          %v5839 = vmax.f32 %v2639, 0.0
          %v5840 = vmax.f32 %v2640, 0.0
          %v5841 = vmax.f32 %v2641, 0.0
          %v5842 = vmax.f32 %v2642, 0.0
          %v5843 = vmax.f32 %v2643, 0.0
          %v5844 = vmax.f32 %v2644, 0.0
          %v5845 = vmax.f32 %v2645, 0.0
          %v5846 = vmax.f32 %v2646, 0.0
          %v5847 = vmax.f32 %v2647, 0.0
          %v5848 = vmax.f32 %v2648, 0.0
          %v5849 = vmax.f32 %v2649, 0.0
          %v5850 = vmax.f32 %v2650, 0.0
          %v5851 = vmax.f32 %v2651, 0.0
          %v5852 = vmax.f32 %v2652, 0.0
          %v5853 = vmax.f32 %v2653, 0.0
          %v5854 = vmax.f32 %v2654, 0.0
          %v5855 = vmax.f32 %v2655, 0.0
          %v5856 = vmax.f32 %v2656, 0.0
          %v5857 = vmax.f32 %v2657, 0.0
          %v5858 = vmax.f32 %v2658, 0.0
          %v5859 = vmax.f32 %v2659, 0.0
          %v5860 = vmax.f32 %v2660, 0.0
          %v5861 = vmax.f32 %v2661, 0.0
          %v5862 = vmax.f32 %v2662, 0.0
          %v5863 = vmax.f32 %v2663, 0.0
          %v5864 = vmax.f32 %v2664, 0.0
          %v5865 = vmax.f32 %v2665, 0.0
          %v5866 = vmax.f32 %v2666, 0.0
          %v5867 = vmax.f32 %v2667, 0.0
          %v5868 = vmax.f32 %v2668, 0.0
          %v5869 = vmax.f32 %v2669, 0.0
          %v5870 = vmax.f32 %v2670, 0.0
          %v5871 = vmax.f32 %v2671, 0.0
          %v5872 = vmax.f32 %v2672, 0.0
          %v5873 = vmax.f32 %v2673, 0.0
          %v5874 = vmax.f32 %v2674, 0.0
          %v5875 = vmax.f32 %v2675, 0.0
          %v5876 = vmax.f32 %v2676, 0.0
          %v5877 = vmax.f32 %v2677, 0.0
          %v5878 = vmax.f32 %v2678, 0.0
          %v5879 = vmax.f32 %v2679, 0.0
          %v5880 = vmax.f32 %v2680, 0.0
          %v5881 = vmax.f32 %v2681, 0.0
          %v5882 = vmax.f32 %v2682, 0.0
          %v5883 = vmax.f32 %v2683, 0.0
          %v5884 = vmax.f32 %v2684, 0.0
          %v5885 = vmax.f32 %v2685, 0.0
          %v5886 = vmax.f32 %v2686, 0.0
          %v5887 = vmax.f32 %v2687, 0.0
          %v5888 = vmax.f32 %v2688, 0.0
          %v5889 = vmax.f32 %v2689, 0.0
          %v5890 = vmax.f32 %v2690, 0.0
          %v5891 = vmax.f32 %v2691, 0.0
          %v5892 = vmax.f32 %v2692, 0.0
          %v5893 = vmax.f32 %v2693, 0.0
          %v5894 = vmax.f32 %v2694, 0.0
          %v5895 = vmax.f32 %v2695, 0.0
          %v5896 = vmax.f32 %v2696, 0.0
          %v5897 = vmax.f32 %v2697, 0.0
          %v5898 = vsel %vm2826, %v5834, %v5770
          %v5899 = vsel %vm2827, %v5835, %v5771
          %v5900 = vsel %vm2828, %v5836, %v5772
          %v5901 = vsel %vm2829, %v5837, %v5773
          %v5902 = vsel %vm2830, %v5838, %v5774
          %v5903 = vsel %vm2831, %v5839, %v5775
          %v5904 = vsel %vm2832, %v5840, %v5776
          %v5905 = vsel %vm2833, %v5841, %v5777
          %v5906 = vsel %vm2834, %v5842, %v5778
          %v5907 = vsel %vm2835, %v5843, %v5779
          %v5908 = vsel %vm2836, %v5844, %v5780
          %v5909 = vsel %vm2837, %v5845, %v5781
          %v5910 = vsel %vm2838, %v5846, %v5782
          %v5911 = vsel %vm2839, %v5847, %v5783
          %v5912 = vsel %vm2840, %v5848, %v5784
          %v5913 = vsel %vm2841, %v5849, %v5785
          %v5914 = vsel %vm2842, %v5850, %v5786
          %v5915 = vsel %vm2843, %v5851, %v5787
          %v5916 = vsel %vm2844, %v5852, %v5788
          %v5917 = vsel %vm2845, %v5853, %v5789
          %v5918 = vsel %vm2846, %v5854, %v5790
          %v5919 = vsel %vm2847, %v5855, %v5791
          %v5920 = vsel %vm2848, %v5856, %v5792
          %v5921 = vsel %vm2849, %v5857, %v5793
          %v5922 = vsel %vm2850, %v5858, %v5794
          %v5923 = vsel %vm2851, %v5859, %v5795
          %v5924 = vsel %vm2852, %v5860, %v5796
          %v5925 = vsel %vm2853, %v5861, %v5797
          %v5926 = vsel %vm2854, %v5862, %v5798
          %v5927 = vsel %vm2855, %v5863, %v5799
          %v5928 = vsel %vm2856, %v5864, %v5800
          %v5929 = vsel %vm2857, %v5865, %v5801
          %v5930 = vsel %vm2858, %v5866, %v5802
          %v5931 = vsel %vm2859, %v5867, %v5803
          %v5932 = vsel %vm2860, %v5868, %v5804
          %v5933 = vsel %vm2861, %v5869, %v5805
          %v5934 = vsel %vm2862, %v5870, %v5806
          %v5935 = vsel %vm2863, %v5871, %v5807
          %v5936 = vsel %vm2864, %v5872, %v5808
          %v5937 = vsel %vm2865, %v5873, %v5809
          %v5938 = vsel %vm2866, %v5874, %v5810
          %v5939 = vsel %vm2867, %v5875, %v5811
          %v5940 = vsel %vm2868, %v5876, %v5812
          %v5941 = vsel %vm2869, %v5877, %v5813
          %v5942 = vsel %vm2870, %v5878, %v5814
          %v5943 = vsel %vm2871, %v5879, %v5815
          %v5944 = vsel %vm2872, %v5880, %v5816
          %v5945 = vsel %vm2873, %v5881, %v5817
          %v5946 = vsel %vm2874, %v5882, %v5818
          %v5947 = vsel %vm2875, %v5883, %v5819
          %v5948 = vsel %vm2876, %v5884, %v5820
          %v5949 = vsel %vm2877, %v5885, %v5821
          %v5950 = vsel %vm2878, %v5886, %v5822
          %v5951 = vsel %vm2879, %v5887, %v5823
          %v5952 = vsel %vm2880, %v5888, %v5824
          %v5953 = vsel %vm2881, %v5889, %v5825
          %v5954 = vsel %vm2882, %v5890, %v5826
          %v5955 = vsel %vm2883, %v5891, %v5827
          %v5956 = vsel %vm2884, %v5892, %v5828
          %v5957 = vsel %vm2885, %v5893, %v5829
          %v5958 = vsel %vm2886, %v5894, %v5830
          %v5959 = vsel %vm2887, %v5895, %v5831
          %v5960 = vsel %vm2888, %v5896, %v5832
          %v5961 = vsel %vm2889, %v5897, %v5833
          %v5962 = vld [vmem:[%s580] sm:$0xff]
          %v5963 = vld [vmem:[%s580 + $0x8] sm:$0xff]
          %v5964 = vld [vmem:[%s580 + $0x10] sm:$0xff]
          %v5965 = vld [vmem:[%s580 + $0x18] sm:$0xff]
          %v5966 = vld [vmem:[%s580 + $0x20] sm:$0xff]
          %v5967 = vld [vmem:[%s580 + $0x28] sm:$0xff]
          %v5968 = vld [vmem:[%s580 + $0x30] sm:$0xff]
          %v5969 = vld [vmem:[%s580 + $0x38] sm:$0xff]
          %v5970 = vld [vmem:[%s580 + $0x40] sm:$0xff]
          %v5971 = vld [vmem:[%s580 + $0x48] sm:$0xff]
          %v5972 = vld [vmem:[%s580 + $0x50] sm:$0xff]
          %v5973 = vld [vmem:[%s580 + $0x58] sm:$0xff]
          %v5974 = vld [vmem:[%s580 + $0x60] sm:$0xff]
          %v5975 = vld [vmem:[%s580 + $0x68] sm:$0xff]
          %v5976 = vld [vmem:[%s580 + $0x70] sm:$0xff]
          %v5977 = vld [vmem:[%s580 + $0x78] sm:$0xff]
          %v5978 = vld [vmem:[%s580 + $0x80] sm:$0xff]
          %v5979 = vld [vmem:[%s580 + $0x88] sm:$0xff]
          %v5980 = vld [vmem:[%s580 + $0x90] sm:$0xff]
          %v5981 = vld [vmem:[%s580 + $0x98] sm:$0xff]
          %v5982 = vld [vmem:[%s580 + $0xa0] sm:$0xff]
          %v5983 = vld [vmem:[%s580 + $0xa8] sm:$0xff]
          %v5984 = vld [vmem:[%s580 + $0xb0] sm:$0xff]
          %v5985 = vld [vmem:[%s580 + $0xb8] sm:$0xff]
          %v5986 = vld [vmem:[%s580 + $0xc0] sm:$0xff]
          %v5987 = vld [vmem:[%s580 + $0xc8] sm:$0xff]
          %v5988 = vld [vmem:[%s580 + $0xd0] sm:$0xff]
          %v5989 = vld [vmem:[%s580 + $0xd8] sm:$0xff]
          %v5990 = vld [vmem:[%s580 + $0xe0] sm:$0xff]
          %v5991 = vld [vmem:[%s580 + $0xe8] sm:$0xff]
          %v5992 = vld [vmem:[%s580 + $0xf0] sm:$0xff]
          %v5993 = vld [vmem:[%s580 + $0xf8] sm:$0xff]
          %v5994 = vld [vmem:[%s5] sm:$0xff]
          %v5995 = vld [vmem:[%s5 + $0x8] sm:$0xff]
          %v5996 = vld [vmem:[%s5 + $0x10] sm:$0xff]
          %v5997 = vld [vmem:[%s5 + $0x18] sm:$0xff]
          %v5998 = vld [vmem:[%s5 + $0x20] sm:$0xff]
          %v5999 = vld [vmem:[%s5 + $0x28] sm:$0xff]
          %v6000 = vld [vmem:[%s5 + $0x30] sm:$0xff]
          %v6001 = vld [vmem:[%s5 + $0x38] sm:$0xff]
          %v6002 = vld [vmem:[%s5 + $0x40] sm:$0xff]
          %v6003 = vld [vmem:[%s5 + $0x48] sm:$0xff]
          %v6004 = vld [vmem:[%s5 + $0x50] sm:$0xff]
          %v6005 = vld [vmem:[%s5 + $0x58] sm:$0xff]
          %v6006 = vld [vmem:[%s5 + $0x60] sm:$0xff]
          %v6007 = vld [vmem:[%s5 + $0x68] sm:$0xff]
          %v6008 = vld [vmem:[%s5 + $0x70] sm:$0xff]
          %v6009 = vld [vmem:[%s5 + $0x78] sm:$0xff]
          %v6010 = vld [vmem:[%s5 + $0x80] sm:$0xff]
          %v6011 = vld [vmem:[%s5 + $0x88] sm:$0xff]
          %v6012 = vld [vmem:[%s5 + $0x90] sm:$0xff]
          %v6013 = vld [vmem:[%s5 + $0x98] sm:$0xff]
          %v6014 = vld [vmem:[%s5 + $0xa0] sm:$0xff]
          %v6015 = vld [vmem:[%s5 + $0xa8] sm:$0xff]
          %v6016 = vld [vmem:[%s5 + $0xb0] sm:$0xff]
          %v6017 = vld [vmem:[%s5 + $0xb8] sm:$0xff]
          %v6018 = vld [vmem:[%s5 + $0xc0] sm:$0xff]
          %v6019 = vld [vmem:[%s5 + $0xc8] sm:$0xff]
          %v6020 = vld [vmem:[%s5 + $0xd0] sm:$0xff]
          %v6021 = vld [vmem:[%s5 + $0xd8] sm:$0xff]
          %v6022 = vld [vmem:[%s5 + $0xe0] sm:$0xff]
          %v6023 = vld [vmem:[%s5 + $0xe8] sm:$0xff]
          %v6024 = vld [vmem:[%s5 + $0xf0] sm:$0xff]
          %v6025 = vld [vmem:[%s5 + $0xf8] sm:$0xff]
          %6026 = vmatpush.msra.mxu0 %v6024
          %6027 = vmatpush.msra.mxu0 %v6022
          %6028 = vmatpush.msra.mxu0 %v6020
          %6029 = vmatpush.msra.mxu0 %v6018
          %6030 = vmatpush.msra.mxu0 %v6016
          %6031 = vmatpush.msra.mxu0 %v6014
          %6032 = vmatpush.msra.mxu0 %v6012
          %6033 = vmatpush.msra.mxu0 %v6010
          %6034 = vmatpush.msra.mxu0 %v6008
          %6035 = vmatpush.msra.mxu0 %v6006
          %6036 = vmatpush.msra.mxu0 %v6004
          %6037 = vmatpush.msra.mxu0 %v6002
          %6038 = vmatpush.msra.mxu0 %v6000
          %6039 = vmatpush.msra.mxu0 %v5998
          %6040 = vmatpush.msra.mxu0 %v5996
          %6041 = vmatpush.msra.mxu0 %v5994
          %6042 = vmatmul.f32.gmra.mxu0 %v5962
          %v6043 = vpop.f32.mrf.mxu0
          %v6044 = vadd.f32 0.0, %v6043
          %6045 = vmatmul.f32.gmra.mxu0 %v5963
          %v6046 = vpop.f32.mrf.mxu0
          %v6047 = vadd.f32 0.0, %v6046
          %6048 = vmatmul.f32.gmra.mxu0 %v5964
          %v6049 = vpop.f32.mrf.mxu0
          %v6050 = vadd.f32 0.0, %v6049
          %6051 = vmatmul.f32.gmra.mxu0 %v5965
          %v6052 = vpop.f32.mrf.mxu0
          %v6053 = vadd.f32 0.0, %v6052
          %6054 = vmatmul.f32.gmra.mxu0 %v5966
          %v6055 = vpop.f32.mrf.mxu0
          %v6056 = vadd.f32 0.0, %v6055
          %6057 = vmatmul.f32.gmra.mxu0 %v5967
          %v6058 = vpop.f32.mrf.mxu0
          %v6059 = vadd.f32 0.0, %v6058
          %6060 = vmatmul.f32.gmra.mxu0 %v5968
          %v6061 = vpop.f32.mrf.mxu0
          %v6062 = vadd.f32 0.0, %v6061
          %6063 = vmatmul.f32.gmra.mxu0 %v5969
          %v6064 = vpop.f32.mrf.mxu0
          %v6065 = vadd.f32 0.0, %v6064
          %6066 = vmatmul.f32.gmra.mxu0 %v5970
          %v6067 = vpop.f32.mrf.mxu0
          %v6068 = vadd.f32 0.0, %v6067
          %6069 = vmatmul.f32.gmra.mxu0 %v5971
          %v6070 = vpop.f32.mrf.mxu0
          %v6071 = vadd.f32 0.0, %v6070
          %6072 = vmatmul.f32.gmra.mxu0 %v5972
          %v6073 = vpop.f32.mrf.mxu0
          %v6074 = vadd.f32 0.0, %v6073
          %6075 = vmatmul.f32.gmra.mxu0 %v5973
          %v6076 = vpop.f32.mrf.mxu0
          %v6077 = vadd.f32 0.0, %v6076
          %6078 = vmatmul.f32.gmra.mxu0 %v5974
          %v6079 = vpop.f32.mrf.mxu0
          %v6080 = vadd.f32 0.0, %v6079
          %6081 = vmatmul.f32.gmra.mxu0 %v5975
          %v6082 = vpop.f32.mrf.mxu0
          %v6083 = vadd.f32 0.0, %v6082
          %6084 = vmatmul.f32.gmra.mxu0 %v5976
          %v6085 = vpop.f32.mrf.mxu0
          %v6086 = vadd.f32 0.0, %v6085
          %6087 = vmatmul.f32.gmra.mxu0 %v5977
          %v6088 = vpop.f32.mrf.mxu0
          %v6089 = vadd.f32 0.0, %v6088
          %6090 = vmatmul.f32.gmra.mxu0 %v5978
          %v6091 = vpop.f32.mrf.mxu0
          %v6092 = vadd.f32 0.0, %v6091
          %6093 = vmatmul.f32.gmra.mxu0 %v5979
          %v6094 = vpop.f32.mrf.mxu0
          %v6095 = vadd.f32 0.0, %v6094
          %6096 = vmatmul.f32.gmra.mxu0 %v5980
          %v6097 = vpop.f32.mrf.mxu0
          %v6098 = vadd.f32 0.0, %v6097
          %6099 = vmatmul.f32.gmra.mxu0 %v5981
          %v6100 = vpop.f32.mrf.mxu0
          %v6101 = vadd.f32 0.0, %v6100
          %6102 = vmatmul.f32.gmra.mxu0 %v5982
          %v6103 = vpop.f32.mrf.mxu0
          %v6104 = vadd.f32 0.0, %v6103
          %6105 = vmatmul.f32.gmra.mxu0 %v5983
          %v6106 = vpop.f32.mrf.mxu0
          %v6107 = vadd.f32 0.0, %v6106
          %6108 = vmatmul.f32.gmra.mxu0 %v5984
          %v6109 = vpop.f32.mrf.mxu0
          %v6110 = vadd.f32 0.0, %v6109
          %6111 = vmatmul.f32.gmra.mxu0 %v5985
          %v6112 = vpop.f32.mrf.mxu0
          %v6113 = vadd.f32 0.0, %v6112
          %6114 = vmatmul.f32.gmra.mxu0 %v5986
          %v6115 = vpop.f32.mrf.mxu0
          %v6116 = vadd.f32 0.0, %v6115
          %6117 = vmatmul.f32.gmra.mxu0 %v5987
          %v6118 = vpop.f32.mrf.mxu0
          %v6119 = vadd.f32 0.0, %v6118
          %6120 = vmatmul.f32.gmra.mxu0 %v5988
          %v6121 = vpop.f32.mrf.mxu0
          %v6122 = vadd.f32 0.0, %v6121
          %6123 = vmatmul.f32.gmra.mxu0 %v5989
          %v6124 = vpop.f32.mrf.mxu0
          %v6125 = vadd.f32 0.0, %v6124
          %6126 = vmatmul.f32.gmra.mxu0 %v5990
          %v6127 = vpop.f32.mrf.mxu0
          %v6128 = vadd.f32 0.0, %v6127
          %6129 = vmatmul.f32.gmra.mxu0 %v5991
          %v6130 = vpop.f32.mrf.mxu0
          %v6131 = vadd.f32 0.0, %v6130
          %6132 = vmatmul.f32.gmra.mxu0 %v5992
          %v6133 = vpop.f32.mrf.mxu0
          %v6134 = vadd.f32 0.0, %v6133
          %6135 = vmatmul.f32.gmra.mxu0 %v5993
          %v6136 = vpop.f32.mrf.mxu0
          %v6137 = vadd.f32 0.0, %v6136
          %6138 = vdwg.mxu0
          %6139 = vmatpush.msra.mxu0 %v6025
          %6140 = vmatpush.msra.mxu0 %v6023
          %6141 = vmatpush.msra.mxu0 %v6021
          %6142 = vmatpush.msra.mxu0 %v6019
          %6143 = vmatpush.msra.mxu0 %v6017
          %6144 = vmatpush.msra.mxu0 %v6015
          %6145 = vmatpush.msra.mxu0 %v6013
          %6146 = vmatpush.msra.mxu0 %v6011
          %6147 = vmatpush.msra.mxu0 %v6009
          %6148 = vmatpush.msra.mxu0 %v6007
          %6149 = vmatpush.msra.mxu0 %v6005
          %6150 = vmatpush.msra.mxu0 %v6003
          %6151 = vmatpush.msra.mxu0 %v6001
          %6152 = vmatpush.msra.mxu0 %v5999
          %6153 = vmatpush.msra.mxu0 %v5997
          %6154 = vmatpush.msra.mxu0 %v5995
          %6155 = vmatmul.f32.gmra.mxu0 %v5962
          %v6156 = vpop.f32.mrf.mxu0
          %v6157 = vadd.f32 0.0, %v6156
          %6158 = vmatmul.f32.gmra.mxu0 %v5963
          %v6159 = vpop.f32.mrf.mxu0
          %v6160 = vadd.f32 0.0, %v6159
          %6161 = vmatmul.f32.gmra.mxu0 %v5964
          %v6162 = vpop.f32.mrf.mxu0
          %v6163 = vadd.f32 0.0, %v6162
          %6164 = vmatmul.f32.gmra.mxu0 %v5965
          %v6165 = vpop.f32.mrf.mxu0
          %v6166 = vadd.f32 0.0, %v6165
          %6167 = vmatmul.f32.gmra.mxu0 %v5966
          %v6168 = vpop.f32.mrf.mxu0
          %v6169 = vadd.f32 0.0, %v6168
          %6170 = vmatmul.f32.gmra.mxu0 %v5967
          %v6171 = vpop.f32.mrf.mxu0
          %v6172 = vadd.f32 0.0, %v6171
          %6173 = vmatmul.f32.gmra.mxu0 %v5968
          %v6174 = vpop.f32.mrf.mxu0
          %v6175 = vadd.f32 0.0, %v6174
          %6176 = vmatmul.f32.gmra.mxu0 %v5969
          %v6177 = vpop.f32.mrf.mxu0
          %v6178 = vadd.f32 0.0, %v6177
          %6179 = vmatmul.f32.gmra.mxu0 %v5970
          %v6180 = vpop.f32.mrf.mxu0
          %v6181 = vadd.f32 0.0, %v6180
          %6182 = vmatmul.f32.gmra.mxu0 %v5971
          %v6183 = vpop.f32.mrf.mxu0
          %v6184 = vadd.f32 0.0, %v6183
          %6185 = vmatmul.f32.gmra.mxu0 %v5972
          %v6186 = vpop.f32.mrf.mxu0
          %v6187 = vadd.f32 0.0, %v6186
          %6188 = vmatmul.f32.gmra.mxu0 %v5973
          %v6189 = vpop.f32.mrf.mxu0
          %v6190 = vadd.f32 0.0, %v6189
          %6191 = vmatmul.f32.gmra.mxu0 %v5974
          %v6192 = vpop.f32.mrf.mxu0
          %v6193 = vadd.f32 0.0, %v6192
          %6194 = vmatmul.f32.gmra.mxu0 %v5975
          %v6195 = vpop.f32.mrf.mxu0
          %v6196 = vadd.f32 0.0, %v6195
          %6197 = vmatmul.f32.gmra.mxu0 %v5976
          %v6198 = vpop.f32.mrf.mxu0
          %v6199 = vadd.f32 0.0, %v6198
          %6200 = vmatmul.f32.gmra.mxu0 %v5977
          %v6201 = vpop.f32.mrf.mxu0
          %v6202 = vadd.f32 0.0, %v6201
          %6203 = vmatmul.f32.gmra.mxu0 %v5978
          %v6204 = vpop.f32.mrf.mxu0
          %v6205 = vadd.f32 0.0, %v6204
          %6206 = vmatmul.f32.gmra.mxu0 %v5979
          %v6207 = vpop.f32.mrf.mxu0
          %v6208 = vadd.f32 0.0, %v6207
          %6209 = vmatmul.f32.gmra.mxu0 %v5980
          %v6210 = vpop.f32.mrf.mxu0
          %v6211 = vadd.f32 0.0, %v6210
          %6212 = vmatmul.f32.gmra.mxu0 %v5981
          %v6213 = vpop.f32.mrf.mxu0
          %v6214 = vadd.f32 0.0, %v6213
          %6215 = vmatmul.f32.gmra.mxu0 %v5982
          %v6216 = vpop.f32.mrf.mxu0
          %v6217 = vadd.f32 0.0, %v6216
          %6218 = vmatmul.f32.gmra.mxu0 %v5983
          %v6219 = vpop.f32.mrf.mxu0
          %v6220 = vadd.f32 0.0, %v6219
          %6221 = vmatmul.f32.gmra.mxu0 %v5984
          %v6222 = vpop.f32.mrf.mxu0
          %v6223 = vadd.f32 0.0, %v6222
          %6224 = vmatmul.f32.gmra.mxu0 %v5985
          %v6225 = vpop.f32.mrf.mxu0
          %v6226 = vadd.f32 0.0, %v6225
          %6227 = vmatmul.f32.gmra.mxu0 %v5986
          %v6228 = vpop.f32.mrf.mxu0
          %v6229 = vadd.f32 0.0, %v6228
          %6230 = vmatmul.f32.gmra.mxu0 %v5987
          %v6231 = vpop.f32.mrf.mxu0
          %v6232 = vadd.f32 0.0, %v6231
          %6233 = vmatmul.f32.gmra.mxu0 %v5988
          %v6234 = vpop.f32.mrf.mxu0
          %v6235 = vadd.f32 0.0, %v6234
          %6236 = vmatmul.f32.gmra.mxu0 %v5989
          %v6237 = vpop.f32.mrf.mxu0
          %v6238 = vadd.f32 0.0, %v6237
          %6239 = vmatmul.f32.gmra.mxu0 %v5990
          %v6240 = vpop.f32.mrf.mxu0
          %v6241 = vadd.f32 0.0, %v6240
          %6242 = vmatmul.f32.gmra.mxu0 %v5991
          %v6243 = vpop.f32.mrf.mxu0
          %v6244 = vadd.f32 0.0, %v6243
          %6245 = vmatmul.f32.gmra.mxu0 %v5992
          %v6246 = vpop.f32.mrf.mxu0
          %v6247 = vadd.f32 0.0, %v6246
          %6248 = vmatmul.f32.gmra.mxu0 %v5993
          %v6249 = vpop.f32.mrf.mxu0
          %v6250 = vadd.f32 0.0, %v6249
          %6251 = vdwg.mxu0
          %v6252 = vmul.f32 %v5898, %v6044
          %v6253 = vmul.f32 %v5899, %v6157
          %v6254 = vmul.f32 %v5900, %v6047
          %v6255 = vmul.f32 %v5901, %v6160
          %v6256 = vmul.f32 %v5902, %v6050
          %v6257 = vmul.f32 %v5903, %v6163
          %v6258 = vmul.f32 %v5904, %v6053
          %v6259 = vmul.f32 %v5905, %v6166
          %v6260 = vmul.f32 %v5906, %v6056
          %v6261 = vmul.f32 %v5907, %v6169
          %v6262 = vmul.f32 %v5908, %v6059
          %v6263 = vmul.f32 %v5909, %v6172
          %v6264 = vmul.f32 %v5910, %v6062
          %v6265 = vmul.f32 %v5911, %v6175
          %v6266 = vmul.f32 %v5912, %v6065
          %v6267 = vmul.f32 %v5913, %v6178
          %v6268 = vmul.f32 %v5914, %v6068
          %v6269 = vmul.f32 %v5915, %v6181
          %v6270 = vmul.f32 %v5916, %v6071
          %v6271 = vmul.f32 %v5917, %v6184
          %v6272 = vmul.f32 %v5918, %v6074
          %v6273 = vmul.f32 %v5919, %v6187
          %v6274 = vmul.f32 %v5920, %v6077
          %v6275 = vmul.f32 %v5921, %v6190
          %v6276 = vmul.f32 %v5922, %v6080
          %v6277 = vmul.f32 %v5923, %v6193
          %v6278 = vmul.f32 %v5924, %v6083
          %v6279 = vmul.f32 %v5925, %v6196
          %v6280 = vmul.f32 %v5926, %v6086
          %v6281 = vmul.f32 %v5927, %v6199
          %v6282 = vmul.f32 %v5928, %v6089
          %v6283 = vmul.f32 %v5929, %v6202
          %v6284 = vmul.f32 %v5930, %v6092
          %v6285 = vmul.f32 %v5931, %v6205
          %v6286 = vmul.f32 %v5932, %v6095
          %v6287 = vmul.f32 %v5933, %v6208
          %v6288 = vmul.f32 %v5934, %v6098
          %v6289 = vmul.f32 %v5935, %v6211
          %v6290 = vmul.f32 %v5936, %v6101
          %v6291 = vmul.f32 %v5937, %v6214
          %v6292 = vmul.f32 %v5938, %v6104
          %v6293 = vmul.f32 %v5939, %v6217
          %v6294 = vmul.f32 %v5940, %v6107
          %v6295 = vmul.f32 %v5941, %v6220
          %v6296 = vmul.f32 %v5942, %v6110
          %v6297 = vmul.f32 %v5943, %v6223
          %v6298 = vmul.f32 %v5944, %v6113
          %v6299 = vmul.f32 %v5945, %v6226
          %v6300 = vmul.f32 %v5946, %v6116
          %v6301 = vmul.f32 %v5947, %v6229
          %v6302 = vmul.f32 %v5948, %v6119
          %v6303 = vmul.f32 %v5949, %v6232
          %v6304 = vmul.f32 %v5950, %v6122
          %v6305 = vmul.f32 %v5951, %v6235
          %v6306 = vmul.f32 %v5952, %v6125
          %v6307 = vmul.f32 %v5953, %v6238
          %v6308 = vmul.f32 %v5954, %v6128
          %v6309 = vmul.f32 %v5955, %v6241
          %v6310 = vmul.f32 %v5956, %v6131
          %v6311 = vmul.f32 %v5957, %v6244
          %v6312 = vmul.f32 %v5958, %v6134
          %v6313 = vmul.f32 %v5959, %v6247
          %v6314 = vmul.f32 %v5960, %v6137
          %v6315 = vmul.f32 %v5961, %v6250
          %v6316 = vld [vmem:[%s6] sm:$0xff]
          %v6317 = vld [vmem:[%s6 + $0x8] sm:$0xff]
          %v6318 = vld [vmem:[%s6 + $0x10] sm:$0xff]
          %v6319 = vld [vmem:[%s6 + $0x18] sm:$0xff]
          %v6320 = vld [vmem:[%s6 + $0x20] sm:$0xff]
          %v6321 = vld [vmem:[%s6 + $0x28] sm:$0xff]
          %v6322 = vld [vmem:[%s6 + $0x30] sm:$0xff]
          %v6323 = vld [vmem:[%s6 + $0x38] sm:$0xff]
          %v6324 = vld [vmem:[%s6 + $0x40] sm:$0xff]
          %v6325 = vld [vmem:[%s6 + $0x48] sm:$0xff]
          %v6326 = vld [vmem:[%s6 + $0x50] sm:$0xff]
          %v6327 = vld [vmem:[%s6 + $0x58] sm:$0xff]
          %v6328 = vld [vmem:[%s6 + $0x60] sm:$0xff]
          %v6329 = vld [vmem:[%s6 + $0x68] sm:$0xff]
          %v6330 = vld [vmem:[%s6 + $0x70] sm:$0xff]
          %v6331 = vld [vmem:[%s6 + $0x78] sm:$0xff]
          %v6332 = vld [vmem:[%s6 + $0x80] sm:$0xff]
          %v6333 = vld [vmem:[%s6 + $0x88] sm:$0xff]
          %v6334 = vld [vmem:[%s6 + $0x90] sm:$0xff]
          %v6335 = vld [vmem:[%s6 + $0x98] sm:$0xff]
          %v6336 = vld [vmem:[%s6 + $0xa0] sm:$0xff]
          %v6337 = vld [vmem:[%s6 + $0xa8] sm:$0xff]
          %v6338 = vld [vmem:[%s6 + $0xb0] sm:$0xff]
          %v6339 = vld [vmem:[%s6 + $0xb8] sm:$0xff]
          %v6340 = vld [vmem:[%s6 + $0xc0] sm:$0xff]
          %v6341 = vld [vmem:[%s6 + $0xc8] sm:$0xff]
          %v6342 = vld [vmem:[%s6 + $0xd0] sm:$0xff]
          %v6343 = vld [vmem:[%s6 + $0xd8] sm:$0xff]
          %v6344 = vld [vmem:[%s6 + $0xe0] sm:$0xff]
          %v6345 = vld [vmem:[%s6 + $0xe8] sm:$0xff]
          %v6346 = vld [vmem:[%s6 + $0xf0] sm:$0xff]
          %v6347 = vld [vmem:[%s6 + $0xf8] sm:$0xff]
          %6348 = vmatpush.msra.mxu0 %v6331
          %6349 = vmatpush.msra.mxu0 %v6330
          %6350 = vmatpush.msra.mxu0 %v6329
          %6351 = vmatpush.msra.mxu0 %v6328
          %6352 = vmatpush.msra.mxu0 %v6327
          %6353 = vmatpush.msra.mxu0 %v6326
          %6354 = vmatpush.msra.mxu0 %v6325
          %6355 = vmatpush.msra.mxu0 %v6324
          %6356 = vmatpush.msra.mxu0 %v6323
          %6357 = vmatpush.msra.mxu0 %v6322
          %6358 = vmatpush.msra.mxu0 %v6321
          %6359 = vmatpush.msra.mxu0 %v6320
          %6360 = vmatpush.msra.mxu0 %v6319
          %6361 = vmatpush.msra.mxu0 %v6318
          %6362 = vmatpush.msra.mxu0 %v6317
          %6363 = vmatpush.msra.mxu0 %v6316
          %6364 = vmatmul.f32.gmra.mxu0 %v6252
          %v6365 = vpop.f32.mrf.mxu0
          %v6366 = vadd.f32 0.0, %v6365
          %6367 = vmatmul.f32.gmra.mxu0 %v6254
          %v6368 = vpop.f32.mrf.mxu0
          %v6369 = vadd.f32 0.0, %v6368
          %6370 = vmatmul.f32.gmra.mxu0 %v6256
          %v6371 = vpop.f32.mrf.mxu0
          %v6372 = vadd.f32 0.0, %v6371
          %6373 = vmatmul.f32.gmra.mxu0 %v6258
          %v6374 = vpop.f32.mrf.mxu0
          %v6375 = vadd.f32 0.0, %v6374
          %6376 = vmatmul.f32.gmra.mxu0 %v6260
          %v6377 = vpop.f32.mrf.mxu0
          %v6378 = vadd.f32 0.0, %v6377
          %6379 = vmatmul.f32.gmra.mxu0 %v6262
          %v6380 = vpop.f32.mrf.mxu0
          %v6381 = vadd.f32 0.0, %v6380
          %6382 = vmatmul.f32.gmra.mxu0 %v6264
          %v6383 = vpop.f32.mrf.mxu0
          %v6384 = vadd.f32 0.0, %v6383
          %6385 = vmatmul.f32.gmra.mxu0 %v6266
          %v6386 = vpop.f32.mrf.mxu0
          %v6387 = vadd.f32 0.0, %v6386
          %6388 = vmatmul.f32.gmra.mxu0 %v6268
          %v6389 = vpop.f32.mrf.mxu0
          %v6390 = vadd.f32 0.0, %v6389
          %6391 = vmatmul.f32.gmra.mxu0 %v6270
          %v6392 = vpop.f32.mrf.mxu0
          %v6393 = vadd.f32 0.0, %v6392
          %6394 = vmatmul.f32.gmra.mxu0 %v6272
          %v6395 = vpop.f32.mrf.mxu0
          %v6396 = vadd.f32 0.0, %v6395
          %6397 = vmatmul.f32.gmra.mxu0 %v6274
          %v6398 = vpop.f32.mrf.mxu0
          %v6399 = vadd.f32 0.0, %v6398
          %6400 = vmatmul.f32.gmra.mxu0 %v6276
          %v6401 = vpop.f32.mrf.mxu0
          %v6402 = vadd.f32 0.0, %v6401
          %6403 = vmatmul.f32.gmra.mxu0 %v6278
          %v6404 = vpop.f32.mrf.mxu0
          %v6405 = vadd.f32 0.0, %v6404
          %6406 = vmatmul.f32.gmra.mxu0 %v6280
          %v6407 = vpop.f32.mrf.mxu0
          %v6408 = vadd.f32 0.0, %v6407
          %6409 = vmatmul.f32.gmra.mxu0 %v6282
          %v6410 = vpop.f32.mrf.mxu0
          %v6411 = vadd.f32 0.0, %v6410
          %6412 = vmatmul.f32.gmra.mxu0 %v6284
          %v6413 = vpop.f32.mrf.mxu0
          %v6414 = vadd.f32 0.0, %v6413
          %6415 = vmatmul.f32.gmra.mxu0 %v6286
          %v6416 = vpop.f32.mrf.mxu0
          %v6417 = vadd.f32 0.0, %v6416
          %6418 = vmatmul.f32.gmra.mxu0 %v6288
          %v6419 = vpop.f32.mrf.mxu0
          %v6420 = vadd.f32 0.0, %v6419
          %6421 = vmatmul.f32.gmra.mxu0 %v6290
          %v6422 = vpop.f32.mrf.mxu0
          %v6423 = vadd.f32 0.0, %v6422
          %6424 = vmatmul.f32.gmra.mxu0 %v6292
          %v6425 = vpop.f32.mrf.mxu0
          %v6426 = vadd.f32 0.0, %v6425
          %6427 = vmatmul.f32.gmra.mxu0 %v6294
          %v6428 = vpop.f32.mrf.mxu0
          %v6429 = vadd.f32 0.0, %v6428
          %6430 = vmatmul.f32.gmra.mxu0 %v6296
          %v6431 = vpop.f32.mrf.mxu0
          %v6432 = vadd.f32 0.0, %v6431
          %6433 = vmatmul.f32.gmra.mxu0 %v6298
          %v6434 = vpop.f32.mrf.mxu0
          %v6435 = vadd.f32 0.0, %v6434
          %6436 = vmatmul.f32.gmra.mxu0 %v6300
          %v6437 = vpop.f32.mrf.mxu0
          %v6438 = vadd.f32 0.0, %v6437
          %6439 = vmatmul.f32.gmra.mxu0 %v6302
          %v6440 = vpop.f32.mrf.mxu0
          %v6441 = vadd.f32 0.0, %v6440
          %6442 = vmatmul.f32.gmra.mxu0 %v6304
          %v6443 = vpop.f32.mrf.mxu0
          %v6444 = vadd.f32 0.0, %v6443
          %6445 = vmatmul.f32.gmra.mxu0 %v6306
          %v6446 = vpop.f32.mrf.mxu0
          %v6447 = vadd.f32 0.0, %v6446
          %6448 = vmatmul.f32.gmra.mxu0 %v6308
          %v6449 = vpop.f32.mrf.mxu0
          %v6450 = vadd.f32 0.0, %v6449
          %6451 = vmatmul.f32.gmra.mxu0 %v6310
          %v6452 = vpop.f32.mrf.mxu0
          %v6453 = vadd.f32 0.0, %v6452
          %6454 = vmatmul.f32.gmra.mxu0 %v6312
          %v6455 = vpop.f32.mrf.mxu0
          %v6456 = vadd.f32 0.0, %v6455
          %6457 = vmatmul.f32.gmra.mxu0 %v6314
          %v6458 = vpop.f32.mrf.mxu0
          %v6459 = vadd.f32 0.0, %v6458
          %6460 = vdwg.mxu0
          %6461 = vmatpush.msra.mxu0 %v6347
          %6462 = vmatpush.msra.mxu0 %v6346
          %6463 = vmatpush.msra.mxu0 %v6345
          %6464 = vmatpush.msra.mxu0 %v6344
          %6465 = vmatpush.msra.mxu0 %v6343
          %6466 = vmatpush.msra.mxu0 %v6342
          %6467 = vmatpush.msra.mxu0 %v6341
          %6468 = vmatpush.msra.mxu0 %v6340
          %6469 = vmatpush.msra.mxu0 %v6339
          %6470 = vmatpush.msra.mxu0 %v6338
          %6471 = vmatpush.msra.mxu0 %v6337
          %6472 = vmatpush.msra.mxu0 %v6336
          %6473 = vmatpush.msra.mxu0 %v6335
          %6474 = vmatpush.msra.mxu0 %v6334
          %6475 = vmatpush.msra.mxu0 %v6333
          %6476 = vmatpush.msra.mxu0 %v6332
          %6477 = vmatmul.f32.gmra.mxu0 %v6253
          %v6478 = vpop.f32.mrf.mxu0
          %v6479 = vadd.f32 %v6366, %v6478
          %6480 = vmatmul.f32.gmra.mxu0 %v6255
          %v6481 = vpop.f32.mrf.mxu0
          %v6482 = vadd.f32 %v6369, %v6481
          %6483 = vmatmul.f32.gmra.mxu0 %v6257
          %v6484 = vpop.f32.mrf.mxu0
          %v6485 = vadd.f32 %v6372, %v6484
          %6486 = vmatmul.f32.gmra.mxu0 %v6259
          %v6487 = vpop.f32.mrf.mxu0
          %v6488 = vadd.f32 %v6375, %v6487
          %6489 = vmatmul.f32.gmra.mxu0 %v6261
          %v6490 = vpop.f32.mrf.mxu0
          %v6491 = vadd.f32 %v6378, %v6490
          %6492 = vmatmul.f32.gmra.mxu0 %v6263
          %v6493 = vpop.f32.mrf.mxu0
          %v6494 = vadd.f32 %v6381, %v6493
          %6495 = vmatmul.f32.gmra.mxu0 %v6265
          %v6496 = vpop.f32.mrf.mxu0
          %v6497 = vadd.f32 %v6384, %v6496
          %6498 = vmatmul.f32.gmra.mxu0 %v6267
          %v6499 = vpop.f32.mrf.mxu0
          %v6500 = vadd.f32 %v6387, %v6499
          %6501 = vmatmul.f32.gmra.mxu0 %v6269
          %v6502 = vpop.f32.mrf.mxu0
          %v6503 = vadd.f32 %v6390, %v6502
          %6504 = vmatmul.f32.gmra.mxu0 %v6271
          %v6505 = vpop.f32.mrf.mxu0
          %v6506 = vadd.f32 %v6393, %v6505
          %6507 = vmatmul.f32.gmra.mxu0 %v6273
          %v6508 = vpop.f32.mrf.mxu0
          %v6509 = vadd.f32 %v6396, %v6508
          %6510 = vmatmul.f32.gmra.mxu0 %v6275
          %v6511 = vpop.f32.mrf.mxu0
          %v6512 = vadd.f32 %v6399, %v6511
          %6513 = vmatmul.f32.gmra.mxu0 %v6277
          %v6514 = vpop.f32.mrf.mxu0
          %v6515 = vadd.f32 %v6402, %v6514
          %6516 = vmatmul.f32.gmra.mxu0 %v6279
          %v6517 = vpop.f32.mrf.mxu0
          %v6518 = vadd.f32 %v6405, %v6517
          %6519 = vmatmul.f32.gmra.mxu0 %v6281
          %v6520 = vpop.f32.mrf.mxu0
          %v6521 = vadd.f32 %v6408, %v6520
          %6522 = vmatmul.f32.gmra.mxu0 %v6283
          %v6523 = vpop.f32.mrf.mxu0
          %v6524 = vadd.f32 %v6411, %v6523
          %6525 = vmatmul.f32.gmra.mxu0 %v6285
          %v6526 = vpop.f32.mrf.mxu0
          %v6527 = vadd.f32 %v6414, %v6526
          %6528 = vmatmul.f32.gmra.mxu0 %v6287
          %v6529 = vpop.f32.mrf.mxu0
          %v6530 = vadd.f32 %v6417, %v6529
          %6531 = vmatmul.f32.gmra.mxu0 %v6289
          %v6532 = vpop.f32.mrf.mxu0
          %v6533 = vadd.f32 %v6420, %v6532
          %6534 = vmatmul.f32.gmra.mxu0 %v6291
          %v6535 = vpop.f32.mrf.mxu0
          %v6536 = vadd.f32 %v6423, %v6535
          %6537 = vmatmul.f32.gmra.mxu0 %v6293
          %v6538 = vpop.f32.mrf.mxu0
          %v6539 = vadd.f32 %v6426, %v6538
          %6540 = vmatmul.f32.gmra.mxu0 %v6295
          %v6541 = vpop.f32.mrf.mxu0
          %v6542 = vadd.f32 %v6429, %v6541
          %6543 = vmatmul.f32.gmra.mxu0 %v6297
          %v6544 = vpop.f32.mrf.mxu0
          %v6545 = vadd.f32 %v6432, %v6544
          %6546 = vmatmul.f32.gmra.mxu0 %v6299
          %v6547 = vpop.f32.mrf.mxu0
          %v6548 = vadd.f32 %v6435, %v6547
          %6549 = vmatmul.f32.gmra.mxu0 %v6301
          %v6550 = vpop.f32.mrf.mxu0
          %v6551 = vadd.f32 %v6438, %v6550
          %6552 = vmatmul.f32.gmra.mxu0 %v6303
          %v6553 = vpop.f32.mrf.mxu0
          %v6554 = vadd.f32 %v6441, %v6553
          %6555 = vmatmul.f32.gmra.mxu0 %v6305
          %v6556 = vpop.f32.mrf.mxu0
          %v6557 = vadd.f32 %v6444, %v6556
          %6558 = vmatmul.f32.gmra.mxu0 %v6307
          %v6559 = vpop.f32.mrf.mxu0
          %v6560 = vadd.f32 %v6447, %v6559
          %6561 = vmatmul.f32.gmra.mxu0 %v6309
          %v6562 = vpop.f32.mrf.mxu0
          %v6563 = vadd.f32 %v6450, %v6562
          %6564 = vmatmul.f32.gmra.mxu0 %v6311
          %v6565 = vpop.f32.mrf.mxu0
          %v6566 = vadd.f32 %v6453, %v6565
          %6567 = vmatmul.f32.gmra.mxu0 %v6313
          %v6568 = vpop.f32.mrf.mxu0
          %v6569 = vadd.f32 %v6456, %v6568
          %6570 = vmatmul.f32.gmra.mxu0 %v6315
          %v6571 = vpop.f32.mrf.mxu0
          %v6572 = vadd.f32 %v6459, %v6571
          %6573 = vdwg.mxu0
          %6574 = vst [vmem:[%s592] sm:$0xff] %v6479
          %6575 = vst [vmem:[%s592 + $0x8] sm:$0xff] %v6482
          %6576 = vst [vmem:[%s592 + $0x10] sm:$0xff] %v6485
          %6577 = vst [vmem:[%s592 + $0x18] sm:$0xff] %v6488
          %6578 = vst [vmem:[%s592 + $0x20] sm:$0xff] %v6491
          %6579 = vst [vmem:[%s592 + $0x28] sm:$0xff] %v6494
          %6580 = vst [vmem:[%s592 + $0x30] sm:$0xff] %v6497
          %6581 = vst [vmem:[%s592 + $0x38] sm:$0xff] %v6500
          %6582 = vst [vmem:[%s592 + $0x40] sm:$0xff] %v6503
          %6583 = vst [vmem:[%s592 + $0x48] sm:$0xff] %v6506
          %6584 = vst [vmem:[%s592 + $0x50] sm:$0xff] %v6509
          %6585 = vst [vmem:[%s592 + $0x58] sm:$0xff] %v6512
          %6586 = vst [vmem:[%s592 + $0x60] sm:$0xff] %v6515
          %6587 = vst [vmem:[%s592 + $0x68] sm:$0xff] %v6518
          %6588 = vst [vmem:[%s592 + $0x70] sm:$0xff] %v6521
          %6589 = vst [vmem:[%s592 + $0x78] sm:$0xff] %v6524
          %6590 = vst [vmem:[%s592 + $0x80] sm:$0xff] %v6527
          %6591 = vst [vmem:[%s592 + $0x88] sm:$0xff] %v6530
          %6592 = vst [vmem:[%s592 + $0x90] sm:$0xff] %v6533
          %6593 = vst [vmem:[%s592 + $0x98] sm:$0xff] %v6536
          %6594 = vst [vmem:[%s592 + $0xa0] sm:$0xff] %v6539
          %6595 = vst [vmem:[%s592 + $0xa8] sm:$0xff] %v6542
          %6596 = vst [vmem:[%s592 + $0xb0] sm:$0xff] %v6545
          %6597 = vst [vmem:[%s592 + $0xb8] sm:$0xff] %v6548
          %6598 = vst [vmem:[%s592 + $0xc0] sm:$0xff] %v6551
          %6599 = vst [vmem:[%s592 + $0xc8] sm:$0xff] %v6554
          %6600 = vst [vmem:[%s592 + $0xd0] sm:$0xff] %v6557
          %6601 = vst [vmem:[%s592 + $0xd8] sm:$0xff] %v6560
          %6602 = vst [vmem:[%s592 + $0xe0] sm:$0xff] %v6563
          %6603 = vst [vmem:[%s592 + $0xe8] sm:$0xff] %v6566
          %6604 = vst [vmem:[%s592 + $0xf0] sm:$0xff] %v6569
          %6605 = vst [vmem:[%s592 + $0xf8] sm:$0xff] %v6572
        $region94: #{gcnmf_forward.4} parent=81 // pred_fallthru
          _
        %s6606 = smul.u32 32, %s24
        %p6607 = scmp.lt.s32.totalorder %s6606, 63
        %s6608 = scalar_select %p6607, %s6606, 63
        %s6609 = smul.addr %s6608, 8
        %s6610 = scalar_lea.vmem %s7, %s6609
        %s6611 = smul.u32 2, %s25
        %p6612 = scmp.lt.s32.totalorder %s24, 1
        %s6613 = scalar_select %p6612, %s24, 1
        %p6614 = scmp.lt.s32.totalorder %s6611, 3
        %s6615 = scalar_select %p6614, %s6611, 3
        %s6616 = smul.addr %s6613, 4
        %s6617 = sadd.s32 %s6615, %s6616
        %s6618 = smul.addr %s6617, 8
        %s6619 = scalar_lea.vmem %s8, %s6618
        // Predicated region
        $region95: #{gcnmf_forward.4} parent=81 // pred_check
          %p6620 = pneg %p224
        $region96: #{gcnmf_forward.4} parent=81 // pred_check_branch
          %6622 = sbr.rel (%p6620) target = $region98
        $region97: #{gcnmf_forward.4} parent=81 // pred_region
          %s6623 = smul.u32 32, %s24
        $region98: #{gcnmf_forward.4} parent=81 // pred_fallthru
          _
        // Predicated region
        $region99: #{gcnmf_forward.4} parent=81 // pred_check
          %p6624 = pneg %p252
        $region100: #{gcnmf_forward.4} parent=81 // pred_check_branch
          %6626 = sbr.rel (%p6624) target = $region102
        $region101: #{gcnmf_forward.4} parent=81 // pred_region
          %s6627 = smul.u32 2, %s25
        $region102: #{gcnmf_forward.4} parent=81 // pred_fallthru
          _
      $region82: #{gcnmf_forward.4} parent=5 // pred_fallthru
        _
      %p6628 = scmp.le.s32.totalorder 2, %s15
      // Predicated region
      $region103: #{gcnmf_forward.4} parent=5 // pred_check
        %p6629 = pneg %p6628
      $region104: #{gcnmf_forward.4} parent=5 // pred_check_branch
        %6631 = sbr.rel (%p6629) target = $region106
      $region105: #{gcnmf_forward.4} parent=5 // pred_region
        %s6632 = ssub.s32 %s15, 2
        // Predicated region
        $region107: #{gcnmf_forward.4} parent=105 // pred_check
          %p6633 = pneg %p230
        $region108: #{gcnmf_forward.4} parent=105 // pred_check_branch
          %6635 = sbr.rel (%p6633) target = $region110
        $region109: #{gcnmf_forward.4} parent=105 // pred_region
          %s6636 = smul.u32 32, %s26
          %p6637 = scmp.lt.s32.totalorder %s6636, 63
          %s6638 = scalar_select %p6637, %s6636, 63
          %s6639 = smul.addr %s6638, 8
          %s6640 = scalar_lea.vmem %s7, %s6639
        $region110: #{gcnmf_forward.4} parent=105 // pred_fallthru
          _
        // Predicated region
        $region111: #{gcnmf_forward.4} parent=105 // pred_check
          %p6641 = pneg %p258
        $region112: #{gcnmf_forward.4} parent=105 // pred_check_branch
          %6643 = sbr.rel (%p6641) target = $region114
        $region113: #{gcnmf_forward.4} parent=105 // pred_region
          %s6644 = smul.u32 2, %s27
          %p6645 = scmp.lt.s32.totalorder %s26, 1
          %s6646 = scalar_select %p6645, %s26, 1
          %p6647 = scmp.lt.s32.totalorder %s6644, 3
          %s6648 = scalar_select %p6647, %s6644, 3
          %s6649 = smul.addr %s6646, 4
          %s6650 = sadd.s32 %s6648, %s6649
          %s6651 = smul.addr %s6650, 8
          %s6652 = scalar_lea.vmem %s8, %s6651
        $region114: #{gcnmf_forward.4} parent=105 // pred_fallthru
          _
      $region106: #{gcnmf_forward.4} parent=5 // pred_fallthru
        _
    $region6: #{gcnmf_forward.4} parent=1 // loop_footer
      %s19 = sadd.s32 1, %s15
    $region7: #{gcnmf_forward.4} parent=1 // loop_footer_branch
      %14 = sbr.rel target = $region3
    $region8: #{gcnmf_forward.4} parent=1 // loop_exit
      _

</llo_original>
